<compile_context>
chip_gen: v7x
topology: tpu7x:2x2x1
jax: 0.10.0
libtpu: 0.0.40
codegen_flags: <defaults>
</compile_context>

<pallas_src>
from functools import partial

import jax
import jax.numpy as jnp
from jax import lax
from jax.experimental import pallas as pl
from jax.experimental.pallas import tpu as pltpu

SEQ = 256  # fixed by Conv1d(256, 256, kernel_size=1) in the module's __init__


def _self_attention_kernel(x_ref, wq_ref, wkv_ref, o_ref,
                           q_scr, kv_scr, acc_scr, *,
                           batch_tile, emb_dim, num_heads, head_dim,
                           q_tile, softmax_dtype):
    """One grid step = one (batch block, query-row block) output tile.

    x_ref:   (S, nt)      f32   full seq rows, nt = batch_tile*emb_dim lanes
    wq_ref:  (q_tile, S)  bf16  Wq rows for this query block (pre-scaled)
    wkv_ref: (2S, S)      bf16  [Wk; Wv] stacked
    o_ref:   (q_tile, nt) f32   output rows for this query block
    """
    S = SEQ
    qi = pl.program_id(1)

    xb = x_ref[...].astype(jnp.bfloat16)                   # (S, nt)

    # Projections (1/sqrt(head_dim) already folded into Wq).  Results go to
    # VMEM scratch so only small per-head slices are live inside the head loop.
    q_scr[...] = jnp.dot(wq_ref[...], xb,
                         preferred_element_type=jnp.float32).astype(jnp.bfloat16)
    kv_scr[...] = jnp.dot(wkv_ref[...], xb,
                          preferred_element_type=jnp.float32).astype(jnp.bfloat16)

    # Ones block: the softmax row-sum becomes an MXU matmul, not an XLU reduce.
    ones_cols = jnp.ones((S, 8), dtype=jnp.bfloat16)

    for b in range(batch_tile):
        for h in range(num_heads):
            lo = b * emb_dim + h * head_dim
            hi = lo + head_dim
            qh = q_scr[:, lo:hi]                            # (q_tile, hd) bf16
            kh = kv_scr[0:S, lo:hi]                         # (S, hd)      bf16
            vh = kv_scr[S:2 * S, lo:hi]                     # (S, hd)      bf16

            # energy = qh @ kh^T without materializing a transpose.
            energy = lax.dot_general(
                qh, kh, (((1,), (1,)), ((), ())),
                preferred_element_type=jnp.float32)         # (q_tile, S) f32

            # Numerically stable softmax, normalization deferred.  Elementwise
            # math in softmax_dtype (bf16 on v6e/v7x, f32 on v5e).
            m = jnp.max(energy, axis=-1, keepdims=True)
            p = jnp.exp(energy.astype(softmax_dtype) - m.astype(softmax_dtype))
            p_b = p.astype(jnp.bfloat16)

            oh = jnp.dot(p_b, vh,
                         preferred_element_type=jnp.float32)      # (q_tile, hd)
            lsum = jnp.dot(p_b, ones_cols,
                           preferred_element_type=jnp.float32)[:, :1]
            # Direct narrow VMEM slice write (no concatenate of 16-lane pieces).
            acc_scr[:, lo:hi] = oh * pl.reciprocal(lsum, approx=True)

    # Residual add + single lane-dense store for this query-row block.
    row_lo = pl.multiple_of(qi * q_tile, q_tile)
    x_res = x_ref[pl.ds(row_lo, q_tile), :]                 # (q_tile, nt) f32
    o_ref[...] = (acc_scr[...] + x_res).astype(o_ref.dtype)


def _choose_batch_tile(B, E):
    """Batch elements packed into the lane axis per grid step.

    Prefer lane-dense blocks (nt % 128 == 0), then >=2 batch blocks (more grid
    steps), then a block width near 256 lanes (good MXU fill, modest VMEM).
    """
    best, best_score = B, None
    for bt in range(1, B + 1):
        if B % bt:
            continue
        nt = bt * E
        lane_dense = nt % 128 == 0
        if not lane_dense and bt != B:
            continue   # keep the lane-dim block (8,128)-legal
        score = (lane_dense, (B // bt) >= 2, -abs(nt - 256))
        if best_score is None or score > best_score:
            best_score, best = score, bt
    return best


def _softmax_dtype():
    """bf16 softmax elementwise math on chips with bf16 VPU/EUP, f32 otherwise."""
    try:
        kind = jax.devices()[0].device_kind.lower()
    except Exception:
        return jnp.float32
    if any(tag in kind for tag in ("v2", "v3", "v4", "v5")):
        return jnp.float32     # no bf16 VPU/EUP on v5e and older
    return jnp.bfloat16        # v6e / v7x


def self_attention_pallas(x, wq, wk, wv, num_heads, batch_tile=None, q_tile=128):
    B, S, E = x.shape
    assert S == SEQ, "Conv1d(256, 256) in the module requires seq_len == 256"
    assert E % num_heads == 0
    head_dim = E // num_heads
    assert S % q_tile == 0 and q_tile % 8 == 0

    if batch_tile is None:
        batch_tile = _choose_batch_tile(B, E)
    assert B % batch_tile == 0
    n_blk = B // batch_tile
    n_q = S // q_tile
    nt = batch_tile * E

    # Fold the 1/sqrt(head_dim) scale into Wq; fuse Wk/Wv into one bf16 matrix.
    scale = 1.0 / (head_dim ** 0.5)
    wq_b = (wq * scale).astype(jnp.bfloat16)                        # (S, S)
    wkv_b = jnp.concatenate([wk, wv], axis=0).astype(jnp.bfloat16)  # (2S, S)

    # Host-side layout plumbing: lane-dense (S, B*E) slab.
    # TODO(synk): at large production B, fold these transposes into adjacent
    # ops (they are extra HBM passes outside the kernel).
    x2d = jnp.transpose(x, (1, 0, 2)).reshape(S, B * E)

    kernel = partial(_self_attention_kernel, batch_tile=batch_tile, emb_dim=E,
                     num_heads=num_heads, head_dim=head_dim, q_tile=q_tile,
                     softmax_dtype=_softmax_dtype())

    out2d = pl.pallas_call(
        kernel,
        out_shape=jax.ShapeDtypeStruct((S, B * E), x.dtype),
        grid_spec=pltpu.PrefetchScalarGridSpec(
            num_scalar_prefetch=0,
            grid=(n_blk, n_q),
            in_specs=[
                pl.BlockSpec((S, nt), lambda g, qi: (0, g)),        # x slab
                pl.BlockSpec((q_tile, S), lambda g, qi: (qi, 0)),   # Wq row block
                pl.BlockSpec((2 * S, S), lambda g, qi: (0, 0)),     # [Wk; Wv]
            ],
            out_specs=pl.BlockSpec((q_tile, nt), lambda g, qi: (qi, g)),
            scratch_shapes=[
                pltpu.VMEM((q_tile, nt), jnp.bfloat16),     # Q
                pltpu.VMEM((2 * SEQ, nt), jnp.bfloat16),    # K ; V
                pltpu.VMEM((q_tile, nt), jnp.float32),      # attention accumulator
            ],
        ),
        compiler_params=pltpu.CompilerParams(
            dimension_semantics=("parallel", "parallel")),
    )(x2d, wq_b, wkv_b)

    return jnp.transpose(out2d.reshape(S, B, E), (1, 0, 2))


def self_attention_reference(x, wq, wk, wv, num_heads):
    """Pure-JAX f32 reference mirroring the PyTorch forward exactly."""
    B, S, E = x.shape
    hd = E // num_heads
    q = jnp.einsum('os,bse->boe', wq, x)
    k = jnp.einsum('os,bse->boe', wk, x)
    v = jnp.einsum('os,bse->boe', wv, x)

    def split(t):  # (B, S, E) -> (B, H, S, hd)
        return t.reshape(B, S, num_heads, hd).transpose(0, 2, 1, 3)

    qh, kh, vh = split(q), split(k), split(v)
    energy = jnp.einsum('bhqd,bhkd->bhqk', qh, kh) / (hd ** 0.5)
    attn = jax.nn.softmax(energy, axis=-1)
    out = jnp.einsum('bhqk,bhkd->bhqd', attn, vh)
    out = out.transpose(0, 2, 1, 3).reshape(B, S, E)
    return out + x


if __name__ == "__main__":
    key = jax.random.PRNGKey(0)
    k_x, k_q, k_k, k_v = jax.random.split(key, 4)

    B = 2
    S = SEQ            # seq axis is forced to 256 by Conv1d(256, 256)
    emb_dim = 64
    num_heads = 4      # head_dim = 16

    x = jax.random.normal(k_x, (B, S, emb_dim), dtype=jnp.float32)
    # Conv1d weight shape is (out=256, in=256, k=1) -> squeeze to (256, 256)
    wq = 0.05 * jax.random.normal(k_q, (S, S), dtype=jnp.float32)
    wk = 0.05 * jax.random.normal(k_k, (S, S), dtype=jnp.float32)
    wv = 0.05 * jax.random.normal(k_v, (S, S), dtype=jnp.float32)

    out = self_attention_pallas(x, wq, wk, wv, num_heads)
    out = jax.block_until_ready(out)

    ref = self_attention_reference(x, wq, wk, wv, num_heads)
    assert out.shape == (B, S, emb_dim)
    # bf16 MXU inputs + bf16 softmax math + approx reciprocal => loose tolerance.
    assert jnp.allclose(out, ref, atol=3e-2, rtol=3e-2), (
        "mismatch vs reference: max abs err "
        f"{float(jnp.max(jnp.abs(out - ref)))}")

    print("KERNEL_OK")
</pallas_src>

<mosaic_0001>
module attributes {stable_mosaic.version = 11 : i64} {
  func.func @_self_attention_kernel(%arg0: i32, %arg1: i32, %arg2: memref<256x128xf32, #tpu.memory_space<vmem>>, %arg3: memref<128x256xbf16, #tpu.memory_space<vmem>>, %arg4: memref<512x256xbf16, #tpu.memory_space<vmem>>, %arg5: memref<128x128xf32, #tpu.memory_space<vmem>>, %arg6: memref<128x128xbf16, #tpu.memory_space<vmem>>, %arg7: memref<512x128xbf16, #tpu.memory_space<vmem>>, %arg8: memref<128x128xf32, #tpu.memory_space<vmem>>) attributes {dimension_semantics = [#tpu.dimension_semantics<parallel>, #tpu.dimension_semantics<parallel>], iteration_bounds = array<i64: 1, 2>, scalar_prefetch = 0 : i64, scratch_operands = 3 : i64, tpu.core_type = #tpu.core_type<tc>, window_params = [{transform_indices = @transform_0, window_bounds = array<i64: 256, 128>}, {transform_indices = @transform_1, window_bounds = array<i64: 128, 256>}, {pipeline_mode = #tpu.pipeline_mode<synchronous>, transform_indices = @transform_2, window_bounds = array<i64: 512, 256>}, {transform_indices = @transform_3, window_bounds = array<i64: 128, 128>}]} {
    %c0 = arith.constant 0 : index
    %c0_0 = arith.constant 0 : index
    %0 = vector.load %arg2[%c0, %c0_0] : memref<256x128xf32, #tpu.memory_space<vmem>>, vector<256x128xf32>
    %1 = arith.truncf %0 : vector<256x128xf32> to vector<256x128xbf16>
    %c0_1 = arith.constant 0 : index
    %c0_2 = arith.constant 0 : index
    %2 = vector.load %arg3[%c0_1, %c0_2] : memref<128x256xbf16, #tpu.memory_space<vmem>>, vector<128x256xbf16>
    %cst = arith.constant dense<0.000000e+00> : vector<128x128xf32>
    %3 = tpu.matmul %2, %1, %cst {dimension_numbers = #tpu.dot_dimension_numbers<[1], [0], [0], [1], [0, 0, 1, 1], [], []>} : vector<128x256xbf16>, vector<256x128xbf16>, vector<128x128xf32> -> vector<128x128xf32>
    %4 = arith.truncf %3 : vector<128x128xf32> to vector<128x128xbf16>
    %c0_3 = arith.constant 0 : index
    %c0_4 = arith.constant 0 : index
    %5 = vector.load %arg6[%c0_3, %c0_4] : memref<128x128xbf16, #tpu.memory_space<vmem>>, vector<128x128xbf16>
    tpu.vector_store %arg6[%c0_3, %c0_4], %4 {strides = array<i32>} : memref<128x128xbf16, #tpu.memory_space<vmem>>, vector<128x128xbf16>,
    %c0_5 = arith.constant 0 : index
    %c0_6 = arith.constant 0 : index
    %6 = vector.load %arg4[%c0_5, %c0_6] : memref<512x256xbf16, #tpu.memory_space<vmem>>, vector<512x256xbf16>
    %cst_7 = arith.constant dense<0.000000e+00> : vector<512x128xf32>
    %7 = tpu.matmul %6, %1, %cst_7 {dimension_numbers = #tpu.dot_dimension_numbers<[1], [0], [0], [1], [0, 0, 1, 1], [], []>} : vector<512x256xbf16>, vector<256x128xbf16>, vector<512x128xf32> -> vector<512x128xf32>
    %8 = arith.truncf %7 : vector<512x128xf32> to vector<512x128xbf16>
    %c0_8 = arith.constant 0 : index
    %c0_9 = arith.constant 0 : index
    %9 = vector.load %arg7[%c0_8, %c0_9] : memref<512x128xbf16, #tpu.memory_space<vmem>>, vector<512x128xbf16>
    tpu.vector_store %arg7[%c0_8, %c0_9], %8 {strides = array<i32>} : memref<512x128xbf16, #tpu.memory_space<vmem>>, vector<512x128xbf16>,
    %cst_10 = arith.constant 1.000000e+00 : bf16
    %10 = vector.broadcast %cst_10 : bf16 to vector<256x8xbf16>
    %c0_11 = arith.constant 0 : index
    %c0_12 = arith.constant 0 : index
    %11 = vector.load %arg6[%c0_11, %c0_12] : memref<128x128xbf16, #tpu.memory_space<vmem>>, vector<128x16xbf16>
    %c0_13 = arith.constant 0 : index
    %c0_14 = arith.constant 0 : index
    %12 = vector.load %arg7[%c0_13, %c0_14] : memref<512x128xbf16, #tpu.memory_space<vmem>>, vector<256x16xbf16>
    %c256 = arith.constant 256 : index
    %c0_15 = arith.constant 0 : index
    %13 = vector.load %arg7[%c256, %c0_15] : memref<512x128xbf16, #tpu.memory_space<vmem>>, vector<256x16xbf16>
    %cst_16 = arith.constant dense<0.000000e+00> : vector<128x256xf32>
    %14 = tpu.matmul %11, %12, %cst_16 {dimension_numbers = #tpu.dot_dimension_numbers<[1], [1], [0], [0], [0, 0, 1, 0], [], []>} : vector<128x16xbf16>, vector<256x16xbf16>, vector<128x256xf32> -> vector<128x256xf32>
    %cst_17 = arith.constant dense<0xFF800000> : vector<128xf32>
    %15 = vector.multi_reduction <maximumf>, %14, %cst_17 [1] : vector<128x256xf32> to vector<128xf32>
    %16 = vector.shape_cast %15 : vector<128xf32> to vector<128x1xf32>
    %17 = arith.truncf %14 : vector<128x256xf32> to vector<128x256xbf16>
    %18 = arith.truncf %16 : vector<128x1xf32> to vector<128x1xbf16>
    %19 = vector.broadcast %18 : vector<128x1xbf16> to vector<128x256xbf16>
    %20 = arith.subf %17, %19 : vector<128x256xbf16>
    %21 = math.exp %20 : vector<128x256xbf16>
    %cst_18 = arith.constant dense<0.000000e+00> : vector<128x16xf32>
    %22 = tpu.matmul %21, %13, %cst_18 {dimension_numbers = #tpu.dot_dimension_numbers<[1], [0], [0], [1], [0, 0, 1, 1], [], []>} : vector<128x256xbf16>, vector<256x16xbf16>, vector<128x16xf32> -> vector<128x16xf32>
    %cst_19 = arith.constant dense<0.000000e+00> : vector<128x8xf32>
    %23 = tpu.matmul %21, %10, %cst_19 {dimension_numbers = #tpu.dot_dimension_numbers<[1], [0], [0], [1], [0, 0, 1, 1], [], []>} : vector<128x256xbf16>, vector<256x8xbf16>, vector<128x8xf32> -> vector<128x8xf32>
    %24 = vector.extract_strided_slice %23 {offsets = [0, 0], sizes = [128, 1], strides = [1, 1]} : vector<128x8xf32> to vector<128x1xf32>
    %25 = tpu.reciprocal %24 {approx = true} : vector<128x1xf32> -> vector<128x1xf32>
    %26 = vector.broadcast %25 : vector<128x1xf32> to vector<128x16xf32>
    %27 = arith.mulf %22, %26 : vector<128x16xf32>
    %c0_20 = arith.constant 0 : index
    %c0_21 = arith.constant 0 : index
    %28 = vector.load %arg8[%c0_20, %c0_21] : memref<128x128xf32, #tpu.memory_space<vmem>>, vector<128x16xf32>
    tpu.vector_store %arg8[%c0_20, %c0_21], %27 {strides = array<i32>} : memref<128x128xf32, #tpu.memory_space<vmem>>, vector<128x16xf32>,
    %c0_22 = arith.constant 0 : index
    %c16 = arith.constant 16 : index
    %29 = vector.load %arg6[%c0_22, %c16] : memref<128x128xbf16, #tpu.memory_space<vmem>>, vector<128x16xbf16>
    %c0_23 = arith.constant 0 : index
    %c16_24 = arith.constant 16 : index
    %30 = vector.load %arg7[%c0_23, %c16_24] : memref<512x128xbf16, #tpu.memory_space<vmem>>, vector<256x16xbf16>
    %c256_25 = arith.constant 256 : index
    %c16_26 = arith.constant 16 : index
    %31 = vector.load %arg7[%c256_25, %c16_26] : memref<512x128xbf16, #tpu.memory_space<vmem>>, vector<256x16xbf16>
    %cst_27 = arith.constant dense<0.000000e+00> : vector<128x256xf32>
    %32 = tpu.matmul %29, %30, %cst_27 {dimension_numbers = #tpu.dot_dimension_numbers<[1], [1], [0], [0], [0, 0, 1, 0], [], []>} : vector<128x16xbf16>, vector<256x16xbf16>, vector<128x256xf32> -> vector<128x256xf32>
    %cst_28 = arith.constant dense<0xFF800000> : vector<128xf32>
    %33 = vector.multi_reduction <maximumf>, %32, %cst_28 [1] : vector<128x256xf32> to vector<128xf32>
    %34 = vector.shape_cast %33 : vector<128xf32> to vector<128x1xf32>
    %35 = arith.truncf %32 : vector<128x256xf32> to vector<128x256xbf16>
    %36 = arith.truncf %34 : vector<128x1xf32> to vector<128x1xbf16>
    %37 = vector.broadcast %36 : vector<128x1xbf16> to vector<128x256xbf16>
    %38 = arith.subf %35, %37 : vector<128x256xbf16>
    %39 = math.exp %38 : vector<128x256xbf16>
    %cst_29 = arith.constant dense<0.000000e+00> : vector<128x16xf32>
    %40 = tpu.matmul %39, %31, %cst_29 {dimension_numbers = #tpu.dot_dimension_numbers<[1], [0], [0], [1], [0, 0, 1, 1], [], []>} : vector<128x256xbf16>, vector<256x16xbf16>, vector<128x16xf32> -> vector<128x16xf32>
    %cst_30 = arith.constant dense<0.000000e+00> : vector<128x8xf32>
    %41 = tpu.matmul %39, %10, %cst_30 {dimension_numbers = #tpu.dot_dimension_numbers<[1], [0], [0], [1], [0, 0, 1, 1], [], []>} : vector<128x256xbf16>, vector<256x8xbf16>, vector<128x8xf32> -> vector<128x8xf32>
    %42 = vector.extract_strided_slice %41 {offsets = [0, 0], sizes = [128, 1], strides = [1, 1]} : vector<128x8xf32> to vector<128x1xf32>
    %43 = tpu.reciprocal %42 {approx = true} : vector<128x1xf32> -> vector<128x1xf32>
    %44 = vector.broadcast %43 : vector<128x1xf32> to vector<128x16xf32>
    %45 = arith.mulf %40, %44 : vector<128x16xf32>
    %c0_31 = arith.constant 0 : index
    %c16_32 = arith.constant 16 : index
    %46 = vector.load %arg8[%c0_31, %c16_32] : memref<128x128xf32, #tpu.memory_space<vmem>>, vector<128x16xf32>
    tpu.vector_store %arg8[%c0_31, %c16_32], %45 {strides = array<i32>} : memref<128x128xf32, #tpu.memory_space<vmem>>, vector<128x16xf32>,
    %c0_33 = arith.constant 0 : index
    %c32 = arith.constant 32 : index
    %47 = vector.load %arg6[%c0_33, %c32] : memref<128x128xbf16, #tpu.memory_space<vmem>>, vector<128x16xbf16>
    %c0_34 = arith.constant 0 : index
    %c32_35 = arith.constant 32 : index
    %48 = vector.load %arg7[%c0_34, %c32_35] : memref<512x128xbf16, #tpu.memory_space<vmem>>, vector<256x16xbf16>
    %c256_36 = arith.constant 256 : index
    %c32_37 = arith.constant 32 : index
    %49 = vector.load %arg7[%c256_36, %c32_37] : memref<512x128xbf16, #tpu.memory_space<vmem>>, vector<256x16xbf16>
    %cst_38 = arith.constant dense<0.000000e+00> : vector<128x256xf32>
    %50 = tpu.matmul %47, %48, %cst_38 {dimension_numbers = #tpu.dot_dimension_numbers<[1], [1], [0], [0], [0, 0, 1, 0], [], []>} : vector<128x16xbf16>, vector<256x16xbf16>, vector<128x256xf32> -> vector<128x256xf32>
    %cst_39 = arith.constant dense<0xFF800000> : vector<128xf32>
    %51 = vector.multi_reduction <maximumf>, %50, %cst_39 [1] : vector<128x256xf32> to vector<128xf32>
    %52 = vector.shape_cast %51 : vector<128xf32> to vector<128x1xf32>
    %53 = arith.truncf %50 : vector<128x256xf32> to vector<128x256xbf16>
    %54 = arith.truncf %52 : vector<128x1xf32> to vector<128x1xbf16>
    %55 = vector.broadcast %54 : vector<128x1xbf16> to vector<128x256xbf16>
    %56 = arith.subf %53, %55 : vector<128x256xbf16>
    %57 = math.exp %56 : vector<128x256xbf16>
    %cst_40 = arith.constant dense<0.000000e+00> : vector<128x16xf32>
    %58 = tpu.matmul %57, %49, %cst_40 {dimension_numbers = #tpu.dot_dimension_numbers<[1], [0], [0], [1], [0, 0, 1, 1], [], []>} : vector<128x256xbf16>, vector<256x16xbf16>, vector<128x16xf32> -> vector<128x16xf32>
    %cst_41 = arith.constant dense<0.000000e+00> : vector<128x8xf32>
    %59 = tpu.matmul %57, %10, %cst_41 {dimension_numbers = #tpu.dot_dimension_numbers<[1], [0], [0], [1], [0, 0, 1, 1], [], []>} : vector<128x256xbf16>, vector<256x8xbf16>, vector<128x8xf32> -> vector<128x8xf32>
    %60 = vector.extract_strided_slice %59 {offsets = [0, 0], sizes = [128, 1], strides = [1, 1]} : vector<128x8xf32> to vector<128x1xf32>
    %61 = tpu.reciprocal %60 {approx = true} : vector<128x1xf32> -> vector<128x1xf32>
    %62 = vector.broadcast %61 : vector<128x1xf32> to vector<128x16xf32>
    %63 = arith.mulf %58, %62 : vector<128x16xf32>
    %c0_42 = arith.constant 0 : index
    %c32_43 = arith.constant 32 : index
    %64 = vector.load %arg8[%c0_42, %c32_43] : memref<128x128xf32, #tpu.memory_space<vmem>>, vector<128x16xf32>
    tpu.vector_store %arg8[%c0_42, %c32_43], %63 {strides = array<i32>} : memref<128x128xf32, #tpu.memory_space<vmem>>, vector<128x16xf32>,
    %c0_44 = arith.constant 0 : index
    %c48 = arith.constant 48 : index
    %65 = vector.load %arg6[%c0_44, %c48] : memref<128x128xbf16, #tpu.memory_space<vmem>>, vector<128x16xbf16>
    %c0_45 = arith.constant 0 : index
    %c48_46 = arith.constant 48 : index
    %66 = vector.load %arg7[%c0_45, %c48_46] : memref<512x128xbf16, #tpu.memory_space<vmem>>, vector<256x16xbf16>
    %c256_47 = arith.constant 256 : index
    %c48_48 = arith.constant 48 : index
    %67 = vector.load %arg7[%c256_47, %c48_48] : memref<512x128xbf16, #tpu.memory_space<vmem>>, vector<256x16xbf16>
    %cst_49 = arith.constant dense<0.000000e+00> : vector<128x256xf32>
    %68 = tpu.matmul %65, %66, %cst_49 {dimension_numbers = #tpu.dot_dimension_numbers<[1], [1], [0], [0], [0, 0, 1, 0], [], []>} : vector<128x16xbf16>, vector<256x16xbf16>, vector<128x256xf32> -> vector<128x256xf32>
    %cst_50 = arith.constant dense<0xFF800000> : vector<128xf32>
    %69 = vector.multi_reduction <maximumf>, %68, %cst_50 [1] : vector<128x256xf32> to vector<128xf32>
    %70 = vector.shape_cast %69 : vector<128xf32> to vector<128x1xf32>
    %71 = arith.truncf %68 : vector<128x256xf32> to vector<128x256xbf16>
    %72 = arith.truncf %70 : vector<128x1xf32> to vector<128x1xbf16>
    %73 = vector.broadcast %72 : vector<128x1xbf16> to vector<128x256xbf16>
    %74 = arith.subf %71, %73 : vector<128x256xbf16>
    %75 = math.exp %74 : vector<128x256xbf16>
    %cst_51 = arith.constant dense<0.000000e+00> : vector<128x16xf32>
    %76 = tpu.matmul %75, %67, %cst_51 {dimension_numbers = #tpu.dot_dimension_numbers<[1], [0], [0], [1], [0, 0, 1, 1], [], []>} : vector<128x256xbf16>, vector<256x16xbf16>, vector<128x16xf32> -> vector<128x16xf32>
    %cst_52 = arith.constant dense<0.000000e+00> : vector<128x8xf32>
    %77 = tpu.matmul %75, %10, %cst_52 {dimension_numbers = #tpu.dot_dimension_numbers<[1], [0], [0], [1], [0, 0, 1, 1], [], []>} : vector<128x256xbf16>, vector<256x8xbf16>, vector<128x8xf32> -> vector<128x8xf32>
    %78 = vector.extract_strided_slice %77 {offsets = [0, 0], sizes = [128, 1], strides = [1, 1]} : vector<128x8xf32> to vector<128x1xf32>
    %79 = tpu.reciprocal %78 {approx = true} : vector<128x1xf32> -> vector<128x1xf32>
    %80 = vector.broadcast %79 : vector<128x1xf32> to vector<128x16xf32>
    %81 = arith.mulf %76, %80 : vector<128x16xf32>
    %c0_53 = arith.constant 0 : index
    %c48_54 = arith.constant 48 : index
    %82 = vector.load %arg8[%c0_53, %c48_54] : memref<128x128xf32, #tpu.memory_space<vmem>>, vector<128x16xf32>
    tpu.vector_store %arg8[%c0_53, %c48_54], %81 {strides = array<i32>} : memref<128x128xf32, #tpu.memory_space<vmem>>, vector<128x16xf32>,
    %c0_55 = arith.constant 0 : index
    %c64 = arith.constant 64 : index
    %83 = vector.load %arg6[%c0_55, %c64] : memref<128x128xbf16, #tpu.memory_space<vmem>>, vector<128x16xbf16>
    %c0_56 = arith.constant 0 : index
    %c64_57 = arith.constant 64 : index
    %84 = vector.load %arg7[%c0_56, %c64_57] : memref<512x128xbf16, #tpu.memory_space<vmem>>, vector<256x16xbf16>
    %c256_58 = arith.constant 256 : index
    %c64_59 = arith.constant 64 : index
    %85 = vector.load %arg7[%c256_58, %c64_59] : memref<512x128xbf16, #tpu.memory_space<vmem>>, vector<256x16xbf16>
    %cst_60 = arith.constant dense<0.000000e+00> : vector<128x256xf32>
    %86 = tpu.matmul %83, %84, %cst_60 {dimension_numbers = #tpu.dot_dimension_numbers<[1], [1], [0], [0], [0, 0, 1, 0], [], []>} : vector<128x16xbf16>, vector<256x16xbf16>, vector<128x256xf32> -> vector<128x256xf32>
    %cst_61 = arith.constant dense<0xFF800000> : vector<128xf32>
    %87 = vector.multi_reduction <maximumf>, %86, %cst_61 [1] : vector<128x256xf32> to vector<128xf32>
    %88 = vector.shape_cast %87 : vector<128xf32> to vector<128x1xf32>
    %89 = arith.truncf %86 : vector<128x256xf32> to vector<128x256xbf16>
    %90 = arith.truncf %88 : vector<128x1xf32> to vector<128x1xbf16>
    %91 = vector.broadcast %90 : vector<128x1xbf16> to vector<128x256xbf16>
    %92 = arith.subf %89, %91 : vector<128x256xbf16>
    %93 = math.exp %92 : vector<128x256xbf16>
    %cst_62 = arith.constant dense<0.000000e+00> : vector<128x16xf32>
    %94 = tpu.matmul %93, %85, %cst_62 {dimension_numbers = #tpu.dot_dimension_numbers<[1], [0], [0], [1], [0, 0, 1, 1], [], []>} : vector<128x256xbf16>, vector<256x16xbf16>, vector<128x16xf32> -> vector<128x16xf32>
    %cst_63 = arith.constant dense<0.000000e+00> : vector<128x8xf32>
    %95 = tpu.matmul %93, %10, %cst_63 {dimension_numbers = #tpu.dot_dimension_numbers<[1], [0], [0], [1], [0, 0, 1, 1], [], []>} : vector<128x256xbf16>, vector<256x8xbf16>, vector<128x8xf32> -> vector<128x8xf32>
    %96 = vector.extract_strided_slice %95 {offsets = [0, 0], sizes = [128, 1], strides = [1, 1]} : vector<128x8xf32> to vector<128x1xf32>
    %97 = tpu.reciprocal %96 {approx = true} : vector<128x1xf32> -> vector<128x1xf32>
    %98 = vector.broadcast %97 : vector<128x1xf32> to vector<128x16xf32>
    %99 = arith.mulf %94, %98 : vector<128x16xf32>
    %c0_64 = arith.constant 0 : index
    %c64_65 = arith.constant 64 : index
    %100 = vector.load %arg8[%c0_64, %c64_65] : memref<128x128xf32, #tpu.memory_space<vmem>>, vector<128x16xf32>
    tpu.vector_store %arg8[%c0_64, %c64_65], %99 {strides = array<i32>} : memref<128x128xf32, #tpu.memory_space<vmem>>, vector<128x16xf32>,
    %c0_66 = arith.constant 0 : index
    %c80 = arith.constant 80 : index
    %101 = vector.load %arg6[%c0_66, %c80] : memref<128x128xbf16, #tpu.memory_space<vmem>>, vector<128x16xbf16>
    %c0_67 = arith.constant 0 : index
    %c80_68 = arith.constant 80 : index
    %102 = vector.load %arg7[%c0_67, %c80_68] : memref<512x128xbf16, #tpu.memory_space<vmem>>, vector<256x16xbf16>
    %c256_69 = arith.constant 256 : index
    %c80_70 = arith.constant 80 : index
    %103 = vector.load %arg7[%c256_69, %c80_70] : memref<512x128xbf16, #tpu.memory_space<vmem>>, vector<256x16xbf16>
    %cst_71 = arith.constant dense<0.000000e+00> : vector<128x256xf32>
    %104 = tpu.matmul %101, %102, %cst_71 {dimension_numbers = #tpu.dot_dimension_numbers<[1], [1], [0], [0], [0, 0, 1, 0], [], []>} : vector<128x16xbf16>, vector<256x16xbf16>, vector<128x256xf32> -> vector<128x256xf32>
    %cst_72 = arith.constant dense<0xFF800000> : vector<128xf32>
    %105 = vector.multi_reduction <maximumf>, %104, %cst_72 [1] : vector<128x256xf32> to vector<128xf32>
    %106 = vector.shape_cast %105 : vector<128xf32> to vector<128x1xf32>
    %107 = arith.truncf %104 : vector<128x256xf32> to vector<128x256xbf16>
    %108 = arith.truncf %106 : vector<128x1xf32> to vector<128x1xbf16>
    %109 = vector.broadcast %108 : vector<128x1xbf16> to vector<128x256xbf16>
    %110 = arith.subf %107, %109 : vector<128x256xbf16>
    %111 = math.exp %110 : vector<128x256xbf16>
    %cst_73 = arith.constant dense<0.000000e+00> : vector<128x16xf32>
    %112 = tpu.matmul %111, %103, %cst_73 {dimension_numbers = #tpu.dot_dimension_numbers<[1], [0], [0], [1], [0, 0, 1, 1], [], []>} : vector<128x256xbf16>, vector<256x16xbf16>, vector<128x16xf32> -> vector<128x16xf32>
    %cst_74 = arith.constant dense<0.000000e+00> : vector<128x8xf32>
    %113 = tpu.matmul %111, %10, %cst_74 {dimension_numbers = #tpu.dot_dimension_numbers<[1], [0], [0], [1], [0, 0, 1, 1], [], []>} : vector<128x256xbf16>, vector<256x8xbf16>, vector<128x8xf32> -> vector<128x8xf32>
    %114 = vector.extract_strided_slice %113 {offsets = [0, 0], sizes = [128, 1], strides = [1, 1]} : vector<128x8xf32> to vector<128x1xf32>
    %115 = tpu.reciprocal %114 {approx = true} : vector<128x1xf32> -> vector<128x1xf32>
    %116 = vector.broadcast %115 : vector<128x1xf32> to vector<128x16xf32>
    %117 = arith.mulf %112, %116 : vector<128x16xf32>
    %c0_75 = arith.constant 0 : index
    %c80_76 = arith.constant 80 : index
    %118 = vector.load %arg8[%c0_75, %c80_76] : memref<128x128xf32, #tpu.memory_space<vmem>>, vector<128x16xf32>
    tpu.vector_store %arg8[%c0_75, %c80_76], %117 {strides = array<i32>} : memref<128x128xf32, #tpu.memory_space<vmem>>, vector<128x16xf32>,
    %c0_77 = arith.constant 0 : index
    %c96 = arith.constant 96 : index
    %119 = vector.load %arg6[%c0_77, %c96] : memref<128x128xbf16, #tpu.memory_space<vmem>>, vector<128x16xbf16>
    %c0_78 = arith.constant 0 : index
    %c96_79 = arith.constant 96 : index
    %120 = vector.load %arg7[%c0_78, %c96_79] : memref<512x128xbf16, #tpu.memory_space<vmem>>, vector<256x16xbf16>
    %c256_80 = arith.constant 256 : index
    %c96_81 = arith.constant 96 : index
    %121 = vector.load %arg7[%c256_80, %c96_81] : memref<512x128xbf16, #tpu.memory_space<vmem>>, vector<256x16xbf16>
    %cst_82 = arith.constant dense<0.000000e+00> : vector<128x256xf32>
    %122 = tpu.matmul %119, %120, %cst_82 {dimension_numbers = #tpu.dot_dimension_numbers<[1], [1], [0], [0], [0, 0, 1, 0], [], []>} : vector<128x16xbf16>, vector<256x16xbf16>, vector<128x256xf32> -> vector<128x256xf32>
    %cst_83 = arith.constant dense<0xFF800000> : vector<128xf32>
    %123 = vector.multi_reduction <maximumf>, %122, %cst_83 [1] : vector<128x256xf32> to vector<128xf32>
    %124 = vector.shape_cast %123 : vector<128xf32> to vector<128x1xf32>
    %125 = arith.truncf %122 : vector<128x256xf32> to vector<128x256xbf16>
    %126 = arith.truncf %124 : vector<128x1xf32> to vector<128x1xbf16>
    %127 = vector.broadcast %126 : vector<128x1xbf16> to vector<128x256xbf16>
    %128 = arith.subf %125, %127 : vector<128x256xbf16>
    %129 = math.exp %128 : vector<128x256xbf16>
    %cst_84 = arith.constant dense<0.000000e+00> : vector<128x16xf32>
    %130 = tpu.matmul %129, %121, %cst_84 {dimension_numbers = #tpu.dot_dimension_numbers<[1], [0], [0], [1], [0, 0, 1, 1], [], []>} : vector<128x256xbf16>, vector<256x16xbf16>, vector<128x16xf32> -> vector<128x16xf32>
    %cst_85 = arith.constant dense<0.000000e+00> : vector<128x8xf32>
    %131 = tpu.matmul %129, %10, %cst_85 {dimension_numbers = #tpu.dot_dimension_numbers<[1], [0], [0], [1], [0, 0, 1, 1], [], []>} : vector<128x256xbf16>, vector<256x8xbf16>, vector<128x8xf32> -> vector<128x8xf32>
    %132 = vector.extract_strided_slice %131 {offsets = [0, 0], sizes = [128, 1], strides = [1, 1]} : vector<128x8xf32> to vector<128x1xf32>
    %133 = tpu.reciprocal %132 {approx = true} : vector<128x1xf32> -> vector<128x1xf32>
    %134 = vector.broadcast %133 : vector<128x1xf32> to vector<128x16xf32>
    %135 = arith.mulf %130, %134 : vector<128x16xf32>
    %c0_86 = arith.constant 0 : index
    %c96_87 = arith.constant 96 : index
    %136 = vector.load %arg8[%c0_86, %c96_87] : memref<128x128xf32, #tpu.memory_space<vmem>>, vector<128x16xf32>
    tpu.vector_store %arg8[%c0_86, %c96_87], %135 {strides = array<i32>} : memref<128x128xf32, #tpu.memory_space<vmem>>, vector<128x16xf32>,
    %c0_88 = arith.constant 0 : index
    %c112 = arith.constant 112 : index
    %137 = vector.load %arg6[%c0_88, %c112] : memref<128x128xbf16, #tpu.memory_space<vmem>>, vector<128x16xbf16>
    %c0_89 = arith.constant 0 : index
    %c112_90 = arith.constant 112 : index
    %138 = vector.load %arg7[%c0_89, %c112_90] : memref<512x128xbf16, #tpu.memory_space<vmem>>, vector<256x16xbf16>
    %c256_91 = arith.constant 256 : index
    %c112_92 = arith.constant 112 : index
    %139 = vector.load %arg7[%c256_91, %c112_92] : memref<512x128xbf16, #tpu.memory_space<vmem>>, vector<256x16xbf16>
    %cst_93 = arith.constant dense<0.000000e+00> : vector<128x256xf32>
    %140 = tpu.matmul %137, %138, %cst_93 {dimension_numbers = #tpu.dot_dimension_numbers<[1], [1], [0], [0], [0, 0, 1, 0], [], []>} : vector<128x16xbf16>, vector<256x16xbf16>, vector<128x256xf32> -> vector<128x256xf32>
    %cst_94 = arith.constant dense<0xFF800000> : vector<128xf32>
    %141 = vector.multi_reduction <maximumf>, %140, %cst_94 [1] : vector<128x256xf32> to vector<128xf32>
    %142 = vector.shape_cast %141 : vector<128xf32> to vector<128x1xf32>
    %143 = arith.truncf %140 : vector<128x256xf32> to vector<128x256xbf16>
    %144 = arith.truncf %142 : vector<128x1xf32> to vector<128x1xbf16>
    %145 = vector.broadcast %144 : vector<128x1xbf16> to vector<128x256xbf16>
    %146 = arith.subf %143, %145 : vector<128x256xbf16>
    %147 = math.exp %146 : vector<128x256xbf16>
    %cst_95 = arith.constant dense<0.000000e+00> : vector<128x16xf32>
    %148 = tpu.matmul %147, %139, %cst_95 {dimension_numbers = #tpu.dot_dimension_numbers<[1], [0], [0], [1], [0, 0, 1, 1], [], []>} : vector<128x256xbf16>, vector<256x16xbf16>, vector<128x16xf32> -> vector<128x16xf32>
    %cst_96 = arith.constant dense<0.000000e+00> : vector<128x8xf32>
    %149 = tpu.matmul %147, %10, %cst_96 {dimension_numbers = #tpu.dot_dimension_numbers<[1], [0], [0], [1], [0, 0, 1, 1], [], []>} : vector<128x256xbf16>, vector<256x8xbf16>, vector<128x8xf32> -> vector<128x8xf32>
    %150 = vector.extract_strided_slice %149 {offsets = [0, 0], sizes = [128, 1], strides = [1, 1]} : vector<128x8xf32> to vector<128x1xf32>
    %151 = tpu.reciprocal %150 {approx = true} : vector<128x1xf32> -> vector<128x1xf32>
    %152 = vector.broadcast %151 : vector<128x1xf32> to vector<128x16xf32>
    %153 = arith.mulf %148, %152 : vector<128x16xf32>
    %c0_97 = arith.constant 0 : index
    %c112_98 = arith.constant 112 : index
    %154 = vector.load %arg8[%c0_97, %c112_98] : memref<128x128xf32, #tpu.memory_space<vmem>>, vector<128x16xf32>
    tpu.vector_store %arg8[%c0_97, %c112_98], %153 {strides = array<i32>} : memref<128x128xf32, #tpu.memory_space<vmem>>, vector<128x16xf32>,
    %c128_i32 = arith.constant 128 : i32
    %155 = arith.muli %arg1, %c128_i32 : i32
    %156 = tpu.assume_multiple %155, 128 : i32
    %157 = arith.index_cast %156 : i32 to index
    %c0_99 = arith.constant 0 : index
    %158 = vector.load %arg2[%157, %c0_99] : memref<256x128xf32, #tpu.memory_space<vmem>>, vector<128x128xf32>
    %c0_100 = arith.constant 0 : index
    %c0_101 = arith.constant 0 : index
    %159 = vector.load %arg8[%c0_100, %c0_101] : memref<128x128xf32, #tpu.memory_space<vmem>>, vector<128x128xf32>
    %160 = arith.addf %159, %158 : vector<128x128xf32>
    %c0_102 = arith.constant 0 : index
    %c0_103 = arith.constant 0 : index
    %161 = vector.load %arg5[%c0_102, %c0_103] : memref<128x128xf32, #tpu.memory_space<vmem>>, vector<128x128xf32>
    tpu.vector_store %arg5[%c0_102, %c0_103], %160 {strides = array<i32>} : memref<128x128xf32, #tpu.memory_space<vmem>>, vector<128x128xf32>,
    return
  }
  func.func @transform_0(%arg0: i32, %arg1: i32) -> (i32, i32) {
    %c0_i32 = arith.constant 0 : i32
    %c0_i32_0 = arith.constant 0 : i32
    return %c0_i32, %arg0 : i32, i32
  }
  func.func @transform_1(%arg0: i32, %arg1: i32) -> (i32, i32) {
    %c0_i32 = arith.constant 0 : i32
    %c0_i32_0 = arith.constant 0 : i32
    return %arg1, %c0_i32 : i32, i32
  }
  func.func @transform_2(%arg0: i32, %arg1: i32) -> (i32, i32) {
    %c0_i32 = arith.constant 0 : i32
    %c0_i32_0 = arith.constant 0 : i32
    %c0_i32_1 = arith.constant 0 : i32
    return %c0_i32, %c0_i32_0 : i32, i32
  }
  func.func @transform_3(%arg0: i32, %arg1: i32) -> (i32, i32) {
    %c0_i32 = arith.constant 0 : i32
    return %arg1, %arg0 : i32, i32
  }
}

</mosaic_0001>

<llo_original>
// kernel: tpu_custom_call.1
$region0: #{tpu_custom_call.1}
  #allocation0 [shape = 'u32[]', space=smem, size = 0x4, offset = 0x4, fixed_abs, tag = 'smem constant byte address 0x4 - core index']
  #allocation1 [shape = 'u32[144,128]{1,0:T(1,128)}', space=vmem, size = 0x12000, scoped, tag = 'internal scratch']
  #allocation2 [shape = 'bf16[128,128]{1,0:T(16,128)(2,1)}', space=vmem, size = 0x8000, scoped, tag = 'scratch operand']
  #allocation3 [shape = 'bf16[512,128]{1,0:T(16,128)(2,1)}', space=vmem, size = 0x20000, scoped, tag = 'scratch operand']
  #allocation4 [shape = 'f32[128,128]{1,0:T(8,128)}', space=vmem, size = 0x10000, scoped, tag = 'scratch operand']
  %s0 = inlined_call_operand.hbm [shape: f32[256,128], index: 0, kind: input, shape index: {}]
  %s1 = inlined_call_operand.hbm [shape: bf16[256,256], index: 1, kind: input, shape index: {}]
  %s2 = inlined_call_operand.hbm [shape: bf16[512,256], index: 2, kind: input, shape index: {}]
  %s3 = inlined_call_operand.hbm [shape: f32[256,128], index: 3, kind: output, shape index: {}]
  %s4 = sld [smem:[#allocation0]]
  $region57: #{tpu_custom_call.1} parent=0
    _
  %s6 = ssub.s32 1, %s4
  %s7 = scalar_select 0, %s6, %s4
  $region1: #{tpu_custom_call.1} parent=0
    #allocation5 [shape = 'u8[131072]{0}', space=vmem, size = 0x20000, scoped, tag = 'input window, operand 0, single buffered']
    #allocation6 [shape = 's32[2]{0}', space=sflag, size = 0x8, scoped, tag = 'scoped memory for tpu_custom_call.1']
    #allocation7 [shape = 's32[2]{0}', space=sflag, size = 0x8, scoped, tag = 'scoped memory for tpu_custom_call.1']
    #allocation8 [shape = 'u8[131072]{0}', space=vmem, size = 0x20000, scoped, tag = 'input window, operand 1']
    #allocation9 [shape = 's32[2]{0}', space=sflag, size = 0x8, scoped, tag = 'scoped memory for tpu_custom_call.1']
    #allocation10 [shape = 'u8[262144]{0}', space=vmem, size = 0x40000, scoped, tag = 'input window, operand 2, single buffered']
    #allocation11 [shape = 'u8[131072]{0}', space=vmem, size = 0x20000, scoped, tag = 'output window, operand 0']
    %8 = vsyncpa [#allocation6], 0
    %9 = vsyncpa [#allocation9], 0
    %s10 = scalar_lea.sflag [#allocation9], 1
    %11 = vsyncpa %s10, 0
    %12 = vsyncpa [#allocation7], 0
    %s13 = scalar_lea.sflag [#allocation7], 1
    %14 = vsyncpa %s13, 0
    loop: start=0, step=1, limit=4
    $region2: #{tpu_custom_call.1} parent=1 // loop_pre_header
      _
    $region3: #{tpu_custom_call.1} parent=1 // loop_header
      %s16 = sphi 0, %s20
      %p17 = scmp.ge.s32.totalorder %s16, 4
      %s23 = sphi 0, %s35
      %s24 = sphi 0, %s31
      %s25 = sphi 0, %s23
      %s26 = sphi 0, %s24
      %s27 = sphi 0, %s25
      %s28 = sphi 0, %s26
      %s38 = sphi 0, %s40
      %s41 = sphi 0, %s38
      %s42 = sphi 0, %s41
      %s58 = sphi 0, %s42
      %s64 = sphi 0, %s66
      %s67 = sphi 0, %s64
      %s68 = sphi 0, %s67
      %s84 = sphi 0, %s68
      %s88 = sphi 0, %s88
      %s90 = sphi 0, %s88
      %s91 = sphi 0, %s90
      %s105 = sphi 0, %s91
      %s113 = sphi 0, %s115
      %s116 = sphi 0, %s113
      %s117 = sphi 0, %s116
      %s133 = sphi 0, %s117
    $region4: #{tpu_custom_call.1} parent=1 // loop_header_branch
      %19 = sbr.rel (%p17) target = $region8
    $region5: #{tpu_custom_call.1} parent=1 // loop_body
      %s21 = ssub.s32 %s16, 1
      %s22 = ssub.s32 %s16, 2
      %s29 = sadd.s32 1, %s24
      %p30 = scmp.ge.s32.totalorder %s29, 2
      %s31 = scalar_select %p30, 0, %s29
      %s32 = sadd.s32 1, %s23
      %s33 = scalar_select %p30, %s32, %s23
      %p34 = scmp.ge.s32.totalorder %s33, 1
      %s35 = scalar_select %p34, 0, %s33
      %s36 = ssub.s32 %s23, %s35
      %p37 = scmp.eq.s32.totalorder %s36, 0
      %s39 = sadd.s32 %s38, 1
      %s40 = scalar_select %p37, %s38, %s39
      %p43 = pneg %p37
      %p44 = scmp.eq.s32.totalorder %s16, 1
      %p45 = por %p43, %p44
      %p46 = scmp.ne.s32.totalorder %s38, %s41
      %p47 = scmp.eq.s32.totalorder %s16, 0
      %p48 = por %p46, %p47
      %p49 = scmp.ne.s32.totalorder %s38, %s41
      %p50 = scmp.eq.s32.totalorder %s21, 1
      %p51 = por %p49, %p50
      %p52 = scmp.ne.s32.totalorder %s41, %s42
      %p53 = scmp.eq.s32.totalorder %s21, 0
      %p54 = por %p52, %p53
      %p55 = scmp.ne.s32.totalorder %s41, %s42
      %p56 = scmp.eq.s32.totalorder %s22, 1
      %p57 = por %p55, %p56
      %p59 = scmp.ne.s32.totalorder %s42, %s58
      %p60 = scmp.eq.s32.totalorder %s22, 0
      %p61 = por %p59, %p60
      %s62 = ssub.s32 %s24, %s31
      %p63 = scmp.eq.s32.totalorder %s62, 0
      %s65 = sadd.s32 %s64, 1
      %s66 = scalar_select %p63, %s64, %s65
      %p69 = pneg %p63
      %p70 = scmp.eq.s32.totalorder %s16, 1
      %p71 = por %p69, %p70
      %p72 = scmp.ne.s32.totalorder %s64, %s67
      %p73 = scmp.eq.s32.totalorder %s16, 0
      %p74 = por %p72, %p73
      %p75 = scmp.ne.s32.totalorder %s64, %s67
      %p76 = scmp.eq.s32.totalorder %s21, 1
      %p77 = por %p75, %p76
      %p78 = scmp.ne.s32.totalorder %s67, %s68
      %p79 = scmp.eq.s32.totalorder %s21, 0
      %p80 = por %p78, %p79
      %p81 = scmp.ne.s32.totalorder %s67, %s68
      %p82 = scmp.eq.s32.totalorder %s22, 1
      %p83 = por %p81, %p82
      %p85 = scmp.ne.s32.totalorder %s68, %s84
      %p86 = scmp.eq.s32.totalorder %s22, 0
      %p87 = por %p85, %p86
      %s89 = sadd.s32 %s88, 1
      %p92 = scmp.eq.s32.totalorder %s16, 1
      %p93 = scmp.ne.s32.totalorder %s88, %s90
      %p94 = scmp.eq.s32.totalorder %s16, 0
      %p95 = por %p93, %p94
      %p96 = scmp.ne.s32.totalorder %s88, %s90
      %p97 = scmp.eq.s32.totalorder %s21, 1
      %p98 = por %p96, %p97
      %p99 = scmp.ne.s32.totalorder %s90, %s91
      %p100 = scmp.eq.s32.totalorder %s21, 0
      %p101 = por %p99, %p100
      %p102 = scmp.ne.s32.totalorder %s90, %s91
      %p103 = scmp.eq.s32.totalorder %s22, 1
      %p104 = por %p102, %p103
      %p106 = scmp.ne.s32.totalorder %s91, %s105
      %p107 = scmp.eq.s32.totalorder %s22, 0
      %p108 = por %p106, %p107
      %s109 = ssub.s32 %s24, %s31
      %s110 = ssub.s32 %s23, %s35
      %s111 = sor.u32 %s109, %s110
      %p112 = scmp.eq.s32.totalorder %s111, 0
      %s114 = sadd.s32 %s113, 1
      %s115 = scalar_select %p112, %s113, %s114
      %p118 = pneg %p112
      %p119 = scmp.eq.s32.totalorder %s16, 1
      %p120 = por %p118, %p119
      %p121 = scmp.ne.s32.totalorder %s113, %s116
      %p122 = scmp.eq.s32.totalorder %s16, 0
      %p123 = por %p121, %p122
      %p124 = scmp.ne.s32.totalorder %s113, %s116
      %p125 = scmp.eq.s32.totalorder %s21, 1
      %p126 = por %p124, %p125
      %p127 = scmp.ne.s32.totalorder %s116, %s117
      %p128 = scmp.eq.s32.totalorder %s21, 0
      %p129 = por %p127, %p128
      %p130 = scmp.ne.s32.totalorder %s116, %s117
      %p131 = scmp.eq.s32.totalorder %s22, 1
      %p132 = por %p130, %p131
      %p134 = scmp.ne.s32.totalorder %s117, %s133
      %p135 = scmp.eq.s32.totalorder %s22, 0
      %p136 = por %p134, %p135
      %p137 = scmp.le.s32.totalorder 1, %s16
      %p138 = scmp.lt.s32.totalorder %s16, 3
      %p139 = pnand %p137, %p138
      %p140 = pneg %p139
      // Predicated region
      $region9: #{tpu_custom_call.1} parent=5 // pred_check
        _
      $region10: #{tpu_custom_call.1} parent=5 // pred_check_branch
        %142 = sbr.rel (%p139) target = $region12
      $region11: #{tpu_custom_call.1} parent=5 // pred_region
        %s143 = ssub.s32 %s16, 1
        // Predicated region
        $region13: #{tpu_custom_call.1} parent=11 // pred_check
          %p144 = pneg %p54
        $region14: #{tpu_custom_call.1} parent=11 // pred_check_branch
          %146 = sbr.rel (%p144) target = $region16
        $region15: #{tpu_custom_call.1} parent=11 // pred_region
          %s148 = ssub.s32 4096, 4096
          %149 = vsyncadd [#allocation6], %s148
          %s150 = smul.addr %s25, 128
          %s151 = scalar_lea.hbm %s0, %s150
          %s152 = sshll.u32 [#allocation5], 4
          %s153 = int_to_ptr.vmem [resolvable:$true] %s152
          %158 = dma.hbm_to_vmem [thread:$0]  %s151, 4096, %s153, [#allocation6], 128, 128, 8
        $region16: #{tpu_custom_call.1} parent=11 // pred_fallthru
          _
        // Predicated region
        $region17: #{tpu_custom_call.1} parent=11 // pred_check
          %p159 = pneg %p101
        $region18: #{tpu_custom_call.1} parent=11 // pred_check_branch
          %161 = sbr.rel (%p159) target = $region20
        $region19: #{tpu_custom_call.1} parent=11 // pred_region
          %s163 = ssub.s32 8192, 8192
          %164 = vsyncadd [#allocation9], %s163
          %s165 = sshll.u32 [#allocation10], 4
          %s166 = int_to_ptr.vmem [resolvable:$true] %s165
          %171 = dma.hbm_to_vmem [thread:$0]  %s2, 8192, %s166, [#allocation9], 128, 128, 8
        $region20: #{tpu_custom_call.1} parent=11 // pred_fallthru
          _
      $region12: #{tpu_custom_call.1} parent=5 // pred_fallthru
        _
      %p172 = scmp.lt.s32.totalorder %s16, 2
      // Predicated region
      $region21: #{tpu_custom_call.1} parent=5 // pred_check
        %p173 = pneg %p172
      $region22: #{tpu_custom_call.1} parent=5 // pred_check_branch
        %175 = sbr.rel (%p173) target = $region24
      $region23: #{tpu_custom_call.1} parent=5 // pred_region
        // Predicated region
        $region25: #{tpu_custom_call.1} parent=23 // pred_check
          %p176 = pneg %p74
        $region26: #{tpu_custom_call.1} parent=23 // pred_check_branch
          %178 = sbr.rel (%p176) target = $region28
        $region27: #{tpu_custom_call.1} parent=23 // pred_region
          %s179 = sand.u32 %s16, 1
          %s180 = scalar_lea.sflag [#allocation9], %s179
          %s181 = sand.u32 %s64, 1
          %s182 = smul.addr %s181, 128
          %s183 = scalar_lea.vmem [#allocation8], %s182
          %s184 = smul.u32 16, %s24
          %s186 = ssub.s32 2048, 2048
          %187 = vsyncadd %s180, %s186
          %s188 = smul.addr %s184, 2
          %s189 = smul.addr %s188, 64
          %s190 = scalar_lea.hbm %s1, %s189
          %s191 = sshll.u32 %s183, 4
          %s192 = int_to_ptr.vmem [resolvable:$true] %s191
          %197 = dma.hbm_to_vmem [thread:$0]  %s190, 2048, %s192, %s180, 128, 128, 8
        $region28: #{tpu_custom_call.1} parent=23 // pred_fallthru
          _
      $region24: #{tpu_custom_call.1} parent=5 // pred_fallthru
        _
      %p198 = scmp.le.s32.totalorder 1, %s16
      %p199 = scmp.lt.s32.totalorder %s16, 3
      %p200 = pnand %p198, %p199
      %p201 = pneg %p200
      // Predicated region
      $region29: #{tpu_custom_call.1} parent=5 // pred_check
        _
      $region30: #{tpu_custom_call.1} parent=5 // pred_check_branch
        %203 = sbr.rel (%p200) target = $region32
      $region31: #{tpu_custom_call.1} parent=5 // pred_region
        %s204 = ssub.s32 %s16, 1
        // Predicated region
        $region33: #{tpu_custom_call.1} parent=31 // pred_check
          %p205 = pneg %p54
        $region34: #{tpu_custom_call.1} parent=31 // pred_check_branch
          %207 = sbr.rel (%p205) target = $region36
        $region35: #{tpu_custom_call.1} parent=31 // pred_region
          %208 = dma.done [#allocation6], 4096
        $region36: #{tpu_custom_call.1} parent=31 // pred_fallthru
          _
        %s209 = sand.u32 %s21, 1
        %s210 = scalar_lea.sflag [#allocation9], %s209
        %s211 = sand.u32 %s67, 1
        %s212 = smul.addr %s211, 128
        %s213 = scalar_lea.vmem [#allocation8], %s212
        // Predicated region
        $region37: #{tpu_custom_call.1} parent=31 // pred_check
          %p214 = pneg %p80
        $region38: #{tpu_custom_call.1} parent=31 // pred_check_branch
          %216 = sbr.rel (%p214) target = $region40
        $region39: #{tpu_custom_call.1} parent=31 // pred_region
          %217 = dma.done %s210, 2048
        $region40: #{tpu_custom_call.1} parent=31 // pred_fallthru
          _
        // Predicated region
        $region41: #{tpu_custom_call.1} parent=31 // pred_check
          %p218 = pneg %p101
        $region42: #{tpu_custom_call.1} parent=31 // pred_check_branch
          %220 = sbr.rel (%p218) target = $region44
        $region43: #{tpu_custom_call.1} parent=31 // pred_region
          %221 = dma.done [#allocation9], 8192
        $region44: #{tpu_custom_call.1} parent=31 // pred_fallthru
          _
        %p222 = pneg %p54
        %p223 = pneg %p51
        %s224 = sand.u32 %s21, 1
        %s225 = scalar_lea.sflag [#allocation9], %s224
        %s226 = sand.u32 %s67, 1
        %s227 = smul.addr %s226, 128
        %s228 = scalar_lea.vmem [#allocation8], %s227
        %p229 = pneg %p80
        %p230 = pneg %p77
        %p231 = pneg %p101
        %p232 = pneg %p98
        %p233 = pneg %p129
        %p234 = pneg %p126
        %s235 = sand.u32 %s116, 1
        %s236 = scalar_lea.sflag [#allocation7], %s235
        %s237 = sand.u32 %s116, 1
        %s238 = smul.addr %s237, 128
        %s239 = scalar_lea.vmem [#allocation11], %s238
        %s240 = smul.u32 16, %s26
        %s241 = smul.u32 16, %s26
        %v244 = vld [vmem:[#allocation5] sm:$0xff]
        %v245 = vld [vmem:[#allocation5 + $0x8] sm:$0xff]
        %v246 = vld [vmem:[#allocation5 + $0x10] sm:$0xff]
        %v247 = vld [vmem:[#allocation5 + $0x18] sm:$0xff]
        %v248 = vld [vmem:[#allocation5 + $0x20] sm:$0xff]
        %v249 = vld [vmem:[#allocation5 + $0x28] sm:$0xff]
        %v250 = vld [vmem:[#allocation5 + $0x30] sm:$0xff]
        %v251 = vld [vmem:[#allocation5 + $0x38] sm:$0xff]
        %v252 = vld [vmem:[#allocation5 + $0x40] sm:$0xff]
        %v253 = vld [vmem:[#allocation5 + $0x48] sm:$0xff]
        %v254 = vld [vmem:[#allocation5 + $0x50] sm:$0xff]
        %v255 = vld [vmem:[#allocation5 + $0x58] sm:$0xff]
        %v256 = vld [vmem:[#allocation5 + $0x60] sm:$0xff]
        %v257 = vld [vmem:[#allocation5 + $0x68] sm:$0xff]
        %v258 = vld [vmem:[#allocation5 + $0x70] sm:$0xff]
        %v259 = vld [vmem:[#allocation5 + $0x78] sm:$0xff]
        %v260 = vld [vmem:[#allocation5 + $0x80] sm:$0xff]
        %v261 = vld [vmem:[#allocation5 + $0x88] sm:$0xff]
        %v262 = vld [vmem:[#allocation5 + $0x90] sm:$0xff]
        %v263 = vld [vmem:[#allocation5 + $0x98] sm:$0xff]
        %v264 = vld [vmem:[#allocation5 + $0xa0] sm:$0xff]
        %v265 = vld [vmem:[#allocation5 + $0xa8] sm:$0xff]
        %v266 = vld [vmem:[#allocation5 + $0xb0] sm:$0xff]
        %v267 = vld [vmem:[#allocation5 + $0xb8] sm:$0xff]
        %v268 = vld [vmem:[#allocation5 + $0xc0] sm:$0xff]
        %v269 = vld [vmem:[#allocation5 + $0xc8] sm:$0xff]
        %v270 = vld [vmem:[#allocation5 + $0xd0] sm:$0xff]
        %v271 = vld [vmem:[#allocation5 + $0xd8] sm:$0xff]
        %v272 = vld [vmem:[#allocation5 + $0xe0] sm:$0xff]
        %v273 = vld [vmem:[#allocation5 + $0xe8] sm:$0xff]
        %v274 = vld [vmem:[#allocation5 + $0xf0] sm:$0xff]
        %v275 = vld [vmem:[#allocation5 + $0xf8] sm:$0xff]
        %v276 = vpack.c.bf16 %v245, %v244
        %v277 = vpack.c.bf16 %v247, %v246
        %v278 = vpack.c.bf16 %v249, %v248
        %v279 = vpack.c.bf16 %v251, %v250
        %v280 = vpack.c.bf16 %v253, %v252
        %v281 = vpack.c.bf16 %v255, %v254
        %v282 = vpack.c.bf16 %v257, %v256
        %v283 = vpack.c.bf16 %v259, %v258
        %v284 = vpack.c.bf16 %v261, %v260
        %v285 = vpack.c.bf16 %v263, %v262
        %v286 = vpack.c.bf16 %v265, %v264
        %v287 = vpack.c.bf16 %v267, %v266
        %v288 = vpack.c.bf16 %v269, %v268
        %v289 = vpack.c.bf16 %v271, %v270
        %v290 = vpack.c.bf16 %v273, %v272
        %v291 = vpack.c.bf16 %v275, %v274
        %v292 = vld [vmem:[%s213] sm:$0xff]
        %v293 = vld [vmem:[%s213 + $0x8] sm:$0xff]
        %v294 = vld [vmem:[%s213 + $0x10] sm:$0xff]
        %v295 = vld [vmem:[%s213 + $0x18] sm:$0xff]
        %v296 = vld [vmem:[%s213 + $0x20] sm:$0xff]
        %v297 = vld [vmem:[%s213 + $0x28] sm:$0xff]
        %v298 = vld [vmem:[%s213 + $0x30] sm:$0xff]
        %v299 = vld [vmem:[%s213 + $0x38] sm:$0xff]
        %v300 = vld [vmem:[%s213 + $0x40] sm:$0xff]
        %v301 = vld [vmem:[%s213 + $0x48] sm:$0xff]
        %v302 = vld [vmem:[%s213 + $0x50] sm:$0xff]
        %v303 = vld [vmem:[%s213 + $0x58] sm:$0xff]
        %v304 = vld [vmem:[%s213 + $0x60] sm:$0xff]
        %v305 = vld [vmem:[%s213 + $0x68] sm:$0xff]
        %v306 = vld [vmem:[%s213 + $0x70] sm:$0xff]
        %v307 = vld [vmem:[%s213 + $0x78] sm:$0xff]
        %v324 = vunpack.c.l.b16 %v292
        %v325 = vunpack.c.h.b16 %v292
        %v326 = vunpack.c.l.b16 %v293
        %v327 = vunpack.c.h.b16 %v293
        %v328 = vunpack.c.l.b16 %v294
        %v329 = vunpack.c.h.b16 %v294
        %v330 = vunpack.c.l.b16 %v295
        %v331 = vunpack.c.h.b16 %v295
        %v332 = vunpack.c.l.b16 %v296
        %v333 = vunpack.c.h.b16 %v296
        %v334 = vunpack.c.l.b16 %v297
        %v335 = vunpack.c.h.b16 %v297
        %v336 = vunpack.c.l.b16 %v298
        %v337 = vunpack.c.h.b16 %v298
        %v338 = vunpack.c.l.b16 %v299
        %v339 = vunpack.c.h.b16 %v299
        %v340 = vunpack.c.l.b16 %v300
        %v341 = vunpack.c.h.b16 %v300
        %v342 = vunpack.c.l.b16 %v301
        %v343 = vunpack.c.h.b16 %v301
        %v344 = vunpack.c.l.b16 %v302
        %v345 = vunpack.c.h.b16 %v302
        %v346 = vunpack.c.l.b16 %v303
        %v347 = vunpack.c.h.b16 %v303
        %v348 = vunpack.c.l.b16 %v304
        %v349 = vunpack.c.h.b16 %v304
        %v350 = vunpack.c.l.b16 %v305
        %v351 = vunpack.c.h.b16 %v305
        %v352 = vunpack.c.l.b16 %v306
        %v353 = vunpack.c.h.b16 %v306
        %v354 = vunpack.c.l.b16 %v307
        %v355 = vunpack.c.h.b16 %v307
        %v356 = vpack.c.b16 %v326, %v324
        %v357 = vpack.c.b16 %v327, %v325
        %v358 = vpack.c.b16 %v330, %v328
        %v359 = vpack.c.b16 %v331, %v329
        %v360 = vpack.c.b16 %v334, %v332
        %v361 = vpack.c.b16 %v335, %v333
        %v362 = vpack.c.b16 %v338, %v336
        %v363 = vpack.c.b16 %v339, %v337
        %v364 = vpack.c.b16 %v342, %v340
        %v365 = vpack.c.b16 %v343, %v341
        %v366 = vpack.c.b16 %v346, %v344
        %v367 = vpack.c.b16 %v347, %v345
        %v368 = vpack.c.b16 %v350, %v348
        %v369 = vpack.c.b16 %v351, %v349
        %v370 = vpack.c.b16 %v354, %v352
        %v371 = vpack.c.b16 %v355, %v353
        %388 = vmatprep.subr.bf16.mxu0 0
        %389 = vmatpush1.bf16.msra.mxu0 %v276
        %390 = vmatprep.subr.bf16.mxu0 0
        %391 = vmatpush1.bf16.msra.mxu0 %v277
        %392 = vmatprep.subr.bf16.mxu0 0
        %393 = vmatpush1.bf16.msra.mxu0 %v278
        %394 = vmatprep.subr.bf16.mxu0 0
        %395 = vmatpush1.bf16.msra.mxu0 %v279
        %396 = vmatprep.subr.bf16.mxu0 0
        %397 = vmatpush1.bf16.msra.mxu0 %v280
        %398 = vmatprep.subr.bf16.mxu0 0
        %399 = vmatpush1.bf16.msra.mxu0 %v281
        %400 = vmatprep.subr.bf16.mxu0 0
        %401 = vmatpush1.bf16.msra.mxu0 %v282
        %402 = vmatprep.subr.bf16.mxu0 0
        %403 = vmatpush1.bf16.msra.mxu0 %v283
        %404 = vmatprep.subr.bf16.mxu0 0
        %405 = vmatpush1.bf16.msra.mxu0 %v284
        %406 = vmatprep.subr.bf16.mxu0 0
        %407 = vmatpush1.bf16.msra.mxu0 %v285
        %408 = vmatprep.subr.bf16.mxu0 0
        %409 = vmatpush1.bf16.msra.mxu0 %v286
        %410 = vmatprep.subr.bf16.mxu0 0
        %411 = vmatpush1.bf16.msra.mxu0 %v287
        %412 = vmatprep.subr.bf16.mxu0 0
        %413 = vmatpush1.bf16.msra.mxu0 %v288
        %414 = vmatprep.subr.bf16.mxu0 0
        %415 = vmatpush1.bf16.msra.mxu0 %v289
        %416 = vmatprep.subr.bf16.mxu0 0
        %417 = vmatpush1.bf16.msra.mxu0 %v290
        %418 = vmatprep.subr.bf16.mxu0 0
        %419 = vmatpush1.bf16.msra.mxu0 %v291
        %420 = vmatprep.mubr.bf16.mxu0 %v357
        %421 = vmatmul.mubr.bf16.gmra.mrb[0].mxu0 %v356
        %v422 = vpop.f32.mrb[0].mxu0
        %v423 = vadd.f32 0.0, %v422
        %v424 = vpop.f32.mrb[0].mxu0
        %v425 = vpop.f32.mrb[0].mxu0
        %v426 = vadd.f32 0.0, %v425
        %v427 = vpop.f32.mrb[0].mxu0
        %428 = vmatprep.mubr.bf16.mxu0 %v359
        %429 = vmatmul.mubr.bf16.gmra.mrb[0].mxu0 %v358
        %v430 = vpop.f32.mrb[0].mxu0
        %v431 = vadd.f32 0.0, %v430
        %v432 = vpop.f32.mrb[0].mxu0
        %v433 = vpop.f32.mrb[0].mxu0
        %v434 = vadd.f32 0.0, %v433
        %v435 = vpop.f32.mrb[0].mxu0
        %436 = vmatprep.mubr.bf16.mxu0 %v361
        %437 = vmatmul.mubr.bf16.gmra.mrb[0].mxu0 %v360
        %v438 = vpop.f32.mrb[0].mxu0
        %v439 = vadd.f32 0.0, %v438
        %v440 = vpop.f32.mrb[0].mxu0
        %v441 = vpop.f32.mrb[0].mxu0
        %v442 = vadd.f32 0.0, %v441
        %v443 = vpop.f32.mrb[0].mxu0
        %444 = vmatprep.mubr.bf16.mxu0 %v363
        %445 = vmatmul.mubr.bf16.gmra.mrb[0].mxu0 %v362
        %v446 = vpop.f32.mrb[0].mxu0
        %v447 = vadd.f32 0.0, %v446
        %v448 = vpop.f32.mrb[0].mxu0
        %v449 = vpop.f32.mrb[0].mxu0
        %v450 = vadd.f32 0.0, %v449
        %v451 = vpop.f32.mrb[0].mxu0
        %452 = vmatprep.mubr.bf16.mxu0 %v365
        %453 = vmatmul.mubr.bf16.gmra.mrb[0].mxu0 %v364
        %v454 = vpop.f32.mrb[0].mxu0
        %v455 = vadd.f32 0.0, %v454
        %v456 = vpop.f32.mrb[0].mxu0
        %v457 = vpop.f32.mrb[0].mxu0
        %v458 = vadd.f32 0.0, %v457
        %v459 = vpop.f32.mrb[0].mxu0
        %460 = vmatprep.mubr.bf16.mxu0 %v367
        %461 = vmatmul.mubr.bf16.gmra.mrb[0].mxu0 %v366
        %v462 = vpop.f32.mrb[0].mxu0
        %v463 = vadd.f32 0.0, %v462
        %v464 = vpop.f32.mrb[0].mxu0
        %v465 = vpop.f32.mrb[0].mxu0
        %v466 = vadd.f32 0.0, %v465
        %v467 = vpop.f32.mrb[0].mxu0
        %468 = vmatprep.mubr.bf16.mxu0 %v369
        %469 = vmatmul.mubr.bf16.gmra.mrb[0].mxu0 %v368
        %v470 = vpop.f32.mrb[0].mxu0
        %v471 = vadd.f32 0.0, %v470
        %v472 = vpop.f32.mrb[0].mxu0
        %v473 = vpop.f32.mrb[0].mxu0
        %v474 = vadd.f32 0.0, %v473
        %v475 = vpop.f32.mrb[0].mxu0
        %476 = vmatprep.mubr.bf16.mxu0 %v371
        %477 = vmatmul.mubr.bf16.gmra.mrb[0].mxu0 %v370
        %v478 = vpop.f32.mrb[0].mxu0
        %v479 = vadd.f32 0.0, %v478
        %v480 = vpop.f32.mrb[0].mxu0
        %v481 = vpop.f32.mrb[0].mxu0
        %v482 = vadd.f32 0.0, %v481
        %v483 = vpop.f32.mrb[0].mxu0
        %484 = vdwg.mxu0
        %v485 = vpack.c.bf16 %v426, %v423
        %v486 = vpack.c.bf16 %v434, %v431
        %v487 = vpack.c.bf16 %v442, %v439
        %v488 = vpack.c.bf16 %v450, %v447
        %v489 = vpack.c.bf16 %v458, %v455
        %v490 = vpack.c.bf16 %v466, %v463
        %v491 = vpack.c.bf16 %v474, %v471
        %v492 = vpack.c.bf16 %v482, %v479
        %493 = vst [vmem:[#allocation2] sm:$0xff] %v485
        %494 = vst [vmem:[#allocation2 + $0x8] sm:$0xff] %v486
        %495 = vst [vmem:[#allocation2 + $0x10] sm:$0xff] %v487
        %496 = vst [vmem:[#allocation2 + $0x18] sm:$0xff] %v488
        %497 = vst [vmem:[#allocation2 + $0x20] sm:$0xff] %v489
        %498 = vst [vmem:[#allocation2 + $0x28] sm:$0xff] %v490
        %499 = vst [vmem:[#allocation2 + $0x30] sm:$0xff] %v491
        %500 = vst [vmem:[#allocation2 + $0x38] sm:$0xff] %v492
        %v501 = vld [vmem:[#allocation10] sm:$0xff]
        %v502 = vld [vmem:[#allocation10 + $0x8] sm:$0xff]
        %v503 = vld [vmem:[#allocation10 + $0x10] sm:$0xff]
        %v504 = vld [vmem:[#allocation10 + $0x18] sm:$0xff]
        %v505 = vld [vmem:[#allocation10 + $0x20] sm:$0xff]
        %v506 = vld [vmem:[#allocation10 + $0x28] sm:$0xff]
        %v507 = vld [vmem:[#allocation10 + $0x30] sm:$0xff]
        %v508 = vld [vmem:[#allocation10 + $0x38] sm:$0xff]
        %v509 = vld [vmem:[#allocation10 + $0x40] sm:$0xff]
        %v510 = vld [vmem:[#allocation10 + $0x48] sm:$0xff]
        %v511 = vld [vmem:[#allocation10 + $0x50] sm:$0xff]
        %v512 = vld [vmem:[#allocation10 + $0x58] sm:$0xff]
        %v513 = vld [vmem:[#allocation10 + $0x60] sm:$0xff]
        %v514 = vld [vmem:[#allocation10 + $0x68] sm:$0xff]
        %v515 = vld [vmem:[#allocation10 + $0x70] sm:$0xff]
        %v516 = vld [vmem:[#allocation10 + $0x78] sm:$0xff]
        %v517 = vld [vmem:[#allocation10 + $0x80] sm:$0xff]
        %v518 = vld [vmem:[#allocation10 + $0x88] sm:$0xff]
        %v519 = vld [vmem:[#allocation10 + $0x90] sm:$0xff]
        %v520 = vld [vmem:[#allocation10 + $0x98] sm:$0xff]
        %v521 = vld [vmem:[#allocation10 + $0xa0] sm:$0xff]
        %v522 = vld [vmem:[#allocation10 + $0xa8] sm:$0xff]
        %v523 = vld [vmem:[#allocation10 + $0xb0] sm:$0xff]
        %v524 = vld [vmem:[#allocation10 + $0xb8] sm:$0xff]
        %v525 = vld [vmem:[#allocation10 + $0xc0] sm:$0xff]
        %v526 = vld [vmem:[#allocation10 + $0xc8] sm:$0xff]
        %v527 = vld [vmem:[#allocation10 + $0xd0] sm:$0xff]
        %v528 = vld [vmem:[#allocation10 + $0xd8] sm:$0xff]
        %v529 = vld [vmem:[#allocation10 + $0xe0] sm:$0xff]
        %v530 = vld [vmem:[#allocation10 + $0xe8] sm:$0xff]
        %v531 = vld [vmem:[#allocation10 + $0xf0] sm:$0xff]
        %v532 = vld [vmem:[#allocation10 + $0xf8] sm:$0xff]
        %v533 = vld [vmem:[#allocation10 + $0x100] sm:$0xff]
        %v534 = vld [vmem:[#allocation10 + $0x108] sm:$0xff]
        %v535 = vld [vmem:[#allocation10 + $0x110] sm:$0xff]
        %v536 = vld [vmem:[#allocation10 + $0x118] sm:$0xff]
        %v537 = vld [vmem:[#allocation10 + $0x120] sm:$0xff]
        %v538 = vld [vmem:[#allocation10 + $0x128] sm:$0xff]
        %v539 = vld [vmem:[#allocation10 + $0x130] sm:$0xff]
        %v540 = vld [vmem:[#allocation10 + $0x138] sm:$0xff]
        %v541 = vld [vmem:[#allocation10 + $0x140] sm:$0xff]
        %v542 = vld [vmem:[#allocation10 + $0x148] sm:$0xff]
        %v543 = vld [vmem:[#allocation10 + $0x150] sm:$0xff]
        %v544 = vld [vmem:[#allocation10 + $0x158] sm:$0xff]
        %v545 = vld [vmem:[#allocation10 + $0x160] sm:$0xff]
        %v546 = vld [vmem:[#allocation10 + $0x168] sm:$0xff]
        %v547 = vld [vmem:[#allocation10 + $0x170] sm:$0xff]
        %v548 = vld [vmem:[#allocation10 + $0x178] sm:$0xff]
        %v549 = vld [vmem:[#allocation10 + $0x180] sm:$0xff]
        %v550 = vld [vmem:[#allocation10 + $0x188] sm:$0xff]
        %v551 = vld [vmem:[#allocation10 + $0x190] sm:$0xff]
        %v552 = vld [vmem:[#allocation10 + $0x198] sm:$0xff]
        %v553 = vld [vmem:[#allocation10 + $0x1a0] sm:$0xff]
        %v554 = vld [vmem:[#allocation10 + $0x1a8] sm:$0xff]
        %v555 = vld [vmem:[#allocation10 + $0x1b0] sm:$0xff]
        %v556 = vld [vmem:[#allocation10 + $0x1b8] sm:$0xff]
        %v557 = vld [vmem:[#allocation10 + $0x1c0] sm:$0xff]
        %v558 = vld [vmem:[#allocation10 + $0x1c8] sm:$0xff]
        %v559 = vld [vmem:[#allocation10 + $0x1d0] sm:$0xff]
        %v560 = vld [vmem:[#allocation10 + $0x1d8] sm:$0xff]
        %v561 = vld [vmem:[#allocation10 + $0x1e0] sm:$0xff]
        %v562 = vld [vmem:[#allocation10 + $0x1e8] sm:$0xff]
        %v563 = vld [vmem:[#allocation10 + $0x1f0] sm:$0xff]
        %v564 = vld [vmem:[#allocation10 + $0x1f8] sm:$0xff]
        %v629 = vunpack.c.l.b16 %v501
        %v630 = vunpack.c.h.b16 %v501
        %v631 = vunpack.c.l.b16 %v502
        %v632 = vunpack.c.h.b16 %v502
        %v633 = vunpack.c.l.b16 %v503
        %v634 = vunpack.c.h.b16 %v503
        %v635 = vunpack.c.l.b16 %v504
        %v636 = vunpack.c.h.b16 %v504
        %v637 = vunpack.c.l.b16 %v505
        %v638 = vunpack.c.h.b16 %v505
        %v639 = vunpack.c.l.b16 %v506
        %v640 = vunpack.c.h.b16 %v506
        %v641 = vunpack.c.l.b16 %v507
        %v642 = vunpack.c.h.b16 %v507
        %v643 = vunpack.c.l.b16 %v508
        %v644 = vunpack.c.h.b16 %v508
        %v645 = vunpack.c.l.b16 %v509
        %v646 = vunpack.c.h.b16 %v509
        %v647 = vunpack.c.l.b16 %v510
        %v648 = vunpack.c.h.b16 %v510
        %v649 = vunpack.c.l.b16 %v511
        %v650 = vunpack.c.h.b16 %v511
        %v651 = vunpack.c.l.b16 %v512
        %v652 = vunpack.c.h.b16 %v512
        %v653 = vunpack.c.l.b16 %v513
        %v654 = vunpack.c.h.b16 %v513
        %v655 = vunpack.c.l.b16 %v514
        %v656 = vunpack.c.h.b16 %v514
        %v657 = vunpack.c.l.b16 %v515
        %v658 = vunpack.c.h.b16 %v515
        %v659 = vunpack.c.l.b16 %v516
        %v660 = vunpack.c.h.b16 %v516
        %v661 = vunpack.c.l.b16 %v517
        %v662 = vunpack.c.h.b16 %v517
        %v663 = vunpack.c.l.b16 %v518
        %v664 = vunpack.c.h.b16 %v518
        %v665 = vunpack.c.l.b16 %v519
        %v666 = vunpack.c.h.b16 %v519
        %v667 = vunpack.c.l.b16 %v520
        %v668 = vunpack.c.h.b16 %v520
        %v669 = vunpack.c.l.b16 %v521
        %v670 = vunpack.c.h.b16 %v521
        %v671 = vunpack.c.l.b16 %v522
        %v672 = vunpack.c.h.b16 %v522
        %v673 = vunpack.c.l.b16 %v523
        %v674 = vunpack.c.h.b16 %v523
        %v675 = vunpack.c.l.b16 %v524
        %v676 = vunpack.c.h.b16 %v524
        %v677 = vunpack.c.l.b16 %v525
        %v678 = vunpack.c.h.b16 %v525
        %v679 = vunpack.c.l.b16 %v526
        %v680 = vunpack.c.h.b16 %v526
        %v681 = vunpack.c.l.b16 %v527
        %v682 = vunpack.c.h.b16 %v527
        %v683 = vunpack.c.l.b16 %v528
        %v684 = vunpack.c.h.b16 %v528
        %v685 = vunpack.c.l.b16 %v529
        %v686 = vunpack.c.h.b16 %v529
        %v687 = vunpack.c.l.b16 %v530
        %v688 = vunpack.c.h.b16 %v530
        %v689 = vunpack.c.l.b16 %v531
        %v690 = vunpack.c.h.b16 %v531
        %v691 = vunpack.c.l.b16 %v532
        %v692 = vunpack.c.h.b16 %v532
        %v693 = vunpack.c.l.b16 %v533
        %v694 = vunpack.c.h.b16 %v533
        %v695 = vunpack.c.l.b16 %v534
        %v696 = vunpack.c.h.b16 %v534
        %v697 = vunpack.c.l.b16 %v535
        %v698 = vunpack.c.h.b16 %v535
        %v699 = vunpack.c.l.b16 %v536
        %v700 = vunpack.c.h.b16 %v536
        %v701 = vunpack.c.l.b16 %v537
        %v702 = vunpack.c.h.b16 %v537
        %v703 = vunpack.c.l.b16 %v538
        %v704 = vunpack.c.h.b16 %v538
        %v705 = vunpack.c.l.b16 %v539
        %v706 = vunpack.c.h.b16 %v539
        %v707 = vunpack.c.l.b16 %v540
        %v708 = vunpack.c.h.b16 %v540
        %v709 = vunpack.c.l.b16 %v541
        %v710 = vunpack.c.h.b16 %v541
        %v711 = vunpack.c.l.b16 %v542
        %v712 = vunpack.c.h.b16 %v542
        %v713 = vunpack.c.l.b16 %v543
        %v714 = vunpack.c.h.b16 %v543
        %v715 = vunpack.c.l.b16 %v544
        %v716 = vunpack.c.h.b16 %v544
        %v717 = vunpack.c.l.b16 %v545
        %v718 = vunpack.c.h.b16 %v545
        %v719 = vunpack.c.l.b16 %v546
        %v720 = vunpack.c.h.b16 %v546
        %v721 = vunpack.c.l.b16 %v547
        %v722 = vunpack.c.h.b16 %v547
        %v723 = vunpack.c.l.b16 %v548
        %v724 = vunpack.c.h.b16 %v548
        %v725 = vunpack.c.l.b16 %v549
        %v726 = vunpack.c.h.b16 %v549
        %v727 = vunpack.c.l.b16 %v550
        %v728 = vunpack.c.h.b16 %v550
        %v729 = vunpack.c.l.b16 %v551
        %v730 = vunpack.c.h.b16 %v551
        %v731 = vunpack.c.l.b16 %v552
        %v732 = vunpack.c.h.b16 %v552
        %v733 = vunpack.c.l.b16 %v553
        %v734 = vunpack.c.h.b16 %v553
        %v735 = vunpack.c.l.b16 %v554
        %v736 = vunpack.c.h.b16 %v554
        %v737 = vunpack.c.l.b16 %v555
        %v738 = vunpack.c.h.b16 %v555
        %v739 = vunpack.c.l.b16 %v556
        %v740 = vunpack.c.h.b16 %v556
        %v741 = vunpack.c.l.b16 %v557
        %v742 = vunpack.c.h.b16 %v557
        %v743 = vunpack.c.l.b16 %v558
        %v744 = vunpack.c.h.b16 %v558
        %v745 = vunpack.c.l.b16 %v559
        %v746 = vunpack.c.h.b16 %v559
        %v747 = vunpack.c.l.b16 %v560
        %v748 = vunpack.c.h.b16 %v560
        %v749 = vunpack.c.l.b16 %v561
        %v750 = vunpack.c.h.b16 %v561
        %v751 = vunpack.c.l.b16 %v562
        %v752 = vunpack.c.h.b16 %v562
        %v753 = vunpack.c.l.b16 %v563
        %v754 = vunpack.c.h.b16 %v563
        %v755 = vunpack.c.l.b16 %v564
        %v756 = vunpack.c.h.b16 %v564
        %v757 = vpack.c.b16 %v631, %v629
        %v758 = vpack.c.b16 %v632, %v630
        %v759 = vpack.c.b16 %v635, %v633
        %v760 = vpack.c.b16 %v636, %v634
        %v761 = vpack.c.b16 %v639, %v637
        %v762 = vpack.c.b16 %v640, %v638
        %v763 = vpack.c.b16 %v643, %v641
        %v764 = vpack.c.b16 %v644, %v642
        %v765 = vpack.c.b16 %v647, %v645
        %v766 = vpack.c.b16 %v648, %v646
        %v767 = vpack.c.b16 %v651, %v649
        %v768 = vpack.c.b16 %v652, %v650
        %v769 = vpack.c.b16 %v655, %v653
        %v770 = vpack.c.b16 %v656, %v654
        %v771 = vpack.c.b16 %v659, %v657
        %v772 = vpack.c.b16 %v660, %v658
        %v773 = vpack.c.b16 %v663, %v661
        %v774 = vpack.c.b16 %v664, %v662
        %v775 = vpack.c.b16 %v667, %v665
        %v776 = vpack.c.b16 %v668, %v666
        %v777 = vpack.c.b16 %v671, %v669
        %v778 = vpack.c.b16 %v672, %v670
        %v779 = vpack.c.b16 %v675, %v673
        %v780 = vpack.c.b16 %v676, %v674
        %v781 = vpack.c.b16 %v679, %v677
        %v782 = vpack.c.b16 %v680, %v678
        %v783 = vpack.c.b16 %v683, %v681
        %v784 = vpack.c.b16 %v684, %v682
        %v785 = vpack.c.b16 %v687, %v685
        %v786 = vpack.c.b16 %v688, %v686
        %v787 = vpack.c.b16 %v691, %v689
        %v788 = vpack.c.b16 %v692, %v690
        %v789 = vpack.c.b16 %v695, %v693
        %v790 = vpack.c.b16 %v696, %v694
        %v791 = vpack.c.b16 %v699, %v697
        %v792 = vpack.c.b16 %v700, %v698
        %v793 = vpack.c.b16 %v703, %v701
        %v794 = vpack.c.b16 %v704, %v702
        %v795 = vpack.c.b16 %v707, %v705
        %v796 = vpack.c.b16 %v708, %v706
        %v797 = vpack.c.b16 %v711, %v709
        %v798 = vpack.c.b16 %v712, %v710
        %v799 = vpack.c.b16 %v715, %v713
        %v800 = vpack.c.b16 %v716, %v714
        %v801 = vpack.c.b16 %v719, %v717
        %v802 = vpack.c.b16 %v720, %v718
        %v803 = vpack.c.b16 %v723, %v721
        %v804 = vpack.c.b16 %v724, %v722
        %v805 = vpack.c.b16 %v727, %v725
        %v806 = vpack.c.b16 %v728, %v726
        %v807 = vpack.c.b16 %v731, %v729
        %v808 = vpack.c.b16 %v732, %v730
        %v809 = vpack.c.b16 %v735, %v733
        %v810 = vpack.c.b16 %v736, %v734
        %v811 = vpack.c.b16 %v739, %v737
        %v812 = vpack.c.b16 %v740, %v738
        %v813 = vpack.c.b16 %v743, %v741
        %v814 = vpack.c.b16 %v744, %v742
        %v815 = vpack.c.b16 %v747, %v745
        %v816 = vpack.c.b16 %v748, %v746
        %v817 = vpack.c.b16 %v751, %v749
        %v818 = vpack.c.b16 %v752, %v750
        %v819 = vpack.c.b16 %v755, %v753
        %v820 = vpack.c.b16 %v756, %v754
        %885 = vmatprep.subr.bf16.mxu0 0
        %886 = vmatpush1.bf16.msra.mxu0 %v276
        %887 = vmatprep.subr.bf16.mxu0 0
        %888 = vmatpush1.bf16.msra.mxu0 %v277
        %889 = vmatprep.subr.bf16.mxu0 0
        %890 = vmatpush1.bf16.msra.mxu0 %v278
        %891 = vmatprep.subr.bf16.mxu0 0
        %892 = vmatpush1.bf16.msra.mxu0 %v279
        %893 = vmatprep.subr.bf16.mxu0 0
        %894 = vmatpush1.bf16.msra.mxu0 %v280
        %895 = vmatprep.subr.bf16.mxu0 0
        %896 = vmatpush1.bf16.msra.mxu0 %v281
        %897 = vmatprep.subr.bf16.mxu0 0
        %898 = vmatpush1.bf16.msra.mxu0 %v282
        %899 = vmatprep.subr.bf16.mxu0 0
        %900 = vmatpush1.bf16.msra.mxu0 %v283
        %901 = vmatprep.subr.bf16.mxu0 0
        %902 = vmatpush1.bf16.msra.mxu0 %v284
        %903 = vmatprep.subr.bf16.mxu0 0
        %904 = vmatpush1.bf16.msra.mxu0 %v285
        %905 = vmatprep.subr.bf16.mxu0 0
        %906 = vmatpush1.bf16.msra.mxu0 %v286
        %907 = vmatprep.subr.bf16.mxu0 0
        %908 = vmatpush1.bf16.msra.mxu0 %v287
        %909 = vmatprep.subr.bf16.mxu0 0
        %910 = vmatpush1.bf16.msra.mxu0 %v288
        %911 = vmatprep.subr.bf16.mxu0 0
        %912 = vmatpush1.bf16.msra.mxu0 %v289
        %913 = vmatprep.subr.bf16.mxu0 0
        %914 = vmatpush1.bf16.msra.mxu0 %v290
        %915 = vmatprep.subr.bf16.mxu0 0
        %916 = vmatpush1.bf16.msra.mxu0 %v291
        %917 = vmatprep.mubr.bf16.mxu0 %v758
        %918 = vmatmul.mubr.bf16.gmra.mrb[0].mxu0 %v757
        %v919 = vpop.f32.mrb[0].mxu0
        %v920 = vadd.f32 0.0, %v919
        %v921 = vpop.f32.mrb[0].mxu0
        %v922 = vpop.f32.mrb[0].mxu0
        %v923 = vadd.f32 0.0, %v922
        %v924 = vpop.f32.mrb[0].mxu0
        %925 = vmatprep.mubr.bf16.mxu0 %v760
        %926 = vmatmul.mubr.bf16.gmra.mrb[0].mxu0 %v759
        %v927 = vpop.f32.mrb[0].mxu0
        %v928 = vadd.f32 0.0, %v927
        %v929 = vpop.f32.mrb[0].mxu0
        %v930 = vpop.f32.mrb[0].mxu0
        %v931 = vadd.f32 0.0, %v930
        %v932 = vpop.f32.mrb[0].mxu0
        %933 = vmatprep.mubr.bf16.mxu0 %v762
        %934 = vmatmul.mubr.bf16.gmra.mrb[0].mxu0 %v761
        %v935 = vpop.f32.mrb[0].mxu0
        %v936 = vadd.f32 0.0, %v935
        %v937 = vpop.f32.mrb[0].mxu0
        %v938 = vpop.f32.mrb[0].mxu0
        %v939 = vadd.f32 0.0, %v938
        %v940 = vpop.f32.mrb[0].mxu0
        %941 = vmatprep.mubr.bf16.mxu0 %v764
        %942 = vmatmul.mubr.bf16.gmra.mrb[0].mxu0 %v763
        %v943 = vpop.f32.mrb[0].mxu0
        %v944 = vadd.f32 0.0, %v943
        %v945 = vpop.f32.mrb[0].mxu0
        %v946 = vpop.f32.mrb[0].mxu0
        %v947 = vadd.f32 0.0, %v946
        %v948 = vpop.f32.mrb[0].mxu0
        %949 = vmatprep.mubr.bf16.mxu0 %v766
        %950 = vmatmul.mubr.bf16.gmra.mrb[0].mxu0 %v765
        %v951 = vpop.f32.mrb[0].mxu0
        %v952 = vadd.f32 0.0, %v951
        %v953 = vpop.f32.mrb[0].mxu0
        %v954 = vpop.f32.mrb[0].mxu0
        %v955 = vadd.f32 0.0, %v954
        %v956 = vpop.f32.mrb[0].mxu0
        %957 = vmatprep.mubr.bf16.mxu0 %v768
        %958 = vmatmul.mubr.bf16.gmra.mrb[0].mxu0 %v767
        %v959 = vpop.f32.mrb[0].mxu0
        %v960 = vadd.f32 0.0, %v959
        %v961 = vpop.f32.mrb[0].mxu0
        %v962 = vpop.f32.mrb[0].mxu0
        %v963 = vadd.f32 0.0, %v962
        %v964 = vpop.f32.mrb[0].mxu0
        %965 = vmatprep.mubr.bf16.mxu0 %v770
        %966 = vmatmul.mubr.bf16.gmra.mrb[0].mxu0 %v769
        %v967 = vpop.f32.mrb[0].mxu0
        %v968 = vadd.f32 0.0, %v967
        %v969 = vpop.f32.mrb[0].mxu0
        %v970 = vpop.f32.mrb[0].mxu0
        %v971 = vadd.f32 0.0, %v970
        %v972 = vpop.f32.mrb[0].mxu0
        %973 = vmatprep.mubr.bf16.mxu0 %v772
        %974 = vmatmul.mubr.bf16.gmra.mrb[0].mxu0 %v771
        %v975 = vpop.f32.mrb[0].mxu0
        %v976 = vadd.f32 0.0, %v975
        %v977 = vpop.f32.mrb[0].mxu0
        %v978 = vpop.f32.mrb[0].mxu0
        %v979 = vadd.f32 0.0, %v978
        %v980 = vpop.f32.mrb[0].mxu0
        %981 = vmatprep.mubr.bf16.mxu0 %v774
        %982 = vmatmul.mubr.bf16.gmra.mrb[0].mxu0 %v773
        %v983 = vpop.f32.mrb[0].mxu0
        %v984 = vadd.f32 0.0, %v983
        %v985 = vpop.f32.mrb[0].mxu0
        %v986 = vpop.f32.mrb[0].mxu0
        %v987 = vadd.f32 0.0, %v986
        %v988 = vpop.f32.mrb[0].mxu0
        %989 = vmatprep.mubr.bf16.mxu0 %v776
        %990 = vmatmul.mubr.bf16.gmra.mrb[0].mxu0 %v775
        %v991 = vpop.f32.mrb[0].mxu0
        %v992 = vadd.f32 0.0, %v991
        %v993 = vpop.f32.mrb[0].mxu0
        %v994 = vpop.f32.mrb[0].mxu0
        %v995 = vadd.f32 0.0, %v994
        %v996 = vpop.f32.mrb[0].mxu0
        %997 = vmatprep.mubr.bf16.mxu0 %v778
        %998 = vmatmul.mubr.bf16.gmra.mrb[0].mxu0 %v777
        %v999 = vpop.f32.mrb[0].mxu0
        %v1000 = vadd.f32 0.0, %v999
        %v1001 = vpop.f32.mrb[0].mxu0
        %v1002 = vpop.f32.mrb[0].mxu0
        %v1003 = vadd.f32 0.0, %v1002
        %v1004 = vpop.f32.mrb[0].mxu0
        %1005 = vmatprep.mubr.bf16.mxu0 %v780
        %1006 = vmatmul.mubr.bf16.gmra.mrb[0].mxu0 %v779
        %v1007 = vpop.f32.mrb[0].mxu0
        %v1008 = vadd.f32 0.0, %v1007
        %v1009 = vpop.f32.mrb[0].mxu0
        %v1010 = vpop.f32.mrb[0].mxu0
        %v1011 = vadd.f32 0.0, %v1010
        %v1012 = vpop.f32.mrb[0].mxu0
        %1013 = vmatprep.mubr.bf16.mxu0 %v782
        %1014 = vmatmul.mubr.bf16.gmra.mrb[0].mxu0 %v781
        %v1015 = vpop.f32.mrb[0].mxu0
        %v1016 = vadd.f32 0.0, %v1015
        %v1017 = vpop.f32.mrb[0].mxu0
        %v1018 = vpop.f32.mrb[0].mxu0
        %v1019 = vadd.f32 0.0, %v1018
        %v1020 = vpop.f32.mrb[0].mxu0
        %1021 = vmatprep.mubr.bf16.mxu0 %v784
        %1022 = vmatmul.mubr.bf16.gmra.mrb[0].mxu0 %v783
        %v1023 = vpop.f32.mrb[0].mxu0
        %v1024 = vadd.f32 0.0, %v1023
        %v1025 = vpop.f32.mrb[0].mxu0
        %v1026 = vpop.f32.mrb[0].mxu0
        %v1027 = vadd.f32 0.0, %v1026
        %v1028 = vpop.f32.mrb[0].mxu0
        %1029 = vmatprep.mubr.bf16.mxu0 %v786
        %1030 = vmatmul.mubr.bf16.gmra.mrb[0].mxu0 %v785
        %v1031 = vpop.f32.mrb[0].mxu0
        %v1032 = vadd.f32 0.0, %v1031
        %v1033 = vpop.f32.mrb[0].mxu0
        %v1034 = vpop.f32.mrb[0].mxu0
        %v1035 = vadd.f32 0.0, %v1034
        %v1036 = vpop.f32.mrb[0].mxu0
        %1037 = vmatprep.mubr.bf16.mxu0 %v788
        %1038 = vmatmul.mubr.bf16.gmra.mrb[0].mxu0 %v787
        %v1039 = vpop.f32.mrb[0].mxu0
        %v1040 = vadd.f32 0.0, %v1039
        %v1041 = vpop.f32.mrb[0].mxu0
        %v1042 = vpop.f32.mrb[0].mxu0
        %v1043 = vadd.f32 0.0, %v1042
        %v1044 = vpop.f32.mrb[0].mxu0
        %1045 = vmatprep.mubr.bf16.mxu0 %v790
        %1046 = vmatmul.mubr.bf16.gmra.mrb[0].mxu0 %v789
        %v1047 = vpop.f32.mrb[0].mxu0
        %v1048 = vadd.f32 0.0, %v1047
        %v1049 = vpop.f32.mrb[0].mxu0
        %v1050 = vpop.f32.mrb[0].mxu0
        %v1051 = vadd.f32 0.0, %v1050
        %v1052 = vpop.f32.mrb[0].mxu0
        %1053 = vmatprep.mubr.bf16.mxu0 %v792
        %1054 = vmatmul.mubr.bf16.gmra.mrb[0].mxu0 %v791
        %v1055 = vpop.f32.mrb[0].mxu0
        %v1056 = vadd.f32 0.0, %v1055
        %v1057 = vpop.f32.mrb[0].mxu0
        %v1058 = vpop.f32.mrb[0].mxu0
        %v1059 = vadd.f32 0.0, %v1058
        %v1060 = vpop.f32.mrb[0].mxu0
        %1061 = vmatprep.mubr.bf16.mxu0 %v794
        %1062 = vmatmul.mubr.bf16.gmra.mrb[0].mxu0 %v793
        %v1063 = vpop.f32.mrb[0].mxu0
        %v1064 = vadd.f32 0.0, %v1063
        %v1065 = vpop.f32.mrb[0].mxu0
        %v1066 = vpop.f32.mrb[0].mxu0
        %v1067 = vadd.f32 0.0, %v1066
        %v1068 = vpop.f32.mrb[0].mxu0
        %1069 = vmatprep.mubr.bf16.mxu0 %v796
        %1070 = vmatmul.mubr.bf16.gmra.mrb[0].mxu0 %v795
        %v1071 = vpop.f32.mrb[0].mxu0
        %v1072 = vadd.f32 0.0, %v1071
        %v1073 = vpop.f32.mrb[0].mxu0
        %v1074 = vpop.f32.mrb[0].mxu0
        %v1075 = vadd.f32 0.0, %v1074
        %v1076 = vpop.f32.mrb[0].mxu0
        %1077 = vmatprep.mubr.bf16.mxu0 %v798
        %1078 = vmatmul.mubr.bf16.gmra.mrb[0].mxu0 %v797
        %v1079 = vpop.f32.mrb[0].mxu0
        %v1080 = vadd.f32 0.0, %v1079
        %v1081 = vpop.f32.mrb[0].mxu0
        %v1082 = vpop.f32.mrb[0].mxu0
        %v1083 = vadd.f32 0.0, %v1082
        %v1084 = vpop.f32.mrb[0].mxu0
        %1085 = vmatprep.mubr.bf16.mxu0 %v800
        %1086 = vmatmul.mubr.bf16.gmra.mrb[0].mxu0 %v799
        %v1087 = vpop.f32.mrb[0].mxu0
        %v1088 = vadd.f32 0.0, %v1087
        %v1089 = vpop.f32.mrb[0].mxu0
        %v1090 = vpop.f32.mrb[0].mxu0
        %v1091 = vadd.f32 0.0, %v1090
        %v1092 = vpop.f32.mrb[0].mxu0
        %1093 = vmatprep.mubr.bf16.mxu0 %v802
        %1094 = vmatmul.mubr.bf16.gmra.mrb[0].mxu0 %v801
        %v1095 = vpop.f32.mrb[0].mxu0
        %v1096 = vadd.f32 0.0, %v1095
        %v1097 = vpop.f32.mrb[0].mxu0
        %v1098 = vpop.f32.mrb[0].mxu0
        %v1099 = vadd.f32 0.0, %v1098
        %v1100 = vpop.f32.mrb[0].mxu0
        %1101 = vmatprep.mubr.bf16.mxu0 %v804
        %1102 = vmatmul.mubr.bf16.gmra.mrb[0].mxu0 %v803
        %v1103 = vpop.f32.mrb[0].mxu0
        %v1104 = vadd.f32 0.0, %v1103
        %v1105 = vpop.f32.mrb[0].mxu0
        %v1106 = vpop.f32.mrb[0].mxu0
        %v1107 = vadd.f32 0.0, %v1106
        %v1108 = vpop.f32.mrb[0].mxu0
        %1109 = vmatprep.mubr.bf16.mxu0 %v806
        %1110 = vmatmul.mubr.bf16.gmra.mrb[0].mxu0 %v805
        %v1111 = vpop.f32.mrb[0].mxu0
        %v1112 = vadd.f32 0.0, %v1111
        %v1113 = vpop.f32.mrb[0].mxu0
        %v1114 = vpop.f32.mrb[0].mxu0
        %v1115 = vadd.f32 0.0, %v1114
        %v1116 = vpop.f32.mrb[0].mxu0
        %1117 = vmatprep.mubr.bf16.mxu0 %v808
        %1118 = vmatmul.mubr.bf16.gmra.mrb[0].mxu0 %v807
        %v1119 = vpop.f32.mrb[0].mxu0
        %v1120 = vadd.f32 0.0, %v1119
        %v1121 = vpop.f32.mrb[0].mxu0
        %v1122 = vpop.f32.mrb[0].mxu0
        %v1123 = vadd.f32 0.0, %v1122
        %v1124 = vpop.f32.mrb[0].mxu0
        %1125 = vmatprep.mubr.bf16.mxu0 %v810
        %1126 = vmatmul.mubr.bf16.gmra.mrb[0].mxu0 %v809
        %v1127 = vpop.f32.mrb[0].mxu0
        %v1128 = vadd.f32 0.0, %v1127
        %v1129 = vpop.f32.mrb[0].mxu0
        %v1130 = vpop.f32.mrb[0].mxu0
        %v1131 = vadd.f32 0.0, %v1130
        %v1132 = vpop.f32.mrb[0].mxu0
        %1133 = vmatprep.mubr.bf16.mxu0 %v812
        %1134 = vmatmul.mubr.bf16.gmra.mrb[0].mxu0 %v811
        %v1135 = vpop.f32.mrb[0].mxu0
        %v1136 = vadd.f32 0.0, %v1135
        %v1137 = vpop.f32.mrb[0].mxu0
        %v1138 = vpop.f32.mrb[0].mxu0
        %v1139 = vadd.f32 0.0, %v1138
        %v1140 = vpop.f32.mrb[0].mxu0
        %1141 = vmatprep.mubr.bf16.mxu0 %v814
        %1142 = vmatmul.mubr.bf16.gmra.mrb[0].mxu0 %v813
        %v1143 = vpop.f32.mrb[0].mxu0
        %v1144 = vadd.f32 0.0, %v1143
        %v1145 = vpop.f32.mrb[0].mxu0
        %v1146 = vpop.f32.mrb[0].mxu0
        %v1147 = vadd.f32 0.0, %v1146
        %v1148 = vpop.f32.mrb[0].mxu0
        %1149 = vmatprep.mubr.bf16.mxu0 %v816
        %1150 = vmatmul.mubr.bf16.gmra.mrb[0].mxu0 %v815
        %v1151 = vpop.f32.mrb[0].mxu0
        %v1152 = vadd.f32 0.0, %v1151
        %v1153 = vpop.f32.mrb[0].mxu0
        %v1154 = vpop.f32.mrb[0].mxu0
        %v1155 = vadd.f32 0.0, %v1154
        %v1156 = vpop.f32.mrb[0].mxu0
        %1157 = vmatprep.mubr.bf16.mxu0 %v818
        %1158 = vmatmul.mubr.bf16.gmra.mrb[0].mxu0 %v817
        %v1159 = vpop.f32.mrb[0].mxu0
        %v1160 = vadd.f32 0.0, %v1159
        %v1161 = vpop.f32.mrb[0].mxu0
        %v1162 = vpop.f32.mrb[0].mxu0
        %v1163 = vadd.f32 0.0, %v1162
        %v1164 = vpop.f32.mrb[0].mxu0
        %1165 = vmatprep.mubr.bf16.mxu0 %v820
        %1166 = vmatmul.mubr.bf16.gmra.mrb[0].mxu0 %v819
        %v1167 = vpop.f32.mrb[0].mxu0
        %v1168 = vadd.f32 0.0, %v1167
        %v1169 = vpop.f32.mrb[0].mxu0
        %v1170 = vpop.f32.mrb[0].mxu0
        %v1171 = vadd.f32 0.0, %v1170
        %v1172 = vpop.f32.mrb[0].mxu0
        %1173 = vdwg.mxu0
        %v1174 = vpack.c.bf16 %v923, %v920
        %v1175 = vpack.c.bf16 %v931, %v928
        %v1176 = vpack.c.bf16 %v939, %v936
        %v1177 = vpack.c.bf16 %v947, %v944
        %v1178 = vpack.c.bf16 %v955, %v952
        %v1179 = vpack.c.bf16 %v963, %v960
        %v1180 = vpack.c.bf16 %v971, %v968
        %v1181 = vpack.c.bf16 %v979, %v976
        %v1182 = vpack.c.bf16 %v987, %v984
        %v1183 = vpack.c.bf16 %v995, %v992
        %v1184 = vpack.c.bf16 %v1003, %v1000
        %v1185 = vpack.c.bf16 %v1011, %v1008
        %v1186 = vpack.c.bf16 %v1019, %v1016
        %v1187 = vpack.c.bf16 %v1027, %v1024
        %v1188 = vpack.c.bf16 %v1035, %v1032
        %v1189 = vpack.c.bf16 %v1043, %v1040
        %v1190 = vpack.c.bf16 %v1051, %v1048
        %v1191 = vpack.c.bf16 %v1059, %v1056
        %v1192 = vpack.c.bf16 %v1067, %v1064
        %v1193 = vpack.c.bf16 %v1075, %v1072
        %v1194 = vpack.c.bf16 %v1083, %v1080
        %v1195 = vpack.c.bf16 %v1091, %v1088
        %v1196 = vpack.c.bf16 %v1099, %v1096
        %v1197 = vpack.c.bf16 %v1107, %v1104
        %v1198 = vpack.c.bf16 %v1115, %v1112
        %v1199 = vpack.c.bf16 %v1123, %v1120
        %v1200 = vpack.c.bf16 %v1131, %v1128
        %v1201 = vpack.c.bf16 %v1139, %v1136
        %v1202 = vpack.c.bf16 %v1147, %v1144
        %v1203 = vpack.c.bf16 %v1155, %v1152
        %v1204 = vpack.c.bf16 %v1163, %v1160
        %v1205 = vpack.c.bf16 %v1171, %v1168
        %1206 = vst [vmem:[#allocation3] sm:$0xff] %v1174
        %1207 = vst [vmem:[#allocation3 + $0x8] sm:$0xff] %v1175
        %1208 = vst [vmem:[#allocation3 + $0x10] sm:$0xff] %v1176
        %1209 = vst [vmem:[#allocation3 + $0x18] sm:$0xff] %v1177
        %1210 = vst [vmem:[#allocation3 + $0x20] sm:$0xff] %v1178
        %1211 = vst [vmem:[#allocation3 + $0x28] sm:$0xff] %v1179
        %1212 = vst [vmem:[#allocation3 + $0x30] sm:$0xff] %v1180
        %1213 = vst [vmem:[#allocation3 + $0x38] sm:$0xff] %v1181
        %1214 = vst [vmem:[#allocation3 + $0x40] sm:$0xff] %v1182
        %1215 = vst [vmem:[#allocation3 + $0x48] sm:$0xff] %v1183
        %1216 = vst [vmem:[#allocation3 + $0x50] sm:$0xff] %v1184
        %1217 = vst [vmem:[#allocation3 + $0x58] sm:$0xff] %v1185
        %1218 = vst [vmem:[#allocation3 + $0x60] sm:$0xff] %v1186
        %1219 = vst [vmem:[#allocation3 + $0x68] sm:$0xff] %v1187
        %1220 = vst [vmem:[#allocation3 + $0x70] sm:$0xff] %v1188
        %1221 = vst [vmem:[#allocation3 + $0x78] sm:$0xff] %v1189
        %1222 = vst [vmem:[#allocation3 + $0x80] sm:$0xff] %v1190
        %1223 = vst [vmem:[#allocation3 + $0x88] sm:$0xff] %v1191
        %1224 = vst [vmem:[#allocation3 + $0x90] sm:$0xff] %v1192
        %1225 = vst [vmem:[#allocation3 + $0x98] sm:$0xff] %v1193
        %1226 = vst [vmem:[#allocation3 + $0xa0] sm:$0xff] %v1194
        %1227 = vst [vmem:[#allocation3 + $0xa8] sm:$0xff] %v1195
        %1228 = vst [vmem:[#allocation3 + $0xb0] sm:$0xff] %v1196
        %1229 = vst [vmem:[#allocation3 + $0xb8] sm:$0xff] %v1197
        %1230 = vst [vmem:[#allocation3 + $0xc0] sm:$0xff] %v1198
        %1231 = vst [vmem:[#allocation3 + $0xc8] sm:$0xff] %v1199
        %1232 = vst [vmem:[#allocation3 + $0xd0] sm:$0xff] %v1200
        %1233 = vst [vmem:[#allocation3 + $0xd8] sm:$0xff] %v1201
        %1234 = vst [vmem:[#allocation3 + $0xe0] sm:$0xff] %v1202
        %1235 = vst [vmem:[#allocation3 + $0xe8] sm:$0xff] %v1203
        %1236 = vst [vmem:[#allocation3 + $0xf0] sm:$0xff] %v1204
        %1237 = vst [vmem:[#allocation3 + $0xf8] sm:$0xff] %v1205
        %v1238 = vld [vmem:[#allocation2] sm:$0xff]
        %v1239 = vld [vmem:[#allocation2 + $0x8] sm:$0xff]
        %v1240 = vld [vmem:[#allocation2 + $0x10] sm:$0xff]
        %v1241 = vld [vmem:[#allocation2 + $0x18] sm:$0xff]
        %v1242 = vld [vmem:[#allocation2 + $0x20] sm:$0xff]
        %v1243 = vld [vmem:[#allocation2 + $0x28] sm:$0xff]
        %v1244 = vld [vmem:[#allocation2 + $0x30] sm:$0xff]
        %v1245 = vld [vmem:[#allocation2 + $0x38] sm:$0xff]
        %v1246 = vld [vmem:[#allocation3] sm:$0xff]
        %v1247 = vld [vmem:[#allocation3 + $0x8] sm:$0xff]
        %v1248 = vld [vmem:[#allocation3 + $0x10] sm:$0xff]
        %v1249 = vld [vmem:[#allocation3 + $0x18] sm:$0xff]
        %v1250 = vld [vmem:[#allocation3 + $0x20] sm:$0xff]
        %v1251 = vld [vmem:[#allocation3 + $0x28] sm:$0xff]
        %v1252 = vld [vmem:[#allocation3 + $0x30] sm:$0xff]
        %v1253 = vld [vmem:[#allocation3 + $0x38] sm:$0xff]
        %v1254 = vld [vmem:[#allocation3 + $0x40] sm:$0xff]
        %v1255 = vld [vmem:[#allocation3 + $0x48] sm:$0xff]
        %v1256 = vld [vmem:[#allocation3 + $0x50] sm:$0xff]
        %v1257 = vld [vmem:[#allocation3 + $0x58] sm:$0xff]
        %v1258 = vld [vmem:[#allocation3 + $0x60] sm:$0xff]
        %v1259 = vld [vmem:[#allocation3 + $0x68] sm:$0xff]
        %v1260 = vld [vmem:[#allocation3 + $0x70] sm:$0xff]
        %v1261 = vld [vmem:[#allocation3 + $0x78] sm:$0xff]
        %v1262 = vld [vmem:[#allocation3 + $0x80] sm:$0xff]
        %v1263 = vld [vmem:[#allocation3 + $0x88] sm:$0xff]
        %v1264 = vld [vmem:[#allocation3 + $0x90] sm:$0xff]
        %v1265 = vld [vmem:[#allocation3 + $0x98] sm:$0xff]
        %v1266 = vld [vmem:[#allocation3 + $0xa0] sm:$0xff]
        %v1267 = vld [vmem:[#allocation3 + $0xa8] sm:$0xff]
        %v1268 = vld [vmem:[#allocation3 + $0xb0] sm:$0xff]
        %v1269 = vld [vmem:[#allocation3 + $0xb8] sm:$0xff]
        %v1270 = vld [vmem:[#allocation3 + $0xc0] sm:$0xff]
        %v1271 = vld [vmem:[#allocation3 + $0xc8] sm:$0xff]
        %v1272 = vld [vmem:[#allocation3 + $0xd0] sm:$0xff]
        %v1273 = vld [vmem:[#allocation3 + $0xd8] sm:$0xff]
        %v1274 = vld [vmem:[#allocation3 + $0xe0] sm:$0xff]
        %v1275 = vld [vmem:[#allocation3 + $0xe8] sm:$0xff]
        %v1276 = vld [vmem:[#allocation3 + $0xf0] sm:$0xff]
        %v1277 = vld [vmem:[#allocation3 + $0xf8] sm:$0xff]
        %vm1278 = vcmask 130048
        %v1280 = vsel %vm1278, %v1238, 0
        %v1283 = vsel %vm1278, %v1239, 0
        %v1286 = vsel %vm1278, %v1240, 0
        %v1289 = vsel %vm1278, %v1241, 0
        %v1292 = vsel %vm1278, %v1242, 0
        %v1295 = vsel %vm1278, %v1243, 0
        %v1298 = vsel %vm1278, %v1244, 0
        %v1301 = vsel %vm1278, %v1245, 0
        %v1304 = vsel %vm1278, %v1246, 0
        %v1307 = vsel %vm1278, %v1247, 0
        %v1310 = vsel %vm1278, %v1248, 0
        %v1313 = vsel %vm1278, %v1249, 0
        %v1316 = vsel %vm1278, %v1250, 0
        %v1319 = vsel %vm1278, %v1251, 0
        %v1322 = vsel %vm1278, %v1252, 0
        %v1325 = vsel %vm1278, %v1253, 0
        %v1328 = vsel %vm1278, %v1254, 0
        %v1331 = vsel %vm1278, %v1255, 0
        %v1334 = vsel %vm1278, %v1256, 0
        %v1337 = vsel %vm1278, %v1257, 0
        %v1340 = vsel %vm1278, %v1258, 0
        %v1343 = vsel %vm1278, %v1259, 0
        %v1346 = vsel %vm1278, %v1260, 0
        %v1349 = vsel %vm1278, %v1261, 0
        %1351 = vmatprep.subr.bf16.mxu0 0
        %1352 = vmatpush1.bf16.xpose.msra.mxu0 %v1304
        %1353 = vmatprep.subr.bf16.mxu0 0
        %1354 = vmatpush1.bf16.xpose.msra.mxu0 %v1307
        %1355 = vmatprep.subr.bf16.mxu0 0
        %1356 = vmatpush1.bf16.xpose.msra.mxu0 %v1310
        %1357 = vmatprep.subr.bf16.mxu0 0
        %1358 = vmatpush1.bf16.xpose.msra.mxu0 %v1313
        %1359 = vmatprep.subr.bf16.mxu0 0
        %1360 = vmatpush1.bf16.xpose.msra.mxu0 %v1316
        %1361 = vmatprep.subr.bf16.mxu0 0
        %1362 = vmatpush1.bf16.xpose.msra.mxu0 %v1319
        %1363 = vmatprep.subr.bf16.mxu0 0
        %1364 = vmatpush1.bf16.xpose.msra.mxu0 %v1322
        %1365 = vmatprep.subr.bf16.mxu0 0
        %1366 = vmatpush1.bf16.xpose.msra.mxu0 %v1325
        %1367 = vmatprep.subr.bf16.mxu0 0
        %1368 = vmatpush1.bf16.xpose.msra.mxu0 %v1328
        %1369 = vmatprep.subr.bf16.mxu0 0
        %1370 = vmatpush1.bf16.xpose.msra.mxu0 %v1331
        %1371 = vmatprep.subr.bf16.mxu0 0
        %1372 = vmatpush1.bf16.xpose.msra.mxu0 %v1334
        %1373 = vmatprep.subr.bf16.mxu0 0
        %1374 = vmatpush1.bf16.xpose.msra.mxu0 %v1337
        %1375 = vmatprep.subr.bf16.mxu0 0
        %1376 = vmatpush1.bf16.xpose.msra.mxu0 %v1340
        %1377 = vmatprep.subr.bf16.mxu0 0
        %1378 = vmatpush1.bf16.xpose.msra.mxu0 %v1343
        %1379 = vmatprep.subr.bf16.mxu0 0
        %1380 = vmatpush1.bf16.xpose.msra.mxu0 %v1346
        %1381 = vmatprep.subr.bf16.mxu0 0
        %1382 = vmatpush1.bf16.xpose.msra.mxu0 %v1349
        %1383 = vmatprep.mubr.bf16.mxu0 0
        %1384 = vmatmul.mubr.bf16.gmra.mrb[0].mxu0 %v1280
        %v1385 = vpop.f32.mrb[0].mxu0
        %v1386 = vadd.f32 0.0, %v1385
        %v1387 = vpop.f32.mrb[0].mxu0
        %v1388 = vadd.f32 0.0, %v1387
        %v1389 = vpop.f32.mrb[0].mxu0
        %v1390 = vadd.f32 0.0, %v1389
        %v1391 = vpop.f32.mrb[0].mxu0
        %v1392 = vadd.f32 0.0, %v1391
        %1393 = vmatprep.mubr.bf16.mxu0 0
        %1394 = vmatmul.mubr.bf16.gmra.mrb[0].mxu0 %v1283
        %v1395 = vpop.f32.mrb[0].mxu0
        %v1396 = vadd.f32 0.0, %v1395
        %v1397 = vpop.f32.mrb[0].mxu0
        %v1398 = vadd.f32 0.0, %v1397
        %v1399 = vpop.f32.mrb[0].mxu0
        %v1400 = vadd.f32 0.0, %v1399
        %v1401 = vpop.f32.mrb[0].mxu0
        %v1402 = vadd.f32 0.0, %v1401
        %1403 = vmatprep.mubr.bf16.mxu0 0
        %1404 = vmatmul.mubr.bf16.gmra.mrb[0].mxu0 %v1286
        %v1405 = vpop.f32.mrb[0].mxu0
        %v1406 = vadd.f32 0.0, %v1405
        %v1407 = vpop.f32.mrb[0].mxu0
        %v1408 = vadd.f32 0.0, %v1407
        %v1409 = vpop.f32.mrb[0].mxu0
        %v1410 = vadd.f32 0.0, %v1409
        %v1411 = vpop.f32.mrb[0].mxu0
        %v1412 = vadd.f32 0.0, %v1411
        %1413 = vmatprep.mubr.bf16.mxu0 0
        %1414 = vmatmul.mubr.bf16.gmra.mrb[0].mxu0 %v1289
        %v1415 = vpop.f32.mrb[0].mxu0
        %v1416 = vadd.f32 0.0, %v1415
        %v1417 = vpop.f32.mrb[0].mxu0
        %v1418 = vadd.f32 0.0, %v1417
        %v1419 = vpop.f32.mrb[0].mxu0
        %v1420 = vadd.f32 0.0, %v1419
        %v1421 = vpop.f32.mrb[0].mxu0
        %v1422 = vadd.f32 0.0, %v1421
        %1423 = vmatprep.mubr.bf16.mxu0 0
        %1424 = vmatmul.mubr.bf16.gmra.mrb[0].mxu0 %v1292
        %v1425 = vpop.f32.mrb[0].mxu0
        %v1426 = vadd.f32 0.0, %v1425
        %v1427 = vpop.f32.mrb[0].mxu0
        %v1428 = vadd.f32 0.0, %v1427
        %v1429 = vpop.f32.mrb[0].mxu0
        %v1430 = vadd.f32 0.0, %v1429
        %v1431 = vpop.f32.mrb[0].mxu0
        %v1432 = vadd.f32 0.0, %v1431
        %1433 = vmatprep.mubr.bf16.mxu0 0
        %1434 = vmatmul.mubr.bf16.gmra.mrb[0].mxu0 %v1295
        %v1435 = vpop.f32.mrb[0].mxu0
        %v1436 = vadd.f32 0.0, %v1435
        %v1437 = vpop.f32.mrb[0].mxu0
        %v1438 = vadd.f32 0.0, %v1437
        %v1439 = vpop.f32.mrb[0].mxu0
        %v1440 = vadd.f32 0.0, %v1439
        %v1441 = vpop.f32.mrb[0].mxu0
        %v1442 = vadd.f32 0.0, %v1441
        %1443 = vmatprep.mubr.bf16.mxu0 0
        %1444 = vmatmul.mubr.bf16.gmra.mrb[0].mxu0 %v1298
        %v1445 = vpop.f32.mrb[0].mxu0
        %v1446 = vadd.f32 0.0, %v1445
        %v1447 = vpop.f32.mrb[0].mxu0
        %v1448 = vadd.f32 0.0, %v1447
        %v1449 = vpop.f32.mrb[0].mxu0
        %v1450 = vadd.f32 0.0, %v1449
        %v1451 = vpop.f32.mrb[0].mxu0
        %v1452 = vadd.f32 0.0, %v1451
        %1453 = vmatprep.mubr.bf16.mxu0 0
        %1454 = vmatmul.mubr.bf16.gmra.mrb[0].mxu0 %v1301
        %v1455 = vpop.f32.mrb[0].mxu0
        %v1456 = vadd.f32 0.0, %v1455
        %v1457 = vpop.f32.mrb[0].mxu0
        %v1458 = vadd.f32 0.0, %v1457
        %v1459 = vpop.f32.mrb[0].mxu0
        %v1460 = vadd.f32 0.0, %v1459
        %v1461 = vpop.f32.mrb[0].mxu0
        %v1462 = vadd.f32 0.0, %v1461
        %1463 = vdwg.mxu0
        %v1464 = vmax.f32 %v1386, %v1388
        %1465 = vmax.xlane.f32.xlu0 %v1464
        %v1466 = vpop.xlane.xlu0 %1465
        %v1467 = vmax.f32 %v1390, %v1392
        %1468 = vmax.xlane.f32.xlu0 %v1467
        %v1469 = vpop.xlane.xlu0 %1468
        %v1470 = vmax.f32 %v1396, %v1398
        %1471 = vmax.xlane.f32.xlu0 %v1470
        %v1472 = vpop.xlane.xlu0 %1471
        %v1473 = vmax.f32 %v1400, %v1402
        %1474 = vmax.xlane.f32.xlu0 %v1473
        %v1475 = vpop.xlane.xlu0 %1474
        %v1476 = vmax.f32 %v1406, %v1408
        %1477 = vmax.xlane.f32.xlu0 %v1476
        %v1478 = vpop.xlane.xlu0 %1477
        %v1479 = vmax.f32 %v1410, %v1412
        %1480 = vmax.xlane.f32.xlu0 %v1479
        %v1481 = vpop.xlane.xlu0 %1480
        %v1482 = vmax.f32 %v1416, %v1418
        %1483 = vmax.xlane.f32.xlu0 %v1482
        %v1484 = vpop.xlane.xlu0 %1483
        %v1485 = vmax.f32 %v1420, %v1422
        %1486 = vmax.xlane.f32.xlu0 %v1485
        %v1487 = vpop.xlane.xlu0 %1486
        %v1488 = vmax.f32 %v1426, %v1428
        %1489 = vmax.xlane.f32.xlu0 %v1488
        %v1490 = vpop.xlane.xlu0 %1489
        %v1491 = vmax.f32 %v1430, %v1432
        %1492 = vmax.xlane.f32.xlu0 %v1491
        %v1493 = vpop.xlane.xlu0 %1492
        %v1494 = vmax.f32 %v1436, %v1438
        %1495 = vmax.xlane.f32.xlu0 %v1494
        %v1496 = vpop.xlane.xlu0 %1495
        %v1497 = vmax.f32 %v1440, %v1442
        %1498 = vmax.xlane.f32.xlu0 %v1497
        %v1499 = vpop.xlane.xlu0 %1498
        %v1500 = vmax.f32 %v1446, %v1448
        %1501 = vmax.xlane.f32.xlu0 %v1500
        %v1502 = vpop.xlane.xlu0 %1501
        %v1503 = vmax.f32 %v1450, %v1452
        %1504 = vmax.xlane.f32.xlu0 %v1503
        %v1505 = vpop.xlane.xlu0 %1504
        %v1506 = vmax.f32 %v1456, %v1458
        %1507 = vmax.xlane.f32.xlu0 %v1506
        %v1508 = vpop.xlane.xlu0 %1507
        %v1509 = vmax.f32 %v1460, %v1462
        %1510 = vmax.xlane.f32.xlu0 %v1509
        %v1511 = vpop.xlane.xlu0 %1510
        %v1512 = vpack.c.bf16 %v1390, %v1386
        %v1513 = vpack.c.bf16 %v1392, %v1388
        %v1514 = vpack.c.bf16 %v1400, %v1396
        %v1515 = vpack.c.bf16 %v1402, %v1398
        %v1516 = vpack.c.bf16 %v1410, %v1406
        %v1517 = vpack.c.bf16 %v1412, %v1408
        %v1518 = vpack.c.bf16 %v1420, %v1416
        %v1519 = vpack.c.bf16 %v1422, %v1418
        %v1520 = vpack.c.bf16 %v1430, %v1426
        %v1521 = vpack.c.bf16 %v1432, %v1428
        %v1522 = vpack.c.bf16 %v1440, %v1436
        %v1523 = vpack.c.bf16 %v1442, %v1438
        %v1524 = vpack.c.bf16 %v1450, %v1446
        %v1525 = vpack.c.bf16 %v1452, %v1448
        %v1526 = vpack.c.bf16 %v1460, %v1456
        %v1527 = vpack.c.bf16 %v1462, %v1458
        %v1528 = vpack.c.bf16 %v1469, %v1466
        %v1529 = vpack.c.bf16 %v1475, %v1472
        %v1530 = vpack.c.bf16 %v1481, %v1478
        %v1531 = vpack.c.bf16 %v1487, %v1484
        %v1532 = vpack.c.bf16 %v1493, %v1490
        %v1533 = vpack.c.bf16 %v1499, %v1496
        %v1534 = vpack.c.bf16 %v1505, %v1502
        %v1535 = vpack.c.bf16 %v1511, %v1508
        %v1536 = vsub.bf16 %v1512, %v1528
        %v1537 = vsub.bf16 %v1513, %v1528
        %v1538 = vsub.bf16 %v1514, %v1529
        %v1539 = vsub.bf16 %v1515, %v1529
        %v1540 = vsub.bf16 %v1516, %v1530
        %v1541 = vsub.bf16 %v1517, %v1530
        %v1542 = vsub.bf16 %v1518, %v1531
        %v1543 = vsub.bf16 %v1519, %v1531
        %v1544 = vsub.bf16 %v1520, %v1532
        %v1545 = vsub.bf16 %v1521, %v1532
        %v1546 = vsub.bf16 %v1522, %v1533
        %v1547 = vsub.bf16 %v1523, %v1533
        %v1548 = vsub.bf16 %v1524, %v1534
        %v1549 = vsub.bf16 %v1525, %v1534
        %v1550 = vsub.bf16 %v1526, %v1535
        %v1551 = vsub.bf16 %v1527, %v1535
        %v1553 = vmul.bf16 %v1536, 1069105081
        %v1554 = vpow.bf16.pop %v1553
        %v1556 = vmul.bf16 %v1537, 1069105081
        %v1557 = vpow.bf16.pop %v1556
        %v1559 = vmul.bf16 %v1538, 1069105081
        %v1560 = vpow.bf16.pop %v1559
        %v1562 = vmul.bf16 %v1539, 1069105081
        %v1563 = vpow.bf16.pop %v1562
        %v1565 = vmul.bf16 %v1540, 1069105081
        %v1566 = vpow.bf16.pop %v1565
        %v1568 = vmul.bf16 %v1541, 1069105081
        %v1569 = vpow.bf16.pop %v1568
        %v1571 = vmul.bf16 %v1542, 1069105081
        %v1572 = vpow.bf16.pop %v1571
        %v1574 = vmul.bf16 %v1543, 1069105081
        %v1575 = vpow.bf16.pop %v1574
        %v1577 = vmul.bf16 %v1544, 1069105081
        %v1578 = vpow.bf16.pop %v1577
        %v1580 = vmul.bf16 %v1545, 1069105081
        %v1581 = vpow.bf16.pop %v1580
        %v1583 = vmul.bf16 %v1546, 1069105081
        %v1584 = vpow.bf16.pop %v1583
        %v1586 = vmul.bf16 %v1547, 1069105081
        %v1587 = vpow.bf16.pop %v1586
        %v1589 = vmul.bf16 %v1548, 1069105081
        %v1590 = vpow.bf16.pop %v1589
        %v1592 = vmul.bf16 %v1549, 1069105081
        %v1593 = vpow.bf16.pop %v1592
        %v1595 = vmul.bf16 %v1550, 1069105081
        %v1596 = vpow.bf16.pop %v1595
        %v1598 = vmul.bf16 %v1551, 1069105081
        %v1599 = vpow.bf16.pop %v1598
        %1600 = vmatprep.subr.bf16.mxu0 0
        %1601 = vmatpush1.bf16.msra.mxu0 %v1262
        %1602 = vmatprep.subr.bf16.mxu0 0
        %1603 = vmatpush1.bf16.msra.mxu0 %v1263
        %1604 = vmatprep.subr.bf16.mxu0 0
        %1605 = vmatpush1.bf16.msra.mxu0 %v1264
        %1606 = vmatprep.subr.bf16.mxu0 0
        %1607 = vmatpush1.bf16.msra.mxu0 %v1265
        %1608 = vmatprep.subr.bf16.mxu0 0
        %1609 = vmatpush1.bf16.msra.mxu0 %v1266
        %1610 = vmatprep.subr.bf16.mxu0 0
        %1611 = vmatpush1.bf16.msra.mxu0 %v1267
        %1612 = vmatprep.subr.bf16.mxu0 0
        %1613 = vmatpush1.bf16.msra.mxu0 %v1268
        %1614 = vmatprep.subr.bf16.mxu0 0
        %1615 = vmatpush1.bf16.msra.mxu0 %v1269
        %1616 = vmatprep.subr.bf16.mxu0 0
        %1617 = vmatpush1.bf16.msra.mxu0 %v1270
        %1618 = vmatprep.subr.bf16.mxu0 0
        %1619 = vmatpush1.bf16.msra.mxu0 %v1271
        %1620 = vmatprep.subr.bf16.mxu0 0
        %1621 = vmatpush1.bf16.msra.mxu0 %v1272
        %1622 = vmatprep.subr.bf16.mxu0 0
        %1623 = vmatpush1.bf16.msra.mxu0 %v1273
        %1624 = vmatprep.subr.bf16.mxu0 0
        %1625 = vmatpush1.bf16.msra.mxu0 %v1274
        %1626 = vmatprep.subr.bf16.mxu0 0
        %1627 = vmatpush1.bf16.msra.mxu0 %v1275
        %1628 = vmatprep.subr.bf16.mxu0 0
        %1629 = vmatpush1.bf16.msra.mxu0 %v1276
        %1630 = vmatprep.subr.bf16.mxu0 0
        %1631 = vmatpush1.bf16.msra.mxu0 %v1277
        %1632 = vmatprep.mubr.bf16.mxu0 %v1557
        %1633 = vmatmul.mubr.bf16.gmra.mrb[0].mxu0 %v1554
        %v1634 = vpop.f32.mrb[0].mxu0
        %v1635 = vadd.f32 0.0, %v1634
        %v1636 = vpop.f32.mrb[0].mxu0
        %v1637 = vpop.f32.mrb[0].mxu0
        %v1638 = vadd.f32 0.0, %v1637
        %v1639 = vpop.f32.mrb[0].mxu0
        %1640 = vmatprep.mubr.bf16.mxu0 %v1563
        %1641 = vmatmul.mubr.bf16.gmra.mrb[0].mxu0 %v1560
        %v1642 = vpop.f32.mrb[0].mxu0
        %v1643 = vadd.f32 0.0, %v1642
        %v1644 = vpop.f32.mrb[0].mxu0
        %v1645 = vpop.f32.mrb[0].mxu0
        %v1646 = vadd.f32 0.0, %v1645
        %v1647 = vpop.f32.mrb[0].mxu0
        %1648 = vmatprep.mubr.bf16.mxu0 %v1569
        %1649 = vmatmul.mubr.bf16.gmra.mrb[0].mxu0 %v1566
        %v1650 = vpop.f32.mrb[0].mxu0
        %v1651 = vadd.f32 0.0, %v1650
        %v1652 = vpop.f32.mrb[0].mxu0
        %v1653 = vpop.f32.mrb[0].mxu0
        %v1654 = vadd.f32 0.0, %v1653
        %v1655 = vpop.f32.mrb[0].mxu0
        %1656 = vmatprep.mubr.bf16.mxu0 %v1575
        %1657 = vmatmul.mubr.bf16.gmra.mrb[0].mxu0 %v1572
        %v1658 = vpop.f32.mrb[0].mxu0
        %v1659 = vadd.f32 0.0, %v1658
        %v1660 = vpop.f32.mrb[0].mxu0
        %v1661 = vpop.f32.mrb[0].mxu0
        %v1662 = vadd.f32 0.0, %v1661
        %v1663 = vpop.f32.mrb[0].mxu0
        %1664 = vmatprep.mubr.bf16.mxu0 %v1581
        %1665 = vmatmul.mubr.bf16.gmra.mrb[0].mxu0 %v1578
        %v1666 = vpop.f32.mrb[0].mxu0
        %v1667 = vadd.f32 0.0, %v1666
        %v1668 = vpop.f32.mrb[0].mxu0
        %v1669 = vpop.f32.mrb[0].mxu0
        %v1670 = vadd.f32 0.0, %v1669
        %v1671 = vpop.f32.mrb[0].mxu0
        %1672 = vmatprep.mubr.bf16.mxu0 %v1587
        %1673 = vmatmul.mubr.bf16.gmra.mrb[0].mxu0 %v1584
        %v1674 = vpop.f32.mrb[0].mxu0
        %v1675 = vadd.f32 0.0, %v1674
        %v1676 = vpop.f32.mrb[0].mxu0
        %v1677 = vpop.f32.mrb[0].mxu0
        %v1678 = vadd.f32 0.0, %v1677
        %v1679 = vpop.f32.mrb[0].mxu0
        %1680 = vmatprep.mubr.bf16.mxu0 %v1593
        %1681 = vmatmul.mubr.bf16.gmra.mrb[0].mxu0 %v1590
        %v1682 = vpop.f32.mrb[0].mxu0
        %v1683 = vadd.f32 0.0, %v1682
        %v1684 = vpop.f32.mrb[0].mxu0
        %v1685 = vpop.f32.mrb[0].mxu0
        %v1686 = vadd.f32 0.0, %v1685
        %v1687 = vpop.f32.mrb[0].mxu0
        %1688 = vmatprep.mubr.bf16.mxu0 %v1599
        %1689 = vmatmul.mubr.bf16.gmra.mrb[0].mxu0 %v1596
        %v1690 = vpop.f32.mrb[0].mxu0
        %v1691 = vadd.f32 0.0, %v1690
        %v1692 = vpop.f32.mrb[0].mxu0
        %v1693 = vpop.f32.mrb[0].mxu0
        %v1694 = vadd.f32 0.0, %v1693
        %v1695 = vpop.f32.mrb[0].mxu0
        %1696 = vdwg.mxu0
        %1697 = vmatprep.subr.bf16.mxu0 0
        %1698 = vmatpush1.bf16.msra.mxu0 1065369472
        %1699 = vmatprep.subr.bf16.mxu0 0
        %1700 = vmatpush1.bf16.msra.mxu0 1065369472
        %1701 = vmatprep.subr.bf16.mxu0 0
        %1702 = vmatpush1.bf16.msra.mxu0 1065369472
        %1703 = vmatprep.subr.bf16.mxu0 0
        %1704 = vmatpush1.bf16.msra.mxu0 1065369472
        %1705 = vmatprep.subr.bf16.mxu0 0
        %1706 = vmatpush1.bf16.msra.mxu0 1065369472
        %1707 = vmatprep.subr.bf16.mxu0 0
        %1708 = vmatpush1.bf16.msra.mxu0 1065369472
        %1709 = vmatprep.subr.bf16.mxu0 0
        %1710 = vmatpush1.bf16.msra.mxu0 1065369472
        %1711 = vmatprep.subr.bf16.mxu0 0
        %1712 = vmatpush1.bf16.msra.mxu0 1065369472
        %1713 = vmatprep.subr.bf16.mxu0 0
        %1714 = vmatpush1.bf16.msra.mxu0 1065369472
        %1715 = vmatprep.subr.bf16.mxu0 0
        %1716 = vmatpush1.bf16.msra.mxu0 1065369472
        %1717 = vmatprep.subr.bf16.mxu0 0
        %1718 = vmatpush1.bf16.msra.mxu0 1065369472
        %1719 = vmatprep.subr.bf16.mxu0 0
        %1720 = vmatpush1.bf16.msra.mxu0 1065369472
        %1721 = vmatprep.subr.bf16.mxu0 0
        %1722 = vmatpush1.bf16.msra.mxu0 1065369472
        %1723 = vmatprep.subr.bf16.mxu0 0
        %1724 = vmatpush1.bf16.msra.mxu0 1065369472
        %1725 = vmatprep.subr.bf16.mxu0 0
        %1726 = vmatpush1.bf16.msra.mxu0 1065369472
        %1727 = vmatprep.subr.bf16.mxu0 0
        %1728 = vmatpush1.bf16.msra.mxu0 1065369472
        %1729 = vmatprep.mubr.bf16.mxu0 %v1557
        %1730 = vmatmul.mubr.bf16.gmra.mrb[0].mxu0 %v1554
        %v1731 = vpop.f32.mrb[0].mxu0
        %v1732 = vadd.f32 0.0, %v1731
        %v1733 = vpop.f32.mrb[0].mxu0
        %v1734 = vpop.f32.mrb[0].mxu0
        %v1735 = vadd.f32 0.0, %v1734
        %v1736 = vpop.f32.mrb[0].mxu0
        %1737 = vmatprep.mubr.bf16.mxu0 %v1563
        %1738 = vmatmul.mubr.bf16.gmra.mrb[0].mxu0 %v1560
        %v1739 = vpop.f32.mrb[0].mxu0
        %v1740 = vadd.f32 0.0, %v1739
        %v1741 = vpop.f32.mrb[0].mxu0
        %v1742 = vpop.f32.mrb[0].mxu0
        %v1743 = vadd.f32 0.0, %v1742
        %v1744 = vpop.f32.mrb[0].mxu0
        %1745 = vmatprep.mubr.bf16.mxu0 %v1569
        %1746 = vmatmul.mubr.bf16.gmra.mrb[0].mxu0 %v1566
        %v1747 = vpop.f32.mrb[0].mxu0
        %v1748 = vadd.f32 0.0, %v1747
        %v1749 = vpop.f32.mrb[0].mxu0
        %v1750 = vpop.f32.mrb[0].mxu0
        %v1751 = vadd.f32 0.0, %v1750
        %v1752 = vpop.f32.mrb[0].mxu0
        %1753 = vmatprep.mubr.bf16.mxu0 %v1575
        %1754 = vmatmul.mubr.bf16.gmra.mrb[0].mxu0 %v1572
        %v1755 = vpop.f32.mrb[0].mxu0
        %v1756 = vadd.f32 0.0, %v1755
        %v1757 = vpop.f32.mrb[0].mxu0
        %v1758 = vpop.f32.mrb[0].mxu0
        %v1759 = vadd.f32 0.0, %v1758
        %v1760 = vpop.f32.mrb[0].mxu0
        %1761 = vmatprep.mubr.bf16.mxu0 %v1581
        %1762 = vmatmul.mubr.bf16.gmra.mrb[0].mxu0 %v1578
        %v1763 = vpop.f32.mrb[0].mxu0
        %v1764 = vadd.f32 0.0, %v1763
        %v1765 = vpop.f32.mrb[0].mxu0
        %v1766 = vpop.f32.mrb[0].mxu0
        %v1767 = vadd.f32 0.0, %v1766
        %v1768 = vpop.f32.mrb[0].mxu0
        %1769 = vmatprep.mubr.bf16.mxu0 %v1587
        %1770 = vmatmul.mubr.bf16.gmra.mrb[0].mxu0 %v1584
        %v1771 = vpop.f32.mrb[0].mxu0
        %v1772 = vadd.f32 0.0, %v1771
        %v1773 = vpop.f32.mrb[0].mxu0
        %v1774 = vpop.f32.mrb[0].mxu0
        %v1775 = vadd.f32 0.0, %v1774
        %v1776 = vpop.f32.mrb[0].mxu0
        %1777 = vmatprep.mubr.bf16.mxu0 %v1593
        %1778 = vmatmul.mubr.bf16.gmra.mrb[0].mxu0 %v1590
        %v1779 = vpop.f32.mrb[0].mxu0
        %v1780 = vadd.f32 0.0, %v1779
        %v1781 = vpop.f32.mrb[0].mxu0
        %v1782 = vpop.f32.mrb[0].mxu0
        %v1783 = vadd.f32 0.0, %v1782
        %v1784 = vpop.f32.mrb[0].mxu0
        %1785 = vmatprep.mubr.bf16.mxu0 %v1599
        %1786 = vmatmul.mubr.bf16.gmra.mrb[0].mxu0 %v1596
        %v1787 = vpop.f32.mrb[0].mxu0
        %v1788 = vadd.f32 0.0, %v1787
        %v1789 = vpop.f32.mrb[0].mxu0
        %v1790 = vpop.f32.mrb[0].mxu0
        %v1791 = vadd.f32 0.0, %v1790
        %v1792 = vpop.f32.mrb[0].mxu0
        %1793 = vdwg.mxu0
        %v1794 = vrcp.pop %v1732
        %v1795 = vrcp.pop %v1735
        %v1796 = vrcp.pop %v1740
        %v1797 = vrcp.pop %v1743
        %v1798 = vrcp.pop %v1748
        %v1799 = vrcp.pop %v1751
        %v1800 = vrcp.pop %v1756
        %v1801 = vrcp.pop %v1759
        %v1802 = vrcp.pop %v1764
        %v1803 = vrcp.pop %v1767
        %v1804 = vrcp.pop %v1772
        %v1805 = vrcp.pop %v1775
        %v1806 = vrcp.pop %v1780
        %v1807 = vrcp.pop %v1783
        %v1808 = vrcp.pop %v1788
        %v1809 = vrcp.pop %v1791
        %1811 = vset.pattern.permute.xlu0 0
        %1812 = vperm.xlu0 %1811, %v1794
        %v1813 = vpop.permute.xlu0 %1812
        %1816 = vset.pattern.permute.xlu0 0
        %1817 = vperm.xlu0 %1816, %v1795
        %v1818 = vpop.permute.xlu0 %1817
        %1821 = vset.pattern.permute.xlu0 0
        %1822 = vperm.xlu0 %1821, %v1796
        %v1823 = vpop.permute.xlu0 %1822
        %1826 = vset.pattern.permute.xlu0 0
        %1827 = vperm.xlu0 %1826, %v1797
        %v1828 = vpop.permute.xlu0 %1827
        %1831 = vset.pattern.permute.xlu0 0
        %1832 = vperm.xlu0 %1831, %v1798
        %v1833 = vpop.permute.xlu0 %1832
        %1836 = vset.pattern.permute.xlu0 0
        %1837 = vperm.xlu0 %1836, %v1799
        %v1838 = vpop.permute.xlu0 %1837
        %1841 = vset.pattern.permute.xlu0 0
        %1842 = vperm.xlu0 %1841, %v1800
        %v1843 = vpop.permute.xlu0 %1842
        %1846 = vset.pattern.permute.xlu0 0
        %1847 = vperm.xlu0 %1846, %v1801
        %v1848 = vpop.permute.xlu0 %1847
        %1851 = vset.pattern.permute.xlu0 0
        %1852 = vperm.xlu0 %1851, %v1802
        %v1853 = vpop.permute.xlu0 %1852
        %1856 = vset.pattern.permute.xlu0 0
        %1857 = vperm.xlu0 %1856, %v1803
        %v1858 = vpop.permute.xlu0 %1857
        %1861 = vset.pattern.permute.xlu0 0
        %1862 = vperm.xlu0 %1861, %v1804
        %v1863 = vpop.permute.xlu0 %1862
        %1866 = vset.pattern.permute.xlu0 0
        %1867 = vperm.xlu0 %1866, %v1805
        %v1868 = vpop.permute.xlu0 %1867
        %1871 = vset.pattern.permute.xlu0 0
        %1872 = vperm.xlu0 %1871, %v1806
        %v1873 = vpop.permute.xlu0 %1872
        %1876 = vset.pattern.permute.xlu0 0
        %1877 = vperm.xlu0 %1876, %v1807
        %v1878 = vpop.permute.xlu0 %1877
        %1881 = vset.pattern.permute.xlu0 0
        %1882 = vperm.xlu0 %1881, %v1808
        %v1883 = vpop.permute.xlu0 %1882
        %1886 = vset.pattern.permute.xlu0 0
        %1887 = vperm.xlu0 %1886, %v1809
        %v1888 = vpop.permute.xlu0 %1887
        %v1890 = vmul.f32 %v1635, %v1813
        %v1891 = vmul.f32 %v1638, %v1818
        %v1892 = vmul.f32 %v1643, %v1823
        %v1893 = vmul.f32 %v1646, %v1828
        %v1894 = vmul.f32 %v1651, %v1833
        %v1895 = vmul.f32 %v1654, %v1838
        %v1896 = vmul.f32 %v1659, %v1843
        %v1897 = vmul.f32 %v1662, %v1848
        %v1898 = vmul.f32 %v1667, %v1853
        %v1899 = vmul.f32 %v1670, %v1858
        %v1900 = vmul.f32 %v1675, %v1863
        %v1901 = vmul.f32 %v1678, %v1868
        %v1902 = vmul.f32 %v1683, %v1873
        %v1903 = vmul.f32 %v1686, %v1878
        %v1904 = vmul.f32 %v1691, %v1883
        %v1905 = vmul.f32 %v1694, %v1888
        %1906 = vst.msk [vmem:[#allocation4] sm:$0xff] %vm1278, %v1890
        %1907 = vst.msk [vmem:[#allocation4 + $0x8] sm:$0xff] %vm1278, %v1891
        %1908 = vst.msk [vmem:[#allocation4 + $0x10] sm:$0xff] %vm1278, %v1892
        %1909 = vst.msk [vmem:[#allocation4 + $0x18] sm:$0xff] %vm1278, %v1893
        %1910 = vst.msk [vmem:[#allocation4 + $0x20] sm:$0xff] %vm1278, %v1894
        %1911 = vst.msk [vmem:[#allocation4 + $0x28] sm:$0xff] %vm1278, %v1895
        %1912 = vst.msk [vmem:[#allocation4 + $0x30] sm:$0xff] %vm1278, %v1896
        %1913 = vst.msk [vmem:[#allocation4 + $0x38] sm:$0xff] %vm1278, %v1897
        %1914 = vst.msk [vmem:[#allocation4 + $0x40] sm:$0xff] %vm1278, %v1898
        %1915 = vst.msk [vmem:[#allocation4 + $0x48] sm:$0xff] %vm1278, %v1899
        %1916 = vst.msk [vmem:[#allocation4 + $0x50] sm:$0xff] %vm1278, %v1900
        %1917 = vst.msk [vmem:[#allocation4 + $0x58] sm:$0xff] %vm1278, %v1901
        %1918 = vst.msk [vmem:[#allocation4 + $0x60] sm:$0xff] %vm1278, %v1902
        %1919 = vst.msk [vmem:[#allocation4 + $0x68] sm:$0xff] %vm1278, %v1903
        %1920 = vst.msk [vmem:[#allocation4 + $0x70] sm:$0xff] %vm1278, %v1904
        %1921 = vst.msk [vmem:[#allocation4 + $0x78] sm:$0xff] %vm1278, %v1905
        %v1922 = vld [vmem:[#allocation2] sm:$0xff]
        %v1923 = vld [vmem:[#allocation2 + $0x8] sm:$0xff]
        %v1924 = vld [vmem:[#allocation2 + $0x10] sm:$0xff]
        %v1925 = vld [vmem:[#allocation2 + $0x18] sm:$0xff]
        %v1926 = vld [vmem:[#allocation2 + $0x20] sm:$0xff]
        %v1927 = vld [vmem:[#allocation2 + $0x28] sm:$0xff]
        %v1928 = vld [vmem:[#allocation2 + $0x30] sm:$0xff]
        %v1929 = vld [vmem:[#allocation2 + $0x38] sm:$0xff]
        %v1930 = vld [vmem:[#allocation3] sm:$0xff]
        %v1931 = vld [vmem:[#allocation3 + $0x8] sm:$0xff]
        %v1932 = vld [vmem:[#allocation3 + $0x10] sm:$0xff]
        %v1933 = vld [vmem:[#allocation3 + $0x18] sm:$0xff]
        %v1934 = vld [vmem:[#allocation3 + $0x20] sm:$0xff]
        %v1935 = vld [vmem:[#allocation3 + $0x28] sm:$0xff]
        %v1936 = vld [vmem:[#allocation3 + $0x30] sm:$0xff]
        %v1937 = vld [vmem:[#allocation3 + $0x38] sm:$0xff]
        %v1938 = vld [vmem:[#allocation3 + $0x40] sm:$0xff]
        %v1939 = vld [vmem:[#allocation3 + $0x48] sm:$0xff]
        %v1940 = vld [vmem:[#allocation3 + $0x50] sm:$0xff]
        %v1941 = vld [vmem:[#allocation3 + $0x58] sm:$0xff]
        %v1942 = vld [vmem:[#allocation3 + $0x60] sm:$0xff]
        %v1943 = vld [vmem:[#allocation3 + $0x68] sm:$0xff]
        %v1944 = vld [vmem:[#allocation3 + $0x70] sm:$0xff]
        %v1945 = vld [vmem:[#allocation3 + $0x78] sm:$0xff]
        %v1946 = vld [vmem:[#allocation3 + $0x80] sm:$0xff]
        %v1947 = vld [vmem:[#allocation3 + $0x88] sm:$0xff]
        %v1948 = vld [vmem:[#allocation3 + $0x90] sm:$0xff]
        %v1949 = vld [vmem:[#allocation3 + $0x98] sm:$0xff]
        %v1950 = vld [vmem:[#allocation3 + $0xa0] sm:$0xff]
        %v1951 = vld [vmem:[#allocation3 + $0xa8] sm:$0xff]
        %v1952 = vld [vmem:[#allocation3 + $0xb0] sm:$0xff]
        %v1953 = vld [vmem:[#allocation3 + $0xb8] sm:$0xff]
        %v1954 = vld [vmem:[#allocation3 + $0xc0] sm:$0xff]
        %v1955 = vld [vmem:[#allocation3 + $0xc8] sm:$0xff]
        %v1956 = vld [vmem:[#allocation3 + $0xd0] sm:$0xff]
        %v1957 = vld [vmem:[#allocation3 + $0xd8] sm:$0xff]
        %v1958 = vld [vmem:[#allocation3 + $0xe0] sm:$0xff]
        %v1959 = vld [vmem:[#allocation3 + $0xe8] sm:$0xff]
        %v1960 = vld [vmem:[#allocation3 + $0xf0] sm:$0xff]
        %v1961 = vld [vmem:[#allocation3 + $0xf8] sm:$0xff]
        %1970 = vrot.lane.b32.xlu0 %v1922, 112
        %v1971 = vpop.permute.xlu0 %1970
        %1972 = vrot.lane.b32.xlu0 %v1923, 112
        %v1973 = vpop.permute.xlu0 %1972
        %1974 = vrot.lane.b32.xlu0 %v1924, 112
        %v1975 = vpop.permute.xlu0 %1974
        %1976 = vrot.lane.b32.xlu0 %v1925, 112
        %v1977 = vpop.permute.xlu0 %1976
        %1978 = vrot.lane.b32.xlu0 %v1926, 112
        %v1979 = vpop.permute.xlu0 %1978
        %1980 = vrot.lane.b32.xlu0 %v1927, 112
        %v1981 = vpop.permute.xlu0 %1980
        %1982 = vrot.lane.b32.xlu0 %v1928, 112
        %v1983 = vpop.permute.xlu0 %1982
        %1984 = vrot.lane.b32.xlu0 %v1929, 112
        %v1985 = vpop.permute.xlu0 %1984
        %2002 = vrot.lane.b32.xlu0 %v1930, 112
        %v2003 = vpop.permute.xlu0 %2002
        %2004 = vrot.lane.b32.xlu0 %v1931, 112
        %v2005 = vpop.permute.xlu0 %2004
        %2006 = vrot.lane.b32.xlu0 %v1932, 112
        %v2007 = vpop.permute.xlu0 %2006
        %2008 = vrot.lane.b32.xlu0 %v1933, 112
        %v2009 = vpop.permute.xlu0 %2008
        %2010 = vrot.lane.b32.xlu0 %v1934, 112
        %v2011 = vpop.permute.xlu0 %2010
        %2012 = vrot.lane.b32.xlu0 %v1935, 112
        %v2013 = vpop.permute.xlu0 %2012
        %2014 = vrot.lane.b32.xlu0 %v1936, 112
        %v2015 = vpop.permute.xlu0 %2014
        %2016 = vrot.lane.b32.xlu0 %v1937, 112
        %v2017 = vpop.permute.xlu0 %2016
        %2018 = vrot.lane.b32.xlu0 %v1938, 112
        %v2019 = vpop.permute.xlu0 %2018
        %2020 = vrot.lane.b32.xlu0 %v1939, 112
        %v2021 = vpop.permute.xlu0 %2020
        %2022 = vrot.lane.b32.xlu0 %v1940, 112
        %v2023 = vpop.permute.xlu0 %2022
        %2024 = vrot.lane.b32.xlu0 %v1941, 112
        %v2025 = vpop.permute.xlu0 %2024
        %2026 = vrot.lane.b32.xlu0 %v1942, 112
        %v2027 = vpop.permute.xlu0 %2026
        %2028 = vrot.lane.b32.xlu0 %v1943, 112
        %v2029 = vpop.permute.xlu0 %2028
        %2030 = vrot.lane.b32.xlu0 %v1944, 112
        %v2031 = vpop.permute.xlu0 %2030
        %2032 = vrot.lane.b32.xlu0 %v1945, 112
        %v2033 = vpop.permute.xlu0 %2032
        %v2035 = vsel %vm1278, %v1971, 0
        %v2038 = vsel %vm1278, %v1973, 0
        %v2041 = vsel %vm1278, %v1975, 0
        %v2044 = vsel %vm1278, %v1977, 0
        %v2047 = vsel %vm1278, %v1979, 0
        %v2050 = vsel %vm1278, %v1981, 0
        %v2053 = vsel %vm1278, %v1983, 0
        %v2056 = vsel %vm1278, %v1985, 0
        %v2059 = vsel %vm1278, %v2003, 0
        %v2062 = vsel %vm1278, %v2005, 0
        %v2065 = vsel %vm1278, %v2007, 0
        %v2068 = vsel %vm1278, %v2009, 0
        %v2071 = vsel %vm1278, %v2011, 0
        %v2074 = vsel %vm1278, %v2013, 0
        %v2077 = vsel %vm1278, %v2015, 0
        %v2080 = vsel %vm1278, %v2017, 0
        %v2083 = vsel %vm1278, %v2019, 0
        %v2086 = vsel %vm1278, %v2021, 0
        %v2089 = vsel %vm1278, %v2023, 0
        %v2092 = vsel %vm1278, %v2025, 0
        %v2095 = vsel %vm1278, %v2027, 0
        %v2098 = vsel %vm1278, %v2029, 0
        %v2101 = vsel %vm1278, %v2031, 0
        %v2104 = vsel %vm1278, %v2033, 0
        %2106 = vmatprep.subr.bf16.mxu0 0
        %2107 = vmatpush1.bf16.xpose.msra.mxu0 %v2059
        %2108 = vmatprep.subr.bf16.mxu0 0
        %2109 = vmatpush1.bf16.xpose.msra.mxu0 %v2062
        %2110 = vmatprep.subr.bf16.mxu0 0
        %2111 = vmatpush1.bf16.xpose.msra.mxu0 %v2065
        %2112 = vmatprep.subr.bf16.mxu0 0
        %2113 = vmatpush1.bf16.xpose.msra.mxu0 %v2068
        %2114 = vmatprep.subr.bf16.mxu0 0
        %2115 = vmatpush1.bf16.xpose.msra.mxu0 %v2071
        %2116 = vmatprep.subr.bf16.mxu0 0
        %2117 = vmatpush1.bf16.xpose.msra.mxu0 %v2074
        %2118 = vmatprep.subr.bf16.mxu0 0
        %2119 = vmatpush1.bf16.xpose.msra.mxu0 %v2077
        %2120 = vmatprep.subr.bf16.mxu0 0
        %2121 = vmatpush1.bf16.xpose.msra.mxu0 %v2080
        %2122 = vmatprep.subr.bf16.mxu0 0
        %2123 = vmatpush1.bf16.xpose.msra.mxu0 %v2083
        %2124 = vmatprep.subr.bf16.mxu0 0
        %2125 = vmatpush1.bf16.xpose.msra.mxu0 %v2086
        %2126 = vmatprep.subr.bf16.mxu0 0
        %2127 = vmatpush1.bf16.xpose.msra.mxu0 %v2089
        %2128 = vmatprep.subr.bf16.mxu0 0
        %2129 = vmatpush1.bf16.xpose.msra.mxu0 %v2092
        %2130 = vmatprep.subr.bf16.mxu0 0
        %2131 = vmatpush1.bf16.xpose.msra.mxu0 %v2095
        %2132 = vmatprep.subr.bf16.mxu0 0
        %2133 = vmatpush1.bf16.xpose.msra.mxu0 %v2098
        %2134 = vmatprep.subr.bf16.mxu0 0
        %2135 = vmatpush1.bf16.xpose.msra.mxu0 %v2101
        %2136 = vmatprep.subr.bf16.mxu0 0
        %2137 = vmatpush1.bf16.xpose.msra.mxu0 %v2104
        %2138 = vmatprep.mubr.bf16.mxu0 0
        %2139 = vmatmul.mubr.bf16.gmra.mrb[0].mxu0 %v2035
        %v2140 = vpop.f32.mrb[0].mxu0
        %v2141 = vadd.f32 0.0, %v2140
        %v2142 = vpop.f32.mrb[0].mxu0
        %v2143 = vadd.f32 0.0, %v2142
        %v2144 = vpop.f32.mrb[0].mxu0
        %v2145 = vadd.f32 0.0, %v2144
        %v2146 = vpop.f32.mrb[0].mxu0
        %v2147 = vadd.f32 0.0, %v2146
        %2148 = vmatprep.mubr.bf16.mxu0 0
        %2149 = vmatmul.mubr.bf16.gmra.mrb[0].mxu0 %v2038
        %v2150 = vpop.f32.mrb[0].mxu0
        %v2151 = vadd.f32 0.0, %v2150
        %v2152 = vpop.f32.mrb[0].mxu0
        %v2153 = vadd.f32 0.0, %v2152
        %v2154 = vpop.f32.mrb[0].mxu0
        %v2155 = vadd.f32 0.0, %v2154
        %v2156 = vpop.f32.mrb[0].mxu0
        %v2157 = vadd.f32 0.0, %v2156
        %2158 = vmatprep.mubr.bf16.mxu0 0
        %2159 = vmatmul.mubr.bf16.gmra.mrb[0].mxu0 %v2041
        %v2160 = vpop.f32.mrb[0].mxu0
        %v2161 = vadd.f32 0.0, %v2160
        %v2162 = vpop.f32.mrb[0].mxu0
        %v2163 = vadd.f32 0.0, %v2162
        %v2164 = vpop.f32.mrb[0].mxu0
        %v2165 = vadd.f32 0.0, %v2164
        %v2166 = vpop.f32.mrb[0].mxu0
        %v2167 = vadd.f32 0.0, %v2166
        %2168 = vmatprep.mubr.bf16.mxu0 0
        %2169 = vmatmul.mubr.bf16.gmra.mrb[0].mxu0 %v2044
        %v2170 = vpop.f32.mrb[0].mxu0
        %v2171 = vadd.f32 0.0, %v2170
        %v2172 = vpop.f32.mrb[0].mxu0
        %v2173 = vadd.f32 0.0, %v2172
        %v2174 = vpop.f32.mrb[0].mxu0
        %v2175 = vadd.f32 0.0, %v2174
        %v2176 = vpop.f32.mrb[0].mxu0
        %v2177 = vadd.f32 0.0, %v2176
        %2178 = vmatprep.mubr.bf16.mxu0 0
        %2179 = vmatmul.mubr.bf16.gmra.mrb[0].mxu0 %v2047
        %v2180 = vpop.f32.mrb[0].mxu0
        %v2181 = vadd.f32 0.0, %v2180
        %v2182 = vpop.f32.mrb[0].mxu0
        %v2183 = vadd.f32 0.0, %v2182
        %v2184 = vpop.f32.mrb[0].mxu0
        %v2185 = vadd.f32 0.0, %v2184
        %v2186 = vpop.f32.mrb[0].mxu0
        %v2187 = vadd.f32 0.0, %v2186
        %2188 = vmatprep.mubr.bf16.mxu0 0
        %2189 = vmatmul.mubr.bf16.gmra.mrb[0].mxu0 %v2050
        %v2190 = vpop.f32.mrb[0].mxu0
        %v2191 = vadd.f32 0.0, %v2190
        %v2192 = vpop.f32.mrb[0].mxu0
        %v2193 = vadd.f32 0.0, %v2192
        %v2194 = vpop.f32.mrb[0].mxu0
        %v2195 = vadd.f32 0.0, %v2194
        %v2196 = vpop.f32.mrb[0].mxu0
        %v2197 = vadd.f32 0.0, %v2196
        %2198 = vmatprep.mubr.bf16.mxu0 0
        %2199 = vmatmul.mubr.bf16.gmra.mrb[0].mxu0 %v2053
        %v2200 = vpop.f32.mrb[0].mxu0
        %v2201 = vadd.f32 0.0, %v2200
        %v2202 = vpop.f32.mrb[0].mxu0
        %v2203 = vadd.f32 0.0, %v2202
        %v2204 = vpop.f32.mrb[0].mxu0
        %v2205 = vadd.f32 0.0, %v2204
        %v2206 = vpop.f32.mrb[0].mxu0
        %v2207 = vadd.f32 0.0, %v2206
        %2208 = vmatprep.mubr.bf16.mxu0 0
        %2209 = vmatmul.mubr.bf16.gmra.mrb[0].mxu0 %v2056
        %v2210 = vpop.f32.mrb[0].mxu0
        %v2211 = vadd.f32 0.0, %v2210
        %v2212 = vpop.f32.mrb[0].mxu0
        %v2213 = vadd.f32 0.0, %v2212
        %v2214 = vpop.f32.mrb[0].mxu0
        %v2215 = vadd.f32 0.0, %v2214
        %v2216 = vpop.f32.mrb[0].mxu0
        %v2217 = vadd.f32 0.0, %v2216
        %2218 = vdwg.mxu0
        %v2219 = vmax.f32 %v2141, %v2143
        %2220 = vmax.xlane.f32.xlu0 %v2219
        %v2221 = vpop.xlane.xlu0 %2220
        %v2222 = vmax.f32 %v2145, %v2147
        %2223 = vmax.xlane.f32.xlu0 %v2222
        %v2224 = vpop.xlane.xlu0 %2223
        %v2225 = vmax.f32 %v2151, %v2153
        %2226 = vmax.xlane.f32.xlu0 %v2225
        %v2227 = vpop.xlane.xlu0 %2226
        %v2228 = vmax.f32 %v2155, %v2157
        %2229 = vmax.xlane.f32.xlu0 %v2228
        %v2230 = vpop.xlane.xlu0 %2229
        %v2231 = vmax.f32 %v2161, %v2163
        %2232 = vmax.xlane.f32.xlu0 %v2231
        %v2233 = vpop.xlane.xlu0 %2232
        %v2234 = vmax.f32 %v2165, %v2167
        %2235 = vmax.xlane.f32.xlu0 %v2234
        %v2236 = vpop.xlane.xlu0 %2235
        %v2237 = vmax.f32 %v2171, %v2173
        %2238 = vmax.xlane.f32.xlu0 %v2237
        %v2239 = vpop.xlane.xlu0 %2238
        %v2240 = vmax.f32 %v2175, %v2177
        %2241 = vmax.xlane.f32.xlu0 %v2240
        %v2242 = vpop.xlane.xlu0 %2241
        %v2243 = vmax.f32 %v2181, %v2183
        %2244 = vmax.xlane.f32.xlu0 %v2243
        %v2245 = vpop.xlane.xlu0 %2244
        %v2246 = vmax.f32 %v2185, %v2187
        %2247 = vmax.xlane.f32.xlu0 %v2246
        %v2248 = vpop.xlane.xlu0 %2247
        %v2249 = vmax.f32 %v2191, %v2193
        %2250 = vmax.xlane.f32.xlu0 %v2249
        %v2251 = vpop.xlane.xlu0 %2250
        %v2252 = vmax.f32 %v2195, %v2197
        %2253 = vmax.xlane.f32.xlu0 %v2252
        %v2254 = vpop.xlane.xlu0 %2253
        %v2255 = vmax.f32 %v2201, %v2203
        %2256 = vmax.xlane.f32.xlu0 %v2255
        %v2257 = vpop.xlane.xlu0 %2256
        %v2258 = vmax.f32 %v2205, %v2207
        %2259 = vmax.xlane.f32.xlu0 %v2258
        %v2260 = vpop.xlane.xlu0 %2259
        %v2261 = vmax.f32 %v2211, %v2213
        %2262 = vmax.xlane.f32.xlu0 %v2261
        %v2263 = vpop.xlane.xlu0 %2262
        %v2264 = vmax.f32 %v2215, %v2217
        %2265 = vmax.xlane.f32.xlu0 %v2264
        %v2266 = vpop.xlane.xlu0 %2265
        %v2267 = vpack.c.bf16 %v2145, %v2141
        %v2268 = vpack.c.bf16 %v2147, %v2143
        %v2269 = vpack.c.bf16 %v2155, %v2151
        %v2270 = vpack.c.bf16 %v2157, %v2153
        %v2271 = vpack.c.bf16 %v2165, %v2161
        %v2272 = vpack.c.bf16 %v2167, %v2163
        %v2273 = vpack.c.bf16 %v2175, %v2171
        %v2274 = vpack.c.bf16 %v2177, %v2173
        %v2275 = vpack.c.bf16 %v2185, %v2181
        %v2276 = vpack.c.bf16 %v2187, %v2183
        %v2277 = vpack.c.bf16 %v2195, %v2191
        %v2278 = vpack.c.bf16 %v2197, %v2193
        %v2279 = vpack.c.bf16 %v2205, %v2201
        %v2280 = vpack.c.bf16 %v2207, %v2203
        %v2281 = vpack.c.bf16 %v2215, %v2211
        %v2282 = vpack.c.bf16 %v2217, %v2213
        %v2283 = vpack.c.bf16 %v2224, %v2221
        %v2284 = vpack.c.bf16 %v2230, %v2227
        %v2285 = vpack.c.bf16 %v2236, %v2233
        %v2286 = vpack.c.bf16 %v2242, %v2239
        %v2287 = vpack.c.bf16 %v2248, %v2245
        %v2288 = vpack.c.bf16 %v2254, %v2251
        %v2289 = vpack.c.bf16 %v2260, %v2257
        %v2290 = vpack.c.bf16 %v2266, %v2263
        %v2291 = vsub.bf16 %v2267, %v2283
        %v2292 = vsub.bf16 %v2268, %v2283
        %v2293 = vsub.bf16 %v2269, %v2284
        %v2294 = vsub.bf16 %v2270, %v2284
        %v2295 = vsub.bf16 %v2271, %v2285
        %v2296 = vsub.bf16 %v2272, %v2285
        %v2297 = vsub.bf16 %v2273, %v2286
        %v2298 = vsub.bf16 %v2274, %v2286
        %v2299 = vsub.bf16 %v2275, %v2287
        %v2300 = vsub.bf16 %v2276, %v2287
        %v2301 = vsub.bf16 %v2277, %v2288
        %v2302 = vsub.bf16 %v2278, %v2288
        %v2303 = vsub.bf16 %v2279, %v2289
        %v2304 = vsub.bf16 %v2280, %v2289
        %v2305 = vsub.bf16 %v2281, %v2290
        %v2306 = vsub.bf16 %v2282, %v2290
        %v2308 = vmul.bf16 %v2291, 1069105081
        %v2309 = vpow.bf16.pop %v2308
        %v2311 = vmul.bf16 %v2292, 1069105081
        %v2312 = vpow.bf16.pop %v2311
        %v2314 = vmul.bf16 %v2293, 1069105081
        %v2315 = vpow.bf16.pop %v2314
        %v2317 = vmul.bf16 %v2294, 1069105081
        %v2318 = vpow.bf16.pop %v2317
        %v2320 = vmul.bf16 %v2295, 1069105081
        %v2321 = vpow.bf16.pop %v2320
        %v2323 = vmul.bf16 %v2296, 1069105081
        %v2324 = vpow.bf16.pop %v2323
        %v2326 = vmul.bf16 %v2297, 1069105081
        %v2327 = vpow.bf16.pop %v2326
        %v2329 = vmul.bf16 %v2298, 1069105081
        %v2330 = vpow.bf16.pop %v2329
        %v2332 = vmul.bf16 %v2299, 1069105081
        %v2333 = vpow.bf16.pop %v2332
        %v2335 = vmul.bf16 %v2300, 1069105081
        %v2336 = vpow.bf16.pop %v2335
        %v2338 = vmul.bf16 %v2301, 1069105081
        %v2339 = vpow.bf16.pop %v2338
        %v2341 = vmul.bf16 %v2302, 1069105081
        %v2342 = vpow.bf16.pop %v2341
        %v2344 = vmul.bf16 %v2303, 1069105081
        %v2345 = vpow.bf16.pop %v2344
        %v2347 = vmul.bf16 %v2304, 1069105081
        %v2348 = vpow.bf16.pop %v2347
        %v2350 = vmul.bf16 %v2305, 1069105081
        %v2351 = vpow.bf16.pop %v2350
        %v2353 = vmul.bf16 %v2306, 1069105081
        %v2354 = vpow.bf16.pop %v2353
        %2371 = vrot.lane.b32.xlu0 %v1946, 112
        %v2372 = vpop.permute.xlu0 %2371
        %2373 = vrot.lane.b32.xlu0 %v1947, 112
        %v2374 = vpop.permute.xlu0 %2373
        %2375 = vrot.lane.b32.xlu0 %v1948, 112
        %v2376 = vpop.permute.xlu0 %2375
        %2377 = vrot.lane.b32.xlu0 %v1949, 112
        %v2378 = vpop.permute.xlu0 %2377
        %2379 = vrot.lane.b32.xlu0 %v1950, 112
        %v2380 = vpop.permute.xlu0 %2379
        %2381 = vrot.lane.b32.xlu0 %v1951, 112
        %v2382 = vpop.permute.xlu0 %2381
        %2383 = vrot.lane.b32.xlu0 %v1952, 112
        %v2384 = vpop.permute.xlu0 %2383
        %2385 = vrot.lane.b32.xlu0 %v1953, 112
        %v2386 = vpop.permute.xlu0 %2385
        %2387 = vrot.lane.b32.xlu0 %v1954, 112
        %v2388 = vpop.permute.xlu0 %2387
        %2389 = vrot.lane.b32.xlu0 %v1955, 112
        %v2390 = vpop.permute.xlu0 %2389
        %2391 = vrot.lane.b32.xlu0 %v1956, 112
        %v2392 = vpop.permute.xlu0 %2391
        %2393 = vrot.lane.b32.xlu0 %v1957, 112
        %v2394 = vpop.permute.xlu0 %2393
        %2395 = vrot.lane.b32.xlu0 %v1958, 112
        %v2396 = vpop.permute.xlu0 %2395
        %2397 = vrot.lane.b32.xlu0 %v1959, 112
        %v2398 = vpop.permute.xlu0 %2397
        %2399 = vrot.lane.b32.xlu0 %v1960, 112
        %v2400 = vpop.permute.xlu0 %2399
        %2401 = vrot.lane.b32.xlu0 %v1961, 112
        %v2402 = vpop.permute.xlu0 %2401
        %2419 = vmatprep.subr.bf16.mxu0 0
        %2420 = vmatpush1.bf16.msra.mxu0 %v2372
        %2421 = vmatprep.subr.bf16.mxu0 0
        %2422 = vmatpush1.bf16.msra.mxu0 %v2374
        %2423 = vmatprep.subr.bf16.mxu0 0
        %2424 = vmatpush1.bf16.msra.mxu0 %v2376
        %2425 = vmatprep.subr.bf16.mxu0 0
        %2426 = vmatpush1.bf16.msra.mxu0 %v2378
        %2427 = vmatprep.subr.bf16.mxu0 0
        %2428 = vmatpush1.bf16.msra.mxu0 %v2380
        %2429 = vmatprep.subr.bf16.mxu0 0
        %2430 = vmatpush1.bf16.msra.mxu0 %v2382
        %2431 = vmatprep.subr.bf16.mxu0 0
        %2432 = vmatpush1.bf16.msra.mxu0 %v2384
        %2433 = vmatprep.subr.bf16.mxu0 0
        %2434 = vmatpush1.bf16.msra.mxu0 %v2386
        %2435 = vmatprep.subr.bf16.mxu0 0
        %2436 = vmatpush1.bf16.msra.mxu0 %v2388
        %2437 = vmatprep.subr.bf16.mxu0 0
        %2438 = vmatpush1.bf16.msra.mxu0 %v2390
        %2439 = vmatprep.subr.bf16.mxu0 0
        %2440 = vmatpush1.bf16.msra.mxu0 %v2392
        %2441 = vmatprep.subr.bf16.mxu0 0
        %2442 = vmatpush1.bf16.msra.mxu0 %v2394
        %2443 = vmatprep.subr.bf16.mxu0 0
        %2444 = vmatpush1.bf16.msra.mxu0 %v2396
        %2445 = vmatprep.subr.bf16.mxu0 0
        %2446 = vmatpush1.bf16.msra.mxu0 %v2398
        %2447 = vmatprep.subr.bf16.mxu0 0
        %2448 = vmatpush1.bf16.msra.mxu0 %v2400
        %2449 = vmatprep.subr.bf16.mxu0 0
        %2450 = vmatpush1.bf16.msra.mxu0 %v2402
        %2451 = vmatprep.mubr.bf16.mxu0 %v2312
        %2452 = vmatmul.mubr.bf16.gmra.mrb[0].mxu0 %v2309
        %v2453 = vpop.f32.mrb[0].mxu0
        %v2454 = vadd.f32 0.0, %v2453
        %v2455 = vpop.f32.mrb[0].mxu0
        %v2456 = vpop.f32.mrb[0].mxu0
        %v2457 = vadd.f32 0.0, %v2456
        %v2458 = vpop.f32.mrb[0].mxu0
        %2459 = vmatprep.mubr.bf16.mxu0 %v2318
        %2460 = vmatmul.mubr.bf16.gmra.mrb[0].mxu0 %v2315
        %v2461 = vpop.f32.mrb[0].mxu0
        %v2462 = vadd.f32 0.0, %v2461
        %v2463 = vpop.f32.mrb[0].mxu0
        %v2464 = vpop.f32.mrb[0].mxu0
        %v2465 = vadd.f32 0.0, %v2464
        %v2466 = vpop.f32.mrb[0].mxu0
        %2467 = vmatprep.mubr.bf16.mxu0 %v2324
        %2468 = vmatmul.mubr.bf16.gmra.mrb[0].mxu0 %v2321
        %v2469 = vpop.f32.mrb[0].mxu0
        %v2470 = vadd.f32 0.0, %v2469
        %v2471 = vpop.f32.mrb[0].mxu0
        %v2472 = vpop.f32.mrb[0].mxu0
        %v2473 = vadd.f32 0.0, %v2472
        %v2474 = vpop.f32.mrb[0].mxu0
        %2475 = vmatprep.mubr.bf16.mxu0 %v2330
        %2476 = vmatmul.mubr.bf16.gmra.mrb[0].mxu0 %v2327
        %v2477 = vpop.f32.mrb[0].mxu0
        %v2478 = vadd.f32 0.0, %v2477
        %v2479 = vpop.f32.mrb[0].mxu0
        %v2480 = vpop.f32.mrb[0].mxu0
        %v2481 = vadd.f32 0.0, %v2480
        %v2482 = vpop.f32.mrb[0].mxu0
        %2483 = vmatprep.mubr.bf16.mxu0 %v2336
        %2484 = vmatmul.mubr.bf16.gmra.mrb[0].mxu0 %v2333
        %v2485 = vpop.f32.mrb[0].mxu0
        %v2486 = vadd.f32 0.0, %v2485
        %v2487 = vpop.f32.mrb[0].mxu0
        %v2488 = vpop.f32.mrb[0].mxu0
        %v2489 = vadd.f32 0.0, %v2488
        %v2490 = vpop.f32.mrb[0].mxu0
        %2491 = vmatprep.mubr.bf16.mxu0 %v2342
        %2492 = vmatmul.mubr.bf16.gmra.mrb[0].mxu0 %v2339
        %v2493 = vpop.f32.mrb[0].mxu0
        %v2494 = vadd.f32 0.0, %v2493
        %v2495 = vpop.f32.mrb[0].mxu0
        %v2496 = vpop.f32.mrb[0].mxu0
        %v2497 = vadd.f32 0.0, %v2496
        %v2498 = vpop.f32.mrb[0].mxu0
        %2499 = vmatprep.mubr.bf16.mxu0 %v2348
        %2500 = vmatmul.mubr.bf16.gmra.mrb[0].mxu0 %v2345
        %v2501 = vpop.f32.mrb[0].mxu0
        %v2502 = vadd.f32 0.0, %v2501
        %v2503 = vpop.f32.mrb[0].mxu0
        %v2504 = vpop.f32.mrb[0].mxu0
        %v2505 = vadd.f32 0.0, %v2504
        %v2506 = vpop.f32.mrb[0].mxu0
        %2507 = vmatprep.mubr.bf16.mxu0 %v2354
        %2508 = vmatmul.mubr.bf16.gmra.mrb[0].mxu0 %v2351
        %v2509 = vpop.f32.mrb[0].mxu0
        %v2510 = vadd.f32 0.0, %v2509
        %v2511 = vpop.f32.mrb[0].mxu0
        %v2512 = vpop.f32.mrb[0].mxu0
        %v2513 = vadd.f32 0.0, %v2512
        %v2514 = vpop.f32.mrb[0].mxu0
        %2515 = vdwg.mxu0
        %2516 = vmatprep.subr.bf16.mxu0 0
        %2517 = vmatpush1.bf16.msra.mxu0 1065369472
        %2518 = vmatprep.subr.bf16.mxu0 0
        %2519 = vmatpush1.bf16.msra.mxu0 1065369472
        %2520 = vmatprep.subr.bf16.mxu0 0
        %2521 = vmatpush1.bf16.msra.mxu0 1065369472
        %2522 = vmatprep.subr.bf16.mxu0 0
        %2523 = vmatpush1.bf16.msra.mxu0 1065369472
        %2524 = vmatprep.subr.bf16.mxu0 0
        %2525 = vmatpush1.bf16.msra.mxu0 1065369472
        %2526 = vmatprep.subr.bf16.mxu0 0
        %2527 = vmatpush1.bf16.msra.mxu0 1065369472
        %2528 = vmatprep.subr.bf16.mxu0 0
        %2529 = vmatpush1.bf16.msra.mxu0 1065369472
        %2530 = vmatprep.subr.bf16.mxu0 0
        %2531 = vmatpush1.bf16.msra.mxu0 1065369472
        %2532 = vmatprep.subr.bf16.mxu0 0
        %2533 = vmatpush1.bf16.msra.mxu0 1065369472
        %2534 = vmatprep.subr.bf16.mxu0 0
        %2535 = vmatpush1.bf16.msra.mxu0 1065369472
        %2536 = vmatprep.subr.bf16.mxu0 0
        %2537 = vmatpush1.bf16.msra.mxu0 1065369472
        %2538 = vmatprep.subr.bf16.mxu0 0
        %2539 = vmatpush1.bf16.msra.mxu0 1065369472
        %2540 = vmatprep.subr.bf16.mxu0 0
        %2541 = vmatpush1.bf16.msra.mxu0 1065369472
        %2542 = vmatprep.subr.bf16.mxu0 0
        %2543 = vmatpush1.bf16.msra.mxu0 1065369472
        %2544 = vmatprep.subr.bf16.mxu0 0
        %2545 = vmatpush1.bf16.msra.mxu0 1065369472
        %2546 = vmatprep.subr.bf16.mxu0 0
        %2547 = vmatpush1.bf16.msra.mxu0 1065369472
        %2548 = vmatprep.mubr.bf16.mxu0 %v2312
        %2549 = vmatmul.mubr.bf16.gmra.mrb[0].mxu0 %v2309
        %v2550 = vpop.f32.mrb[0].mxu0
        %v2551 = vadd.f32 0.0, %v2550
        %v2552 = vpop.f32.mrb[0].mxu0
        %v2553 = vpop.f32.mrb[0].mxu0
        %v2554 = vadd.f32 0.0, %v2553
        %v2555 = vpop.f32.mrb[0].mxu0
        %2556 = vmatprep.mubr.bf16.mxu0 %v2318
        %2557 = vmatmul.mubr.bf16.gmra.mrb[0].mxu0 %v2315
        %v2558 = vpop.f32.mrb[0].mxu0
        %v2559 = vadd.f32 0.0, %v2558
        %v2560 = vpop.f32.mrb[0].mxu0
        %v2561 = vpop.f32.mrb[0].mxu0
        %v2562 = vadd.f32 0.0, %v2561
        %v2563 = vpop.f32.mrb[0].mxu0
        %2564 = vmatprep.mubr.bf16.mxu0 %v2324
        %2565 = vmatmul.mubr.bf16.gmra.mrb[0].mxu0 %v2321
        %v2566 = vpop.f32.mrb[0].mxu0
        %v2567 = vadd.f32 0.0, %v2566
        %v2568 = vpop.f32.mrb[0].mxu0
        %v2569 = vpop.f32.mrb[0].mxu0
        %v2570 = vadd.f32 0.0, %v2569
        %v2571 = vpop.f32.mrb[0].mxu0
        %2572 = vmatprep.mubr.bf16.mxu0 %v2330
        %2573 = vmatmul.mubr.bf16.gmra.mrb[0].mxu0 %v2327
        %v2574 = vpop.f32.mrb[0].mxu0
        %v2575 = vadd.f32 0.0, %v2574
        %v2576 = vpop.f32.mrb[0].mxu0
        %v2577 = vpop.f32.mrb[0].mxu0
        %v2578 = vadd.f32 0.0, %v2577
        %v2579 = vpop.f32.mrb[0].mxu0
        %2580 = vmatprep.mubr.bf16.mxu0 %v2336
        %2581 = vmatmul.mubr.bf16.gmra.mrb[0].mxu0 %v2333
        %v2582 = vpop.f32.mrb[0].mxu0
        %v2583 = vadd.f32 0.0, %v2582
        %v2584 = vpop.f32.mrb[0].mxu0
        %v2585 = vpop.f32.mrb[0].mxu0
        %v2586 = vadd.f32 0.0, %v2585
        %v2587 = vpop.f32.mrb[0].mxu0
        %2588 = vmatprep.mubr.bf16.mxu0 %v2342
        %2589 = vmatmul.mubr.bf16.gmra.mrb[0].mxu0 %v2339
        %v2590 = vpop.f32.mrb[0].mxu0
        %v2591 = vadd.f32 0.0, %v2590
        %v2592 = vpop.f32.mrb[0].mxu0
        %v2593 = vpop.f32.mrb[0].mxu0
        %v2594 = vadd.f32 0.0, %v2593
        %v2595 = vpop.f32.mrb[0].mxu0
        %2596 = vmatprep.mubr.bf16.mxu0 %v2348
        %2597 = vmatmul.mubr.bf16.gmra.mrb[0].mxu0 %v2345
        %v2598 = vpop.f32.mrb[0].mxu0
        %v2599 = vadd.f32 0.0, %v2598
        %v2600 = vpop.f32.mrb[0].mxu0
        %v2601 = vpop.f32.mrb[0].mxu0
        %v2602 = vadd.f32 0.0, %v2601
        %v2603 = vpop.f32.mrb[0].mxu0
        %2604 = vmatprep.mubr.bf16.mxu0 %v2354
        %2605 = vmatmul.mubr.bf16.gmra.mrb[0].mxu0 %v2351
        %v2606 = vpop.f32.mrb[0].mxu0
        %v2607 = vadd.f32 0.0, %v2606
        %v2608 = vpop.f32.mrb[0].mxu0
        %v2609 = vpop.f32.mrb[0].mxu0
        %v2610 = vadd.f32 0.0, %v2609
        %v2611 = vpop.f32.mrb[0].mxu0
        %2612 = vdwg.mxu0
        %v2613 = vrcp.pop %v2551
        %v2614 = vrcp.pop %v2554
        %v2615 = vrcp.pop %v2559
        %v2616 = vrcp.pop %v2562
        %v2617 = vrcp.pop %v2567
        %v2618 = vrcp.pop %v2570
        %v2619 = vrcp.pop %v2575
        %v2620 = vrcp.pop %v2578
        %v2621 = vrcp.pop %v2583
        %v2622 = vrcp.pop %v2586
        %v2623 = vrcp.pop %v2591
        %v2624 = vrcp.pop %v2594
        %v2625 = vrcp.pop %v2599
        %v2626 = vrcp.pop %v2602
        %v2627 = vrcp.pop %v2607
        %v2628 = vrcp.pop %v2610
        %2630 = vset.pattern.permute.xlu0 0
        %2631 = vperm.xlu0 %2630, %v2613
        %v2632 = vpop.permute.xlu0 %2631
        %2635 = vset.pattern.permute.xlu0 0
        %2636 = vperm.xlu0 %2635, %v2614
        %v2637 = vpop.permute.xlu0 %2636
        %2640 = vset.pattern.permute.xlu0 0
        %2641 = vperm.xlu0 %2640, %v2615
        %v2642 = vpop.permute.xlu0 %2641
        %2645 = vset.pattern.permute.xlu0 0
        %2646 = vperm.xlu0 %2645, %v2616
        %v2647 = vpop.permute.xlu0 %2646
        %2650 = vset.pattern.permute.xlu0 0
        %2651 = vperm.xlu0 %2650, %v2617
        %v2652 = vpop.permute.xlu0 %2651
        %2655 = vset.pattern.permute.xlu0 0
        %2656 = vperm.xlu0 %2655, %v2618
        %v2657 = vpop.permute.xlu0 %2656
        %2660 = vset.pattern.permute.xlu0 0
        %2661 = vperm.xlu0 %2660, %v2619
        %v2662 = vpop.permute.xlu0 %2661
        %2665 = vset.pattern.permute.xlu0 0
        %2666 = vperm.xlu0 %2665, %v2620
        %v2667 = vpop.permute.xlu0 %2666
        %2670 = vset.pattern.permute.xlu0 0
        %2671 = vperm.xlu0 %2670, %v2621
        %v2672 = vpop.permute.xlu0 %2671
        %2675 = vset.pattern.permute.xlu0 0
        %2676 = vperm.xlu0 %2675, %v2622
        %v2677 = vpop.permute.xlu0 %2676
        %2680 = vset.pattern.permute.xlu0 0
        %2681 = vperm.xlu0 %2680, %v2623
        %v2682 = vpop.permute.xlu0 %2681
        %2685 = vset.pattern.permute.xlu0 0
        %2686 = vperm.xlu0 %2685, %v2624
        %v2687 = vpop.permute.xlu0 %2686
        %2690 = vset.pattern.permute.xlu0 0
        %2691 = vperm.xlu0 %2690, %v2625
        %v2692 = vpop.permute.xlu0 %2691
        %2695 = vset.pattern.permute.xlu0 0
        %2696 = vperm.xlu0 %2695, %v2626
        %v2697 = vpop.permute.xlu0 %2696
        %2700 = vset.pattern.permute.xlu0 0
        %2701 = vperm.xlu0 %2700, %v2627
        %v2702 = vpop.permute.xlu0 %2701
        %2705 = vset.pattern.permute.xlu0 0
        %2706 = vperm.xlu0 %2705, %v2628
        %v2707 = vpop.permute.xlu0 %2706
        %v2709 = vmul.f32 %v2454, %v2632
        %v2710 = vmul.f32 %v2457, %v2637
        %v2711 = vmul.f32 %v2462, %v2642
        %v2712 = vmul.f32 %v2465, %v2647
        %v2713 = vmul.f32 %v2470, %v2652
        %v2714 = vmul.f32 %v2473, %v2657
        %v2715 = vmul.f32 %v2478, %v2662
        %v2716 = vmul.f32 %v2481, %v2667
        %v2717 = vmul.f32 %v2486, %v2672
        %v2718 = vmul.f32 %v2489, %v2677
        %v2719 = vmul.f32 %v2494, %v2682
        %v2720 = vmul.f32 %v2497, %v2687
        %v2721 = vmul.f32 %v2502, %v2692
        %v2722 = vmul.f32 %v2505, %v2697
        %v2723 = vmul.f32 %v2510, %v2702
        %v2724 = vmul.f32 %v2513, %v2707
        %2741 = vrot.lane.b32.xlu0 %v2709, 16
        %v2742 = vpop.permute.xlu0 %2741
        %2743 = vrot.lane.b32.xlu0 %v2710, 16
        %v2744 = vpop.permute.xlu0 %2743
        %2745 = vrot.lane.b32.xlu0 %v2711, 16
        %v2746 = vpop.permute.xlu0 %2745
        %2747 = vrot.lane.b32.xlu0 %v2712, 16
        %v2748 = vpop.permute.xlu0 %2747
        %2749 = vrot.lane.b32.xlu0 %v2713, 16
        %v2750 = vpop.permute.xlu0 %2749
        %2751 = vrot.lane.b32.xlu0 %v2714, 16
        %v2752 = vpop.permute.xlu0 %2751
        %2753 = vrot.lane.b32.xlu0 %v2715, 16
        %v2754 = vpop.permute.xlu0 %2753
        %2755 = vrot.lane.b32.xlu0 %v2716, 16
        %v2756 = vpop.permute.xlu0 %2755
        %2757 = vrot.lane.b32.xlu0 %v2717, 16
        %v2758 = vpop.permute.xlu0 %2757
        %2759 = vrot.lane.b32.xlu0 %v2718, 16
        %v2760 = vpop.permute.xlu0 %2759
        %2761 = vrot.lane.b32.xlu0 %v2719, 16
        %v2762 = vpop.permute.xlu0 %2761
        %2763 = vrot.lane.b32.xlu0 %v2720, 16
        %v2764 = vpop.permute.xlu0 %2763
        %2765 = vrot.lane.b32.xlu0 %v2721, 16
        %v2766 = vpop.permute.xlu0 %2765
        %2767 = vrot.lane.b32.xlu0 %v2722, 16
        %v2768 = vpop.permute.xlu0 %2767
        %2769 = vrot.lane.b32.xlu0 %v2723, 16
        %v2770 = vpop.permute.xlu0 %2769
        %2771 = vrot.lane.b32.xlu0 %v2724, 16
        %v2772 = vpop.permute.xlu0 %2771
        %vm2789 = vcmask 261248
        %2790 = vst.msk [vmem:[#allocation4] sm:$0xff] %vm2789, %v2742
        %2791 = vst.msk [vmem:[#allocation4 + $0x8] sm:$0xff] %vm2789, %v2744
        %2792 = vst.msk [vmem:[#allocation4 + $0x10] sm:$0xff] %vm2789, %v2746
        %2793 = vst.msk [vmem:[#allocation4 + $0x18] sm:$0xff] %vm2789, %v2748
        %2794 = vst.msk [vmem:[#allocation4 + $0x20] sm:$0xff] %vm2789, %v2750
        %2795 = vst.msk [vmem:[#allocation4 + $0x28] sm:$0xff] %vm2789, %v2752
        %2796 = vst.msk [vmem:[#allocation4 + $0x30] sm:$0xff] %vm2789, %v2754
        %2797 = vst.msk [vmem:[#allocation4 + $0x38] sm:$0xff] %vm2789, %v2756
        %2798 = vst.msk [vmem:[#allocation4 + $0x40] sm:$0xff] %vm2789, %v2758
        %2799 = vst.msk [vmem:[#allocation4 + $0x48] sm:$0xff] %vm2789, %v2760
        %2800 = vst.msk [vmem:[#allocation4 + $0x50] sm:$0xff] %vm2789, %v2762
        %2801 = vst.msk [vmem:[#allocation4 + $0x58] sm:$0xff] %vm2789, %v2764
        %2802 = vst.msk [vmem:[#allocation4 + $0x60] sm:$0xff] %vm2789, %v2766
        %2803 = vst.msk [vmem:[#allocation4 + $0x68] sm:$0xff] %vm2789, %v2768
        %2804 = vst.msk [vmem:[#allocation4 + $0x70] sm:$0xff] %vm2789, %v2770
        %2805 = vst.msk [vmem:[#allocation4 + $0x78] sm:$0xff] %vm2789, %v2772
        %v2806 = vld [vmem:[#allocation2] sm:$0xff]
        %v2807 = vld [vmem:[#allocation2 + $0x8] sm:$0xff]
        %v2808 = vld [vmem:[#allocation2 + $0x10] sm:$0xff]
        %v2809 = vld [vmem:[#allocation2 + $0x18] sm:$0xff]
        %v2810 = vld [vmem:[#allocation2 + $0x20] sm:$0xff]
        %v2811 = vld [vmem:[#allocation2 + $0x28] sm:$0xff]
        %v2812 = vld [vmem:[#allocation2 + $0x30] sm:$0xff]
        %v2813 = vld [vmem:[#allocation2 + $0x38] sm:$0xff]
        %v2814 = vld [vmem:[#allocation3] sm:$0xff]
        %v2815 = vld [vmem:[#allocation3 + $0x8] sm:$0xff]
        %v2816 = vld [vmem:[#allocation3 + $0x10] sm:$0xff]
        %v2817 = vld [vmem:[#allocation3 + $0x18] sm:$0xff]
        %v2818 = vld [vmem:[#allocation3 + $0x20] sm:$0xff]
        %v2819 = vld [vmem:[#allocation3 + $0x28] sm:$0xff]
        %v2820 = vld [vmem:[#allocation3 + $0x30] sm:$0xff]
        %v2821 = vld [vmem:[#allocation3 + $0x38] sm:$0xff]
        %v2822 = vld [vmem:[#allocation3 + $0x40] sm:$0xff]
        %v2823 = vld [vmem:[#allocation3 + $0x48] sm:$0xff]
        %v2824 = vld [vmem:[#allocation3 + $0x50] sm:$0xff]
        %v2825 = vld [vmem:[#allocation3 + $0x58] sm:$0xff]
        %v2826 = vld [vmem:[#allocation3 + $0x60] sm:$0xff]
        %v2827 = vld [vmem:[#allocation3 + $0x68] sm:$0xff]
        %v2828 = vld [vmem:[#allocation3 + $0x70] sm:$0xff]
        %v2829 = vld [vmem:[#allocation3 + $0x78] sm:$0xff]
        %v2830 = vld [vmem:[#allocation3 + $0x80] sm:$0xff]
        %v2831 = vld [vmem:[#allocation3 + $0x88] sm:$0xff]
        %v2832 = vld [vmem:[#allocation3 + $0x90] sm:$0xff]
        %v2833 = vld [vmem:[#allocation3 + $0x98] sm:$0xff]
        %v2834 = vld [vmem:[#allocation3 + $0xa0] sm:$0xff]
        %v2835 = vld [vmem:[#allocation3 + $0xa8] sm:$0xff]
        %v2836 = vld [vmem:[#allocation3 + $0xb0] sm:$0xff]
        %v2837 = vld [vmem:[#allocation3 + $0xb8] sm:$0xff]
        %v2838 = vld [vmem:[#allocation3 + $0xc0] sm:$0xff]
        %v2839 = vld [vmem:[#allocation3 + $0xc8] sm:$0xff]
        %v2840 = vld [vmem:[#allocation3 + $0xd0] sm:$0xff]
        %v2841 = vld [vmem:[#allocation3 + $0xd8] sm:$0xff]
        %v2842 = vld [vmem:[#allocation3 + $0xe0] sm:$0xff]
        %v2843 = vld [vmem:[#allocation3 + $0xe8] sm:$0xff]
        %v2844 = vld [vmem:[#allocation3 + $0xf0] sm:$0xff]
        %v2845 = vld [vmem:[#allocation3 + $0xf8] sm:$0xff]
        %2854 = vrot.lane.b32.xlu0 %v2806, 96
        %v2855 = vpop.permute.xlu0 %2854
        %2856 = vrot.lane.b32.xlu0 %v2807, 96
        %v2857 = vpop.permute.xlu0 %2856
        %2858 = vrot.lane.b32.xlu0 %v2808, 96
        %v2859 = vpop.permute.xlu0 %2858
        %2860 = vrot.lane.b32.xlu0 %v2809, 96
        %v2861 = vpop.permute.xlu0 %2860
        %2862 = vrot.lane.b32.xlu0 %v2810, 96
        %v2863 = vpop.permute.xlu0 %2862
        %2864 = vrot.lane.b32.xlu0 %v2811, 96
        %v2865 = vpop.permute.xlu0 %2864
        %2866 = vrot.lane.b32.xlu0 %v2812, 96
        %v2867 = vpop.permute.xlu0 %2866
        %2868 = vrot.lane.b32.xlu0 %v2813, 96
        %v2869 = vpop.permute.xlu0 %2868
        %2886 = vrot.lane.b32.xlu0 %v2814, 96
        %v2887 = vpop.permute.xlu0 %2886
        %2888 = vrot.lane.b32.xlu0 %v2815, 96
        %v2889 = vpop.permute.xlu0 %2888
        %2890 = vrot.lane.b32.xlu0 %v2816, 96
        %v2891 = vpop.permute.xlu0 %2890
        %2892 = vrot.lane.b32.xlu0 %v2817, 96
        %v2893 = vpop.permute.xlu0 %2892
        %2894 = vrot.lane.b32.xlu0 %v2818, 96
        %v2895 = vpop.permute.xlu0 %2894
        %2896 = vrot.lane.b32.xlu0 %v2819, 96
        %v2897 = vpop.permute.xlu0 %2896
        %2898 = vrot.lane.b32.xlu0 %v2820, 96
        %v2899 = vpop.permute.xlu0 %2898
        %2900 = vrot.lane.b32.xlu0 %v2821, 96
        %v2901 = vpop.permute.xlu0 %2900
        %2902 = vrot.lane.b32.xlu0 %v2822, 96
        %v2903 = vpop.permute.xlu0 %2902
        %2904 = vrot.lane.b32.xlu0 %v2823, 96
        %v2905 = vpop.permute.xlu0 %2904
        %2906 = vrot.lane.b32.xlu0 %v2824, 96
        %v2907 = vpop.permute.xlu0 %2906
        %2908 = vrot.lane.b32.xlu0 %v2825, 96
        %v2909 = vpop.permute.xlu0 %2908
        %2910 = vrot.lane.b32.xlu0 %v2826, 96
        %v2911 = vpop.permute.xlu0 %2910
        %2912 = vrot.lane.b32.xlu0 %v2827, 96
        %v2913 = vpop.permute.xlu0 %2912
        %2914 = vrot.lane.b32.xlu0 %v2828, 96
        %v2915 = vpop.permute.xlu0 %2914
        %2916 = vrot.lane.b32.xlu0 %v2829, 96
        %v2917 = vpop.permute.xlu0 %2916
        %v2919 = vsel %vm1278, %v2855, 0
        %v2922 = vsel %vm1278, %v2857, 0
        %v2925 = vsel %vm1278, %v2859, 0
        %v2928 = vsel %vm1278, %v2861, 0
        %v2931 = vsel %vm1278, %v2863, 0
        %v2934 = vsel %vm1278, %v2865, 0
        %v2937 = vsel %vm1278, %v2867, 0
        %v2940 = vsel %vm1278, %v2869, 0
        %v2943 = vsel %vm1278, %v2887, 0
        %v2946 = vsel %vm1278, %v2889, 0
        %v2949 = vsel %vm1278, %v2891, 0
        %v2952 = vsel %vm1278, %v2893, 0
        %v2955 = vsel %vm1278, %v2895, 0
        %v2958 = vsel %vm1278, %v2897, 0
        %v2961 = vsel %vm1278, %v2899, 0
        %v2964 = vsel %vm1278, %v2901, 0
        %v2967 = vsel %vm1278, %v2903, 0
        %v2970 = vsel %vm1278, %v2905, 0
        %v2973 = vsel %vm1278, %v2907, 0
        %v2976 = vsel %vm1278, %v2909, 0
        %v2979 = vsel %vm1278, %v2911, 0
        %v2982 = vsel %vm1278, %v2913, 0
        %v2985 = vsel %vm1278, %v2915, 0
        %v2988 = vsel %vm1278, %v2917, 0
        %2990 = vmatprep.subr.bf16.mxu0 0
        %2991 = vmatpush1.bf16.xpose.msra.mxu0 %v2943
        %2992 = vmatprep.subr.bf16.mxu0 0
        %2993 = vmatpush1.bf16.xpose.msra.mxu0 %v2946
        %2994 = vmatprep.subr.bf16.mxu0 0
        %2995 = vmatpush1.bf16.xpose.msra.mxu0 %v2949
        %2996 = vmatprep.subr.bf16.mxu0 0
        %2997 = vmatpush1.bf16.xpose.msra.mxu0 %v2952
        %2998 = vmatprep.subr.bf16.mxu0 0
        %2999 = vmatpush1.bf16.xpose.msra.mxu0 %v2955
        %3000 = vmatprep.subr.bf16.mxu0 0
        %3001 = vmatpush1.bf16.xpose.msra.mxu0 %v2958
        %3002 = vmatprep.subr.bf16.mxu0 0
        %3003 = vmatpush1.bf16.xpose.msra.mxu0 %v2961
        %3004 = vmatprep.subr.bf16.mxu0 0
        %3005 = vmatpush1.bf16.xpose.msra.mxu0 %v2964
        %3006 = vmatprep.subr.bf16.mxu0 0
        %3007 = vmatpush1.bf16.xpose.msra.mxu0 %v2967
        %3008 = vmatprep.subr.bf16.mxu0 0
        %3009 = vmatpush1.bf16.xpose.msra.mxu0 %v2970
        %3010 = vmatprep.subr.bf16.mxu0 0
        %3011 = vmatpush1.bf16.xpose.msra.mxu0 %v2973
        %3012 = vmatprep.subr.bf16.mxu0 0
        %3013 = vmatpush1.bf16.xpose.msra.mxu0 %v2976
        %3014 = vmatprep.subr.bf16.mxu0 0
        %3015 = vmatpush1.bf16.xpose.msra.mxu0 %v2979
        %3016 = vmatprep.subr.bf16.mxu0 0
        %3017 = vmatpush1.bf16.xpose.msra.mxu0 %v2982
        %3018 = vmatprep.subr.bf16.mxu0 0
        %3019 = vmatpush1.bf16.xpose.msra.mxu0 %v2985
        %3020 = vmatprep.subr.bf16.mxu0 0
        %3021 = vmatpush1.bf16.xpose.msra.mxu0 %v2988
        %3022 = vmatprep.mubr.bf16.mxu0 0
        %3023 = vmatmul.mubr.bf16.gmra.mrb[0].mxu0 %v2919
        %v3024 = vpop.f32.mrb[0].mxu0
        %v3025 = vadd.f32 0.0, %v3024
        %v3026 = vpop.f32.mrb[0].mxu0
        %v3027 = vadd.f32 0.0, %v3026
        %v3028 = vpop.f32.mrb[0].mxu0
        %v3029 = vadd.f32 0.0, %v3028
        %v3030 = vpop.f32.mrb[0].mxu0
        %v3031 = vadd.f32 0.0, %v3030
        %3032 = vmatprep.mubr.bf16.mxu0 0
        %3033 = vmatmul.mubr.bf16.gmra.mrb[0].mxu0 %v2922
        %v3034 = vpop.f32.mrb[0].mxu0
        %v3035 = vadd.f32 0.0, %v3034
        %v3036 = vpop.f32.mrb[0].mxu0
        %v3037 = vadd.f32 0.0, %v3036
        %v3038 = vpop.f32.mrb[0].mxu0
        %v3039 = vadd.f32 0.0, %v3038
        %v3040 = vpop.f32.mrb[0].mxu0
        %v3041 = vadd.f32 0.0, %v3040
        %3042 = vmatprep.mubr.bf16.mxu0 0
        %3043 = vmatmul.mubr.bf16.gmra.mrb[0].mxu0 %v2925
        %v3044 = vpop.f32.mrb[0].mxu0
        %v3045 = vadd.f32 0.0, %v3044
        %v3046 = vpop.f32.mrb[0].mxu0
        %v3047 = vadd.f32 0.0, %v3046
        %v3048 = vpop.f32.mrb[0].mxu0
        %v3049 = vadd.f32 0.0, %v3048
        %v3050 = vpop.f32.mrb[0].mxu0
        %v3051 = vadd.f32 0.0, %v3050
        %3052 = vmatprep.mubr.bf16.mxu0 0
        %3053 = vmatmul.mubr.bf16.gmra.mrb[0].mxu0 %v2928
        %v3054 = vpop.f32.mrb[0].mxu0
        %v3055 = vadd.f32 0.0, %v3054
        %v3056 = vpop.f32.mrb[0].mxu0
        %v3057 = vadd.f32 0.0, %v3056
        %v3058 = vpop.f32.mrb[0].mxu0
        %v3059 = vadd.f32 0.0, %v3058
        %v3060 = vpop.f32.mrb[0].mxu0
        %v3061 = vadd.f32 0.0, %v3060
        %3062 = vmatprep.mubr.bf16.mxu0 0
        %3063 = vmatmul.mubr.bf16.gmra.mrb[0].mxu0 %v2931
        %v3064 = vpop.f32.mrb[0].mxu0
        %v3065 = vadd.f32 0.0, %v3064
        %v3066 = vpop.f32.mrb[0].mxu0
        %v3067 = vadd.f32 0.0, %v3066
        %v3068 = vpop.f32.mrb[0].mxu0
        %v3069 = vadd.f32 0.0, %v3068
        %v3070 = vpop.f32.mrb[0].mxu0
        %v3071 = vadd.f32 0.0, %v3070
        %3072 = vmatprep.mubr.bf16.mxu0 0
        %3073 = vmatmul.mubr.bf16.gmra.mrb[0].mxu0 %v2934
        %v3074 = vpop.f32.mrb[0].mxu0
        %v3075 = vadd.f32 0.0, %v3074
        %v3076 = vpop.f32.mrb[0].mxu0
        %v3077 = vadd.f32 0.0, %v3076
        %v3078 = vpop.f32.mrb[0].mxu0
        %v3079 = vadd.f32 0.0, %v3078
        %v3080 = vpop.f32.mrb[0].mxu0
        %v3081 = vadd.f32 0.0, %v3080
        %3082 = vmatprep.mubr.bf16.mxu0 0
        %3083 = vmatmul.mubr.bf16.gmra.mrb[0].mxu0 %v2937
        %v3084 = vpop.f32.mrb[0].mxu0
        %v3085 = vadd.f32 0.0, %v3084
        %v3086 = vpop.f32.mrb[0].mxu0
        %v3087 = vadd.f32 0.0, %v3086
        %v3088 = vpop.f32.mrb[0].mxu0
        %v3089 = vadd.f32 0.0, %v3088
        %v3090 = vpop.f32.mrb[0].mxu0
        %v3091 = vadd.f32 0.0, %v3090
        %3092 = vmatprep.mubr.bf16.mxu0 0
        %3093 = vmatmul.mubr.bf16.gmra.mrb[0].mxu0 %v2940
        %v3094 = vpop.f32.mrb[0].mxu0
        %v3095 = vadd.f32 0.0, %v3094
        %v3096 = vpop.f32.mrb[0].mxu0
        %v3097 = vadd.f32 0.0, %v3096
        %v3098 = vpop.f32.mrb[0].mxu0
        %v3099 = vadd.f32 0.0, %v3098
        %v3100 = vpop.f32.mrb[0].mxu0
        %v3101 = vadd.f32 0.0, %v3100
        %3102 = vdwg.mxu0
        %v3103 = vmax.f32 %v3025, %v3027
        %3104 = vmax.xlane.f32.xlu0 %v3103
        %v3105 = vpop.xlane.xlu0 %3104
        %v3106 = vmax.f32 %v3029, %v3031
        %3107 = vmax.xlane.f32.xlu0 %v3106
        %v3108 = vpop.xlane.xlu0 %3107
        %v3109 = vmax.f32 %v3035, %v3037
        %3110 = vmax.xlane.f32.xlu0 %v3109
        %v3111 = vpop.xlane.xlu0 %3110
        %v3112 = vmax.f32 %v3039, %v3041
        %3113 = vmax.xlane.f32.xlu0 %v3112
        %v3114 = vpop.xlane.xlu0 %3113
        %v3115 = vmax.f32 %v3045, %v3047
        %3116 = vmax.xlane.f32.xlu0 %v3115
        %v3117 = vpop.xlane.xlu0 %3116
        %v3118 = vmax.f32 %v3049, %v3051
        %3119 = vmax.xlane.f32.xlu0 %v3118
        %v3120 = vpop.xlane.xlu0 %3119
        %v3121 = vmax.f32 %v3055, %v3057
        %3122 = vmax.xlane.f32.xlu0 %v3121
        %v3123 = vpop.xlane.xlu0 %3122
        %v3124 = vmax.f32 %v3059, %v3061
        %3125 = vmax.xlane.f32.xlu0 %v3124
        %v3126 = vpop.xlane.xlu0 %3125
        %v3127 = vmax.f32 %v3065, %v3067
        %3128 = vmax.xlane.f32.xlu0 %v3127
        %v3129 = vpop.xlane.xlu0 %3128
        %v3130 = vmax.f32 %v3069, %v3071
        %3131 = vmax.xlane.f32.xlu0 %v3130
        %v3132 = vpop.xlane.xlu0 %3131
        %v3133 = vmax.f32 %v3075, %v3077
        %3134 = vmax.xlane.f32.xlu0 %v3133
        %v3135 = vpop.xlane.xlu0 %3134
        %v3136 = vmax.f32 %v3079, %v3081
        %3137 = vmax.xlane.f32.xlu0 %v3136
        %v3138 = vpop.xlane.xlu0 %3137
        %v3139 = vmax.f32 %v3085, %v3087
        %3140 = vmax.xlane.f32.xlu0 %v3139
        %v3141 = vpop.xlane.xlu0 %3140
        %v3142 = vmax.f32 %v3089, %v3091
        %3143 = vmax.xlane.f32.xlu0 %v3142
        %v3144 = vpop.xlane.xlu0 %3143
        %v3145 = vmax.f32 %v3095, %v3097
        %3146 = vmax.xlane.f32.xlu0 %v3145
        %v3147 = vpop.xlane.xlu0 %3146
        %v3148 = vmax.f32 %v3099, %v3101
        %3149 = vmax.xlane.f32.xlu0 %v3148
        %v3150 = vpop.xlane.xlu0 %3149
        %v3151 = vpack.c.bf16 %v3029, %v3025
        %v3152 = vpack.c.bf16 %v3031, %v3027
        %v3153 = vpack.c.bf16 %v3039, %v3035
        %v3154 = vpack.c.bf16 %v3041, %v3037
        %v3155 = vpack.c.bf16 %v3049, %v3045
        %v3156 = vpack.c.bf16 %v3051, %v3047
        %v3157 = vpack.c.bf16 %v3059, %v3055
        %v3158 = vpack.c.bf16 %v3061, %v3057
        %v3159 = vpack.c.bf16 %v3069, %v3065
        %v3160 = vpack.c.bf16 %v3071, %v3067
        %v3161 = vpack.c.bf16 %v3079, %v3075
        %v3162 = vpack.c.bf16 %v3081, %v3077
        %v3163 = vpack.c.bf16 %v3089, %v3085
        %v3164 = vpack.c.bf16 %v3091, %v3087
        %v3165 = vpack.c.bf16 %v3099, %v3095
        %v3166 = vpack.c.bf16 %v3101, %v3097
        %v3167 = vpack.c.bf16 %v3108, %v3105
        %v3168 = vpack.c.bf16 %v3114, %v3111
        %v3169 = vpack.c.bf16 %v3120, %v3117
        %v3170 = vpack.c.bf16 %v3126, %v3123
        %v3171 = vpack.c.bf16 %v3132, %v3129
        %v3172 = vpack.c.bf16 %v3138, %v3135
        %v3173 = vpack.c.bf16 %v3144, %v3141
        %v3174 = vpack.c.bf16 %v3150, %v3147
        %v3175 = vsub.bf16 %v3151, %v3167
        %v3176 = vsub.bf16 %v3152, %v3167
        %v3177 = vsub.bf16 %v3153, %v3168
        %v3178 = vsub.bf16 %v3154, %v3168
        %v3179 = vsub.bf16 %v3155, %v3169
        %v3180 = vsub.bf16 %v3156, %v3169
        %v3181 = vsub.bf16 %v3157, %v3170
        %v3182 = vsub.bf16 %v3158, %v3170
        %v3183 = vsub.bf16 %v3159, %v3171
        %v3184 = vsub.bf16 %v3160, %v3171
        %v3185 = vsub.bf16 %v3161, %v3172
        %v3186 = vsub.bf16 %v3162, %v3172
        %v3187 = vsub.bf16 %v3163, %v3173
        %v3188 = vsub.bf16 %v3164, %v3173
        %v3189 = vsub.bf16 %v3165, %v3174
        %v3190 = vsub.bf16 %v3166, %v3174
        %v3192 = vmul.bf16 %v3175, 1069105081
        %v3193 = vpow.bf16.pop %v3192
        %v3195 = vmul.bf16 %v3176, 1069105081
        %v3196 = vpow.bf16.pop %v3195
        %v3198 = vmul.bf16 %v3177, 1069105081
        %v3199 = vpow.bf16.pop %v3198
        %v3201 = vmul.bf16 %v3178, 1069105081
        %v3202 = vpow.bf16.pop %v3201
        %v3204 = vmul.bf16 %v3179, 1069105081
        %v3205 = vpow.bf16.pop %v3204
        %v3207 = vmul.bf16 %v3180, 1069105081
        %v3208 = vpow.bf16.pop %v3207
        %v3210 = vmul.bf16 %v3181, 1069105081
        %v3211 = vpow.bf16.pop %v3210
        %v3213 = vmul.bf16 %v3182, 1069105081
        %v3214 = vpow.bf16.pop %v3213
        %v3216 = vmul.bf16 %v3183, 1069105081
        %v3217 = vpow.bf16.pop %v3216
        %v3219 = vmul.bf16 %v3184, 1069105081
        %v3220 = vpow.bf16.pop %v3219
        %v3222 = vmul.bf16 %v3185, 1069105081
        %v3223 = vpow.bf16.pop %v3222
        %v3225 = vmul.bf16 %v3186, 1069105081
        %v3226 = vpow.bf16.pop %v3225
        %v3228 = vmul.bf16 %v3187, 1069105081
        %v3229 = vpow.bf16.pop %v3228
        %v3231 = vmul.bf16 %v3188, 1069105081
        %v3232 = vpow.bf16.pop %v3231
        %v3234 = vmul.bf16 %v3189, 1069105081
        %v3235 = vpow.bf16.pop %v3234
        %v3237 = vmul.bf16 %v3190, 1069105081
        %v3238 = vpow.bf16.pop %v3237
        %3255 = vrot.lane.b32.xlu0 %v2830, 96
        %v3256 = vpop.permute.xlu0 %3255
        %3257 = vrot.lane.b32.xlu0 %v2831, 96
        %v3258 = vpop.permute.xlu0 %3257
        %3259 = vrot.lane.b32.xlu0 %v2832, 96
        %v3260 = vpop.permute.xlu0 %3259
        %3261 = vrot.lane.b32.xlu0 %v2833, 96
        %v3262 = vpop.permute.xlu0 %3261
        %3263 = vrot.lane.b32.xlu0 %v2834, 96
        %v3264 = vpop.permute.xlu0 %3263
        %3265 = vrot.lane.b32.xlu0 %v2835, 96
        %v3266 = vpop.permute.xlu0 %3265
        %3267 = vrot.lane.b32.xlu0 %v2836, 96
        %v3268 = vpop.permute.xlu0 %3267
        %3269 = vrot.lane.b32.xlu0 %v2837, 96
        %v3270 = vpop.permute.xlu0 %3269
        %3271 = vrot.lane.b32.xlu0 %v2838, 96
        %v3272 = vpop.permute.xlu0 %3271
        %3273 = vrot.lane.b32.xlu0 %v2839, 96
        %v3274 = vpop.permute.xlu0 %3273
        %3275 = vrot.lane.b32.xlu0 %v2840, 96
        %v3276 = vpop.permute.xlu0 %3275
        %3277 = vrot.lane.b32.xlu0 %v2841, 96
        %v3278 = vpop.permute.xlu0 %3277
        %3279 = vrot.lane.b32.xlu0 %v2842, 96
        %v3280 = vpop.permute.xlu0 %3279
        %3281 = vrot.lane.b32.xlu0 %v2843, 96
        %v3282 = vpop.permute.xlu0 %3281
        %3283 = vrot.lane.b32.xlu0 %v2844, 96
        %v3284 = vpop.permute.xlu0 %3283
        %3285 = vrot.lane.b32.xlu0 %v2845, 96
        %v3286 = vpop.permute.xlu0 %3285
        %3303 = vmatprep.subr.bf16.mxu0 0
        %3304 = vmatpush1.bf16.msra.mxu0 %v3256
        %3305 = vmatprep.subr.bf16.mxu0 0
        %3306 = vmatpush1.bf16.msra.mxu0 %v3258
        %3307 = vmatprep.subr.bf16.mxu0 0
        %3308 = vmatpush1.bf16.msra.mxu0 %v3260
        %3309 = vmatprep.subr.bf16.mxu0 0
        %3310 = vmatpush1.bf16.msra.mxu0 %v3262
        %3311 = vmatprep.subr.bf16.mxu0 0
        %3312 = vmatpush1.bf16.msra.mxu0 %v3264
        %3313 = vmatprep.subr.bf16.mxu0 0
        %3314 = vmatpush1.bf16.msra.mxu0 %v3266
        %3315 = vmatprep.subr.bf16.mxu0 0
        %3316 = vmatpush1.bf16.msra.mxu0 %v3268
        %3317 = vmatprep.subr.bf16.mxu0 0
        %3318 = vmatpush1.bf16.msra.mxu0 %v3270
        %3319 = vmatprep.subr.bf16.mxu0 0
        %3320 = vmatpush1.bf16.msra.mxu0 %v3272
        %3321 = vmatprep.subr.bf16.mxu0 0
        %3322 = vmatpush1.bf16.msra.mxu0 %v3274
        %3323 = vmatprep.subr.bf16.mxu0 0
        %3324 = vmatpush1.bf16.msra.mxu0 %v3276
        %3325 = vmatprep.subr.bf16.mxu0 0
        %3326 = vmatpush1.bf16.msra.mxu0 %v3278
        %3327 = vmatprep.subr.bf16.mxu0 0
        %3328 = vmatpush1.bf16.msra.mxu0 %v3280
        %3329 = vmatprep.subr.bf16.mxu0 0
        %3330 = vmatpush1.bf16.msra.mxu0 %v3282
        %3331 = vmatprep.subr.bf16.mxu0 0
        %3332 = vmatpush1.bf16.msra.mxu0 %v3284
        %3333 = vmatprep.subr.bf16.mxu0 0
        %3334 = vmatpush1.bf16.msra.mxu0 %v3286
        %3335 = vmatprep.mubr.bf16.mxu0 %v3196
        %3336 = vmatmul.mubr.bf16.gmra.mrb[0].mxu0 %v3193
        %v3337 = vpop.f32.mrb[0].mxu0
        %v3338 = vadd.f32 0.0, %v3337
        %v3339 = vpop.f32.mrb[0].mxu0
        %v3340 = vpop.f32.mrb[0].mxu0
        %v3341 = vadd.f32 0.0, %v3340
        %v3342 = vpop.f32.mrb[0].mxu0
        %3343 = vmatprep.mubr.bf16.mxu0 %v3202
        %3344 = vmatmul.mubr.bf16.gmra.mrb[0].mxu0 %v3199
        %v3345 = vpop.f32.mrb[0].mxu0
        %v3346 = vadd.f32 0.0, %v3345
        %v3347 = vpop.f32.mrb[0].mxu0
        %v3348 = vpop.f32.mrb[0].mxu0
        %v3349 = vadd.f32 0.0, %v3348
        %v3350 = vpop.f32.mrb[0].mxu0
        %3351 = vmatprep.mubr.bf16.mxu0 %v3208
        %3352 = vmatmul.mubr.bf16.gmra.mrb[0].mxu0 %v3205
        %v3353 = vpop.f32.mrb[0].mxu0
        %v3354 = vadd.f32 0.0, %v3353
        %v3355 = vpop.f32.mrb[0].mxu0
        %v3356 = vpop.f32.mrb[0].mxu0
        %v3357 = vadd.f32 0.0, %v3356
        %v3358 = vpop.f32.mrb[0].mxu0
        %3359 = vmatprep.mubr.bf16.mxu0 %v3214
        %3360 = vmatmul.mubr.bf16.gmra.mrb[0].mxu0 %v3211
        %v3361 = vpop.f32.mrb[0].mxu0
        %v3362 = vadd.f32 0.0, %v3361
        %v3363 = vpop.f32.mrb[0].mxu0
        %v3364 = vpop.f32.mrb[0].mxu0
        %v3365 = vadd.f32 0.0, %v3364
        %v3366 = vpop.f32.mrb[0].mxu0
        %3367 = vmatprep.mubr.bf16.mxu0 %v3220
        %3368 = vmatmul.mubr.bf16.gmra.mrb[0].mxu0 %v3217
        %v3369 = vpop.f32.mrb[0].mxu0
        %v3370 = vadd.f32 0.0, %v3369
        %v3371 = vpop.f32.mrb[0].mxu0
        %v3372 = vpop.f32.mrb[0].mxu0
        %v3373 = vadd.f32 0.0, %v3372
        %v3374 = vpop.f32.mrb[0].mxu0
        %3375 = vmatprep.mubr.bf16.mxu0 %v3226
        %3376 = vmatmul.mubr.bf16.gmra.mrb[0].mxu0 %v3223
        %v3377 = vpop.f32.mrb[0].mxu0
        %v3378 = vadd.f32 0.0, %v3377
        %v3379 = vpop.f32.mrb[0].mxu0
        %v3380 = vpop.f32.mrb[0].mxu0
        %v3381 = vadd.f32 0.0, %v3380
        %v3382 = vpop.f32.mrb[0].mxu0
        %3383 = vmatprep.mubr.bf16.mxu0 %v3232
        %3384 = vmatmul.mubr.bf16.gmra.mrb[0].mxu0 %v3229
        %v3385 = vpop.f32.mrb[0].mxu0
        %v3386 = vadd.f32 0.0, %v3385
        %v3387 = vpop.f32.mrb[0].mxu0
        %v3388 = vpop.f32.mrb[0].mxu0
        %v3389 = vadd.f32 0.0, %v3388
        %v3390 = vpop.f32.mrb[0].mxu0
        %3391 = vmatprep.mubr.bf16.mxu0 %v3238
        %3392 = vmatmul.mubr.bf16.gmra.mrb[0].mxu0 %v3235
        %v3393 = vpop.f32.mrb[0].mxu0
        %v3394 = vadd.f32 0.0, %v3393
        %v3395 = vpop.f32.mrb[0].mxu0
        %v3396 = vpop.f32.mrb[0].mxu0
        %v3397 = vadd.f32 0.0, %v3396
        %v3398 = vpop.f32.mrb[0].mxu0
        %3399 = vdwg.mxu0
        %3400 = vmatprep.subr.bf16.mxu0 0
        %3401 = vmatpush1.bf16.msra.mxu0 1065369472
        %3402 = vmatprep.subr.bf16.mxu0 0
        %3403 = vmatpush1.bf16.msra.mxu0 1065369472
        %3404 = vmatprep.subr.bf16.mxu0 0
        %3405 = vmatpush1.bf16.msra.mxu0 1065369472
        %3406 = vmatprep.subr.bf16.mxu0 0
        %3407 = vmatpush1.bf16.msra.mxu0 1065369472
        %3408 = vmatprep.subr.bf16.mxu0 0
        %3409 = vmatpush1.bf16.msra.mxu0 1065369472
        %3410 = vmatprep.subr.bf16.mxu0 0
        %3411 = vmatpush1.bf16.msra.mxu0 1065369472
        %3412 = vmatprep.subr.bf16.mxu0 0
        %3413 = vmatpush1.bf16.msra.mxu0 1065369472
        %3414 = vmatprep.subr.bf16.mxu0 0
        %3415 = vmatpush1.bf16.msra.mxu0 1065369472
        %3416 = vmatprep.subr.bf16.mxu0 0
        %3417 = vmatpush1.bf16.msra.mxu0 1065369472
        %3418 = vmatprep.subr.bf16.mxu0 0
        %3419 = vmatpush1.bf16.msra.mxu0 1065369472
        %3420 = vmatprep.subr.bf16.mxu0 0
        %3421 = vmatpush1.bf16.msra.mxu0 1065369472
        %3422 = vmatprep.subr.bf16.mxu0 0
        %3423 = vmatpush1.bf16.msra.mxu0 1065369472
        %3424 = vmatprep.subr.bf16.mxu0 0
        %3425 = vmatpush1.bf16.msra.mxu0 1065369472
        %3426 = vmatprep.subr.bf16.mxu0 0
        %3427 = vmatpush1.bf16.msra.mxu0 1065369472
        %3428 = vmatprep.subr.bf16.mxu0 0
        %3429 = vmatpush1.bf16.msra.mxu0 1065369472
        %3430 = vmatprep.subr.bf16.mxu0 0
        %3431 = vmatpush1.bf16.msra.mxu0 1065369472
        %3432 = vmatprep.mubr.bf16.mxu0 %v3196
        %3433 = vmatmul.mubr.bf16.gmra.mrb[0].mxu0 %v3193
        %v3434 = vpop.f32.mrb[0].mxu0
        %v3435 = vadd.f32 0.0, %v3434
        %v3436 = vpop.f32.mrb[0].mxu0
        %v3437 = vpop.f32.mrb[0].mxu0
        %v3438 = vadd.f32 0.0, %v3437
        %v3439 = vpop.f32.mrb[0].mxu0
        %3440 = vmatprep.mubr.bf16.mxu0 %v3202
        %3441 = vmatmul.mubr.bf16.gmra.mrb[0].mxu0 %v3199
        %v3442 = vpop.f32.mrb[0].mxu0
        %v3443 = vadd.f32 0.0, %v3442
        %v3444 = vpop.f32.mrb[0].mxu0
        %v3445 = vpop.f32.mrb[0].mxu0
        %v3446 = vadd.f32 0.0, %v3445
        %v3447 = vpop.f32.mrb[0].mxu0
        %3448 = vmatprep.mubr.bf16.mxu0 %v3208
        %3449 = vmatmul.mubr.bf16.gmra.mrb[0].mxu0 %v3205
        %v3450 = vpop.f32.mrb[0].mxu0
        %v3451 = vadd.f32 0.0, %v3450
        %v3452 = vpop.f32.mrb[0].mxu0
        %v3453 = vpop.f32.mrb[0].mxu0
        %v3454 = vadd.f32 0.0, %v3453
        %v3455 = vpop.f32.mrb[0].mxu0
        %3456 = vmatprep.mubr.bf16.mxu0 %v3214
        %3457 = vmatmul.mubr.bf16.gmra.mrb[0].mxu0 %v3211
        %v3458 = vpop.f32.mrb[0].mxu0
        %v3459 = vadd.f32 0.0, %v3458
        %v3460 = vpop.f32.mrb[0].mxu0
        %v3461 = vpop.f32.mrb[0].mxu0
        %v3462 = vadd.f32 0.0, %v3461
        %v3463 = vpop.f32.mrb[0].mxu0
        %3464 = vmatprep.mubr.bf16.mxu0 %v3220
        %3465 = vmatmul.mubr.bf16.gmra.mrb[0].mxu0 %v3217
        %v3466 = vpop.f32.mrb[0].mxu0
        %v3467 = vadd.f32 0.0, %v3466
        %v3468 = vpop.f32.mrb[0].mxu0
        %v3469 = vpop.f32.mrb[0].mxu0
        %v3470 = vadd.f32 0.0, %v3469
        %v3471 = vpop.f32.mrb[0].mxu0
        %3472 = vmatprep.mubr.bf16.mxu0 %v3226
        %3473 = vmatmul.mubr.bf16.gmra.mrb[0].mxu0 %v3223
        %v3474 = vpop.f32.mrb[0].mxu0
        %v3475 = vadd.f32 0.0, %v3474
        %v3476 = vpop.f32.mrb[0].mxu0
        %v3477 = vpop.f32.mrb[0].mxu0
        %v3478 = vadd.f32 0.0, %v3477
        %v3479 = vpop.f32.mrb[0].mxu0
        %3480 = vmatprep.mubr.bf16.mxu0 %v3232
        %3481 = vmatmul.mubr.bf16.gmra.mrb[0].mxu0 %v3229
        %v3482 = vpop.f32.mrb[0].mxu0
        %v3483 = vadd.f32 0.0, %v3482
        %v3484 = vpop.f32.mrb[0].mxu0
        %v3485 = vpop.f32.mrb[0].mxu0
        %v3486 = vadd.f32 0.0, %v3485
        %v3487 = vpop.f32.mrb[0].mxu0
        %3488 = vmatprep.mubr.bf16.mxu0 %v3238
        %3489 = vmatmul.mubr.bf16.gmra.mrb[0].mxu0 %v3235
        %v3490 = vpop.f32.mrb[0].mxu0
        %v3491 = vadd.f32 0.0, %v3490
        %v3492 = vpop.f32.mrb[0].mxu0
        %v3493 = vpop.f32.mrb[0].mxu0
        %v3494 = vadd.f32 0.0, %v3493
        %v3495 = vpop.f32.mrb[0].mxu0
        %3496 = vdwg.mxu0
        %v3497 = vrcp.pop %v3435
        %v3498 = vrcp.pop %v3438
        %v3499 = vrcp.pop %v3443
        %v3500 = vrcp.pop %v3446
        %v3501 = vrcp.pop %v3451
        %v3502 = vrcp.pop %v3454
        %v3503 = vrcp.pop %v3459
        %v3504 = vrcp.pop %v3462
        %v3505 = vrcp.pop %v3467
        %v3506 = vrcp.pop %v3470
        %v3507 = vrcp.pop %v3475
        %v3508 = vrcp.pop %v3478
        %v3509 = vrcp.pop %v3483
        %v3510 = vrcp.pop %v3486
        %v3511 = vrcp.pop %v3491
        %v3512 = vrcp.pop %v3494
        %3514 = vset.pattern.permute.xlu0 0
        %3515 = vperm.xlu0 %3514, %v3497
        %v3516 = vpop.permute.xlu0 %3515
        %3519 = vset.pattern.permute.xlu0 0
        %3520 = vperm.xlu0 %3519, %v3498
        %v3521 = vpop.permute.xlu0 %3520
        %3524 = vset.pattern.permute.xlu0 0
        %3525 = vperm.xlu0 %3524, %v3499
        %v3526 = vpop.permute.xlu0 %3525
        %3529 = vset.pattern.permute.xlu0 0
        %3530 = vperm.xlu0 %3529, %v3500
        %v3531 = vpop.permute.xlu0 %3530
        %3534 = vset.pattern.permute.xlu0 0
        %3535 = vperm.xlu0 %3534, %v3501
        %v3536 = vpop.permute.xlu0 %3535
        %3539 = vset.pattern.permute.xlu0 0
        %3540 = vperm.xlu0 %3539, %v3502
        %v3541 = vpop.permute.xlu0 %3540
        %3544 = vset.pattern.permute.xlu0 0
        %3545 = vperm.xlu0 %3544, %v3503
        %v3546 = vpop.permute.xlu0 %3545
        %3549 = vset.pattern.permute.xlu0 0
        %3550 = vperm.xlu0 %3549, %v3504
        %v3551 = vpop.permute.xlu0 %3550
        %3554 = vset.pattern.permute.xlu0 0
        %3555 = vperm.xlu0 %3554, %v3505
        %v3556 = vpop.permute.xlu0 %3555
        %3559 = vset.pattern.permute.xlu0 0
        %3560 = vperm.xlu0 %3559, %v3506
        %v3561 = vpop.permute.xlu0 %3560
        %3564 = vset.pattern.permute.xlu0 0
        %3565 = vperm.xlu0 %3564, %v3507
        %v3566 = vpop.permute.xlu0 %3565
        %3569 = vset.pattern.permute.xlu0 0
        %3570 = vperm.xlu0 %3569, %v3508
        %v3571 = vpop.permute.xlu0 %3570
        %3574 = vset.pattern.permute.xlu0 0
        %3575 = vperm.xlu0 %3574, %v3509
        %v3576 = vpop.permute.xlu0 %3575
        %3579 = vset.pattern.permute.xlu0 0
        %3580 = vperm.xlu0 %3579, %v3510
        %v3581 = vpop.permute.xlu0 %3580
        %3584 = vset.pattern.permute.xlu0 0
        %3585 = vperm.xlu0 %3584, %v3511
        %v3586 = vpop.permute.xlu0 %3585
        %3589 = vset.pattern.permute.xlu0 0
        %3590 = vperm.xlu0 %3589, %v3512
        %v3591 = vpop.permute.xlu0 %3590
        %v3593 = vmul.f32 %v3338, %v3516
        %v3594 = vmul.f32 %v3341, %v3521
        %v3595 = vmul.f32 %v3346, %v3526
        %v3596 = vmul.f32 %v3349, %v3531
        %v3597 = vmul.f32 %v3354, %v3536
        %v3598 = vmul.f32 %v3357, %v3541
        %v3599 = vmul.f32 %v3362, %v3546
        %v3600 = vmul.f32 %v3365, %v3551
        %v3601 = vmul.f32 %v3370, %v3556
        %v3602 = vmul.f32 %v3373, %v3561
        %v3603 = vmul.f32 %v3378, %v3566
        %v3604 = vmul.f32 %v3381, %v3571
        %v3605 = vmul.f32 %v3386, %v3576
        %v3606 = vmul.f32 %v3389, %v3581
        %v3607 = vmul.f32 %v3394, %v3586
        %v3608 = vmul.f32 %v3397, %v3591
        %3625 = vrot.lane.b32.xlu0 %v3593, 32
        %v3626 = vpop.permute.xlu0 %3625
        %3627 = vrot.lane.b32.xlu0 %v3594, 32
        %v3628 = vpop.permute.xlu0 %3627
        %3629 = vrot.lane.b32.xlu0 %v3595, 32
        %v3630 = vpop.permute.xlu0 %3629
        %3631 = vrot.lane.b32.xlu0 %v3596, 32
        %v3632 = vpop.permute.xlu0 %3631
        %3633 = vrot.lane.b32.xlu0 %v3597, 32
        %v3634 = vpop.permute.xlu0 %3633
        %3635 = vrot.lane.b32.xlu0 %v3598, 32
        %v3636 = vpop.permute.xlu0 %3635
        %3637 = vrot.lane.b32.xlu0 %v3599, 32
        %v3638 = vpop.permute.xlu0 %3637
        %3639 = vrot.lane.b32.xlu0 %v3600, 32
        %v3640 = vpop.permute.xlu0 %3639
        %3641 = vrot.lane.b32.xlu0 %v3601, 32
        %v3642 = vpop.permute.xlu0 %3641
        %3643 = vrot.lane.b32.xlu0 %v3602, 32
        %v3644 = vpop.permute.xlu0 %3643
        %3645 = vrot.lane.b32.xlu0 %v3603, 32
        %v3646 = vpop.permute.xlu0 %3645
        %3647 = vrot.lane.b32.xlu0 %v3604, 32
        %v3648 = vpop.permute.xlu0 %3647
        %3649 = vrot.lane.b32.xlu0 %v3605, 32
        %v3650 = vpop.permute.xlu0 %3649
        %3651 = vrot.lane.b32.xlu0 %v3606, 32
        %v3652 = vpop.permute.xlu0 %3651
        %3653 = vrot.lane.b32.xlu0 %v3607, 32
        %v3654 = vpop.permute.xlu0 %3653
        %3655 = vrot.lane.b32.xlu0 %v3608, 32
        %v3656 = vpop.permute.xlu0 %3655
        %vm3673 = vcmask 392448
        %3674 = vst.msk [vmem:[#allocation4] sm:$0xff] %vm3673, %v3626
        %3675 = vst.msk [vmem:[#allocation4 + $0x8] sm:$0xff] %vm3673, %v3628
        %3676 = vst.msk [vmem:[#allocation4 + $0x10] sm:$0xff] %vm3673, %v3630
        %3677 = vst.msk [vmem:[#allocation4 + $0x18] sm:$0xff] %vm3673, %v3632
        %3678 = vst.msk [vmem:[#allocation4 + $0x20] sm:$0xff] %vm3673, %v3634
        %3679 = vst.msk [vmem:[#allocation4 + $0x28] sm:$0xff] %vm3673, %v3636
        %3680 = vst.msk [vmem:[#allocation4 + $0x30] sm:$0xff] %vm3673, %v3638
        %3681 = vst.msk [vmem:[#allocation4 + $0x38] sm:$0xff] %vm3673, %v3640
        %3682 = vst.msk [vmem:[#allocation4 + $0x40] sm:$0xff] %vm3673, %v3642
        %3683 = vst.msk [vmem:[#allocation4 + $0x48] sm:$0xff] %vm3673, %v3644
        %3684 = vst.msk [vmem:[#allocation4 + $0x50] sm:$0xff] %vm3673, %v3646
        %3685 = vst.msk [vmem:[#allocation4 + $0x58] sm:$0xff] %vm3673, %v3648
        %3686 = vst.msk [vmem:[#allocation4 + $0x60] sm:$0xff] %vm3673, %v3650
        %3687 = vst.msk [vmem:[#allocation4 + $0x68] sm:$0xff] %vm3673, %v3652
        %3688 = vst.msk [vmem:[#allocation4 + $0x70] sm:$0xff] %vm3673, %v3654
        %3689 = vst.msk [vmem:[#allocation4 + $0x78] sm:$0xff] %vm3673, %v3656
        %v3690 = vld [vmem:[#allocation2] sm:$0xff]
        %v3691 = vld [vmem:[#allocation2 + $0x8] sm:$0xff]
        %v3692 = vld [vmem:[#allocation2 + $0x10] sm:$0xff]
        %v3693 = vld [vmem:[#allocation2 + $0x18] sm:$0xff]
        %v3694 = vld [vmem:[#allocation2 + $0x20] sm:$0xff]
        %v3695 = vld [vmem:[#allocation2 + $0x28] sm:$0xff]
        %v3696 = vld [vmem:[#allocation2 + $0x30] sm:$0xff]
        %v3697 = vld [vmem:[#allocation2 + $0x38] sm:$0xff]
        %v3698 = vld [vmem:[#allocation3] sm:$0xff]
        %v3699 = vld [vmem:[#allocation3 + $0x8] sm:$0xff]
        %v3700 = vld [vmem:[#allocation3 + $0x10] sm:$0xff]
        %v3701 = vld [vmem:[#allocation3 + $0x18] sm:$0xff]
        %v3702 = vld [vmem:[#allocation3 + $0x20] sm:$0xff]
        %v3703 = vld [vmem:[#allocation3 + $0x28] sm:$0xff]
        %v3704 = vld [vmem:[#allocation3 + $0x30] sm:$0xff]
        %v3705 = vld [vmem:[#allocation3 + $0x38] sm:$0xff]
        %v3706 = vld [vmem:[#allocation3 + $0x40] sm:$0xff]
        %v3707 = vld [vmem:[#allocation3 + $0x48] sm:$0xff]
        %v3708 = vld [vmem:[#allocation3 + $0x50] sm:$0xff]
        %v3709 = vld [vmem:[#allocation3 + $0x58] sm:$0xff]
        %v3710 = vld [vmem:[#allocation3 + $0x60] sm:$0xff]
        %v3711 = vld [vmem:[#allocation3 + $0x68] sm:$0xff]
        %v3712 = vld [vmem:[#allocation3 + $0x70] sm:$0xff]
        %v3713 = vld [vmem:[#allocation3 + $0x78] sm:$0xff]
        %v3714 = vld [vmem:[#allocation3 + $0x80] sm:$0xff]
        %v3715 = vld [vmem:[#allocation3 + $0x88] sm:$0xff]
        %v3716 = vld [vmem:[#allocation3 + $0x90] sm:$0xff]
        %v3717 = vld [vmem:[#allocation3 + $0x98] sm:$0xff]
        %v3718 = vld [vmem:[#allocation3 + $0xa0] sm:$0xff]
        %v3719 = vld [vmem:[#allocation3 + $0xa8] sm:$0xff]
        %v3720 = vld [vmem:[#allocation3 + $0xb0] sm:$0xff]
        %v3721 = vld [vmem:[#allocation3 + $0xb8] sm:$0xff]
        %v3722 = vld [vmem:[#allocation3 + $0xc0] sm:$0xff]
        %v3723 = vld [vmem:[#allocation3 + $0xc8] sm:$0xff]
        %v3724 = vld [vmem:[#allocation3 + $0xd0] sm:$0xff]
        %v3725 = vld [vmem:[#allocation3 + $0xd8] sm:$0xff]
        %v3726 = vld [vmem:[#allocation3 + $0xe0] sm:$0xff]
        %v3727 = vld [vmem:[#allocation3 + $0xe8] sm:$0xff]
        %v3728 = vld [vmem:[#allocation3 + $0xf0] sm:$0xff]
        %v3729 = vld [vmem:[#allocation3 + $0xf8] sm:$0xff]
        %3738 = vrot.lane.b32.xlu0 %v3690, 80
        %v3739 = vpop.permute.xlu0 %3738
        %3740 = vrot.lane.b32.xlu0 %v3691, 80
        %v3741 = vpop.permute.xlu0 %3740
        %3742 = vrot.lane.b32.xlu0 %v3692, 80
        %v3743 = vpop.permute.xlu0 %3742
        %3744 = vrot.lane.b32.xlu0 %v3693, 80
        %v3745 = vpop.permute.xlu0 %3744
        %3746 = vrot.lane.b32.xlu0 %v3694, 80
        %v3747 = vpop.permute.xlu0 %3746
        %3748 = vrot.lane.b32.xlu0 %v3695, 80
        %v3749 = vpop.permute.xlu0 %3748
        %3750 = vrot.lane.b32.xlu0 %v3696, 80
        %v3751 = vpop.permute.xlu0 %3750
        %3752 = vrot.lane.b32.xlu0 %v3697, 80
        %v3753 = vpop.permute.xlu0 %3752
        %3770 = vrot.lane.b32.xlu0 %v3698, 80
        %v3771 = vpop.permute.xlu0 %3770
        %3772 = vrot.lane.b32.xlu0 %v3699, 80
        %v3773 = vpop.permute.xlu0 %3772
        %3774 = vrot.lane.b32.xlu0 %v3700, 80
        %v3775 = vpop.permute.xlu0 %3774
        %3776 = vrot.lane.b32.xlu0 %v3701, 80
        %v3777 = vpop.permute.xlu0 %3776
        %3778 = vrot.lane.b32.xlu0 %v3702, 80
        %v3779 = vpop.permute.xlu0 %3778
        %3780 = vrot.lane.b32.xlu0 %v3703, 80
        %v3781 = vpop.permute.xlu0 %3780
        %3782 = vrot.lane.b32.xlu0 %v3704, 80
        %v3783 = vpop.permute.xlu0 %3782
        %3784 = vrot.lane.b32.xlu0 %v3705, 80
        %v3785 = vpop.permute.xlu0 %3784
        %3786 = vrot.lane.b32.xlu0 %v3706, 80
        %v3787 = vpop.permute.xlu0 %3786
        %3788 = vrot.lane.b32.xlu0 %v3707, 80
        %v3789 = vpop.permute.xlu0 %3788
        %3790 = vrot.lane.b32.xlu0 %v3708, 80
        %v3791 = vpop.permute.xlu0 %3790
        %3792 = vrot.lane.b32.xlu0 %v3709, 80
        %v3793 = vpop.permute.xlu0 %3792
        %3794 = vrot.lane.b32.xlu0 %v3710, 80
        %v3795 = vpop.permute.xlu0 %3794
        %3796 = vrot.lane.b32.xlu0 %v3711, 80
        %v3797 = vpop.permute.xlu0 %3796
        %3798 = vrot.lane.b32.xlu0 %v3712, 80
        %v3799 = vpop.permute.xlu0 %3798
        %3800 = vrot.lane.b32.xlu0 %v3713, 80
        %v3801 = vpop.permute.xlu0 %3800
        %v3803 = vsel %vm1278, %v3739, 0
        %v3806 = vsel %vm1278, %v3741, 0
        %v3809 = vsel %vm1278, %v3743, 0
        %v3812 = vsel %vm1278, %v3745, 0
        %v3815 = vsel %vm1278, %v3747, 0
        %v3818 = vsel %vm1278, %v3749, 0
        %v3821 = vsel %vm1278, %v3751, 0
        %v3824 = vsel %vm1278, %v3753, 0
        %v3827 = vsel %vm1278, %v3771, 0
        %v3830 = vsel %vm1278, %v3773, 0
        %v3833 = vsel %vm1278, %v3775, 0
        %v3836 = vsel %vm1278, %v3777, 0
        %v3839 = vsel %vm1278, %v3779, 0
        %v3842 = vsel %vm1278, %v3781, 0
        %v3845 = vsel %vm1278, %v3783, 0
        %v3848 = vsel %vm1278, %v3785, 0
        %v3851 = vsel %vm1278, %v3787, 0
        %v3854 = vsel %vm1278, %v3789, 0
        %v3857 = vsel %vm1278, %v3791, 0
        %v3860 = vsel %vm1278, %v3793, 0
        %v3863 = vsel %vm1278, %v3795, 0
        %v3866 = vsel %vm1278, %v3797, 0
        %v3869 = vsel %vm1278, %v3799, 0
        %v3872 = vsel %vm1278, %v3801, 0
        %3874 = vmatprep.subr.bf16.mxu0 0
        %3875 = vmatpush1.bf16.xpose.msra.mxu0 %v3827
        %3876 = vmatprep.subr.bf16.mxu0 0
        %3877 = vmatpush1.bf16.xpose.msra.mxu0 %v3830
        %3878 = vmatprep.subr.bf16.mxu0 0
        %3879 = vmatpush1.bf16.xpose.msra.mxu0 %v3833
        %3880 = vmatprep.subr.bf16.mxu0 0
        %3881 = vmatpush1.bf16.xpose.msra.mxu0 %v3836
        %3882 = vmatprep.subr.bf16.mxu0 0
        %3883 = vmatpush1.bf16.xpose.msra.mxu0 %v3839
        %3884 = vmatprep.subr.bf16.mxu0 0
        %3885 = vmatpush1.bf16.xpose.msra.mxu0 %v3842
        %3886 = vmatprep.subr.bf16.mxu0 0
        %3887 = vmatpush1.bf16.xpose.msra.mxu0 %v3845
        %3888 = vmatprep.subr.bf16.mxu0 0
        %3889 = vmatpush1.bf16.xpose.msra.mxu0 %v3848
        %3890 = vmatprep.subr.bf16.mxu0 0
        %3891 = vmatpush1.bf16.xpose.msra.mxu0 %v3851
        %3892 = vmatprep.subr.bf16.mxu0 0
        %3893 = vmatpush1.bf16.xpose.msra.mxu0 %v3854
        %3894 = vmatprep.subr.bf16.mxu0 0
        %3895 = vmatpush1.bf16.xpose.msra.mxu0 %v3857
        %3896 = vmatprep.subr.bf16.mxu0 0
        %3897 = vmatpush1.bf16.xpose.msra.mxu0 %v3860
        %3898 = vmatprep.subr.bf16.mxu0 0
        %3899 = vmatpush1.bf16.xpose.msra.mxu0 %v3863
        %3900 = vmatprep.subr.bf16.mxu0 0
        %3901 = vmatpush1.bf16.xpose.msra.mxu0 %v3866
        %3902 = vmatprep.subr.bf16.mxu0 0
        %3903 = vmatpush1.bf16.xpose.msra.mxu0 %v3869
        %3904 = vmatprep.subr.bf16.mxu0 0
        %3905 = vmatpush1.bf16.xpose.msra.mxu0 %v3872
        %3906 = vmatprep.mubr.bf16.mxu0 0
        %3907 = vmatmul.mubr.bf16.gmra.mrb[0].mxu0 %v3803
        %v3908 = vpop.f32.mrb[0].mxu0
        %v3909 = vadd.f32 0.0, %v3908
        %v3910 = vpop.f32.mrb[0].mxu0
        %v3911 = vadd.f32 0.0, %v3910
        %v3912 = vpop.f32.mrb[0].mxu0
        %v3913 = vadd.f32 0.0, %v3912
        %v3914 = vpop.f32.mrb[0].mxu0
        %v3915 = vadd.f32 0.0, %v3914
        %3916 = vmatprep.mubr.bf16.mxu0 0
        %3917 = vmatmul.mubr.bf16.gmra.mrb[0].mxu0 %v3806
        %v3918 = vpop.f32.mrb[0].mxu0
        %v3919 = vadd.f32 0.0, %v3918
        %v3920 = vpop.f32.mrb[0].mxu0
        %v3921 = vadd.f32 0.0, %v3920
        %v3922 = vpop.f32.mrb[0].mxu0
        %v3923 = vadd.f32 0.0, %v3922
        %v3924 = vpop.f32.mrb[0].mxu0
        %v3925 = vadd.f32 0.0, %v3924
        %3926 = vmatprep.mubr.bf16.mxu0 0
        %3927 = vmatmul.mubr.bf16.gmra.mrb[0].mxu0 %v3809
        %v3928 = vpop.f32.mrb[0].mxu0
        %v3929 = vadd.f32 0.0, %v3928
        %v3930 = vpop.f32.mrb[0].mxu0
        %v3931 = vadd.f32 0.0, %v3930
        %v3932 = vpop.f32.mrb[0].mxu0
        %v3933 = vadd.f32 0.0, %v3932
        %v3934 = vpop.f32.mrb[0].mxu0
        %v3935 = vadd.f32 0.0, %v3934
        %3936 = vmatprep.mubr.bf16.mxu0 0
        %3937 = vmatmul.mubr.bf16.gmra.mrb[0].mxu0 %v3812
        %v3938 = vpop.f32.mrb[0].mxu0
        %v3939 = vadd.f32 0.0, %v3938
        %v3940 = vpop.f32.mrb[0].mxu0
        %v3941 = vadd.f32 0.0, %v3940
        %v3942 = vpop.f32.mrb[0].mxu0
        %v3943 = vadd.f32 0.0, %v3942
        %v3944 = vpop.f32.mrb[0].mxu0
        %v3945 = vadd.f32 0.0, %v3944
        %3946 = vmatprep.mubr.bf16.mxu0 0
        %3947 = vmatmul.mubr.bf16.gmra.mrb[0].mxu0 %v3815
        %v3948 = vpop.f32.mrb[0].mxu0
        %v3949 = vadd.f32 0.0, %v3948
        %v3950 = vpop.f32.mrb[0].mxu0
        %v3951 = vadd.f32 0.0, %v3950
        %v3952 = vpop.f32.mrb[0].mxu0
        %v3953 = vadd.f32 0.0, %v3952
        %v3954 = vpop.f32.mrb[0].mxu0
        %v3955 = vadd.f32 0.0, %v3954
        %3956 = vmatprep.mubr.bf16.mxu0 0
        %3957 = vmatmul.mubr.bf16.gmra.mrb[0].mxu0 %v3818
        %v3958 = vpop.f32.mrb[0].mxu0
        %v3959 = vadd.f32 0.0, %v3958
        %v3960 = vpop.f32.mrb[0].mxu0
        %v3961 = vadd.f32 0.0, %v3960
        %v3962 = vpop.f32.mrb[0].mxu0
        %v3963 = vadd.f32 0.0, %v3962
        %v3964 = vpop.f32.mrb[0].mxu0
        %v3965 = vadd.f32 0.0, %v3964
        %3966 = vmatprep.mubr.bf16.mxu0 0
        %3967 = vmatmul.mubr.bf16.gmra.mrb[0].mxu0 %v3821
        %v3968 = vpop.f32.mrb[0].mxu0
        %v3969 = vadd.f32 0.0, %v3968
        %v3970 = vpop.f32.mrb[0].mxu0
        %v3971 = vadd.f32 0.0, %v3970
        %v3972 = vpop.f32.mrb[0].mxu0
        %v3973 = vadd.f32 0.0, %v3972
        %v3974 = vpop.f32.mrb[0].mxu0
        %v3975 = vadd.f32 0.0, %v3974
        %3976 = vmatprep.mubr.bf16.mxu0 0
        %3977 = vmatmul.mubr.bf16.gmra.mrb[0].mxu0 %v3824
        %v3978 = vpop.f32.mrb[0].mxu0
        %v3979 = vadd.f32 0.0, %v3978
        %v3980 = vpop.f32.mrb[0].mxu0
        %v3981 = vadd.f32 0.0, %v3980
        %v3982 = vpop.f32.mrb[0].mxu0
        %v3983 = vadd.f32 0.0, %v3982
        %v3984 = vpop.f32.mrb[0].mxu0
        %v3985 = vadd.f32 0.0, %v3984
        %3986 = vdwg.mxu0
        %v3987 = vmax.f32 %v3909, %v3911
        %3988 = vmax.xlane.f32.xlu0 %v3987
        %v3989 = vpop.xlane.xlu0 %3988
        %v3990 = vmax.f32 %v3913, %v3915
        %3991 = vmax.xlane.f32.xlu0 %v3990
        %v3992 = vpop.xlane.xlu0 %3991
        %v3993 = vmax.f32 %v3919, %v3921
        %3994 = vmax.xlane.f32.xlu0 %v3993
        %v3995 = vpop.xlane.xlu0 %3994
        %v3996 = vmax.f32 %v3923, %v3925
        %3997 = vmax.xlane.f32.xlu0 %v3996
        %v3998 = vpop.xlane.xlu0 %3997
        %v3999 = vmax.f32 %v3929, %v3931
        %4000 = vmax.xlane.f32.xlu0 %v3999
        %v4001 = vpop.xlane.xlu0 %4000
        %v4002 = vmax.f32 %v3933, %v3935
        %4003 = vmax.xlane.f32.xlu0 %v4002
        %v4004 = vpop.xlane.xlu0 %4003
        %v4005 = vmax.f32 %v3939, %v3941
        %4006 = vmax.xlane.f32.xlu0 %v4005
        %v4007 = vpop.xlane.xlu0 %4006
        %v4008 = vmax.f32 %v3943, %v3945
        %4009 = vmax.xlane.f32.xlu0 %v4008
        %v4010 = vpop.xlane.xlu0 %4009
        %v4011 = vmax.f32 %v3949, %v3951
        %4012 = vmax.xlane.f32.xlu0 %v4011
        %v4013 = vpop.xlane.xlu0 %4012
        %v4014 = vmax.f32 %v3953, %v3955
        %4015 = vmax.xlane.f32.xlu0 %v4014
        %v4016 = vpop.xlane.xlu0 %4015
        %v4017 = vmax.f32 %v3959, %v3961
        %4018 = vmax.xlane.f32.xlu0 %v4017
        %v4019 = vpop.xlane.xlu0 %4018
        %v4020 = vmax.f32 %v3963, %v3965
        %4021 = vmax.xlane.f32.xlu0 %v4020
        %v4022 = vpop.xlane.xlu0 %4021
        %v4023 = vmax.f32 %v3969, %v3971
        %4024 = vmax.xlane.f32.xlu0 %v4023
        %v4025 = vpop.xlane.xlu0 %4024
        %v4026 = vmax.f32 %v3973, %v3975
        %4027 = vmax.xlane.f32.xlu0 %v4026
        %v4028 = vpop.xlane.xlu0 %4027
        %v4029 = vmax.f32 %v3979, %v3981
        %4030 = vmax.xlane.f32.xlu0 %v4029
        %v4031 = vpop.xlane.xlu0 %4030
        %v4032 = vmax.f32 %v3983, %v3985
        %4033 = vmax.xlane.f32.xlu0 %v4032
        %v4034 = vpop.xlane.xlu0 %4033
        %v4035 = vpack.c.bf16 %v3913, %v3909
        %v4036 = vpack.c.bf16 %v3915, %v3911
        %v4037 = vpack.c.bf16 %v3923, %v3919
        %v4038 = vpack.c.bf16 %v3925, %v3921
        %v4039 = vpack.c.bf16 %v3933, %v3929
        %v4040 = vpack.c.bf16 %v3935, %v3931
        %v4041 = vpack.c.bf16 %v3943, %v3939
        %v4042 = vpack.c.bf16 %v3945, %v3941
        %v4043 = vpack.c.bf16 %v3953, %v3949
        %v4044 = vpack.c.bf16 %v3955, %v3951
        %v4045 = vpack.c.bf16 %v3963, %v3959
        %v4046 = vpack.c.bf16 %v3965, %v3961
        %v4047 = vpack.c.bf16 %v3973, %v3969
        %v4048 = vpack.c.bf16 %v3975, %v3971
        %v4049 = vpack.c.bf16 %v3983, %v3979
        %v4050 = vpack.c.bf16 %v3985, %v3981
        %v4051 = vpack.c.bf16 %v3992, %v3989
        %v4052 = vpack.c.bf16 %v3998, %v3995
        %v4053 = vpack.c.bf16 %v4004, %v4001
        %v4054 = vpack.c.bf16 %v4010, %v4007
        %v4055 = vpack.c.bf16 %v4016, %v4013
        %v4056 = vpack.c.bf16 %v4022, %v4019
        %v4057 = vpack.c.bf16 %v4028, %v4025
        %v4058 = vpack.c.bf16 %v4034, %v4031
        %v4059 = vsub.bf16 %v4035, %v4051
        %v4060 = vsub.bf16 %v4036, %v4051
        %v4061 = vsub.bf16 %v4037, %v4052
        %v4062 = vsub.bf16 %v4038, %v4052
        %v4063 = vsub.bf16 %v4039, %v4053
        %v4064 = vsub.bf16 %v4040, %v4053
        %v4065 = vsub.bf16 %v4041, %v4054
        %v4066 = vsub.bf16 %v4042, %v4054
        %v4067 = vsub.bf16 %v4043, %v4055
        %v4068 = vsub.bf16 %v4044, %v4055
        %v4069 = vsub.bf16 %v4045, %v4056
        %v4070 = vsub.bf16 %v4046, %v4056
        %v4071 = vsub.bf16 %v4047, %v4057
        %v4072 = vsub.bf16 %v4048, %v4057
        %v4073 = vsub.bf16 %v4049, %v4058
        %v4074 = vsub.bf16 %v4050, %v4058
        %v4076 = vmul.bf16 %v4059, 1069105081
        %v4077 = vpow.bf16.pop %v4076
        %v4079 = vmul.bf16 %v4060, 1069105081
        %v4080 = vpow.bf16.pop %v4079
        %v4082 = vmul.bf16 %v4061, 1069105081
        %v4083 = vpow.bf16.pop %v4082
        %v4085 = vmul.bf16 %v4062, 1069105081
        %v4086 = vpow.bf16.pop %v4085
        %v4088 = vmul.bf16 %v4063, 1069105081
        %v4089 = vpow.bf16.pop %v4088
        %v4091 = vmul.bf16 %v4064, 1069105081
        %v4092 = vpow.bf16.pop %v4091
        %v4094 = vmul.bf16 %v4065, 1069105081
        %v4095 = vpow.bf16.pop %v4094
        %v4097 = vmul.bf16 %v4066, 1069105081
        %v4098 = vpow.bf16.pop %v4097
        %v4100 = vmul.bf16 %v4067, 1069105081
        %v4101 = vpow.bf16.pop %v4100
        %v4103 = vmul.bf16 %v4068, 1069105081
        %v4104 = vpow.bf16.pop %v4103
        %v4106 = vmul.bf16 %v4069, 1069105081
        %v4107 = vpow.bf16.pop %v4106
        %v4109 = vmul.bf16 %v4070, 1069105081
        %v4110 = vpow.bf16.pop %v4109
        %v4112 = vmul.bf16 %v4071, 1069105081
        %v4113 = vpow.bf16.pop %v4112
        %v4115 = vmul.bf16 %v4072, 1069105081
        %v4116 = vpow.bf16.pop %v4115
        %v4118 = vmul.bf16 %v4073, 1069105081
        %v4119 = vpow.bf16.pop %v4118
        %v4121 = vmul.bf16 %v4074, 1069105081
        %v4122 = vpow.bf16.pop %v4121
        %4139 = vrot.lane.b32.xlu0 %v3714, 80
        %v4140 = vpop.permute.xlu0 %4139
        %4141 = vrot.lane.b32.xlu0 %v3715, 80
        %v4142 = vpop.permute.xlu0 %4141
        %4143 = vrot.lane.b32.xlu0 %v3716, 80
        %v4144 = vpop.permute.xlu0 %4143
        %4145 = vrot.lane.b32.xlu0 %v3717, 80
        %v4146 = vpop.permute.xlu0 %4145
        %4147 = vrot.lane.b32.xlu0 %v3718, 80
        %v4148 = vpop.permute.xlu0 %4147
        %4149 = vrot.lane.b32.xlu0 %v3719, 80
        %v4150 = vpop.permute.xlu0 %4149
        %4151 = vrot.lane.b32.xlu0 %v3720, 80
        %v4152 = vpop.permute.xlu0 %4151
        %4153 = vrot.lane.b32.xlu0 %v3721, 80
        %v4154 = vpop.permute.xlu0 %4153
        %4155 = vrot.lane.b32.xlu0 %v3722, 80
        %v4156 = vpop.permute.xlu0 %4155
        %4157 = vrot.lane.b32.xlu0 %v3723, 80
        %v4158 = vpop.permute.xlu0 %4157
        %4159 = vrot.lane.b32.xlu0 %v3724, 80
        %v4160 = vpop.permute.xlu0 %4159
        %4161 = vrot.lane.b32.xlu0 %v3725, 80
        %v4162 = vpop.permute.xlu0 %4161
        %4163 = vrot.lane.b32.xlu0 %v3726, 80
        %v4164 = vpop.permute.xlu0 %4163
        %4165 = vrot.lane.b32.xlu0 %v3727, 80
        %v4166 = vpop.permute.xlu0 %4165
        %4167 = vrot.lane.b32.xlu0 %v3728, 80
        %v4168 = vpop.permute.xlu0 %4167
        %4169 = vrot.lane.b32.xlu0 %v3729, 80
        %v4170 = vpop.permute.xlu0 %4169
        %4187 = vmatprep.subr.bf16.mxu0 0
        %4188 = vmatpush1.bf16.msra.mxu0 %v4140
        %4189 = vmatprep.subr.bf16.mxu0 0
        %4190 = vmatpush1.bf16.msra.mxu0 %v4142
        %4191 = vmatprep.subr.bf16.mxu0 0
        %4192 = vmatpush1.bf16.msra.mxu0 %v4144
        %4193 = vmatprep.subr.bf16.mxu0 0
        %4194 = vmatpush1.bf16.msra.mxu0 %v4146
        %4195 = vmatprep.subr.bf16.mxu0 0
        %4196 = vmatpush1.bf16.msra.mxu0 %v4148
        %4197 = vmatprep.subr.bf16.mxu0 0
        %4198 = vmatpush1.bf16.msra.mxu0 %v4150
        %4199 = vmatprep.subr.bf16.mxu0 0
        %4200 = vmatpush1.bf16.msra.mxu0 %v4152
        %4201 = vmatprep.subr.bf16.mxu0 0
        %4202 = vmatpush1.bf16.msra.mxu0 %v4154
        %4203 = vmatprep.subr.bf16.mxu0 0
        %4204 = vmatpush1.bf16.msra.mxu0 %v4156
        %4205 = vmatprep.subr.bf16.mxu0 0
        %4206 = vmatpush1.bf16.msra.mxu0 %v4158
        %4207 = vmatprep.subr.bf16.mxu0 0
        %4208 = vmatpush1.bf16.msra.mxu0 %v4160
        %4209 = vmatprep.subr.bf16.mxu0 0
        %4210 = vmatpush1.bf16.msra.mxu0 %v4162
        %4211 = vmatprep.subr.bf16.mxu0 0
        %4212 = vmatpush1.bf16.msra.mxu0 %v4164
        %4213 = vmatprep.subr.bf16.mxu0 0
        %4214 = vmatpush1.bf16.msra.mxu0 %v4166
        %4215 = vmatprep.subr.bf16.mxu0 0
        %4216 = vmatpush1.bf16.msra.mxu0 %v4168
        %4217 = vmatprep.subr.bf16.mxu0 0
        %4218 = vmatpush1.bf16.msra.mxu0 %v4170
        %4219 = vmatprep.mubr.bf16.mxu0 %v4080
        %4220 = vmatmul.mubr.bf16.gmra.mrb[0].mxu0 %v4077
        %v4221 = vpop.f32.mrb[0].mxu0
        %v4222 = vadd.f32 0.0, %v4221
        %v4223 = vpop.f32.mrb[0].mxu0
        %v4224 = vpop.f32.mrb[0].mxu0
        %v4225 = vadd.f32 0.0, %v4224
        %v4226 = vpop.f32.mrb[0].mxu0
        %4227 = vmatprep.mubr.bf16.mxu0 %v4086
        %4228 = vmatmul.mubr.bf16.gmra.mrb[0].mxu0 %v4083
        %v4229 = vpop.f32.mrb[0].mxu0
        %v4230 = vadd.f32 0.0, %v4229
        %v4231 = vpop.f32.mrb[0].mxu0
        %v4232 = vpop.f32.mrb[0].mxu0
        %v4233 = vadd.f32 0.0, %v4232
        %v4234 = vpop.f32.mrb[0].mxu0
        %4235 = vmatprep.mubr.bf16.mxu0 %v4092
        %4236 = vmatmul.mubr.bf16.gmra.mrb[0].mxu0 %v4089
        %v4237 = vpop.f32.mrb[0].mxu0
        %v4238 = vadd.f32 0.0, %v4237
        %v4239 = vpop.f32.mrb[0].mxu0
        %v4240 = vpop.f32.mrb[0].mxu0
        %v4241 = vadd.f32 0.0, %v4240
        %v4242 = vpop.f32.mrb[0].mxu0
        %4243 = vmatprep.mubr.bf16.mxu0 %v4098
        %4244 = vmatmul.mubr.bf16.gmra.mrb[0].mxu0 %v4095
        %v4245 = vpop.f32.mrb[0].mxu0
        %v4246 = vadd.f32 0.0, %v4245
        %v4247 = vpop.f32.mrb[0].mxu0
        %v4248 = vpop.f32.mrb[0].mxu0
        %v4249 = vadd.f32 0.0, %v4248
        %v4250 = vpop.f32.mrb[0].mxu0
        %4251 = vmatprep.mubr.bf16.mxu0 %v4104
        %4252 = vmatmul.mubr.bf16.gmra.mrb[0].mxu0 %v4101
        %v4253 = vpop.f32.mrb[0].mxu0
        %v4254 = vadd.f32 0.0, %v4253
        %v4255 = vpop.f32.mrb[0].mxu0
        %v4256 = vpop.f32.mrb[0].mxu0
        %v4257 = vadd.f32 0.0, %v4256
        %v4258 = vpop.f32.mrb[0].mxu0
        %4259 = vmatprep.mubr.bf16.mxu0 %v4110
        %4260 = vmatmul.mubr.bf16.gmra.mrb[0].mxu0 %v4107
        %v4261 = vpop.f32.mrb[0].mxu0
        %v4262 = vadd.f32 0.0, %v4261
        %v4263 = vpop.f32.mrb[0].mxu0
        %v4264 = vpop.f32.mrb[0].mxu0
        %v4265 = vadd.f32 0.0, %v4264
        %v4266 = vpop.f32.mrb[0].mxu0
        %4267 = vmatprep.mubr.bf16.mxu0 %v4116
        %4268 = vmatmul.mubr.bf16.gmra.mrb[0].mxu0 %v4113
        %v4269 = vpop.f32.mrb[0].mxu0
        %v4270 = vadd.f32 0.0, %v4269
        %v4271 = vpop.f32.mrb[0].mxu0
        %v4272 = vpop.f32.mrb[0].mxu0
        %v4273 = vadd.f32 0.0, %v4272
        %v4274 = vpop.f32.mrb[0].mxu0
        %4275 = vmatprep.mubr.bf16.mxu0 %v4122
        %4276 = vmatmul.mubr.bf16.gmra.mrb[0].mxu0 %v4119
        %v4277 = vpop.f32.mrb[0].mxu0
        %v4278 = vadd.f32 0.0, %v4277
        %v4279 = vpop.f32.mrb[0].mxu0
        %v4280 = vpop.f32.mrb[0].mxu0
        %v4281 = vadd.f32 0.0, %v4280
        %v4282 = vpop.f32.mrb[0].mxu0
        %4283 = vdwg.mxu0
        %4284 = vmatprep.subr.bf16.mxu0 0
        %4285 = vmatpush1.bf16.msra.mxu0 1065369472
        %4286 = vmatprep.subr.bf16.mxu0 0
        %4287 = vmatpush1.bf16.msra.mxu0 1065369472
        %4288 = vmatprep.subr.bf16.mxu0 0
        %4289 = vmatpush1.bf16.msra.mxu0 1065369472
        %4290 = vmatprep.subr.bf16.mxu0 0
        %4291 = vmatpush1.bf16.msra.mxu0 1065369472
        %4292 = vmatprep.subr.bf16.mxu0 0
        %4293 = vmatpush1.bf16.msra.mxu0 1065369472
        %4294 = vmatprep.subr.bf16.mxu0 0
        %4295 = vmatpush1.bf16.msra.mxu0 1065369472
        %4296 = vmatprep.subr.bf16.mxu0 0
        %4297 = vmatpush1.bf16.msra.mxu0 1065369472
        %4298 = vmatprep.subr.bf16.mxu0 0
        %4299 = vmatpush1.bf16.msra.mxu0 1065369472
        %4300 = vmatprep.subr.bf16.mxu0 0
        %4301 = vmatpush1.bf16.msra.mxu0 1065369472
        %4302 = vmatprep.subr.bf16.mxu0 0
        %4303 = vmatpush1.bf16.msra.mxu0 1065369472
        %4304 = vmatprep.subr.bf16.mxu0 0
        %4305 = vmatpush1.bf16.msra.mxu0 1065369472
        %4306 = vmatprep.subr.bf16.mxu0 0
        %4307 = vmatpush1.bf16.msra.mxu0 1065369472
        %4308 = vmatprep.subr.bf16.mxu0 0
        %4309 = vmatpush1.bf16.msra.mxu0 1065369472
        %4310 = vmatprep.subr.bf16.mxu0 0
        %4311 = vmatpush1.bf16.msra.mxu0 1065369472
        %4312 = vmatprep.subr.bf16.mxu0 0
        %4313 = vmatpush1.bf16.msra.mxu0 1065369472
        %4314 = vmatprep.subr.bf16.mxu0 0
        %4315 = vmatpush1.bf16.msra.mxu0 1065369472
        %4316 = vmatprep.mubr.bf16.mxu0 %v4080
        %4317 = vmatmul.mubr.bf16.gmra.mrb[0].mxu0 %v4077
        %v4318 = vpop.f32.mrb[0].mxu0
        %v4319 = vadd.f32 0.0, %v4318
        %v4320 = vpop.f32.mrb[0].mxu0
        %v4321 = vpop.f32.mrb[0].mxu0
        %v4322 = vadd.f32 0.0, %v4321
        %v4323 = vpop.f32.mrb[0].mxu0
        %4324 = vmatprep.mubr.bf16.mxu0 %v4086
        %4325 = vmatmul.mubr.bf16.gmra.mrb[0].mxu0 %v4083
        %v4326 = vpop.f32.mrb[0].mxu0
        %v4327 = vadd.f32 0.0, %v4326
        %v4328 = vpop.f32.mrb[0].mxu0
        %v4329 = vpop.f32.mrb[0].mxu0
        %v4330 = vadd.f32 0.0, %v4329
        %v4331 = vpop.f32.mrb[0].mxu0
        %4332 = vmatprep.mubr.bf16.mxu0 %v4092
        %4333 = vmatmul.mubr.bf16.gmra.mrb[0].mxu0 %v4089
        %v4334 = vpop.f32.mrb[0].mxu0
        %v4335 = vadd.f32 0.0, %v4334
        %v4336 = vpop.f32.mrb[0].mxu0
        %v4337 = vpop.f32.mrb[0].mxu0
        %v4338 = vadd.f32 0.0, %v4337
        %v4339 = vpop.f32.mrb[0].mxu0
        %4340 = vmatprep.mubr.bf16.mxu0 %v4098
        %4341 = vmatmul.mubr.bf16.gmra.mrb[0].mxu0 %v4095
        %v4342 = vpop.f32.mrb[0].mxu0
        %v4343 = vadd.f32 0.0, %v4342
        %v4344 = vpop.f32.mrb[0].mxu0
        %v4345 = vpop.f32.mrb[0].mxu0
        %v4346 = vadd.f32 0.0, %v4345
        %v4347 = vpop.f32.mrb[0].mxu0
        %4348 = vmatprep.mubr.bf16.mxu0 %v4104
        %4349 = vmatmul.mubr.bf16.gmra.mrb[0].mxu0 %v4101
        %v4350 = vpop.f32.mrb[0].mxu0
        %v4351 = vadd.f32 0.0, %v4350
        %v4352 = vpop.f32.mrb[0].mxu0
        %v4353 = vpop.f32.mrb[0].mxu0
        %v4354 = vadd.f32 0.0, %v4353
        %v4355 = vpop.f32.mrb[0].mxu0
        %4356 = vmatprep.mubr.bf16.mxu0 %v4110
        %4357 = vmatmul.mubr.bf16.gmra.mrb[0].mxu0 %v4107
        %v4358 = vpop.f32.mrb[0].mxu0
        %v4359 = vadd.f32 0.0, %v4358
        %v4360 = vpop.f32.mrb[0].mxu0
        %v4361 = vpop.f32.mrb[0].mxu0
        %v4362 = vadd.f32 0.0, %v4361
        %v4363 = vpop.f32.mrb[0].mxu0
        %4364 = vmatprep.mubr.bf16.mxu0 %v4116
        %4365 = vmatmul.mubr.bf16.gmra.mrb[0].mxu0 %v4113
        %v4366 = vpop.f32.mrb[0].mxu0
        %v4367 = vadd.f32 0.0, %v4366
        %v4368 = vpop.f32.mrb[0].mxu0
        %v4369 = vpop.f32.mrb[0].mxu0
        %v4370 = vadd.f32 0.0, %v4369
        %v4371 = vpop.f32.mrb[0].mxu0
        %4372 = vmatprep.mubr.bf16.mxu0 %v4122
        %4373 = vmatmul.mubr.bf16.gmra.mrb[0].mxu0 %v4119
        %v4374 = vpop.f32.mrb[0].mxu0
        %v4375 = vadd.f32 0.0, %v4374
        %v4376 = vpop.f32.mrb[0].mxu0
        %v4377 = vpop.f32.mrb[0].mxu0
        %v4378 = vadd.f32 0.0, %v4377
        %v4379 = vpop.f32.mrb[0].mxu0
        %4380 = vdwg.mxu0
        %v4381 = vrcp.pop %v4319
        %v4382 = vrcp.pop %v4322
        %v4383 = vrcp.pop %v4327
        %v4384 = vrcp.pop %v4330
        %v4385 = vrcp.pop %v4335
        %v4386 = vrcp.pop %v4338
        %v4387 = vrcp.pop %v4343
        %v4388 = vrcp.pop %v4346
        %v4389 = vrcp.pop %v4351
        %v4390 = vrcp.pop %v4354
        %v4391 = vrcp.pop %v4359
        %v4392 = vrcp.pop %v4362
        %v4393 = vrcp.pop %v4367
        %v4394 = vrcp.pop %v4370
        %v4395 = vrcp.pop %v4375
        %v4396 = vrcp.pop %v4378
        %4398 = vset.pattern.permute.xlu0 0
        %4399 = vperm.xlu0 %4398, %v4381
        %v4400 = vpop.permute.xlu0 %4399
        %4403 = vset.pattern.permute.xlu0 0
        %4404 = vperm.xlu0 %4403, %v4382
        %v4405 = vpop.permute.xlu0 %4404
        %4408 = vset.pattern.permute.xlu0 0
        %4409 = vperm.xlu0 %4408, %v4383
        %v4410 = vpop.permute.xlu0 %4409
        %4413 = vset.pattern.permute.xlu0 0
        %4414 = vperm.xlu0 %4413, %v4384
        %v4415 = vpop.permute.xlu0 %4414
        %4418 = vset.pattern.permute.xlu0 0
        %4419 = vperm.xlu0 %4418, %v4385
        %v4420 = vpop.permute.xlu0 %4419
        %4423 = vset.pattern.permute.xlu0 0
        %4424 = vperm.xlu0 %4423, %v4386
        %v4425 = vpop.permute.xlu0 %4424
        %4428 = vset.pattern.permute.xlu0 0
        %4429 = vperm.xlu0 %4428, %v4387
        %v4430 = vpop.permute.xlu0 %4429
        %4433 = vset.pattern.permute.xlu0 0
        %4434 = vperm.xlu0 %4433, %v4388
        %v4435 = vpop.permute.xlu0 %4434
        %4438 = vset.pattern.permute.xlu0 0
        %4439 = vperm.xlu0 %4438, %v4389
        %v4440 = vpop.permute.xlu0 %4439
        %4443 = vset.pattern.permute.xlu0 0
        %4444 = vperm.xlu0 %4443, %v4390
        %v4445 = vpop.permute.xlu0 %4444
        %4448 = vset.pattern.permute.xlu0 0
        %4449 = vperm.xlu0 %4448, %v4391
        %v4450 = vpop.permute.xlu0 %4449
        %4453 = vset.pattern.permute.xlu0 0
        %4454 = vperm.xlu0 %4453, %v4392
        %v4455 = vpop.permute.xlu0 %4454
        %4458 = vset.pattern.permute.xlu0 0
        %4459 = vperm.xlu0 %4458, %v4393
        %v4460 = vpop.permute.xlu0 %4459
        %4463 = vset.pattern.permute.xlu0 0
        %4464 = vperm.xlu0 %4463, %v4394
        %v4465 = vpop.permute.xlu0 %4464
        %4468 = vset.pattern.permute.xlu0 0
        %4469 = vperm.xlu0 %4468, %v4395
        %v4470 = vpop.permute.xlu0 %4469
        %4473 = vset.pattern.permute.xlu0 0
        %4474 = vperm.xlu0 %4473, %v4396
        %v4475 = vpop.permute.xlu0 %4474
        %v4477 = vmul.f32 %v4222, %v4400
        %v4478 = vmul.f32 %v4225, %v4405
        %v4479 = vmul.f32 %v4230, %v4410
        %v4480 = vmul.f32 %v4233, %v4415
        %v4481 = vmul.f32 %v4238, %v4420
        %v4482 = vmul.f32 %v4241, %v4425
        %v4483 = vmul.f32 %v4246, %v4430
        %v4484 = vmul.f32 %v4249, %v4435
        %v4485 = vmul.f32 %v4254, %v4440
        %v4486 = vmul.f32 %v4257, %v4445
        %v4487 = vmul.f32 %v4262, %v4450
        %v4488 = vmul.f32 %v4265, %v4455
        %v4489 = vmul.f32 %v4270, %v4460
        %v4490 = vmul.f32 %v4273, %v4465
        %v4491 = vmul.f32 %v4278, %v4470
        %v4492 = vmul.f32 %v4281, %v4475
        %4509 = vrot.lane.b32.xlu0 %v4477, 48
        %v4510 = vpop.permute.xlu0 %4509
        %4511 = vrot.lane.b32.xlu0 %v4478, 48
        %v4512 = vpop.permute.xlu0 %4511
        %4513 = vrot.lane.b32.xlu0 %v4479, 48
        %v4514 = vpop.permute.xlu0 %4513
        %4515 = vrot.lane.b32.xlu0 %v4480, 48
        %v4516 = vpop.permute.xlu0 %4515
        %4517 = vrot.lane.b32.xlu0 %v4481, 48
        %v4518 = vpop.permute.xlu0 %4517
        %4519 = vrot.lane.b32.xlu0 %v4482, 48
        %v4520 = vpop.permute.xlu0 %4519
        %4521 = vrot.lane.b32.xlu0 %v4483, 48
        %v4522 = vpop.permute.xlu0 %4521
        %4523 = vrot.lane.b32.xlu0 %v4484, 48
        %v4524 = vpop.permute.xlu0 %4523
        %4525 = vrot.lane.b32.xlu0 %v4485, 48
        %v4526 = vpop.permute.xlu0 %4525
        %4527 = vrot.lane.b32.xlu0 %v4486, 48
        %v4528 = vpop.permute.xlu0 %4527
        %4529 = vrot.lane.b32.xlu0 %v4487, 48
        %v4530 = vpop.permute.xlu0 %4529
        %4531 = vrot.lane.b32.xlu0 %v4488, 48
        %v4532 = vpop.permute.xlu0 %4531
        %4533 = vrot.lane.b32.xlu0 %v4489, 48
        %v4534 = vpop.permute.xlu0 %4533
        %4535 = vrot.lane.b32.xlu0 %v4490, 48
        %v4536 = vpop.permute.xlu0 %4535
        %4537 = vrot.lane.b32.xlu0 %v4491, 48
        %v4538 = vpop.permute.xlu0 %4537
        %4539 = vrot.lane.b32.xlu0 %v4492, 48
        %v4540 = vpop.permute.xlu0 %4539
        %vm4557 = vcmask 523648
        %4558 = vst.msk [vmem:[#allocation4] sm:$0xff] %vm4557, %v4510
        %4559 = vst.msk [vmem:[#allocation4 + $0x8] sm:$0xff] %vm4557, %v4512
        %4560 = vst.msk [vmem:[#allocation4 + $0x10] sm:$0xff] %vm4557, %v4514
        %4561 = vst.msk [vmem:[#allocation4 + $0x18] sm:$0xff] %vm4557, %v4516
        %4562 = vst.msk [vmem:[#allocation4 + $0x20] sm:$0xff] %vm4557, %v4518
        %4563 = vst.msk [vmem:[#allocation4 + $0x28] sm:$0xff] %vm4557, %v4520
        %4564 = vst.msk [vmem:[#allocation4 + $0x30] sm:$0xff] %vm4557, %v4522
        %4565 = vst.msk [vmem:[#allocation4 + $0x38] sm:$0xff] %vm4557, %v4524
        %4566 = vst.msk [vmem:[#allocation4 + $0x40] sm:$0xff] %vm4557, %v4526
        %4567 = vst.msk [vmem:[#allocation4 + $0x48] sm:$0xff] %vm4557, %v4528
        %4568 = vst.msk [vmem:[#allocation4 + $0x50] sm:$0xff] %vm4557, %v4530
        %4569 = vst.msk [vmem:[#allocation4 + $0x58] sm:$0xff] %vm4557, %v4532
        %4570 = vst.msk [vmem:[#allocation4 + $0x60] sm:$0xff] %vm4557, %v4534
        %4571 = vst.msk [vmem:[#allocation4 + $0x68] sm:$0xff] %vm4557, %v4536
        %4572 = vst.msk [vmem:[#allocation4 + $0x70] sm:$0xff] %vm4557, %v4538
        %4573 = vst.msk [vmem:[#allocation4 + $0x78] sm:$0xff] %vm4557, %v4540
        %v4574 = vld [vmem:[#allocation2] sm:$0xff]
        %v4575 = vld [vmem:[#allocation2 + $0x8] sm:$0xff]
        %v4576 = vld [vmem:[#allocation2 + $0x10] sm:$0xff]
        %v4577 = vld [vmem:[#allocation2 + $0x18] sm:$0xff]
        %v4578 = vld [vmem:[#allocation2 + $0x20] sm:$0xff]
        %v4579 = vld [vmem:[#allocation2 + $0x28] sm:$0xff]
        %v4580 = vld [vmem:[#allocation2 + $0x30] sm:$0xff]
        %v4581 = vld [vmem:[#allocation2 + $0x38] sm:$0xff]
        %v4582 = vld [vmem:[#allocation3] sm:$0xff]
        %v4583 = vld [vmem:[#allocation3 + $0x8] sm:$0xff]
        %v4584 = vld [vmem:[#allocation3 + $0x10] sm:$0xff]
        %v4585 = vld [vmem:[#allocation3 + $0x18] sm:$0xff]
        %v4586 = vld [vmem:[#allocation3 + $0x20] sm:$0xff]
        %v4587 = vld [vmem:[#allocation3 + $0x28] sm:$0xff]
        %v4588 = vld [vmem:[#allocation3 + $0x30] sm:$0xff]
        %v4589 = vld [vmem:[#allocation3 + $0x38] sm:$0xff]
        %v4590 = vld [vmem:[#allocation3 + $0x40] sm:$0xff]
        %v4591 = vld [vmem:[#allocation3 + $0x48] sm:$0xff]
        %v4592 = vld [vmem:[#allocation3 + $0x50] sm:$0xff]
        %v4593 = vld [vmem:[#allocation3 + $0x58] sm:$0xff]
        %v4594 = vld [vmem:[#allocation3 + $0x60] sm:$0xff]
        %v4595 = vld [vmem:[#allocation3 + $0x68] sm:$0xff]
        %v4596 = vld [vmem:[#allocation3 + $0x70] sm:$0xff]
        %v4597 = vld [vmem:[#allocation3 + $0x78] sm:$0xff]
        %v4598 = vld [vmem:[#allocation3 + $0x80] sm:$0xff]
        %v4599 = vld [vmem:[#allocation3 + $0x88] sm:$0xff]
        %v4600 = vld [vmem:[#allocation3 + $0x90] sm:$0xff]
        %v4601 = vld [vmem:[#allocation3 + $0x98] sm:$0xff]
        %v4602 = vld [vmem:[#allocation3 + $0xa0] sm:$0xff]
        %v4603 = vld [vmem:[#allocation3 + $0xa8] sm:$0xff]
        %v4604 = vld [vmem:[#allocation3 + $0xb0] sm:$0xff]
        %v4605 = vld [vmem:[#allocation3 + $0xb8] sm:$0xff]
        %v4606 = vld [vmem:[#allocation3 + $0xc0] sm:$0xff]
        %v4607 = vld [vmem:[#allocation3 + $0xc8] sm:$0xff]
        %v4608 = vld [vmem:[#allocation3 + $0xd0] sm:$0xff]
        %v4609 = vld [vmem:[#allocation3 + $0xd8] sm:$0xff]
        %v4610 = vld [vmem:[#allocation3 + $0xe0] sm:$0xff]
        %v4611 = vld [vmem:[#allocation3 + $0xe8] sm:$0xff]
        %v4612 = vld [vmem:[#allocation3 + $0xf0] sm:$0xff]
        %v4613 = vld [vmem:[#allocation3 + $0xf8] sm:$0xff]
        %4622 = vrot.lane.b32.xlu0 %v4574, 64
        %v4623 = vpop.permute.xlu0 %4622
        %4624 = vrot.lane.b32.xlu0 %v4575, 64
        %v4625 = vpop.permute.xlu0 %4624
        %4626 = vrot.lane.b32.xlu0 %v4576, 64
        %v4627 = vpop.permute.xlu0 %4626
        %4628 = vrot.lane.b32.xlu0 %v4577, 64
        %v4629 = vpop.permute.xlu0 %4628
        %4630 = vrot.lane.b32.xlu0 %v4578, 64
        %v4631 = vpop.permute.xlu0 %4630
        %4632 = vrot.lane.b32.xlu0 %v4579, 64
        %v4633 = vpop.permute.xlu0 %4632
        %4634 = vrot.lane.b32.xlu0 %v4580, 64
        %v4635 = vpop.permute.xlu0 %4634
        %4636 = vrot.lane.b32.xlu0 %v4581, 64
        %v4637 = vpop.permute.xlu0 %4636
        %4654 = vrot.lane.b32.xlu0 %v4582, 64
        %v4655 = vpop.permute.xlu0 %4654
        %4656 = vrot.lane.b32.xlu0 %v4583, 64
        %v4657 = vpop.permute.xlu0 %4656
        %4658 = vrot.lane.b32.xlu0 %v4584, 64
        %v4659 = vpop.permute.xlu0 %4658
        %4660 = vrot.lane.b32.xlu0 %v4585, 64
        %v4661 = vpop.permute.xlu0 %4660
        %4662 = vrot.lane.b32.xlu0 %v4586, 64
        %v4663 = vpop.permute.xlu0 %4662
        %4664 = vrot.lane.b32.xlu0 %v4587, 64
        %v4665 = vpop.permute.xlu0 %4664
        %4666 = vrot.lane.b32.xlu0 %v4588, 64
        %v4667 = vpop.permute.xlu0 %4666
        %4668 = vrot.lane.b32.xlu0 %v4589, 64
        %v4669 = vpop.permute.xlu0 %4668
        %4670 = vrot.lane.b32.xlu0 %v4590, 64
        %v4671 = vpop.permute.xlu0 %4670
        %4672 = vrot.lane.b32.xlu0 %v4591, 64
        %v4673 = vpop.permute.xlu0 %4672
        %4674 = vrot.lane.b32.xlu0 %v4592, 64
        %v4675 = vpop.permute.xlu0 %4674
        %4676 = vrot.lane.b32.xlu0 %v4593, 64
        %v4677 = vpop.permute.xlu0 %4676
        %4678 = vrot.lane.b32.xlu0 %v4594, 64
        %v4679 = vpop.permute.xlu0 %4678
        %4680 = vrot.lane.b32.xlu0 %v4595, 64
        %v4681 = vpop.permute.xlu0 %4680
        %4682 = vrot.lane.b32.xlu0 %v4596, 64
        %v4683 = vpop.permute.xlu0 %4682
        %4684 = vrot.lane.b32.xlu0 %v4597, 64
        %v4685 = vpop.permute.xlu0 %4684
        %v4687 = vsel %vm1278, %v4623, 0
        %v4690 = vsel %vm1278, %v4625, 0
        %v4693 = vsel %vm1278, %v4627, 0
        %v4696 = vsel %vm1278, %v4629, 0
        %v4699 = vsel %vm1278, %v4631, 0
        %v4702 = vsel %vm1278, %v4633, 0
        %v4705 = vsel %vm1278, %v4635, 0
        %v4708 = vsel %vm1278, %v4637, 0
        %v4711 = vsel %vm1278, %v4655, 0
        %v4714 = vsel %vm1278, %v4657, 0
        %v4717 = vsel %vm1278, %v4659, 0
        %v4720 = vsel %vm1278, %v4661, 0
        %v4723 = vsel %vm1278, %v4663, 0
        %v4726 = vsel %vm1278, %v4665, 0
        %v4729 = vsel %vm1278, %v4667, 0
        %v4732 = vsel %vm1278, %v4669, 0
        %v4735 = vsel %vm1278, %v4671, 0
        %v4738 = vsel %vm1278, %v4673, 0
        %v4741 = vsel %vm1278, %v4675, 0
        %v4744 = vsel %vm1278, %v4677, 0
        %v4747 = vsel %vm1278, %v4679, 0
        %v4750 = vsel %vm1278, %v4681, 0
        %v4753 = vsel %vm1278, %v4683, 0
        %v4756 = vsel %vm1278, %v4685, 0
        %4758 = vmatprep.subr.bf16.mxu0 0
        %4759 = vmatpush1.bf16.xpose.msra.mxu0 %v4711
        %4760 = vmatprep.subr.bf16.mxu0 0
        %4761 = vmatpush1.bf16.xpose.msra.mxu0 %v4714
        %4762 = vmatprep.subr.bf16.mxu0 0
        %4763 = vmatpush1.bf16.xpose.msra.mxu0 %v4717
        %4764 = vmatprep.subr.bf16.mxu0 0
        %4765 = vmatpush1.bf16.xpose.msra.mxu0 %v4720
        %4766 = vmatprep.subr.bf16.mxu0 0
        %4767 = vmatpush1.bf16.xpose.msra.mxu0 %v4723
        %4768 = vmatprep.subr.bf16.mxu0 0
        %4769 = vmatpush1.bf16.xpose.msra.mxu0 %v4726
        %4770 = vmatprep.subr.bf16.mxu0 0
        %4771 = vmatpush1.bf16.xpose.msra.mxu0 %v4729
        %4772 = vmatprep.subr.bf16.mxu0 0
        %4773 = vmatpush1.bf16.xpose.msra.mxu0 %v4732
        %4774 = vmatprep.subr.bf16.mxu0 0
        %4775 = vmatpush1.bf16.xpose.msra.mxu0 %v4735
        %4776 = vmatprep.subr.bf16.mxu0 0
        %4777 = vmatpush1.bf16.xpose.msra.mxu0 %v4738
        %4778 = vmatprep.subr.bf16.mxu0 0
        %4779 = vmatpush1.bf16.xpose.msra.mxu0 %v4741
        %4780 = vmatprep.subr.bf16.mxu0 0
        %4781 = vmatpush1.bf16.xpose.msra.mxu0 %v4744
        %4782 = vmatprep.subr.bf16.mxu0 0
        %4783 = vmatpush1.bf16.xpose.msra.mxu0 %v4747
        %4784 = vmatprep.subr.bf16.mxu0 0
        %4785 = vmatpush1.bf16.xpose.msra.mxu0 %v4750
        %4786 = vmatprep.subr.bf16.mxu0 0
        %4787 = vmatpush1.bf16.xpose.msra.mxu0 %v4753
        %4788 = vmatprep.subr.bf16.mxu0 0
        %4789 = vmatpush1.bf16.xpose.msra.mxu0 %v4756
        %4790 = vmatprep.mubr.bf16.mxu0 0
        %4791 = vmatmul.mubr.bf16.gmra.mrb[0].mxu0 %v4687
        %v4792 = vpop.f32.mrb[0].mxu0
        %v4793 = vadd.f32 0.0, %v4792
        %v4794 = vpop.f32.mrb[0].mxu0
        %v4795 = vadd.f32 0.0, %v4794
        %v4796 = vpop.f32.mrb[0].mxu0
        %v4797 = vadd.f32 0.0, %v4796
        %v4798 = vpop.f32.mrb[0].mxu0
        %v4799 = vadd.f32 0.0, %v4798
        %4800 = vmatprep.mubr.bf16.mxu0 0
        %4801 = vmatmul.mubr.bf16.gmra.mrb[0].mxu0 %v4690
        %v4802 = vpop.f32.mrb[0].mxu0
        %v4803 = vadd.f32 0.0, %v4802
        %v4804 = vpop.f32.mrb[0].mxu0
        %v4805 = vadd.f32 0.0, %v4804
        %v4806 = vpop.f32.mrb[0].mxu0
        %v4807 = vadd.f32 0.0, %v4806
        %v4808 = vpop.f32.mrb[0].mxu0
        %v4809 = vadd.f32 0.0, %v4808
        %4810 = vmatprep.mubr.bf16.mxu0 0
        %4811 = vmatmul.mubr.bf16.gmra.mrb[0].mxu0 %v4693
        %v4812 = vpop.f32.mrb[0].mxu0
        %v4813 = vadd.f32 0.0, %v4812
        %v4814 = vpop.f32.mrb[0].mxu0
        %v4815 = vadd.f32 0.0, %v4814
        %v4816 = vpop.f32.mrb[0].mxu0
        %v4817 = vadd.f32 0.0, %v4816
        %v4818 = vpop.f32.mrb[0].mxu0
        %v4819 = vadd.f32 0.0, %v4818
        %4820 = vmatprep.mubr.bf16.mxu0 0
        %4821 = vmatmul.mubr.bf16.gmra.mrb[0].mxu0 %v4696
        %v4822 = vpop.f32.mrb[0].mxu0
        %v4823 = vadd.f32 0.0, %v4822
        %v4824 = vpop.f32.mrb[0].mxu0
        %v4825 = vadd.f32 0.0, %v4824
        %v4826 = vpop.f32.mrb[0].mxu0
        %v4827 = vadd.f32 0.0, %v4826
        %v4828 = vpop.f32.mrb[0].mxu0
        %v4829 = vadd.f32 0.0, %v4828
        %4830 = vmatprep.mubr.bf16.mxu0 0
        %4831 = vmatmul.mubr.bf16.gmra.mrb[0].mxu0 %v4699
        %v4832 = vpop.f32.mrb[0].mxu0
        %v4833 = vadd.f32 0.0, %v4832
        %v4834 = vpop.f32.mrb[0].mxu0
        %v4835 = vadd.f32 0.0, %v4834
        %v4836 = vpop.f32.mrb[0].mxu0
        %v4837 = vadd.f32 0.0, %v4836
        %v4838 = vpop.f32.mrb[0].mxu0
        %v4839 = vadd.f32 0.0, %v4838
        %4840 = vmatprep.mubr.bf16.mxu0 0
        %4841 = vmatmul.mubr.bf16.gmra.mrb[0].mxu0 %v4702
        %v4842 = vpop.f32.mrb[0].mxu0
        %v4843 = vadd.f32 0.0, %v4842
        %v4844 = vpop.f32.mrb[0].mxu0
        %v4845 = vadd.f32 0.0, %v4844
        %v4846 = vpop.f32.mrb[0].mxu0
        %v4847 = vadd.f32 0.0, %v4846
        %v4848 = vpop.f32.mrb[0].mxu0
        %v4849 = vadd.f32 0.0, %v4848
        %4850 = vmatprep.mubr.bf16.mxu0 0
        %4851 = vmatmul.mubr.bf16.gmra.mrb[0].mxu0 %v4705
        %v4852 = vpop.f32.mrb[0].mxu0
        %v4853 = vadd.f32 0.0, %v4852
        %v4854 = vpop.f32.mrb[0].mxu0
        %v4855 = vadd.f32 0.0, %v4854
        %v4856 = vpop.f32.mrb[0].mxu0
        %v4857 = vadd.f32 0.0, %v4856
        %v4858 = vpop.f32.mrb[0].mxu0
        %v4859 = vadd.f32 0.0, %v4858
        %4860 = vmatprep.mubr.bf16.mxu0 0
        %4861 = vmatmul.mubr.bf16.gmra.mrb[0].mxu0 %v4708
        %v4862 = vpop.f32.mrb[0].mxu0
        %v4863 = vadd.f32 0.0, %v4862
        %v4864 = vpop.f32.mrb[0].mxu0
        %v4865 = vadd.f32 0.0, %v4864
        %v4866 = vpop.f32.mrb[0].mxu0
        %v4867 = vadd.f32 0.0, %v4866
        %v4868 = vpop.f32.mrb[0].mxu0
        %v4869 = vadd.f32 0.0, %v4868
        %4870 = vdwg.mxu0
        %v4871 = vmax.f32 %v4793, %v4795
        %4872 = vmax.xlane.f32.xlu0 %v4871
        %v4873 = vpop.xlane.xlu0 %4872
        %v4874 = vmax.f32 %v4797, %v4799
        %4875 = vmax.xlane.f32.xlu0 %v4874
        %v4876 = vpop.xlane.xlu0 %4875
        %v4877 = vmax.f32 %v4803, %v4805
        %4878 = vmax.xlane.f32.xlu0 %v4877
        %v4879 = vpop.xlane.xlu0 %4878
        %v4880 = vmax.f32 %v4807, %v4809
        %4881 = vmax.xlane.f32.xlu0 %v4880
        %v4882 = vpop.xlane.xlu0 %4881
        %v4883 = vmax.f32 %v4813, %v4815
        %4884 = vmax.xlane.f32.xlu0 %v4883
        %v4885 = vpop.xlane.xlu0 %4884
        %v4886 = vmax.f32 %v4817, %v4819
        %4887 = vmax.xlane.f32.xlu0 %v4886
        %v4888 = vpop.xlane.xlu0 %4887
        %v4889 = vmax.f32 %v4823, %v4825
        %4890 = vmax.xlane.f32.xlu0 %v4889
        %v4891 = vpop.xlane.xlu0 %4890
        %v4892 = vmax.f32 %v4827, %v4829
        %4893 = vmax.xlane.f32.xlu0 %v4892
        %v4894 = vpop.xlane.xlu0 %4893
        %v4895 = vmax.f32 %v4833, %v4835
        %4896 = vmax.xlane.f32.xlu0 %v4895
        %v4897 = vpop.xlane.xlu0 %4896
        %v4898 = vmax.f32 %v4837, %v4839
        %4899 = vmax.xlane.f32.xlu0 %v4898
        %v4900 = vpop.xlane.xlu0 %4899
        %v4901 = vmax.f32 %v4843, %v4845
        %4902 = vmax.xlane.f32.xlu0 %v4901
        %v4903 = vpop.xlane.xlu0 %4902
        %v4904 = vmax.f32 %v4847, %v4849
        %4905 = vmax.xlane.f32.xlu0 %v4904
        %v4906 = vpop.xlane.xlu0 %4905
        %v4907 = vmax.f32 %v4853, %v4855
        %4908 = vmax.xlane.f32.xlu0 %v4907
        %v4909 = vpop.xlane.xlu0 %4908
        %v4910 = vmax.f32 %v4857, %v4859
        %4911 = vmax.xlane.f32.xlu0 %v4910
        %v4912 = vpop.xlane.xlu0 %4911
        %v4913 = vmax.f32 %v4863, %v4865
        %4914 = vmax.xlane.f32.xlu0 %v4913
        %v4915 = vpop.xlane.xlu0 %4914
        %v4916 = vmax.f32 %v4867, %v4869
        %4917 = vmax.xlane.f32.xlu0 %v4916
        %v4918 = vpop.xlane.xlu0 %4917
        %v4919 = vpack.c.bf16 %v4797, %v4793
        %v4920 = vpack.c.bf16 %v4799, %v4795
        %v4921 = vpack.c.bf16 %v4807, %v4803
        %v4922 = vpack.c.bf16 %v4809, %v4805
        %v4923 = vpack.c.bf16 %v4817, %v4813
        %v4924 = vpack.c.bf16 %v4819, %v4815
        %v4925 = vpack.c.bf16 %v4827, %v4823
        %v4926 = vpack.c.bf16 %v4829, %v4825
        %v4927 = vpack.c.bf16 %v4837, %v4833
        %v4928 = vpack.c.bf16 %v4839, %v4835
        %v4929 = vpack.c.bf16 %v4847, %v4843
        %v4930 = vpack.c.bf16 %v4849, %v4845
        %v4931 = vpack.c.bf16 %v4857, %v4853
        %v4932 = vpack.c.bf16 %v4859, %v4855
        %v4933 = vpack.c.bf16 %v4867, %v4863
        %v4934 = vpack.c.bf16 %v4869, %v4865
        %v4935 = vpack.c.bf16 %v4876, %v4873
        %v4936 = vpack.c.bf16 %v4882, %v4879
        %v4937 = vpack.c.bf16 %v4888, %v4885
        %v4938 = vpack.c.bf16 %v4894, %v4891
        %v4939 = vpack.c.bf16 %v4900, %v4897
        %v4940 = vpack.c.bf16 %v4906, %v4903
        %v4941 = vpack.c.bf16 %v4912, %v4909
        %v4942 = vpack.c.bf16 %v4918, %v4915
        %v4943 = vsub.bf16 %v4919, %v4935
        %v4944 = vsub.bf16 %v4920, %v4935
        %v4945 = vsub.bf16 %v4921, %v4936
        %v4946 = vsub.bf16 %v4922, %v4936
        %v4947 = vsub.bf16 %v4923, %v4937
        %v4948 = vsub.bf16 %v4924, %v4937
        %v4949 = vsub.bf16 %v4925, %v4938
        %v4950 = vsub.bf16 %v4926, %v4938
        %v4951 = vsub.bf16 %v4927, %v4939
        %v4952 = vsub.bf16 %v4928, %v4939
        %v4953 = vsub.bf16 %v4929, %v4940
        %v4954 = vsub.bf16 %v4930, %v4940
        %v4955 = vsub.bf16 %v4931, %v4941
        %v4956 = vsub.bf16 %v4932, %v4941
        %v4957 = vsub.bf16 %v4933, %v4942
        %v4958 = vsub.bf16 %v4934, %v4942
        %v4960 = vmul.bf16 %v4943, 1069105081
        %v4961 = vpow.bf16.pop %v4960
        %v4963 = vmul.bf16 %v4944, 1069105081
        %v4964 = vpow.bf16.pop %v4963
        %v4966 = vmul.bf16 %v4945, 1069105081
        %v4967 = vpow.bf16.pop %v4966
        %v4969 = vmul.bf16 %v4946, 1069105081
        %v4970 = vpow.bf16.pop %v4969
        %v4972 = vmul.bf16 %v4947, 1069105081
        %v4973 = vpow.bf16.pop %v4972
        %v4975 = vmul.bf16 %v4948, 1069105081
        %v4976 = vpow.bf16.pop %v4975
        %v4978 = vmul.bf16 %v4949, 1069105081
        %v4979 = vpow.bf16.pop %v4978
        %v4981 = vmul.bf16 %v4950, 1069105081
        %v4982 = vpow.bf16.pop %v4981
        %v4984 = vmul.bf16 %v4951, 1069105081
        %v4985 = vpow.bf16.pop %v4984
        %v4987 = vmul.bf16 %v4952, 1069105081
        %v4988 = vpow.bf16.pop %v4987
        %v4990 = vmul.bf16 %v4953, 1069105081
        %v4991 = vpow.bf16.pop %v4990
        %v4993 = vmul.bf16 %v4954, 1069105081
        %v4994 = vpow.bf16.pop %v4993
        %v4996 = vmul.bf16 %v4955, 1069105081
        %v4997 = vpow.bf16.pop %v4996
        %v4999 = vmul.bf16 %v4956, 1069105081
        %v5000 = vpow.bf16.pop %v4999
        %v5002 = vmul.bf16 %v4957, 1069105081
        %v5003 = vpow.bf16.pop %v5002
        %v5005 = vmul.bf16 %v4958, 1069105081
        %v5006 = vpow.bf16.pop %v5005
        %5023 = vrot.lane.b32.xlu0 %v4598, 64
        %v5024 = vpop.permute.xlu0 %5023
        %5025 = vrot.lane.b32.xlu0 %v4599, 64
        %v5026 = vpop.permute.xlu0 %5025
        %5027 = vrot.lane.b32.xlu0 %v4600, 64
        %v5028 = vpop.permute.xlu0 %5027
        %5029 = vrot.lane.b32.xlu0 %v4601, 64
        %v5030 = vpop.permute.xlu0 %5029
        %5031 = vrot.lane.b32.xlu0 %v4602, 64
        %v5032 = vpop.permute.xlu0 %5031
        %5033 = vrot.lane.b32.xlu0 %v4603, 64
        %v5034 = vpop.permute.xlu0 %5033
        %5035 = vrot.lane.b32.xlu0 %v4604, 64
        %v5036 = vpop.permute.xlu0 %5035
        %5037 = vrot.lane.b32.xlu0 %v4605, 64
        %v5038 = vpop.permute.xlu0 %5037
        %5039 = vrot.lane.b32.xlu0 %v4606, 64
        %v5040 = vpop.permute.xlu0 %5039
        %5041 = vrot.lane.b32.xlu0 %v4607, 64
        %v5042 = vpop.permute.xlu0 %5041
        %5043 = vrot.lane.b32.xlu0 %v4608, 64
        %v5044 = vpop.permute.xlu0 %5043
        %5045 = vrot.lane.b32.xlu0 %v4609, 64
        %v5046 = vpop.permute.xlu0 %5045
        %5047 = vrot.lane.b32.xlu0 %v4610, 64
        %v5048 = vpop.permute.xlu0 %5047
        %5049 = vrot.lane.b32.xlu0 %v4611, 64
        %v5050 = vpop.permute.xlu0 %5049
        %5051 = vrot.lane.b32.xlu0 %v4612, 64
        %v5052 = vpop.permute.xlu0 %5051
        %5053 = vrot.lane.b32.xlu0 %v4613, 64
        %v5054 = vpop.permute.xlu0 %5053
        %5071 = vmatprep.subr.bf16.mxu0 0
        %5072 = vmatpush1.bf16.msra.mxu0 %v5024
        %5073 = vmatprep.subr.bf16.mxu0 0
        %5074 = vmatpush1.bf16.msra.mxu0 %v5026
        %5075 = vmatprep.subr.bf16.mxu0 0
        %5076 = vmatpush1.bf16.msra.mxu0 %v5028
        %5077 = vmatprep.subr.bf16.mxu0 0
        %5078 = vmatpush1.bf16.msra.mxu0 %v5030
        %5079 = vmatprep.subr.bf16.mxu0 0
        %5080 = vmatpush1.bf16.msra.mxu0 %v5032
        %5081 = vmatprep.subr.bf16.mxu0 0
        %5082 = vmatpush1.bf16.msra.mxu0 %v5034
        %5083 = vmatprep.subr.bf16.mxu0 0
        %5084 = vmatpush1.bf16.msra.mxu0 %v5036
        %5085 = vmatprep.subr.bf16.mxu0 0
        %5086 = vmatpush1.bf16.msra.mxu0 %v5038
        %5087 = vmatprep.subr.bf16.mxu0 0
        %5088 = vmatpush1.bf16.msra.mxu0 %v5040
        %5089 = vmatprep.subr.bf16.mxu0 0
        %5090 = vmatpush1.bf16.msra.mxu0 %v5042
        %5091 = vmatprep.subr.bf16.mxu0 0
        %5092 = vmatpush1.bf16.msra.mxu0 %v5044
        %5093 = vmatprep.subr.bf16.mxu0 0
        %5094 = vmatpush1.bf16.msra.mxu0 %v5046
        %5095 = vmatprep.subr.bf16.mxu0 0
        %5096 = vmatpush1.bf16.msra.mxu0 %v5048
        %5097 = vmatprep.subr.bf16.mxu0 0
        %5098 = vmatpush1.bf16.msra.mxu0 %v5050
        %5099 = vmatprep.subr.bf16.mxu0 0
        %5100 = vmatpush1.bf16.msra.mxu0 %v5052
        %5101 = vmatprep.subr.bf16.mxu0 0
        %5102 = vmatpush1.bf16.msra.mxu0 %v5054
        %5103 = vmatprep.mubr.bf16.mxu0 %v4964
        %5104 = vmatmul.mubr.bf16.gmra.mrb[0].mxu0 %v4961
        %v5105 = vpop.f32.mrb[0].mxu0
        %v5106 = vadd.f32 0.0, %v5105
        %v5107 = vpop.f32.mrb[0].mxu0
        %v5108 = vpop.f32.mrb[0].mxu0
        %v5109 = vadd.f32 0.0, %v5108
        %v5110 = vpop.f32.mrb[0].mxu0
        %5111 = vmatprep.mubr.bf16.mxu0 %v4970
        %5112 = vmatmul.mubr.bf16.gmra.mrb[0].mxu0 %v4967
        %v5113 = vpop.f32.mrb[0].mxu0
        %v5114 = vadd.f32 0.0, %v5113
        %v5115 = vpop.f32.mrb[0].mxu0
        %v5116 = vpop.f32.mrb[0].mxu0
        %v5117 = vadd.f32 0.0, %v5116
        %v5118 = vpop.f32.mrb[0].mxu0
        %5119 = vmatprep.mubr.bf16.mxu0 %v4976
        %5120 = vmatmul.mubr.bf16.gmra.mrb[0].mxu0 %v4973
        %v5121 = vpop.f32.mrb[0].mxu0
        %v5122 = vadd.f32 0.0, %v5121
        %v5123 = vpop.f32.mrb[0].mxu0
        %v5124 = vpop.f32.mrb[0].mxu0
        %v5125 = vadd.f32 0.0, %v5124
        %v5126 = vpop.f32.mrb[0].mxu0
        %5127 = vmatprep.mubr.bf16.mxu0 %v4982
        %5128 = vmatmul.mubr.bf16.gmra.mrb[0].mxu0 %v4979
        %v5129 = vpop.f32.mrb[0].mxu0
        %v5130 = vadd.f32 0.0, %v5129
        %v5131 = vpop.f32.mrb[0].mxu0
        %v5132 = vpop.f32.mrb[0].mxu0
        %v5133 = vadd.f32 0.0, %v5132
        %v5134 = vpop.f32.mrb[0].mxu0
        %5135 = vmatprep.mubr.bf16.mxu0 %v4988
        %5136 = vmatmul.mubr.bf16.gmra.mrb[0].mxu0 %v4985
        %v5137 = vpop.f32.mrb[0].mxu0
        %v5138 = vadd.f32 0.0, %v5137
        %v5139 = vpop.f32.mrb[0].mxu0
        %v5140 = vpop.f32.mrb[0].mxu0
        %v5141 = vadd.f32 0.0, %v5140
        %v5142 = vpop.f32.mrb[0].mxu0
        %5143 = vmatprep.mubr.bf16.mxu0 %v4994
        %5144 = vmatmul.mubr.bf16.gmra.mrb[0].mxu0 %v4991
        %v5145 = vpop.f32.mrb[0].mxu0
        %v5146 = vadd.f32 0.0, %v5145
        %v5147 = vpop.f32.mrb[0].mxu0
        %v5148 = vpop.f32.mrb[0].mxu0
        %v5149 = vadd.f32 0.0, %v5148
        %v5150 = vpop.f32.mrb[0].mxu0
        %5151 = vmatprep.mubr.bf16.mxu0 %v5000
        %5152 = vmatmul.mubr.bf16.gmra.mrb[0].mxu0 %v4997
        %v5153 = vpop.f32.mrb[0].mxu0
        %v5154 = vadd.f32 0.0, %v5153
        %v5155 = vpop.f32.mrb[0].mxu0
        %v5156 = vpop.f32.mrb[0].mxu0
        %v5157 = vadd.f32 0.0, %v5156
        %v5158 = vpop.f32.mrb[0].mxu0
        %5159 = vmatprep.mubr.bf16.mxu0 %v5006
        %5160 = vmatmul.mubr.bf16.gmra.mrb[0].mxu0 %v5003
        %v5161 = vpop.f32.mrb[0].mxu0
        %v5162 = vadd.f32 0.0, %v5161
        %v5163 = vpop.f32.mrb[0].mxu0
        %v5164 = vpop.f32.mrb[0].mxu0
        %v5165 = vadd.f32 0.0, %v5164
        %v5166 = vpop.f32.mrb[0].mxu0
        %5167 = vdwg.mxu0
        %5168 = vmatprep.subr.bf16.mxu0 0
        %5169 = vmatpush1.bf16.msra.mxu0 1065369472
        %5170 = vmatprep.subr.bf16.mxu0 0
        %5171 = vmatpush1.bf16.msra.mxu0 1065369472
        %5172 = vmatprep.subr.bf16.mxu0 0
        %5173 = vmatpush1.bf16.msra.mxu0 1065369472
        %5174 = vmatprep.subr.bf16.mxu0 0
        %5175 = vmatpush1.bf16.msra.mxu0 1065369472
        %5176 = vmatprep.subr.bf16.mxu0 0
        %5177 = vmatpush1.bf16.msra.mxu0 1065369472
        %5178 = vmatprep.subr.bf16.mxu0 0
        %5179 = vmatpush1.bf16.msra.mxu0 1065369472
        %5180 = vmatprep.subr.bf16.mxu0 0
        %5181 = vmatpush1.bf16.msra.mxu0 1065369472
        %5182 = vmatprep.subr.bf16.mxu0 0
        %5183 = vmatpush1.bf16.msra.mxu0 1065369472
        %5184 = vmatprep.subr.bf16.mxu0 0
        %5185 = vmatpush1.bf16.msra.mxu0 1065369472
        %5186 = vmatprep.subr.bf16.mxu0 0
        %5187 = vmatpush1.bf16.msra.mxu0 1065369472
        %5188 = vmatprep.subr.bf16.mxu0 0
        %5189 = vmatpush1.bf16.msra.mxu0 1065369472
        %5190 = vmatprep.subr.bf16.mxu0 0
        %5191 = vmatpush1.bf16.msra.mxu0 1065369472
        %5192 = vmatprep.subr.bf16.mxu0 0
        %5193 = vmatpush1.bf16.msra.mxu0 1065369472
        %5194 = vmatprep.subr.bf16.mxu0 0
        %5195 = vmatpush1.bf16.msra.mxu0 1065369472
        %5196 = vmatprep.subr.bf16.mxu0 0
        %5197 = vmatpush1.bf16.msra.mxu0 1065369472
        %5198 = vmatprep.subr.bf16.mxu0 0
        %5199 = vmatpush1.bf16.msra.mxu0 1065369472
        %5200 = vmatprep.mubr.bf16.mxu0 %v4964
        %5201 = vmatmul.mubr.bf16.gmra.mrb[0].mxu0 %v4961
        %v5202 = vpop.f32.mrb[0].mxu0
        %v5203 = vadd.f32 0.0, %v5202
        %v5204 = vpop.f32.mrb[0].mxu0
        %v5205 = vpop.f32.mrb[0].mxu0
        %v5206 = vadd.f32 0.0, %v5205
        %v5207 = vpop.f32.mrb[0].mxu0
        %5208 = vmatprep.mubr.bf16.mxu0 %v4970
        %5209 = vmatmul.mubr.bf16.gmra.mrb[0].mxu0 %v4967
        %v5210 = vpop.f32.mrb[0].mxu0
        %v5211 = vadd.f32 0.0, %v5210
        %v5212 = vpop.f32.mrb[0].mxu0
        %v5213 = vpop.f32.mrb[0].mxu0
        %v5214 = vadd.f32 0.0, %v5213
        %v5215 = vpop.f32.mrb[0].mxu0
        %5216 = vmatprep.mubr.bf16.mxu0 %v4976
        %5217 = vmatmul.mubr.bf16.gmra.mrb[0].mxu0 %v4973
        %v5218 = vpop.f32.mrb[0].mxu0
        %v5219 = vadd.f32 0.0, %v5218
        %v5220 = vpop.f32.mrb[0].mxu0
        %v5221 = vpop.f32.mrb[0].mxu0
        %v5222 = vadd.f32 0.0, %v5221
        %v5223 = vpop.f32.mrb[0].mxu0
        %5224 = vmatprep.mubr.bf16.mxu0 %v4982
        %5225 = vmatmul.mubr.bf16.gmra.mrb[0].mxu0 %v4979
        %v5226 = vpop.f32.mrb[0].mxu0
        %v5227 = vadd.f32 0.0, %v5226
        %v5228 = vpop.f32.mrb[0].mxu0
        %v5229 = vpop.f32.mrb[0].mxu0
        %v5230 = vadd.f32 0.0, %v5229
        %v5231 = vpop.f32.mrb[0].mxu0
        %5232 = vmatprep.mubr.bf16.mxu0 %v4988
        %5233 = vmatmul.mubr.bf16.gmra.mrb[0].mxu0 %v4985
        %v5234 = vpop.f32.mrb[0].mxu0
        %v5235 = vadd.f32 0.0, %v5234
        %v5236 = vpop.f32.mrb[0].mxu0
        %v5237 = vpop.f32.mrb[0].mxu0
        %v5238 = vadd.f32 0.0, %v5237
        %v5239 = vpop.f32.mrb[0].mxu0
        %5240 = vmatprep.mubr.bf16.mxu0 %v4994
        %5241 = vmatmul.mubr.bf16.gmra.mrb[0].mxu0 %v4991
        %v5242 = vpop.f32.mrb[0].mxu0
        %v5243 = vadd.f32 0.0, %v5242
        %v5244 = vpop.f32.mrb[0].mxu0
        %v5245 = vpop.f32.mrb[0].mxu0
        %v5246 = vadd.f32 0.0, %v5245
        %v5247 = vpop.f32.mrb[0].mxu0
        %5248 = vmatprep.mubr.bf16.mxu0 %v5000
        %5249 = vmatmul.mubr.bf16.gmra.mrb[0].mxu0 %v4997
        %v5250 = vpop.f32.mrb[0].mxu0
        %v5251 = vadd.f32 0.0, %v5250
        %v5252 = vpop.f32.mrb[0].mxu0
        %v5253 = vpop.f32.mrb[0].mxu0
        %v5254 = vadd.f32 0.0, %v5253
        %v5255 = vpop.f32.mrb[0].mxu0
        %5256 = vmatprep.mubr.bf16.mxu0 %v5006
        %5257 = vmatmul.mubr.bf16.gmra.mrb[0].mxu0 %v5003
        %v5258 = vpop.f32.mrb[0].mxu0
        %v5259 = vadd.f32 0.0, %v5258
        %v5260 = vpop.f32.mrb[0].mxu0
        %v5261 = vpop.f32.mrb[0].mxu0
        %v5262 = vadd.f32 0.0, %v5261
        %v5263 = vpop.f32.mrb[0].mxu0
        %5264 = vdwg.mxu0
        %v5265 = vrcp.pop %v5203
        %v5266 = vrcp.pop %v5206
        %v5267 = vrcp.pop %v5211
        %v5268 = vrcp.pop %v5214
        %v5269 = vrcp.pop %v5219
        %v5270 = vrcp.pop %v5222
        %v5271 = vrcp.pop %v5227
        %v5272 = vrcp.pop %v5230
        %v5273 = vrcp.pop %v5235
        %v5274 = vrcp.pop %v5238
        %v5275 = vrcp.pop %v5243
        %v5276 = vrcp.pop %v5246
        %v5277 = vrcp.pop %v5251
        %v5278 = vrcp.pop %v5254
        %v5279 = vrcp.pop %v5259
        %v5280 = vrcp.pop %v5262
        %5282 = vset.pattern.permute.xlu0 0
        %5283 = vperm.xlu0 %5282, %v5265
        %v5284 = vpop.permute.xlu0 %5283
        %5287 = vset.pattern.permute.xlu0 0
        %5288 = vperm.xlu0 %5287, %v5266
        %v5289 = vpop.permute.xlu0 %5288
        %5292 = vset.pattern.permute.xlu0 0
        %5293 = vperm.xlu0 %5292, %v5267
        %v5294 = vpop.permute.xlu0 %5293
        %5297 = vset.pattern.permute.xlu0 0
        %5298 = vperm.xlu0 %5297, %v5268
        %v5299 = vpop.permute.xlu0 %5298
        %5302 = vset.pattern.permute.xlu0 0
        %5303 = vperm.xlu0 %5302, %v5269
        %v5304 = vpop.permute.xlu0 %5303
        %5307 = vset.pattern.permute.xlu0 0
        %5308 = vperm.xlu0 %5307, %v5270
        %v5309 = vpop.permute.xlu0 %5308
        %5312 = vset.pattern.permute.xlu0 0
        %5313 = vperm.xlu0 %5312, %v5271
        %v5314 = vpop.permute.xlu0 %5313
        %5317 = vset.pattern.permute.xlu0 0
        %5318 = vperm.xlu0 %5317, %v5272
        %v5319 = vpop.permute.xlu0 %5318
        %5322 = vset.pattern.permute.xlu0 0
        %5323 = vperm.xlu0 %5322, %v5273
        %v5324 = vpop.permute.xlu0 %5323
        %5327 = vset.pattern.permute.xlu0 0
        %5328 = vperm.xlu0 %5327, %v5274
        %v5329 = vpop.permute.xlu0 %5328
        %5332 = vset.pattern.permute.xlu0 0
        %5333 = vperm.xlu0 %5332, %v5275
        %v5334 = vpop.permute.xlu0 %5333
        %5337 = vset.pattern.permute.xlu0 0
        %5338 = vperm.xlu0 %5337, %v5276
        %v5339 = vpop.permute.xlu0 %5338
        %5342 = vset.pattern.permute.xlu0 0
        %5343 = vperm.xlu0 %5342, %v5277
        %v5344 = vpop.permute.xlu0 %5343
        %5347 = vset.pattern.permute.xlu0 0
        %5348 = vperm.xlu0 %5347, %v5278
        %v5349 = vpop.permute.xlu0 %5348
        %5352 = vset.pattern.permute.xlu0 0
        %5353 = vperm.xlu0 %5352, %v5279
        %v5354 = vpop.permute.xlu0 %5353
        %5357 = vset.pattern.permute.xlu0 0
        %5358 = vperm.xlu0 %5357, %v5280
        %v5359 = vpop.permute.xlu0 %5358
        %v5361 = vmul.f32 %v5106, %v5284
        %v5362 = vmul.f32 %v5109, %v5289
        %v5363 = vmul.f32 %v5114, %v5294
        %v5364 = vmul.f32 %v5117, %v5299
        %v5365 = vmul.f32 %v5122, %v5304
        %v5366 = vmul.f32 %v5125, %v5309
        %v5367 = vmul.f32 %v5130, %v5314
        %v5368 = vmul.f32 %v5133, %v5319
        %v5369 = vmul.f32 %v5138, %v5324
        %v5370 = vmul.f32 %v5141, %v5329
        %v5371 = vmul.f32 %v5146, %v5334
        %v5372 = vmul.f32 %v5149, %v5339
        %v5373 = vmul.f32 %v5154, %v5344
        %v5374 = vmul.f32 %v5157, %v5349
        %v5375 = vmul.f32 %v5162, %v5354
        %v5376 = vmul.f32 %v5165, %v5359
        %5393 = vrot.lane.b32.xlu0 %v5361, 64
        %v5394 = vpop.permute.xlu0 %5393
        %5395 = vrot.lane.b32.xlu0 %v5362, 64
        %v5396 = vpop.permute.xlu0 %5395
        %5397 = vrot.lane.b32.xlu0 %v5363, 64
        %v5398 = vpop.permute.xlu0 %5397
        %5399 = vrot.lane.b32.xlu0 %v5364, 64
        %v5400 = vpop.permute.xlu0 %5399
        %5401 = vrot.lane.b32.xlu0 %v5365, 64
        %v5402 = vpop.permute.xlu0 %5401
        %5403 = vrot.lane.b32.xlu0 %v5366, 64
        %v5404 = vpop.permute.xlu0 %5403
        %5405 = vrot.lane.b32.xlu0 %v5367, 64
        %v5406 = vpop.permute.xlu0 %5405
        %5407 = vrot.lane.b32.xlu0 %v5368, 64
        %v5408 = vpop.permute.xlu0 %5407
        %5409 = vrot.lane.b32.xlu0 %v5369, 64
        %v5410 = vpop.permute.xlu0 %5409
        %5411 = vrot.lane.b32.xlu0 %v5370, 64
        %v5412 = vpop.permute.xlu0 %5411
        %5413 = vrot.lane.b32.xlu0 %v5371, 64
        %v5414 = vpop.permute.xlu0 %5413
        %5415 = vrot.lane.b32.xlu0 %v5372, 64
        %v5416 = vpop.permute.xlu0 %5415
        %5417 = vrot.lane.b32.xlu0 %v5373, 64
        %v5418 = vpop.permute.xlu0 %5417
        %5419 = vrot.lane.b32.xlu0 %v5374, 64
        %v5420 = vpop.permute.xlu0 %5419
        %5421 = vrot.lane.b32.xlu0 %v5375, 64
        %v5422 = vpop.permute.xlu0 %5421
        %5423 = vrot.lane.b32.xlu0 %v5376, 64
        %v5424 = vpop.permute.xlu0 %5423
        %vm5441 = vcmask 654848
        %5442 = vst.msk [vmem:[#allocation4] sm:$0xff] %vm5441, %v5394
        %5443 = vst.msk [vmem:[#allocation4 + $0x8] sm:$0xff] %vm5441, %v5396
        %5444 = vst.msk [vmem:[#allocation4 + $0x10] sm:$0xff] %vm5441, %v5398
        %5445 = vst.msk [vmem:[#allocation4 + $0x18] sm:$0xff] %vm5441, %v5400
        %5446 = vst.msk [vmem:[#allocation4 + $0x20] sm:$0xff] %vm5441, %v5402
        %5447 = vst.msk [vmem:[#allocation4 + $0x28] sm:$0xff] %vm5441, %v5404
        %5448 = vst.msk [vmem:[#allocation4 + $0x30] sm:$0xff] %vm5441, %v5406
        %5449 = vst.msk [vmem:[#allocation4 + $0x38] sm:$0xff] %vm5441, %v5408
        %5450 = vst.msk [vmem:[#allocation4 + $0x40] sm:$0xff] %vm5441, %v5410
        %5451 = vst.msk [vmem:[#allocation4 + $0x48] sm:$0xff] %vm5441, %v5412
        %5452 = vst.msk [vmem:[#allocation4 + $0x50] sm:$0xff] %vm5441, %v5414
        %5453 = vst.msk [vmem:[#allocation4 + $0x58] sm:$0xff] %vm5441, %v5416
        %5454 = vst.msk [vmem:[#allocation4 + $0x60] sm:$0xff] %vm5441, %v5418
        %5455 = vst.msk [vmem:[#allocation4 + $0x68] sm:$0xff] %vm5441, %v5420
        %5456 = vst.msk [vmem:[#allocation4 + $0x70] sm:$0xff] %vm5441, %v5422
        %5457 = vst.msk [vmem:[#allocation4 + $0x78] sm:$0xff] %vm5441, %v5424
        %v5458 = vld [vmem:[#allocation2] sm:$0xff]
        %v5459 = vld [vmem:[#allocation2 + $0x8] sm:$0xff]
        %v5460 = vld [vmem:[#allocation2 + $0x10] sm:$0xff]
        %v5461 = vld [vmem:[#allocation2 + $0x18] sm:$0xff]
        %v5462 = vld [vmem:[#allocation2 + $0x20] sm:$0xff]
        %v5463 = vld [vmem:[#allocation2 + $0x28] sm:$0xff]
        %v5464 = vld [vmem:[#allocation2 + $0x30] sm:$0xff]
        %v5465 = vld [vmem:[#allocation2 + $0x38] sm:$0xff]
        %v5466 = vld [vmem:[#allocation3] sm:$0xff]
        %v5467 = vld [vmem:[#allocation3 + $0x8] sm:$0xff]
        %v5468 = vld [vmem:[#allocation3 + $0x10] sm:$0xff]
        %v5469 = vld [vmem:[#allocation3 + $0x18] sm:$0xff]
        %v5470 = vld [vmem:[#allocation3 + $0x20] sm:$0xff]
        %v5471 = vld [vmem:[#allocation3 + $0x28] sm:$0xff]
        %v5472 = vld [vmem:[#allocation3 + $0x30] sm:$0xff]
        %v5473 = vld [vmem:[#allocation3 + $0x38] sm:$0xff]
        %v5474 = vld [vmem:[#allocation3 + $0x40] sm:$0xff]
        %v5475 = vld [vmem:[#allocation3 + $0x48] sm:$0xff]
        %v5476 = vld [vmem:[#allocation3 + $0x50] sm:$0xff]
        %v5477 = vld [vmem:[#allocation3 + $0x58] sm:$0xff]
        %v5478 = vld [vmem:[#allocation3 + $0x60] sm:$0xff]
        %v5479 = vld [vmem:[#allocation3 + $0x68] sm:$0xff]
        %v5480 = vld [vmem:[#allocation3 + $0x70] sm:$0xff]
        %v5481 = vld [vmem:[#allocation3 + $0x78] sm:$0xff]
        %v5482 = vld [vmem:[#allocation3 + $0x80] sm:$0xff]
        %v5483 = vld [vmem:[#allocation3 + $0x88] sm:$0xff]
        %v5484 = vld [vmem:[#allocation3 + $0x90] sm:$0xff]
        %v5485 = vld [vmem:[#allocation3 + $0x98] sm:$0xff]
        %v5486 = vld [vmem:[#allocation3 + $0xa0] sm:$0xff]
        %v5487 = vld [vmem:[#allocation3 + $0xa8] sm:$0xff]
        %v5488 = vld [vmem:[#allocation3 + $0xb0] sm:$0xff]
        %v5489 = vld [vmem:[#allocation3 + $0xb8] sm:$0xff]
        %v5490 = vld [vmem:[#allocation3 + $0xc0] sm:$0xff]
        %v5491 = vld [vmem:[#allocation3 + $0xc8] sm:$0xff]
        %v5492 = vld [vmem:[#allocation3 + $0xd0] sm:$0xff]
        %v5493 = vld [vmem:[#allocation3 + $0xd8] sm:$0xff]
        %v5494 = vld [vmem:[#allocation3 + $0xe0] sm:$0xff]
        %v5495 = vld [vmem:[#allocation3 + $0xe8] sm:$0xff]
        %v5496 = vld [vmem:[#allocation3 + $0xf0] sm:$0xff]
        %v5497 = vld [vmem:[#allocation3 + $0xf8] sm:$0xff]
        %5506 = vrot.lane.b32.xlu0 %v5458, 48
        %v5507 = vpop.permute.xlu0 %5506
        %5508 = vrot.lane.b32.xlu0 %v5459, 48
        %v5509 = vpop.permute.xlu0 %5508
        %5510 = vrot.lane.b32.xlu0 %v5460, 48
        %v5511 = vpop.permute.xlu0 %5510
        %5512 = vrot.lane.b32.xlu0 %v5461, 48
        %v5513 = vpop.permute.xlu0 %5512
        %5514 = vrot.lane.b32.xlu0 %v5462, 48
        %v5515 = vpop.permute.xlu0 %5514
        %5516 = vrot.lane.b32.xlu0 %v5463, 48
        %v5517 = vpop.permute.xlu0 %5516
        %5518 = vrot.lane.b32.xlu0 %v5464, 48
        %v5519 = vpop.permute.xlu0 %5518
        %5520 = vrot.lane.b32.xlu0 %v5465, 48
        %v5521 = vpop.permute.xlu0 %5520
        %5538 = vrot.lane.b32.xlu0 %v5466, 48
        %v5539 = vpop.permute.xlu0 %5538
        %5540 = vrot.lane.b32.xlu0 %v5467, 48
        %v5541 = vpop.permute.xlu0 %5540
        %5542 = vrot.lane.b32.xlu0 %v5468, 48
        %v5543 = vpop.permute.xlu0 %5542
        %5544 = vrot.lane.b32.xlu0 %v5469, 48
        %v5545 = vpop.permute.xlu0 %5544
        %5546 = vrot.lane.b32.xlu0 %v5470, 48
        %v5547 = vpop.permute.xlu0 %5546
        %5548 = vrot.lane.b32.xlu0 %v5471, 48
        %v5549 = vpop.permute.xlu0 %5548
        %5550 = vrot.lane.b32.xlu0 %v5472, 48
        %v5551 = vpop.permute.xlu0 %5550
        %5552 = vrot.lane.b32.xlu0 %v5473, 48
        %v5553 = vpop.permute.xlu0 %5552
        %5554 = vrot.lane.b32.xlu0 %v5474, 48
        %v5555 = vpop.permute.xlu0 %5554
        %5556 = vrot.lane.b32.xlu0 %v5475, 48
        %v5557 = vpop.permute.xlu0 %5556
        %5558 = vrot.lane.b32.xlu0 %v5476, 48
        %v5559 = vpop.permute.xlu0 %5558
        %5560 = vrot.lane.b32.xlu0 %v5477, 48
        %v5561 = vpop.permute.xlu0 %5560
        %5562 = vrot.lane.b32.xlu0 %v5478, 48
        %v5563 = vpop.permute.xlu0 %5562
        %5564 = vrot.lane.b32.xlu0 %v5479, 48
        %v5565 = vpop.permute.xlu0 %5564
        %5566 = vrot.lane.b32.xlu0 %v5480, 48
        %v5567 = vpop.permute.xlu0 %5566
        %5568 = vrot.lane.b32.xlu0 %v5481, 48
        %v5569 = vpop.permute.xlu0 %5568
        %v5571 = vsel %vm1278, %v5507, 0
        %v5574 = vsel %vm1278, %v5509, 0
        %v5577 = vsel %vm1278, %v5511, 0
        %v5580 = vsel %vm1278, %v5513, 0
        %v5583 = vsel %vm1278, %v5515, 0
        %v5586 = vsel %vm1278, %v5517, 0
        %v5589 = vsel %vm1278, %v5519, 0
        %v5592 = vsel %vm1278, %v5521, 0
        %v5595 = vsel %vm1278, %v5539, 0
        %v5598 = vsel %vm1278, %v5541, 0
        %v5601 = vsel %vm1278, %v5543, 0
        %v5604 = vsel %vm1278, %v5545, 0
        %v5607 = vsel %vm1278, %v5547, 0
        %v5610 = vsel %vm1278, %v5549, 0
        %v5613 = vsel %vm1278, %v5551, 0
        %v5616 = vsel %vm1278, %v5553, 0
        %v5619 = vsel %vm1278, %v5555, 0
        %v5622 = vsel %vm1278, %v5557, 0
        %v5625 = vsel %vm1278, %v5559, 0
        %v5628 = vsel %vm1278, %v5561, 0
        %v5631 = vsel %vm1278, %v5563, 0
        %v5634 = vsel %vm1278, %v5565, 0
        %v5637 = vsel %vm1278, %v5567, 0
        %v5640 = vsel %vm1278, %v5569, 0
        %5642 = vmatprep.subr.bf16.mxu0 0
        %5643 = vmatpush1.bf16.xpose.msra.mxu0 %v5595
        %5644 = vmatprep.subr.bf16.mxu0 0
        %5645 = vmatpush1.bf16.xpose.msra.mxu0 %v5598
        %5646 = vmatprep.subr.bf16.mxu0 0
        %5647 = vmatpush1.bf16.xpose.msra.mxu0 %v5601
        %5648 = vmatprep.subr.bf16.mxu0 0
        %5649 = vmatpush1.bf16.xpose.msra.mxu0 %v5604
        %5650 = vmatprep.subr.bf16.mxu0 0
        %5651 = vmatpush1.bf16.xpose.msra.mxu0 %v5607
        %5652 = vmatprep.subr.bf16.mxu0 0
        %5653 = vmatpush1.bf16.xpose.msra.mxu0 %v5610
        %5654 = vmatprep.subr.bf16.mxu0 0
        %5655 = vmatpush1.bf16.xpose.msra.mxu0 %v5613
        %5656 = vmatprep.subr.bf16.mxu0 0
        %5657 = vmatpush1.bf16.xpose.msra.mxu0 %v5616
        %5658 = vmatprep.subr.bf16.mxu0 0
        %5659 = vmatpush1.bf16.xpose.msra.mxu0 %v5619
        %5660 = vmatprep.subr.bf16.mxu0 0
        %5661 = vmatpush1.bf16.xpose.msra.mxu0 %v5622
        %5662 = vmatprep.subr.bf16.mxu0 0
        %5663 = vmatpush1.bf16.xpose.msra.mxu0 %v5625
        %5664 = vmatprep.subr.bf16.mxu0 0
        %5665 = vmatpush1.bf16.xpose.msra.mxu0 %v5628
        %5666 = vmatprep.subr.bf16.mxu0 0
        %5667 = vmatpush1.bf16.xpose.msra.mxu0 %v5631
        %5668 = vmatprep.subr.bf16.mxu0 0
        %5669 = vmatpush1.bf16.xpose.msra.mxu0 %v5634
        %5670 = vmatprep.subr.bf16.mxu0 0
        %5671 = vmatpush1.bf16.xpose.msra.mxu0 %v5637
        %5672 = vmatprep.subr.bf16.mxu0 0
        %5673 = vmatpush1.bf16.xpose.msra.mxu0 %v5640
        %5674 = vmatprep.mubr.bf16.mxu0 0
        %5675 = vmatmul.mubr.bf16.gmra.mrb[0].mxu0 %v5571
        %v5676 = vpop.f32.mrb[0].mxu0
        %v5677 = vadd.f32 0.0, %v5676
        %v5678 = vpop.f32.mrb[0].mxu0
        %v5679 = vadd.f32 0.0, %v5678
        %v5680 = vpop.f32.mrb[0].mxu0
        %v5681 = vadd.f32 0.0, %v5680
        %v5682 = vpop.f32.mrb[0].mxu0
        %v5683 = vadd.f32 0.0, %v5682
        %5684 = vmatprep.mubr.bf16.mxu0 0
        %5685 = vmatmul.mubr.bf16.gmra.mrb[0].mxu0 %v5574
        %v5686 = vpop.f32.mrb[0].mxu0
        %v5687 = vadd.f32 0.0, %v5686
        %v5688 = vpop.f32.mrb[0].mxu0
        %v5689 = vadd.f32 0.0, %v5688
        %v5690 = vpop.f32.mrb[0].mxu0
        %v5691 = vadd.f32 0.0, %v5690
        %v5692 = vpop.f32.mrb[0].mxu0
        %v5693 = vadd.f32 0.0, %v5692
        %5694 = vmatprep.mubr.bf16.mxu0 0
        %5695 = vmatmul.mubr.bf16.gmra.mrb[0].mxu0 %v5577
        %v5696 = vpop.f32.mrb[0].mxu0
        %v5697 = vadd.f32 0.0, %v5696
        %v5698 = vpop.f32.mrb[0].mxu0
        %v5699 = vadd.f32 0.0, %v5698
        %v5700 = vpop.f32.mrb[0].mxu0
        %v5701 = vadd.f32 0.0, %v5700
        %v5702 = vpop.f32.mrb[0].mxu0
        %v5703 = vadd.f32 0.0, %v5702
        %5704 = vmatprep.mubr.bf16.mxu0 0
        %5705 = vmatmul.mubr.bf16.gmra.mrb[0].mxu0 %v5580
        %v5706 = vpop.f32.mrb[0].mxu0
        %v5707 = vadd.f32 0.0, %v5706
        %v5708 = vpop.f32.mrb[0].mxu0
        %v5709 = vadd.f32 0.0, %v5708
        %v5710 = vpop.f32.mrb[0].mxu0
        %v5711 = vadd.f32 0.0, %v5710
        %v5712 = vpop.f32.mrb[0].mxu0
        %v5713 = vadd.f32 0.0, %v5712
        %5714 = vmatprep.mubr.bf16.mxu0 0
        %5715 = vmatmul.mubr.bf16.gmra.mrb[0].mxu0 %v5583
        %v5716 = vpop.f32.mrb[0].mxu0
        %v5717 = vadd.f32 0.0, %v5716
        %v5718 = vpop.f32.mrb[0].mxu0
        %v5719 = vadd.f32 0.0, %v5718
        %v5720 = vpop.f32.mrb[0].mxu0
        %v5721 = vadd.f32 0.0, %v5720
        %v5722 = vpop.f32.mrb[0].mxu0
        %v5723 = vadd.f32 0.0, %v5722
        %5724 = vmatprep.mubr.bf16.mxu0 0
        %5725 = vmatmul.mubr.bf16.gmra.mrb[0].mxu0 %v5586
        %v5726 = vpop.f32.mrb[0].mxu0
        %v5727 = vadd.f32 0.0, %v5726
        %v5728 = vpop.f32.mrb[0].mxu0
        %v5729 = vadd.f32 0.0, %v5728
        %v5730 = vpop.f32.mrb[0].mxu0
        %v5731 = vadd.f32 0.0, %v5730
        %v5732 = vpop.f32.mrb[0].mxu0
        %v5733 = vadd.f32 0.0, %v5732
        %5734 = vmatprep.mubr.bf16.mxu0 0
        %5735 = vmatmul.mubr.bf16.gmra.mrb[0].mxu0 %v5589
        %v5736 = vpop.f32.mrb[0].mxu0
        %v5737 = vadd.f32 0.0, %v5736
        %v5738 = vpop.f32.mrb[0].mxu0
        %v5739 = vadd.f32 0.0, %v5738
        %v5740 = vpop.f32.mrb[0].mxu0
        %v5741 = vadd.f32 0.0, %v5740
        %v5742 = vpop.f32.mrb[0].mxu0
        %v5743 = vadd.f32 0.0, %v5742
        %5744 = vmatprep.mubr.bf16.mxu0 0
        %5745 = vmatmul.mubr.bf16.gmra.mrb[0].mxu0 %v5592
        %v5746 = vpop.f32.mrb[0].mxu0
        %v5747 = vadd.f32 0.0, %v5746
        %v5748 = vpop.f32.mrb[0].mxu0
        %v5749 = vadd.f32 0.0, %v5748
        %v5750 = vpop.f32.mrb[0].mxu0
        %v5751 = vadd.f32 0.0, %v5750
        %v5752 = vpop.f32.mrb[0].mxu0
        %v5753 = vadd.f32 0.0, %v5752
        %5754 = vdwg.mxu0
        %v5755 = vmax.f32 %v5677, %v5679
        %5756 = vmax.xlane.f32.xlu0 %v5755
        %v5757 = vpop.xlane.xlu0 %5756
        %v5758 = vmax.f32 %v5681, %v5683
        %5759 = vmax.xlane.f32.xlu0 %v5758
        %v5760 = vpop.xlane.xlu0 %5759
        %v5761 = vmax.f32 %v5687, %v5689
        %5762 = vmax.xlane.f32.xlu0 %v5761
        %v5763 = vpop.xlane.xlu0 %5762
        %v5764 = vmax.f32 %v5691, %v5693
        %5765 = vmax.xlane.f32.xlu0 %v5764
        %v5766 = vpop.xlane.xlu0 %5765
        %v5767 = vmax.f32 %v5697, %v5699
        %5768 = vmax.xlane.f32.xlu0 %v5767
        %v5769 = vpop.xlane.xlu0 %5768
        %v5770 = vmax.f32 %v5701, %v5703
        %5771 = vmax.xlane.f32.xlu0 %v5770
        %v5772 = vpop.xlane.xlu0 %5771
        %v5773 = vmax.f32 %v5707, %v5709
        %5774 = vmax.xlane.f32.xlu0 %v5773
        %v5775 = vpop.xlane.xlu0 %5774
        %v5776 = vmax.f32 %v5711, %v5713
        %5777 = vmax.xlane.f32.xlu0 %v5776
        %v5778 = vpop.xlane.xlu0 %5777
        %v5779 = vmax.f32 %v5717, %v5719
        %5780 = vmax.xlane.f32.xlu0 %v5779
        %v5781 = vpop.xlane.xlu0 %5780
        %v5782 = vmax.f32 %v5721, %v5723
        %5783 = vmax.xlane.f32.xlu0 %v5782
        %v5784 = vpop.xlane.xlu0 %5783
        %v5785 = vmax.f32 %v5727, %v5729
        %5786 = vmax.xlane.f32.xlu0 %v5785
        %v5787 = vpop.xlane.xlu0 %5786
        %v5788 = vmax.f32 %v5731, %v5733
        %5789 = vmax.xlane.f32.xlu0 %v5788
        %v5790 = vpop.xlane.xlu0 %5789
        %v5791 = vmax.f32 %v5737, %v5739
        %5792 = vmax.xlane.f32.xlu0 %v5791
        %v5793 = vpop.xlane.xlu0 %5792
        %v5794 = vmax.f32 %v5741, %v5743
        %5795 = vmax.xlane.f32.xlu0 %v5794
        %v5796 = vpop.xlane.xlu0 %5795
        %v5797 = vmax.f32 %v5747, %v5749
        %5798 = vmax.xlane.f32.xlu0 %v5797
        %v5799 = vpop.xlane.xlu0 %5798
        %v5800 = vmax.f32 %v5751, %v5753
        %5801 = vmax.xlane.f32.xlu0 %v5800
        %v5802 = vpop.xlane.xlu0 %5801
        %v5803 = vpack.c.bf16 %v5681, %v5677
        %v5804 = vpack.c.bf16 %v5683, %v5679
        %v5805 = vpack.c.bf16 %v5691, %v5687
        %v5806 = vpack.c.bf16 %v5693, %v5689
        %v5807 = vpack.c.bf16 %v5701, %v5697
        %v5808 = vpack.c.bf16 %v5703, %v5699
        %v5809 = vpack.c.bf16 %v5711, %v5707
        %v5810 = vpack.c.bf16 %v5713, %v5709
        %v5811 = vpack.c.bf16 %v5721, %v5717
        %v5812 = vpack.c.bf16 %v5723, %v5719
        %v5813 = vpack.c.bf16 %v5731, %v5727
        %v5814 = vpack.c.bf16 %v5733, %v5729
        %v5815 = vpack.c.bf16 %v5741, %v5737
        %v5816 = vpack.c.bf16 %v5743, %v5739
        %v5817 = vpack.c.bf16 %v5751, %v5747
        %v5818 = vpack.c.bf16 %v5753, %v5749
        %v5819 = vpack.c.bf16 %v5760, %v5757
        %v5820 = vpack.c.bf16 %v5766, %v5763
        %v5821 = vpack.c.bf16 %v5772, %v5769
        %v5822 = vpack.c.bf16 %v5778, %v5775
        %v5823 = vpack.c.bf16 %v5784, %v5781
        %v5824 = vpack.c.bf16 %v5790, %v5787
        %v5825 = vpack.c.bf16 %v5796, %v5793
        %v5826 = vpack.c.bf16 %v5802, %v5799
        %v5827 = vsub.bf16 %v5803, %v5819
        %v5828 = vsub.bf16 %v5804, %v5819
        %v5829 = vsub.bf16 %v5805, %v5820
        %v5830 = vsub.bf16 %v5806, %v5820
        %v5831 = vsub.bf16 %v5807, %v5821
        %v5832 = vsub.bf16 %v5808, %v5821
        %v5833 = vsub.bf16 %v5809, %v5822
        %v5834 = vsub.bf16 %v5810, %v5822
        %v5835 = vsub.bf16 %v5811, %v5823
        %v5836 = vsub.bf16 %v5812, %v5823
        %v5837 = vsub.bf16 %v5813, %v5824
        %v5838 = vsub.bf16 %v5814, %v5824
        %v5839 = vsub.bf16 %v5815, %v5825
        %v5840 = vsub.bf16 %v5816, %v5825
        %v5841 = vsub.bf16 %v5817, %v5826
        %v5842 = vsub.bf16 %v5818, %v5826
        %v5844 = vmul.bf16 %v5827, 1069105081
        %v5845 = vpow.bf16.pop %v5844
        %v5847 = vmul.bf16 %v5828, 1069105081
        %v5848 = vpow.bf16.pop %v5847
        %v5850 = vmul.bf16 %v5829, 1069105081
        %v5851 = vpow.bf16.pop %v5850
        %v5853 = vmul.bf16 %v5830, 1069105081
        %v5854 = vpow.bf16.pop %v5853
        %v5856 = vmul.bf16 %v5831, 1069105081
        %v5857 = vpow.bf16.pop %v5856
        %v5859 = vmul.bf16 %v5832, 1069105081
        %v5860 = vpow.bf16.pop %v5859
        %v5862 = vmul.bf16 %v5833, 1069105081
        %v5863 = vpow.bf16.pop %v5862
        %v5865 = vmul.bf16 %v5834, 1069105081
        %v5866 = vpow.bf16.pop %v5865
        %v5868 = vmul.bf16 %v5835, 1069105081
        %v5869 = vpow.bf16.pop %v5868
        %v5871 = vmul.bf16 %v5836, 1069105081
        %v5872 = vpow.bf16.pop %v5871
        %v5874 = vmul.bf16 %v5837, 1069105081
        %v5875 = vpow.bf16.pop %v5874
        %v5877 = vmul.bf16 %v5838, 1069105081
        %v5878 = vpow.bf16.pop %v5877
        %v5880 = vmul.bf16 %v5839, 1069105081
        %v5881 = vpow.bf16.pop %v5880
        %v5883 = vmul.bf16 %v5840, 1069105081
        %v5884 = vpow.bf16.pop %v5883
        %v5886 = vmul.bf16 %v5841, 1069105081
        %v5887 = vpow.bf16.pop %v5886
        %v5889 = vmul.bf16 %v5842, 1069105081
        %v5890 = vpow.bf16.pop %v5889
        %5907 = vrot.lane.b32.xlu0 %v5482, 48
        %v5908 = vpop.permute.xlu0 %5907
        %5909 = vrot.lane.b32.xlu0 %v5483, 48
        %v5910 = vpop.permute.xlu0 %5909
        %5911 = vrot.lane.b32.xlu0 %v5484, 48
        %v5912 = vpop.permute.xlu0 %5911
        %5913 = vrot.lane.b32.xlu0 %v5485, 48
        %v5914 = vpop.permute.xlu0 %5913
        %5915 = vrot.lane.b32.xlu0 %v5486, 48
        %v5916 = vpop.permute.xlu0 %5915
        %5917 = vrot.lane.b32.xlu0 %v5487, 48
        %v5918 = vpop.permute.xlu0 %5917
        %5919 = vrot.lane.b32.xlu0 %v5488, 48
        %v5920 = vpop.permute.xlu0 %5919
        %5921 = vrot.lane.b32.xlu0 %v5489, 48
        %v5922 = vpop.permute.xlu0 %5921
        %5923 = vrot.lane.b32.xlu0 %v5490, 48
        %v5924 = vpop.permute.xlu0 %5923
        %5925 = vrot.lane.b32.xlu0 %v5491, 48
        %v5926 = vpop.permute.xlu0 %5925
        %5927 = vrot.lane.b32.xlu0 %v5492, 48
        %v5928 = vpop.permute.xlu0 %5927
        %5929 = vrot.lane.b32.xlu0 %v5493, 48
        %v5930 = vpop.permute.xlu0 %5929
        %5931 = vrot.lane.b32.xlu0 %v5494, 48
        %v5932 = vpop.permute.xlu0 %5931
        %5933 = vrot.lane.b32.xlu0 %v5495, 48
        %v5934 = vpop.permute.xlu0 %5933
        %5935 = vrot.lane.b32.xlu0 %v5496, 48
        %v5936 = vpop.permute.xlu0 %5935
        %5937 = vrot.lane.b32.xlu0 %v5497, 48
        %v5938 = vpop.permute.xlu0 %5937
        %5955 = vmatprep.subr.bf16.mxu0 0
        %5956 = vmatpush1.bf16.msra.mxu0 %v5908
        %5957 = vmatprep.subr.bf16.mxu0 0
        %5958 = vmatpush1.bf16.msra.mxu0 %v5910
        %5959 = vmatprep.subr.bf16.mxu0 0
        %5960 = vmatpush1.bf16.msra.mxu0 %v5912
        %5961 = vmatprep.subr.bf16.mxu0 0
        %5962 = vmatpush1.bf16.msra.mxu0 %v5914
        %5963 = vmatprep.subr.bf16.mxu0 0
        %5964 = vmatpush1.bf16.msra.mxu0 %v5916
        %5965 = vmatprep.subr.bf16.mxu0 0
        %5966 = vmatpush1.bf16.msra.mxu0 %v5918
        %5967 = vmatprep.subr.bf16.mxu0 0
        %5968 = vmatpush1.bf16.msra.mxu0 %v5920
        %5969 = vmatprep.subr.bf16.mxu0 0
        %5970 = vmatpush1.bf16.msra.mxu0 %v5922
        %5971 = vmatprep.subr.bf16.mxu0 0
        %5972 = vmatpush1.bf16.msra.mxu0 %v5924
        %5973 = vmatprep.subr.bf16.mxu0 0
        %5974 = vmatpush1.bf16.msra.mxu0 %v5926
        %5975 = vmatprep.subr.bf16.mxu0 0
        %5976 = vmatpush1.bf16.msra.mxu0 %v5928
        %5977 = vmatprep.subr.bf16.mxu0 0
        %5978 = vmatpush1.bf16.msra.mxu0 %v5930
        %5979 = vmatprep.subr.bf16.mxu0 0
        %5980 = vmatpush1.bf16.msra.mxu0 %v5932
        %5981 = vmatprep.subr.bf16.mxu0 0
        %5982 = vmatpush1.bf16.msra.mxu0 %v5934
        %5983 = vmatprep.subr.bf16.mxu0 0
        %5984 = vmatpush1.bf16.msra.mxu0 %v5936
        %5985 = vmatprep.subr.bf16.mxu0 0
        %5986 = vmatpush1.bf16.msra.mxu0 %v5938
        %5987 = vmatprep.mubr.bf16.mxu0 %v5848
        %5988 = vmatmul.mubr.bf16.gmra.mrb[0].mxu0 %v5845
        %v5989 = vpop.f32.mrb[0].mxu0
        %v5990 = vadd.f32 0.0, %v5989
        %v5991 = vpop.f32.mrb[0].mxu0
        %v5992 = vpop.f32.mrb[0].mxu0
        %v5993 = vadd.f32 0.0, %v5992
        %v5994 = vpop.f32.mrb[0].mxu0
        %5995 = vmatprep.mubr.bf16.mxu0 %v5854
        %5996 = vmatmul.mubr.bf16.gmra.mrb[0].mxu0 %v5851
        %v5997 = vpop.f32.mrb[0].mxu0
        %v5998 = vadd.f32 0.0, %v5997
        %v5999 = vpop.f32.mrb[0].mxu0
        %v6000 = vpop.f32.mrb[0].mxu0
        %v6001 = vadd.f32 0.0, %v6000
        %v6002 = vpop.f32.mrb[0].mxu0
        %6003 = vmatprep.mubr.bf16.mxu0 %v5860
        %6004 = vmatmul.mubr.bf16.gmra.mrb[0].mxu0 %v5857
        %v6005 = vpop.f32.mrb[0].mxu0
        %v6006 = vadd.f32 0.0, %v6005
        %v6007 = vpop.f32.mrb[0].mxu0
        %v6008 = vpop.f32.mrb[0].mxu0
        %v6009 = vadd.f32 0.0, %v6008
        %v6010 = vpop.f32.mrb[0].mxu0
        %6011 = vmatprep.mubr.bf16.mxu0 %v5866
        %6012 = vmatmul.mubr.bf16.gmra.mrb[0].mxu0 %v5863
        %v6013 = vpop.f32.mrb[0].mxu0
        %v6014 = vadd.f32 0.0, %v6013
        %v6015 = vpop.f32.mrb[0].mxu0
        %v6016 = vpop.f32.mrb[0].mxu0
        %v6017 = vadd.f32 0.0, %v6016
        %v6018 = vpop.f32.mrb[0].mxu0
        %6019 = vmatprep.mubr.bf16.mxu0 %v5872
        %6020 = vmatmul.mubr.bf16.gmra.mrb[0].mxu0 %v5869
        %v6021 = vpop.f32.mrb[0].mxu0
        %v6022 = vadd.f32 0.0, %v6021
        %v6023 = vpop.f32.mrb[0].mxu0
        %v6024 = vpop.f32.mrb[0].mxu0
        %v6025 = vadd.f32 0.0, %v6024
        %v6026 = vpop.f32.mrb[0].mxu0
        %6027 = vmatprep.mubr.bf16.mxu0 %v5878
        %6028 = vmatmul.mubr.bf16.gmra.mrb[0].mxu0 %v5875
        %v6029 = vpop.f32.mrb[0].mxu0
        %v6030 = vadd.f32 0.0, %v6029
        %v6031 = vpop.f32.mrb[0].mxu0
        %v6032 = vpop.f32.mrb[0].mxu0
        %v6033 = vadd.f32 0.0, %v6032
        %v6034 = vpop.f32.mrb[0].mxu0
        %6035 = vmatprep.mubr.bf16.mxu0 %v5884
        %6036 = vmatmul.mubr.bf16.gmra.mrb[0].mxu0 %v5881
        %v6037 = vpop.f32.mrb[0].mxu0
        %v6038 = vadd.f32 0.0, %v6037
        %v6039 = vpop.f32.mrb[0].mxu0
        %v6040 = vpop.f32.mrb[0].mxu0
        %v6041 = vadd.f32 0.0, %v6040
        %v6042 = vpop.f32.mrb[0].mxu0
        %6043 = vmatprep.mubr.bf16.mxu0 %v5890
        %6044 = vmatmul.mubr.bf16.gmra.mrb[0].mxu0 %v5887
        %v6045 = vpop.f32.mrb[0].mxu0
        %v6046 = vadd.f32 0.0, %v6045
        %v6047 = vpop.f32.mrb[0].mxu0
        %v6048 = vpop.f32.mrb[0].mxu0
        %v6049 = vadd.f32 0.0, %v6048
        %v6050 = vpop.f32.mrb[0].mxu0
        %6051 = vdwg.mxu0
        %6052 = vmatprep.subr.bf16.mxu0 0
        %6053 = vmatpush1.bf16.msra.mxu0 1065369472
        %6054 = vmatprep.subr.bf16.mxu0 0
        %6055 = vmatpush1.bf16.msra.mxu0 1065369472
        %6056 = vmatprep.subr.bf16.mxu0 0
        %6057 = vmatpush1.bf16.msra.mxu0 1065369472
        %6058 = vmatprep.subr.bf16.mxu0 0
        %6059 = vmatpush1.bf16.msra.mxu0 1065369472
        %6060 = vmatprep.subr.bf16.mxu0 0
        %6061 = vmatpush1.bf16.msra.mxu0 1065369472
        %6062 = vmatprep.subr.bf16.mxu0 0
        %6063 = vmatpush1.bf16.msra.mxu0 1065369472
        %6064 = vmatprep.subr.bf16.mxu0 0
        %6065 = vmatpush1.bf16.msra.mxu0 1065369472
        %6066 = vmatprep.subr.bf16.mxu0 0
        %6067 = vmatpush1.bf16.msra.mxu0 1065369472
        %6068 = vmatprep.subr.bf16.mxu0 0
        %6069 = vmatpush1.bf16.msra.mxu0 1065369472
        %6070 = vmatprep.subr.bf16.mxu0 0
        %6071 = vmatpush1.bf16.msra.mxu0 1065369472
        %6072 = vmatprep.subr.bf16.mxu0 0
        %6073 = vmatpush1.bf16.msra.mxu0 1065369472
        %6074 = vmatprep.subr.bf16.mxu0 0
        %6075 = vmatpush1.bf16.msra.mxu0 1065369472
        %6076 = vmatprep.subr.bf16.mxu0 0
        %6077 = vmatpush1.bf16.msra.mxu0 1065369472
        %6078 = vmatprep.subr.bf16.mxu0 0
        %6079 = vmatpush1.bf16.msra.mxu0 1065369472
        %6080 = vmatprep.subr.bf16.mxu0 0
        %6081 = vmatpush1.bf16.msra.mxu0 1065369472
        %6082 = vmatprep.subr.bf16.mxu0 0
        %6083 = vmatpush1.bf16.msra.mxu0 1065369472
        %6084 = vmatprep.mubr.bf16.mxu0 %v5848
        %6085 = vmatmul.mubr.bf16.gmra.mrb[0].mxu0 %v5845
        %v6086 = vpop.f32.mrb[0].mxu0
        %v6087 = vadd.f32 0.0, %v6086
        %v6088 = vpop.f32.mrb[0].mxu0
        %v6089 = vpop.f32.mrb[0].mxu0
        %v6090 = vadd.f32 0.0, %v6089
        %v6091 = vpop.f32.mrb[0].mxu0
        %6092 = vmatprep.mubr.bf16.mxu0 %v5854
        %6093 = vmatmul.mubr.bf16.gmra.mrb[0].mxu0 %v5851
        %v6094 = vpop.f32.mrb[0].mxu0
        %v6095 = vadd.f32 0.0, %v6094
        %v6096 = vpop.f32.mrb[0].mxu0
        %v6097 = vpop.f32.mrb[0].mxu0
        %v6098 = vadd.f32 0.0, %v6097
        %v6099 = vpop.f32.mrb[0].mxu0
        %6100 = vmatprep.mubr.bf16.mxu0 %v5860
        %6101 = vmatmul.mubr.bf16.gmra.mrb[0].mxu0 %v5857
        %v6102 = vpop.f32.mrb[0].mxu0
        %v6103 = vadd.f32 0.0, %v6102
        %v6104 = vpop.f32.mrb[0].mxu0
        %v6105 = vpop.f32.mrb[0].mxu0
        %v6106 = vadd.f32 0.0, %v6105
        %v6107 = vpop.f32.mrb[0].mxu0
        %6108 = vmatprep.mubr.bf16.mxu0 %v5866
        %6109 = vmatmul.mubr.bf16.gmra.mrb[0].mxu0 %v5863
        %v6110 = vpop.f32.mrb[0].mxu0
        %v6111 = vadd.f32 0.0, %v6110
        %v6112 = vpop.f32.mrb[0].mxu0
        %v6113 = vpop.f32.mrb[0].mxu0
        %v6114 = vadd.f32 0.0, %v6113
        %v6115 = vpop.f32.mrb[0].mxu0
        %6116 = vmatprep.mubr.bf16.mxu0 %v5872
        %6117 = vmatmul.mubr.bf16.gmra.mrb[0].mxu0 %v5869
        %v6118 = vpop.f32.mrb[0].mxu0
        %v6119 = vadd.f32 0.0, %v6118
        %v6120 = vpop.f32.mrb[0].mxu0
        %v6121 = vpop.f32.mrb[0].mxu0
        %v6122 = vadd.f32 0.0, %v6121
        %v6123 = vpop.f32.mrb[0].mxu0
        %6124 = vmatprep.mubr.bf16.mxu0 %v5878
        %6125 = vmatmul.mubr.bf16.gmra.mrb[0].mxu0 %v5875
        %v6126 = vpop.f32.mrb[0].mxu0
        %v6127 = vadd.f32 0.0, %v6126
        %v6128 = vpop.f32.mrb[0].mxu0
        %v6129 = vpop.f32.mrb[0].mxu0
        %v6130 = vadd.f32 0.0, %v6129
        %v6131 = vpop.f32.mrb[0].mxu0
        %6132 = vmatprep.mubr.bf16.mxu0 %v5884
        %6133 = vmatmul.mubr.bf16.gmra.mrb[0].mxu0 %v5881
        %v6134 = vpop.f32.mrb[0].mxu0
        %v6135 = vadd.f32 0.0, %v6134
        %v6136 = vpop.f32.mrb[0].mxu0
        %v6137 = vpop.f32.mrb[0].mxu0
        %v6138 = vadd.f32 0.0, %v6137
        %v6139 = vpop.f32.mrb[0].mxu0
        %6140 = vmatprep.mubr.bf16.mxu0 %v5890
        %6141 = vmatmul.mubr.bf16.gmra.mrb[0].mxu0 %v5887
        %v6142 = vpop.f32.mrb[0].mxu0
        %v6143 = vadd.f32 0.0, %v6142
        %v6144 = vpop.f32.mrb[0].mxu0
        %v6145 = vpop.f32.mrb[0].mxu0
        %v6146 = vadd.f32 0.0, %v6145
        %v6147 = vpop.f32.mrb[0].mxu0
        %6148 = vdwg.mxu0
        %v6149 = vrcp.pop %v6087
        %v6150 = vrcp.pop %v6090
        %v6151 = vrcp.pop %v6095
        %v6152 = vrcp.pop %v6098
        %v6153 = vrcp.pop %v6103
        %v6154 = vrcp.pop %v6106
        %v6155 = vrcp.pop %v6111
        %v6156 = vrcp.pop %v6114
        %v6157 = vrcp.pop %v6119
        %v6158 = vrcp.pop %v6122
        %v6159 = vrcp.pop %v6127
        %v6160 = vrcp.pop %v6130
        %v6161 = vrcp.pop %v6135
        %v6162 = vrcp.pop %v6138
        %v6163 = vrcp.pop %v6143
        %v6164 = vrcp.pop %v6146
        %6166 = vset.pattern.permute.xlu0 0
        %6167 = vperm.xlu0 %6166, %v6149
        %v6168 = vpop.permute.xlu0 %6167
        %6171 = vset.pattern.permute.xlu0 0
        %6172 = vperm.xlu0 %6171, %v6150
        %v6173 = vpop.permute.xlu0 %6172
        %6176 = vset.pattern.permute.xlu0 0
        %6177 = vperm.xlu0 %6176, %v6151
        %v6178 = vpop.permute.xlu0 %6177
        %6181 = vset.pattern.permute.xlu0 0
        %6182 = vperm.xlu0 %6181, %v6152
        %v6183 = vpop.permute.xlu0 %6182
        %6186 = vset.pattern.permute.xlu0 0
        %6187 = vperm.xlu0 %6186, %v6153
        %v6188 = vpop.permute.xlu0 %6187
        %6191 = vset.pattern.permute.xlu0 0
        %6192 = vperm.xlu0 %6191, %v6154
        %v6193 = vpop.permute.xlu0 %6192
        %6196 = vset.pattern.permute.xlu0 0
        %6197 = vperm.xlu0 %6196, %v6155
        %v6198 = vpop.permute.xlu0 %6197
        %6201 = vset.pattern.permute.xlu0 0
        %6202 = vperm.xlu0 %6201, %v6156
        %v6203 = vpop.permute.xlu0 %6202
        %6206 = vset.pattern.permute.xlu0 0
        %6207 = vperm.xlu0 %6206, %v6157
        %v6208 = vpop.permute.xlu0 %6207
        %6211 = vset.pattern.permute.xlu0 0
        %6212 = vperm.xlu0 %6211, %v6158
        %v6213 = vpop.permute.xlu0 %6212
        %6216 = vset.pattern.permute.xlu0 0
        %6217 = vperm.xlu0 %6216, %v6159
        %v6218 = vpop.permute.xlu0 %6217
        %6221 = vset.pattern.permute.xlu0 0
        %6222 = vperm.xlu0 %6221, %v6160
        %v6223 = vpop.permute.xlu0 %6222
        %6226 = vset.pattern.permute.xlu0 0
        %6227 = vperm.xlu0 %6226, %v6161
        %v6228 = vpop.permute.xlu0 %6227
        %6231 = vset.pattern.permute.xlu0 0
        %6232 = vperm.xlu0 %6231, %v6162
        %v6233 = vpop.permute.xlu0 %6232
        %6236 = vset.pattern.permute.xlu0 0
        %6237 = vperm.xlu0 %6236, %v6163
        %v6238 = vpop.permute.xlu0 %6237
        %6241 = vset.pattern.permute.xlu0 0
        %6242 = vperm.xlu0 %6241, %v6164
        %v6243 = vpop.permute.xlu0 %6242
        %v6245 = vmul.f32 %v5990, %v6168
        %v6246 = vmul.f32 %v5993, %v6173
        %v6247 = vmul.f32 %v5998, %v6178
        %v6248 = vmul.f32 %v6001, %v6183
        %v6249 = vmul.f32 %v6006, %v6188
        %v6250 = vmul.f32 %v6009, %v6193
        %v6251 = vmul.f32 %v6014, %v6198
        %v6252 = vmul.f32 %v6017, %v6203
        %v6253 = vmul.f32 %v6022, %v6208
        %v6254 = vmul.f32 %v6025, %v6213
        %v6255 = vmul.f32 %v6030, %v6218
        %v6256 = vmul.f32 %v6033, %v6223
        %v6257 = vmul.f32 %v6038, %v6228
        %v6258 = vmul.f32 %v6041, %v6233
        %v6259 = vmul.f32 %v6046, %v6238
        %v6260 = vmul.f32 %v6049, %v6243
        %6277 = vrot.lane.b32.xlu0 %v6245, 80
        %v6278 = vpop.permute.xlu0 %6277
        %6279 = vrot.lane.b32.xlu0 %v6246, 80
        %v6280 = vpop.permute.xlu0 %6279
        %6281 = vrot.lane.b32.xlu0 %v6247, 80
        %v6282 = vpop.permute.xlu0 %6281
        %6283 = vrot.lane.b32.xlu0 %v6248, 80
        %v6284 = vpop.permute.xlu0 %6283
        %6285 = vrot.lane.b32.xlu0 %v6249, 80
        %v6286 = vpop.permute.xlu0 %6285
        %6287 = vrot.lane.b32.xlu0 %v6250, 80
        %v6288 = vpop.permute.xlu0 %6287
        %6289 = vrot.lane.b32.xlu0 %v6251, 80
        %v6290 = vpop.permute.xlu0 %6289
        %6291 = vrot.lane.b32.xlu0 %v6252, 80
        %v6292 = vpop.permute.xlu0 %6291
        %6293 = vrot.lane.b32.xlu0 %v6253, 80
        %v6294 = vpop.permute.xlu0 %6293
        %6295 = vrot.lane.b32.xlu0 %v6254, 80
        %v6296 = vpop.permute.xlu0 %6295
        %6297 = vrot.lane.b32.xlu0 %v6255, 80
        %v6298 = vpop.permute.xlu0 %6297
        %6299 = vrot.lane.b32.xlu0 %v6256, 80
        %v6300 = vpop.permute.xlu0 %6299
        %6301 = vrot.lane.b32.xlu0 %v6257, 80
        %v6302 = vpop.permute.xlu0 %6301
        %6303 = vrot.lane.b32.xlu0 %v6258, 80
        %v6304 = vpop.permute.xlu0 %6303
        %6305 = vrot.lane.b32.xlu0 %v6259, 80
        %v6306 = vpop.permute.xlu0 %6305
        %6307 = vrot.lane.b32.xlu0 %v6260, 80
        %v6308 = vpop.permute.xlu0 %6307
        %vm6325 = vcmask 786048
        %6326 = vst.msk [vmem:[#allocation4] sm:$0xff] %vm6325, %v6278
        %6327 = vst.msk [vmem:[#allocation4 + $0x8] sm:$0xff] %vm6325, %v6280
        %6328 = vst.msk [vmem:[#allocation4 + $0x10] sm:$0xff] %vm6325, %v6282
        %6329 = vst.msk [vmem:[#allocation4 + $0x18] sm:$0xff] %vm6325, %v6284
        %6330 = vst.msk [vmem:[#allocation4 + $0x20] sm:$0xff] %vm6325, %v6286
        %6331 = vst.msk [vmem:[#allocation4 + $0x28] sm:$0xff] %vm6325, %v6288
        %6332 = vst.msk [vmem:[#allocation4 + $0x30] sm:$0xff] %vm6325, %v6290
        %6333 = vst.msk [vmem:[#allocation4 + $0x38] sm:$0xff] %vm6325, %v6292
        %6334 = vst.msk [vmem:[#allocation4 + $0x40] sm:$0xff] %vm6325, %v6294
        %6335 = vst.msk [vmem:[#allocation4 + $0x48] sm:$0xff] %vm6325, %v6296
        %6336 = vst.msk [vmem:[#allocation4 + $0x50] sm:$0xff] %vm6325, %v6298
        %6337 = vst.msk [vmem:[#allocation4 + $0x58] sm:$0xff] %vm6325, %v6300
        %6338 = vst.msk [vmem:[#allocation4 + $0x60] sm:$0xff] %vm6325, %v6302
        %6339 = vst.msk [vmem:[#allocation4 + $0x68] sm:$0xff] %vm6325, %v6304
        %6340 = vst.msk [vmem:[#allocation4 + $0x70] sm:$0xff] %vm6325, %v6306
        %6341 = vst.msk [vmem:[#allocation4 + $0x78] sm:$0xff] %vm6325, %v6308
        %v6342 = vld [vmem:[#allocation2] sm:$0xff]
        %v6343 = vld [vmem:[#allocation2 + $0x8] sm:$0xff]
        %v6344 = vld [vmem:[#allocation2 + $0x10] sm:$0xff]
        %v6345 = vld [vmem:[#allocation2 + $0x18] sm:$0xff]
        %v6346 = vld [vmem:[#allocation2 + $0x20] sm:$0xff]
        %v6347 = vld [vmem:[#allocation2 + $0x28] sm:$0xff]
        %v6348 = vld [vmem:[#allocation2 + $0x30] sm:$0xff]
        %v6349 = vld [vmem:[#allocation2 + $0x38] sm:$0xff]
        %v6350 = vld [vmem:[#allocation3] sm:$0xff]
        %v6351 = vld [vmem:[#allocation3 + $0x8] sm:$0xff]
        %v6352 = vld [vmem:[#allocation3 + $0x10] sm:$0xff]
        %v6353 = vld [vmem:[#allocation3 + $0x18] sm:$0xff]
        %v6354 = vld [vmem:[#allocation3 + $0x20] sm:$0xff]
        %v6355 = vld [vmem:[#allocation3 + $0x28] sm:$0xff]
        %v6356 = vld [vmem:[#allocation3 + $0x30] sm:$0xff]
        %v6357 = vld [vmem:[#allocation3 + $0x38] sm:$0xff]
        %v6358 = vld [vmem:[#allocation3 + $0x40] sm:$0xff]
        %v6359 = vld [vmem:[#allocation3 + $0x48] sm:$0xff]
        %v6360 = vld [vmem:[#allocation3 + $0x50] sm:$0xff]
        %v6361 = vld [vmem:[#allocation3 + $0x58] sm:$0xff]
        %v6362 = vld [vmem:[#allocation3 + $0x60] sm:$0xff]
        %v6363 = vld [vmem:[#allocation3 + $0x68] sm:$0xff]
        %v6364 = vld [vmem:[#allocation3 + $0x70] sm:$0xff]
        %v6365 = vld [vmem:[#allocation3 + $0x78] sm:$0xff]
        %v6366 = vld [vmem:[#allocation3 + $0x80] sm:$0xff]
        %v6367 = vld [vmem:[#allocation3 + $0x88] sm:$0xff]
        %v6368 = vld [vmem:[#allocation3 + $0x90] sm:$0xff]
        %v6369 = vld [vmem:[#allocation3 + $0x98] sm:$0xff]
        %v6370 = vld [vmem:[#allocation3 + $0xa0] sm:$0xff]
        %v6371 = vld [vmem:[#allocation3 + $0xa8] sm:$0xff]
        %v6372 = vld [vmem:[#allocation3 + $0xb0] sm:$0xff]
        %v6373 = vld [vmem:[#allocation3 + $0xb8] sm:$0xff]
        %v6374 = vld [vmem:[#allocation3 + $0xc0] sm:$0xff]
        %v6375 = vld [vmem:[#allocation3 + $0xc8] sm:$0xff]
        %v6376 = vld [vmem:[#allocation3 + $0xd0] sm:$0xff]
        %v6377 = vld [vmem:[#allocation3 + $0xd8] sm:$0xff]
        %v6378 = vld [vmem:[#allocation3 + $0xe0] sm:$0xff]
        %v6379 = vld [vmem:[#allocation3 + $0xe8] sm:$0xff]
        %v6380 = vld [vmem:[#allocation3 + $0xf0] sm:$0xff]
        %v6381 = vld [vmem:[#allocation3 + $0xf8] sm:$0xff]
        %6390 = vrot.lane.b32.xlu0 %v6342, 32
        %v6391 = vpop.permute.xlu0 %6390
        %6392 = vrot.lane.b32.xlu0 %v6343, 32
        %v6393 = vpop.permute.xlu0 %6392
        %6394 = vrot.lane.b32.xlu0 %v6344, 32
        %v6395 = vpop.permute.xlu0 %6394
        %6396 = vrot.lane.b32.xlu0 %v6345, 32
        %v6397 = vpop.permute.xlu0 %6396
        %6398 = vrot.lane.b32.xlu0 %v6346, 32
        %v6399 = vpop.permute.xlu0 %6398
        %6400 = vrot.lane.b32.xlu0 %v6347, 32
        %v6401 = vpop.permute.xlu0 %6400
        %6402 = vrot.lane.b32.xlu0 %v6348, 32
        %v6403 = vpop.permute.xlu0 %6402
        %6404 = vrot.lane.b32.xlu0 %v6349, 32
        %v6405 = vpop.permute.xlu0 %6404
        %6422 = vrot.lane.b32.xlu0 %v6350, 32
        %v6423 = vpop.permute.xlu0 %6422
        %6424 = vrot.lane.b32.xlu0 %v6351, 32
        %v6425 = vpop.permute.xlu0 %6424
        %6426 = vrot.lane.b32.xlu0 %v6352, 32
        %v6427 = vpop.permute.xlu0 %6426
        %6428 = vrot.lane.b32.xlu0 %v6353, 32
        %v6429 = vpop.permute.xlu0 %6428
        %6430 = vrot.lane.b32.xlu0 %v6354, 32
        %v6431 = vpop.permute.xlu0 %6430
        %6432 = vrot.lane.b32.xlu0 %v6355, 32
        %v6433 = vpop.permute.xlu0 %6432
        %6434 = vrot.lane.b32.xlu0 %v6356, 32
        %v6435 = vpop.permute.xlu0 %6434
        %6436 = vrot.lane.b32.xlu0 %v6357, 32
        %v6437 = vpop.permute.xlu0 %6436
        %6438 = vrot.lane.b32.xlu0 %v6358, 32
        %v6439 = vpop.permute.xlu0 %6438
        %6440 = vrot.lane.b32.xlu0 %v6359, 32
        %v6441 = vpop.permute.xlu0 %6440
        %6442 = vrot.lane.b32.xlu0 %v6360, 32
        %v6443 = vpop.permute.xlu0 %6442
        %6444 = vrot.lane.b32.xlu0 %v6361, 32
        %v6445 = vpop.permute.xlu0 %6444
        %6446 = vrot.lane.b32.xlu0 %v6362, 32
        %v6447 = vpop.permute.xlu0 %6446
        %6448 = vrot.lane.b32.xlu0 %v6363, 32
        %v6449 = vpop.permute.xlu0 %6448
        %6450 = vrot.lane.b32.xlu0 %v6364, 32
        %v6451 = vpop.permute.xlu0 %6450
        %6452 = vrot.lane.b32.xlu0 %v6365, 32
        %v6453 = vpop.permute.xlu0 %6452
        %v6455 = vsel %vm1278, %v6391, 0
        %v6458 = vsel %vm1278, %v6393, 0
        %v6461 = vsel %vm1278, %v6395, 0
        %v6464 = vsel %vm1278, %v6397, 0
        %v6467 = vsel %vm1278, %v6399, 0
        %v6470 = vsel %vm1278, %v6401, 0
        %v6473 = vsel %vm1278, %v6403, 0
        %v6476 = vsel %vm1278, %v6405, 0
        %v6479 = vsel %vm1278, %v6423, 0
        %v6482 = vsel %vm1278, %v6425, 0
        %v6485 = vsel %vm1278, %v6427, 0
        %v6488 = vsel %vm1278, %v6429, 0
        %v6491 = vsel %vm1278, %v6431, 0
        %v6494 = vsel %vm1278, %v6433, 0
        %v6497 = vsel %vm1278, %v6435, 0
        %v6500 = vsel %vm1278, %v6437, 0
        %v6503 = vsel %vm1278, %v6439, 0
        %v6506 = vsel %vm1278, %v6441, 0
        %v6509 = vsel %vm1278, %v6443, 0
        %v6512 = vsel %vm1278, %v6445, 0
        %v6515 = vsel %vm1278, %v6447, 0
        %v6518 = vsel %vm1278, %v6449, 0
        %v6521 = vsel %vm1278, %v6451, 0
        %v6524 = vsel %vm1278, %v6453, 0
        %6526 = vmatprep.subr.bf16.mxu0 0
        %6527 = vmatpush1.bf16.xpose.msra.mxu0 %v6479
        %6528 = vmatprep.subr.bf16.mxu0 0
        %6529 = vmatpush1.bf16.xpose.msra.mxu0 %v6482
        %6530 = vmatprep.subr.bf16.mxu0 0
        %6531 = vmatpush1.bf16.xpose.msra.mxu0 %v6485
        %6532 = vmatprep.subr.bf16.mxu0 0
        %6533 = vmatpush1.bf16.xpose.msra.mxu0 %v6488
        %6534 = vmatprep.subr.bf16.mxu0 0
        %6535 = vmatpush1.bf16.xpose.msra.mxu0 %v6491
        %6536 = vmatprep.subr.bf16.mxu0 0
        %6537 = vmatpush1.bf16.xpose.msra.mxu0 %v6494
        %6538 = vmatprep.subr.bf16.mxu0 0
        %6539 = vmatpush1.bf16.xpose.msra.mxu0 %v6497
        %6540 = vmatprep.subr.bf16.mxu0 0
        %6541 = vmatpush1.bf16.xpose.msra.mxu0 %v6500
        %6542 = vmatprep.subr.bf16.mxu0 0
        %6543 = vmatpush1.bf16.xpose.msra.mxu0 %v6503
        %6544 = vmatprep.subr.bf16.mxu0 0
        %6545 = vmatpush1.bf16.xpose.msra.mxu0 %v6506
        %6546 = vmatprep.subr.bf16.mxu0 0
        %6547 = vmatpush1.bf16.xpose.msra.mxu0 %v6509
        %6548 = vmatprep.subr.bf16.mxu0 0
        %6549 = vmatpush1.bf16.xpose.msra.mxu0 %v6512
        %6550 = vmatprep.subr.bf16.mxu0 0
        %6551 = vmatpush1.bf16.xpose.msra.mxu0 %v6515
        %6552 = vmatprep.subr.bf16.mxu0 0
        %6553 = vmatpush1.bf16.xpose.msra.mxu0 %v6518
        %6554 = vmatprep.subr.bf16.mxu0 0
        %6555 = vmatpush1.bf16.xpose.msra.mxu0 %v6521
        %6556 = vmatprep.subr.bf16.mxu0 0
        %6557 = vmatpush1.bf16.xpose.msra.mxu0 %v6524
        %6558 = vmatprep.mubr.bf16.mxu0 0
        %6559 = vmatmul.mubr.bf16.gmra.mrb[0].mxu0 %v6455
        %v6560 = vpop.f32.mrb[0].mxu0
        %v6561 = vadd.f32 0.0, %v6560
        %v6562 = vpop.f32.mrb[0].mxu0
        %v6563 = vadd.f32 0.0, %v6562
        %v6564 = vpop.f32.mrb[0].mxu0
        %v6565 = vadd.f32 0.0, %v6564
        %v6566 = vpop.f32.mrb[0].mxu0
        %v6567 = vadd.f32 0.0, %v6566
        %6568 = vmatprep.mubr.bf16.mxu0 0
        %6569 = vmatmul.mubr.bf16.gmra.mrb[0].mxu0 %v6458
        %v6570 = vpop.f32.mrb[0].mxu0
        %v6571 = vadd.f32 0.0, %v6570
        %v6572 = vpop.f32.mrb[0].mxu0
        %v6573 = vadd.f32 0.0, %v6572
        %v6574 = vpop.f32.mrb[0].mxu0
        %v6575 = vadd.f32 0.0, %v6574
        %v6576 = vpop.f32.mrb[0].mxu0
        %v6577 = vadd.f32 0.0, %v6576
        %6578 = vmatprep.mubr.bf16.mxu0 0
        %6579 = vmatmul.mubr.bf16.gmra.mrb[0].mxu0 %v6461
        %v6580 = vpop.f32.mrb[0].mxu0
        %v6581 = vadd.f32 0.0, %v6580
        %v6582 = vpop.f32.mrb[0].mxu0
        %v6583 = vadd.f32 0.0, %v6582
        %v6584 = vpop.f32.mrb[0].mxu0
        %v6585 = vadd.f32 0.0, %v6584
        %v6586 = vpop.f32.mrb[0].mxu0
        %v6587 = vadd.f32 0.0, %v6586
        %6588 = vmatprep.mubr.bf16.mxu0 0
        %6589 = vmatmul.mubr.bf16.gmra.mrb[0].mxu0 %v6464
        %v6590 = vpop.f32.mrb[0].mxu0
        %v6591 = vadd.f32 0.0, %v6590
        %v6592 = vpop.f32.mrb[0].mxu0
        %v6593 = vadd.f32 0.0, %v6592
        %v6594 = vpop.f32.mrb[0].mxu0
        %v6595 = vadd.f32 0.0, %v6594
        %v6596 = vpop.f32.mrb[0].mxu0
        %v6597 = vadd.f32 0.0, %v6596
        %6598 = vmatprep.mubr.bf16.mxu0 0
        %6599 = vmatmul.mubr.bf16.gmra.mrb[0].mxu0 %v6467
        %v6600 = vpop.f32.mrb[0].mxu0
        %v6601 = vadd.f32 0.0, %v6600
        %v6602 = vpop.f32.mrb[0].mxu0
        %v6603 = vadd.f32 0.0, %v6602
        %v6604 = vpop.f32.mrb[0].mxu0
        %v6605 = vadd.f32 0.0, %v6604
        %v6606 = vpop.f32.mrb[0].mxu0
        %v6607 = vadd.f32 0.0, %v6606
        %6608 = vmatprep.mubr.bf16.mxu0 0
        %6609 = vmatmul.mubr.bf16.gmra.mrb[0].mxu0 %v6470
        %v6610 = vpop.f32.mrb[0].mxu0
        %v6611 = vadd.f32 0.0, %v6610
        %v6612 = vpop.f32.mrb[0].mxu0
        %v6613 = vadd.f32 0.0, %v6612
        %v6614 = vpop.f32.mrb[0].mxu0
        %v6615 = vadd.f32 0.0, %v6614
        %v6616 = vpop.f32.mrb[0].mxu0
        %v6617 = vadd.f32 0.0, %v6616
        %6618 = vmatprep.mubr.bf16.mxu0 0
        %6619 = vmatmul.mubr.bf16.gmra.mrb[0].mxu0 %v6473
        %v6620 = vpop.f32.mrb[0].mxu0
        %v6621 = vadd.f32 0.0, %v6620
        %v6622 = vpop.f32.mrb[0].mxu0
        %v6623 = vadd.f32 0.0, %v6622
        %v6624 = vpop.f32.mrb[0].mxu0
        %v6625 = vadd.f32 0.0, %v6624
        %v6626 = vpop.f32.mrb[0].mxu0
        %v6627 = vadd.f32 0.0, %v6626
        %6628 = vmatprep.mubr.bf16.mxu0 0
        %6629 = vmatmul.mubr.bf16.gmra.mrb[0].mxu0 %v6476
        %v6630 = vpop.f32.mrb[0].mxu0
        %v6631 = vadd.f32 0.0, %v6630
        %v6632 = vpop.f32.mrb[0].mxu0
        %v6633 = vadd.f32 0.0, %v6632
        %v6634 = vpop.f32.mrb[0].mxu0
        %v6635 = vadd.f32 0.0, %v6634
        %v6636 = vpop.f32.mrb[0].mxu0
        %v6637 = vadd.f32 0.0, %v6636
        %6638 = vdwg.mxu0
        %v6639 = vmax.f32 %v6561, %v6563
        %6640 = vmax.xlane.f32.xlu0 %v6639
        %v6641 = vpop.xlane.xlu0 %6640
        %v6642 = vmax.f32 %v6565, %v6567
        %6643 = vmax.xlane.f32.xlu0 %v6642
        %v6644 = vpop.xlane.xlu0 %6643
        %v6645 = vmax.f32 %v6571, %v6573
        %6646 = vmax.xlane.f32.xlu0 %v6645
        %v6647 = vpop.xlane.xlu0 %6646
        %v6648 = vmax.f32 %v6575, %v6577
        %6649 = vmax.xlane.f32.xlu0 %v6648
        %v6650 = vpop.xlane.xlu0 %6649
        %v6651 = vmax.f32 %v6581, %v6583
        %6652 = vmax.xlane.f32.xlu0 %v6651
        %v6653 = vpop.xlane.xlu0 %6652
        %v6654 = vmax.f32 %v6585, %v6587
        %6655 = vmax.xlane.f32.xlu0 %v6654
        %v6656 = vpop.xlane.xlu0 %6655
        %v6657 = vmax.f32 %v6591, %v6593
        %6658 = vmax.xlane.f32.xlu0 %v6657
        %v6659 = vpop.xlane.xlu0 %6658
        %v6660 = vmax.f32 %v6595, %v6597
        %6661 = vmax.xlane.f32.xlu0 %v6660
        %v6662 = vpop.xlane.xlu0 %6661
        %v6663 = vmax.f32 %v6601, %v6603
        %6664 = vmax.xlane.f32.xlu0 %v6663
        %v6665 = vpop.xlane.xlu0 %6664
        %v6666 = vmax.f32 %v6605, %v6607
        %6667 = vmax.xlane.f32.xlu0 %v6666
        %v6668 = vpop.xlane.xlu0 %6667
        %v6669 = vmax.f32 %v6611, %v6613
        %6670 = vmax.xlane.f32.xlu0 %v6669
        %v6671 = vpop.xlane.xlu0 %6670
        %v6672 = vmax.f32 %v6615, %v6617
        %6673 = vmax.xlane.f32.xlu0 %v6672
        %v6674 = vpop.xlane.xlu0 %6673
        %v6675 = vmax.f32 %v6621, %v6623
        %6676 = vmax.xlane.f32.xlu0 %v6675
        %v6677 = vpop.xlane.xlu0 %6676
        %v6678 = vmax.f32 %v6625, %v6627
        %6679 = vmax.xlane.f32.xlu0 %v6678
        %v6680 = vpop.xlane.xlu0 %6679
        %v6681 = vmax.f32 %v6631, %v6633
        %6682 = vmax.xlane.f32.xlu0 %v6681
        %v6683 = vpop.xlane.xlu0 %6682
        %v6684 = vmax.f32 %v6635, %v6637
        %6685 = vmax.xlane.f32.xlu0 %v6684
        %v6686 = vpop.xlane.xlu0 %6685
        %v6687 = vpack.c.bf16 %v6565, %v6561
        %v6688 = vpack.c.bf16 %v6567, %v6563
        %v6689 = vpack.c.bf16 %v6575, %v6571
        %v6690 = vpack.c.bf16 %v6577, %v6573
        %v6691 = vpack.c.bf16 %v6585, %v6581
        %v6692 = vpack.c.bf16 %v6587, %v6583
        %v6693 = vpack.c.bf16 %v6595, %v6591
        %v6694 = vpack.c.bf16 %v6597, %v6593
        %v6695 = vpack.c.bf16 %v6605, %v6601
        %v6696 = vpack.c.bf16 %v6607, %v6603
        %v6697 = vpack.c.bf16 %v6615, %v6611
        %v6698 = vpack.c.bf16 %v6617, %v6613
        %v6699 = vpack.c.bf16 %v6625, %v6621
        %v6700 = vpack.c.bf16 %v6627, %v6623
        %v6701 = vpack.c.bf16 %v6635, %v6631
        %v6702 = vpack.c.bf16 %v6637, %v6633
        %v6703 = vpack.c.bf16 %v6644, %v6641
        %v6704 = vpack.c.bf16 %v6650, %v6647
        %v6705 = vpack.c.bf16 %v6656, %v6653
        %v6706 = vpack.c.bf16 %v6662, %v6659
        %v6707 = vpack.c.bf16 %v6668, %v6665
        %v6708 = vpack.c.bf16 %v6674, %v6671
        %v6709 = vpack.c.bf16 %v6680, %v6677
        %v6710 = vpack.c.bf16 %v6686, %v6683
        %v6711 = vsub.bf16 %v6687, %v6703
        %v6712 = vsub.bf16 %v6688, %v6703
        %v6713 = vsub.bf16 %v6689, %v6704
        %v6714 = vsub.bf16 %v6690, %v6704
        %v6715 = vsub.bf16 %v6691, %v6705
        %v6716 = vsub.bf16 %v6692, %v6705
        %v6717 = vsub.bf16 %v6693, %v6706
        %v6718 = vsub.bf16 %v6694, %v6706
        %v6719 = vsub.bf16 %v6695, %v6707
        %v6720 = vsub.bf16 %v6696, %v6707
        %v6721 = vsub.bf16 %v6697, %v6708
        %v6722 = vsub.bf16 %v6698, %v6708
        %v6723 = vsub.bf16 %v6699, %v6709
        %v6724 = vsub.bf16 %v6700, %v6709
        %v6725 = vsub.bf16 %v6701, %v6710
        %v6726 = vsub.bf16 %v6702, %v6710
        %v6728 = vmul.bf16 %v6711, 1069105081
        %v6729 = vpow.bf16.pop %v6728
        %v6731 = vmul.bf16 %v6712, 1069105081
        %v6732 = vpow.bf16.pop %v6731
        %v6734 = vmul.bf16 %v6713, 1069105081
        %v6735 = vpow.bf16.pop %v6734
        %v6737 = vmul.bf16 %v6714, 1069105081
        %v6738 = vpow.bf16.pop %v6737
        %v6740 = vmul.bf16 %v6715, 1069105081
        %v6741 = vpow.bf16.pop %v6740
        %v6743 = vmul.bf16 %v6716, 1069105081
        %v6744 = vpow.bf16.pop %v6743
        %v6746 = vmul.bf16 %v6717, 1069105081
        %v6747 = vpow.bf16.pop %v6746
        %v6749 = vmul.bf16 %v6718, 1069105081
        %v6750 = vpow.bf16.pop %v6749
        %v6752 = vmul.bf16 %v6719, 1069105081
        %v6753 = vpow.bf16.pop %v6752
        %v6755 = vmul.bf16 %v6720, 1069105081
        %v6756 = vpow.bf16.pop %v6755
        %v6758 = vmul.bf16 %v6721, 1069105081
        %v6759 = vpow.bf16.pop %v6758
        %v6761 = vmul.bf16 %v6722, 1069105081
        %v6762 = vpow.bf16.pop %v6761
        %v6764 = vmul.bf16 %v6723, 1069105081
        %v6765 = vpow.bf16.pop %v6764
        %v6767 = vmul.bf16 %v6724, 1069105081
        %v6768 = vpow.bf16.pop %v6767
        %v6770 = vmul.bf16 %v6725, 1069105081
        %v6771 = vpow.bf16.pop %v6770
        %v6773 = vmul.bf16 %v6726, 1069105081
        %v6774 = vpow.bf16.pop %v6773
        %6791 = vrot.lane.b32.xlu0 %v6366, 32
        %v6792 = vpop.permute.xlu0 %6791
        %6793 = vrot.lane.b32.xlu0 %v6367, 32
        %v6794 = vpop.permute.xlu0 %6793
        %6795 = vrot.lane.b32.xlu0 %v6368, 32
        %v6796 = vpop.permute.xlu0 %6795
        %6797 = vrot.lane.b32.xlu0 %v6369, 32
        %v6798 = vpop.permute.xlu0 %6797
        %6799 = vrot.lane.b32.xlu0 %v6370, 32
        %v6800 = vpop.permute.xlu0 %6799
        %6801 = vrot.lane.b32.xlu0 %v6371, 32
        %v6802 = vpop.permute.xlu0 %6801
        %6803 = vrot.lane.b32.xlu0 %v6372, 32
        %v6804 = vpop.permute.xlu0 %6803
        %6805 = vrot.lane.b32.xlu0 %v6373, 32
        %v6806 = vpop.permute.xlu0 %6805
        %6807 = vrot.lane.b32.xlu0 %v6374, 32
        %v6808 = vpop.permute.xlu0 %6807
        %6809 = vrot.lane.b32.xlu0 %v6375, 32
        %v6810 = vpop.permute.xlu0 %6809
        %6811 = vrot.lane.b32.xlu0 %v6376, 32
        %v6812 = vpop.permute.xlu0 %6811
        %6813 = vrot.lane.b32.xlu0 %v6377, 32
        %v6814 = vpop.permute.xlu0 %6813
        %6815 = vrot.lane.b32.xlu0 %v6378, 32
        %v6816 = vpop.permute.xlu0 %6815
        %6817 = vrot.lane.b32.xlu0 %v6379, 32
        %v6818 = vpop.permute.xlu0 %6817
        %6819 = vrot.lane.b32.xlu0 %v6380, 32
        %v6820 = vpop.permute.xlu0 %6819
        %6821 = vrot.lane.b32.xlu0 %v6381, 32
        %v6822 = vpop.permute.xlu0 %6821
        %6839 = vmatprep.subr.bf16.mxu0 0
        %6840 = vmatpush1.bf16.msra.mxu0 %v6792
        %6841 = vmatprep.subr.bf16.mxu0 0
        %6842 = vmatpush1.bf16.msra.mxu0 %v6794
        %6843 = vmatprep.subr.bf16.mxu0 0
        %6844 = vmatpush1.bf16.msra.mxu0 %v6796
        %6845 = vmatprep.subr.bf16.mxu0 0
        %6846 = vmatpush1.bf16.msra.mxu0 %v6798
        %6847 = vmatprep.subr.bf16.mxu0 0
        %6848 = vmatpush1.bf16.msra.mxu0 %v6800
        %6849 = vmatprep.subr.bf16.mxu0 0
        %6850 = vmatpush1.bf16.msra.mxu0 %v6802
        %6851 = vmatprep.subr.bf16.mxu0 0
        %6852 = vmatpush1.bf16.msra.mxu0 %v6804
        %6853 = vmatprep.subr.bf16.mxu0 0
        %6854 = vmatpush1.bf16.msra.mxu0 %v6806
        %6855 = vmatprep.subr.bf16.mxu0 0
        %6856 = vmatpush1.bf16.msra.mxu0 %v6808
        %6857 = vmatprep.subr.bf16.mxu0 0
        %6858 = vmatpush1.bf16.msra.mxu0 %v6810
        %6859 = vmatprep.subr.bf16.mxu0 0
        %6860 = vmatpush1.bf16.msra.mxu0 %v6812
        %6861 = vmatprep.subr.bf16.mxu0 0
        %6862 = vmatpush1.bf16.msra.mxu0 %v6814
        %6863 = vmatprep.subr.bf16.mxu0 0
        %6864 = vmatpush1.bf16.msra.mxu0 %v6816
        %6865 = vmatprep.subr.bf16.mxu0 0
        %6866 = vmatpush1.bf16.msra.mxu0 %v6818
        %6867 = vmatprep.subr.bf16.mxu0 0
        %6868 = vmatpush1.bf16.msra.mxu0 %v6820
        %6869 = vmatprep.subr.bf16.mxu0 0
        %6870 = vmatpush1.bf16.msra.mxu0 %v6822
        %6871 = vmatprep.mubr.bf16.mxu0 %v6732
        %6872 = vmatmul.mubr.bf16.gmra.mrb[0].mxu0 %v6729
        %v6873 = vpop.f32.mrb[0].mxu0
        %v6874 = vadd.f32 0.0, %v6873
        %v6875 = vpop.f32.mrb[0].mxu0
        %v6876 = vpop.f32.mrb[0].mxu0
        %v6877 = vadd.f32 0.0, %v6876
        %v6878 = vpop.f32.mrb[0].mxu0
        %6879 = vmatprep.mubr.bf16.mxu0 %v6738
        %6880 = vmatmul.mubr.bf16.gmra.mrb[0].mxu0 %v6735
        %v6881 = vpop.f32.mrb[0].mxu0
        %v6882 = vadd.f32 0.0, %v6881
        %v6883 = vpop.f32.mrb[0].mxu0
        %v6884 = vpop.f32.mrb[0].mxu0
        %v6885 = vadd.f32 0.0, %v6884
        %v6886 = vpop.f32.mrb[0].mxu0
        %6887 = vmatprep.mubr.bf16.mxu0 %v6744
        %6888 = vmatmul.mubr.bf16.gmra.mrb[0].mxu0 %v6741
        %v6889 = vpop.f32.mrb[0].mxu0
        %v6890 = vadd.f32 0.0, %v6889
        %v6891 = vpop.f32.mrb[0].mxu0
        %v6892 = vpop.f32.mrb[0].mxu0
        %v6893 = vadd.f32 0.0, %v6892
        %v6894 = vpop.f32.mrb[0].mxu0
        %6895 = vmatprep.mubr.bf16.mxu0 %v6750
        %6896 = vmatmul.mubr.bf16.gmra.mrb[0].mxu0 %v6747
        %v6897 = vpop.f32.mrb[0].mxu0
        %v6898 = vadd.f32 0.0, %v6897
        %v6899 = vpop.f32.mrb[0].mxu0
        %v6900 = vpop.f32.mrb[0].mxu0
        %v6901 = vadd.f32 0.0, %v6900
        %v6902 = vpop.f32.mrb[0].mxu0
        %6903 = vmatprep.mubr.bf16.mxu0 %v6756
        %6904 = vmatmul.mubr.bf16.gmra.mrb[0].mxu0 %v6753
        %v6905 = vpop.f32.mrb[0].mxu0
        %v6906 = vadd.f32 0.0, %v6905
        %v6907 = vpop.f32.mrb[0].mxu0
        %v6908 = vpop.f32.mrb[0].mxu0
        %v6909 = vadd.f32 0.0, %v6908
        %v6910 = vpop.f32.mrb[0].mxu0
        %6911 = vmatprep.mubr.bf16.mxu0 %v6762
        %6912 = vmatmul.mubr.bf16.gmra.mrb[0].mxu0 %v6759
        %v6913 = vpop.f32.mrb[0].mxu0
        %v6914 = vadd.f32 0.0, %v6913
        %v6915 = vpop.f32.mrb[0].mxu0
        %v6916 = vpop.f32.mrb[0].mxu0
        %v6917 = vadd.f32 0.0, %v6916
        %v6918 = vpop.f32.mrb[0].mxu0
        %6919 = vmatprep.mubr.bf16.mxu0 %v6768
        %6920 = vmatmul.mubr.bf16.gmra.mrb[0].mxu0 %v6765
        %v6921 = vpop.f32.mrb[0].mxu0
        %v6922 = vadd.f32 0.0, %v6921
        %v6923 = vpop.f32.mrb[0].mxu0
        %v6924 = vpop.f32.mrb[0].mxu0
        %v6925 = vadd.f32 0.0, %v6924
        %v6926 = vpop.f32.mrb[0].mxu0
        %6927 = vmatprep.mubr.bf16.mxu0 %v6774
        %6928 = vmatmul.mubr.bf16.gmra.mrb[0].mxu0 %v6771
        %v6929 = vpop.f32.mrb[0].mxu0
        %v6930 = vadd.f32 0.0, %v6929
        %v6931 = vpop.f32.mrb[0].mxu0
        %v6932 = vpop.f32.mrb[0].mxu0
        %v6933 = vadd.f32 0.0, %v6932
        %v6934 = vpop.f32.mrb[0].mxu0
        %6935 = vdwg.mxu0
        %6936 = vmatprep.subr.bf16.mxu0 0
        %6937 = vmatpush1.bf16.msra.mxu0 1065369472
        %6938 = vmatprep.subr.bf16.mxu0 0
        %6939 = vmatpush1.bf16.msra.mxu0 1065369472
        %6940 = vmatprep.subr.bf16.mxu0 0
        %6941 = vmatpush1.bf16.msra.mxu0 1065369472
        %6942 = vmatprep.subr.bf16.mxu0 0
        %6943 = vmatpush1.bf16.msra.mxu0 1065369472
        %6944 = vmatprep.subr.bf16.mxu0 0
        %6945 = vmatpush1.bf16.msra.mxu0 1065369472
        %6946 = vmatprep.subr.bf16.mxu0 0
        %6947 = vmatpush1.bf16.msra.mxu0 1065369472
        %6948 = vmatprep.subr.bf16.mxu0 0
        %6949 = vmatpush1.bf16.msra.mxu0 1065369472
        %6950 = vmatprep.subr.bf16.mxu0 0
        %6951 = vmatpush1.bf16.msra.mxu0 1065369472
        %6952 = vmatprep.subr.bf16.mxu0 0
        %6953 = vmatpush1.bf16.msra.mxu0 1065369472
        %6954 = vmatprep.subr.bf16.mxu0 0
        %6955 = vmatpush1.bf16.msra.mxu0 1065369472
        %6956 = vmatprep.subr.bf16.mxu0 0
        %6957 = vmatpush1.bf16.msra.mxu0 1065369472
        %6958 = vmatprep.subr.bf16.mxu0 0
        %6959 = vmatpush1.bf16.msra.mxu0 1065369472
        %6960 = vmatprep.subr.bf16.mxu0 0
        %6961 = vmatpush1.bf16.msra.mxu0 1065369472
        %6962 = vmatprep.subr.bf16.mxu0 0
        %6963 = vmatpush1.bf16.msra.mxu0 1065369472
        %6964 = vmatprep.subr.bf16.mxu0 0
        %6965 = vmatpush1.bf16.msra.mxu0 1065369472
        %6966 = vmatprep.subr.bf16.mxu0 0
        %6967 = vmatpush1.bf16.msra.mxu0 1065369472
        %6968 = vmatprep.mubr.bf16.mxu0 %v6732
        %6969 = vmatmul.mubr.bf16.gmra.mrb[0].mxu0 %v6729
        %v6970 = vpop.f32.mrb[0].mxu0
        %v6971 = vadd.f32 0.0, %v6970
        %v6972 = vpop.f32.mrb[0].mxu0
        %v6973 = vpop.f32.mrb[0].mxu0
        %v6974 = vadd.f32 0.0, %v6973
        %v6975 = vpop.f32.mrb[0].mxu0
        %6976 = vmatprep.mubr.bf16.mxu0 %v6738
        %6977 = vmatmul.mubr.bf16.gmra.mrb[0].mxu0 %v6735
        %v6978 = vpop.f32.mrb[0].mxu0
        %v6979 = vadd.f32 0.0, %v6978
        %v6980 = vpop.f32.mrb[0].mxu0
        %v6981 = vpop.f32.mrb[0].mxu0
        %v6982 = vadd.f32 0.0, %v6981
        %v6983 = vpop.f32.mrb[0].mxu0
        %6984 = vmatprep.mubr.bf16.mxu0 %v6744
        %6985 = vmatmul.mubr.bf16.gmra.mrb[0].mxu0 %v6741
        %v6986 = vpop.f32.mrb[0].mxu0
        %v6987 = vadd.f32 0.0, %v6986
        %v6988 = vpop.f32.mrb[0].mxu0
        %v6989 = vpop.f32.mrb[0].mxu0
        %v6990 = vadd.f32 0.0, %v6989
        %v6991 = vpop.f32.mrb[0].mxu0
        %6992 = vmatprep.mubr.bf16.mxu0 %v6750
        %6993 = vmatmul.mubr.bf16.gmra.mrb[0].mxu0 %v6747
        %v6994 = vpop.f32.mrb[0].mxu0
        %v6995 = vadd.f32 0.0, %v6994
        %v6996 = vpop.f32.mrb[0].mxu0
        %v6997 = vpop.f32.mrb[0].mxu0
        %v6998 = vadd.f32 0.0, %v6997
        %v6999 = vpop.f32.mrb[0].mxu0
        %7000 = vmatprep.mubr.bf16.mxu0 %v6756
        %7001 = vmatmul.mubr.bf16.gmra.mrb[0].mxu0 %v6753
        %v7002 = vpop.f32.mrb[0].mxu0
        %v7003 = vadd.f32 0.0, %v7002
        %v7004 = vpop.f32.mrb[0].mxu0
        %v7005 = vpop.f32.mrb[0].mxu0
        %v7006 = vadd.f32 0.0, %v7005
        %v7007 = vpop.f32.mrb[0].mxu0
        %7008 = vmatprep.mubr.bf16.mxu0 %v6762
        %7009 = vmatmul.mubr.bf16.gmra.mrb[0].mxu0 %v6759
        %v7010 = vpop.f32.mrb[0].mxu0
        %v7011 = vadd.f32 0.0, %v7010
        %v7012 = vpop.f32.mrb[0].mxu0
        %v7013 = vpop.f32.mrb[0].mxu0
        %v7014 = vadd.f32 0.0, %v7013
        %v7015 = vpop.f32.mrb[0].mxu0
        %7016 = vmatprep.mubr.bf16.mxu0 %v6768
        %7017 = vmatmul.mubr.bf16.gmra.mrb[0].mxu0 %v6765
        %v7018 = vpop.f32.mrb[0].mxu0
        %v7019 = vadd.f32 0.0, %v7018
        %v7020 = vpop.f32.mrb[0].mxu0
        %v7021 = vpop.f32.mrb[0].mxu0
        %v7022 = vadd.f32 0.0, %v7021
        %v7023 = vpop.f32.mrb[0].mxu0
        %7024 = vmatprep.mubr.bf16.mxu0 %v6774
        %7025 = vmatmul.mubr.bf16.gmra.mrb[0].mxu0 %v6771
        %v7026 = vpop.f32.mrb[0].mxu0
        %v7027 = vadd.f32 0.0, %v7026
        %v7028 = vpop.f32.mrb[0].mxu0
        %v7029 = vpop.f32.mrb[0].mxu0
        %v7030 = vadd.f32 0.0, %v7029
        %v7031 = vpop.f32.mrb[0].mxu0
        %7032 = vdwg.mxu0
        %v7033 = vrcp.pop %v6971
        %v7034 = vrcp.pop %v6974
        %v7035 = vrcp.pop %v6979
        %v7036 = vrcp.pop %v6982
        %v7037 = vrcp.pop %v6987
        %v7038 = vrcp.pop %v6990
        %v7039 = vrcp.pop %v6995
        %v7040 = vrcp.pop %v6998
        %v7041 = vrcp.pop %v7003
        %v7042 = vrcp.pop %v7006
        %v7043 = vrcp.pop %v7011
        %v7044 = vrcp.pop %v7014
        %v7045 = vrcp.pop %v7019
        %v7046 = vrcp.pop %v7022
        %v7047 = vrcp.pop %v7027
        %v7048 = vrcp.pop %v7030
        %7050 = vset.pattern.permute.xlu0 0
        %7051 = vperm.xlu0 %7050, %v7033
        %v7052 = vpop.permute.xlu0 %7051
        %7055 = vset.pattern.permute.xlu0 0
        %7056 = vperm.xlu0 %7055, %v7034
        %v7057 = vpop.permute.xlu0 %7056
        %7060 = vset.pattern.permute.xlu0 0
        %7061 = vperm.xlu0 %7060, %v7035
        %v7062 = vpop.permute.xlu0 %7061
        %7065 = vset.pattern.permute.xlu0 0
        %7066 = vperm.xlu0 %7065, %v7036
        %v7067 = vpop.permute.xlu0 %7066
        %7070 = vset.pattern.permute.xlu0 0
        %7071 = vperm.xlu0 %7070, %v7037
        %v7072 = vpop.permute.xlu0 %7071
        %7075 = vset.pattern.permute.xlu0 0
        %7076 = vperm.xlu0 %7075, %v7038
        %v7077 = vpop.permute.xlu0 %7076
        %7080 = vset.pattern.permute.xlu0 0
        %7081 = vperm.xlu0 %7080, %v7039
        %v7082 = vpop.permute.xlu0 %7081
        %7085 = vset.pattern.permute.xlu0 0
        %7086 = vperm.xlu0 %7085, %v7040
        %v7087 = vpop.permute.xlu0 %7086
        %7090 = vset.pattern.permute.xlu0 0
        %7091 = vperm.xlu0 %7090, %v7041
        %v7092 = vpop.permute.xlu0 %7091
        %7095 = vset.pattern.permute.xlu0 0
        %7096 = vperm.xlu0 %7095, %v7042
        %v7097 = vpop.permute.xlu0 %7096
        %7100 = vset.pattern.permute.xlu0 0
        %7101 = vperm.xlu0 %7100, %v7043
        %v7102 = vpop.permute.xlu0 %7101
        %7105 = vset.pattern.permute.xlu0 0
        %7106 = vperm.xlu0 %7105, %v7044
        %v7107 = vpop.permute.xlu0 %7106
        %7110 = vset.pattern.permute.xlu0 0
        %7111 = vperm.xlu0 %7110, %v7045
        %v7112 = vpop.permute.xlu0 %7111
        %7115 = vset.pattern.permute.xlu0 0
        %7116 = vperm.xlu0 %7115, %v7046
        %v7117 = vpop.permute.xlu0 %7116
        %7120 = vset.pattern.permute.xlu0 0
        %7121 = vperm.xlu0 %7120, %v7047
        %v7122 = vpop.permute.xlu0 %7121
        %7125 = vset.pattern.permute.xlu0 0
        %7126 = vperm.xlu0 %7125, %v7048
        %v7127 = vpop.permute.xlu0 %7126
        %v7129 = vmul.f32 %v6874, %v7052
        %v7130 = vmul.f32 %v6877, %v7057
        %v7131 = vmul.f32 %v6882, %v7062
        %v7132 = vmul.f32 %v6885, %v7067
        %v7133 = vmul.f32 %v6890, %v7072
        %v7134 = vmul.f32 %v6893, %v7077
        %v7135 = vmul.f32 %v6898, %v7082
        %v7136 = vmul.f32 %v6901, %v7087
        %v7137 = vmul.f32 %v6906, %v7092
        %v7138 = vmul.f32 %v6909, %v7097
        %v7139 = vmul.f32 %v6914, %v7102
        %v7140 = vmul.f32 %v6917, %v7107
        %v7141 = vmul.f32 %v6922, %v7112
        %v7142 = vmul.f32 %v6925, %v7117
        %v7143 = vmul.f32 %v6930, %v7122
        %v7144 = vmul.f32 %v6933, %v7127
        %7161 = vrot.lane.b32.xlu0 %v7129, 96
        %v7162 = vpop.permute.xlu0 %7161
        %7163 = vrot.lane.b32.xlu0 %v7130, 96
        %v7164 = vpop.permute.xlu0 %7163
        %7165 = vrot.lane.b32.xlu0 %v7131, 96
        %v7166 = vpop.permute.xlu0 %7165
        %7167 = vrot.lane.b32.xlu0 %v7132, 96
        %v7168 = vpop.permute.xlu0 %7167
        %7169 = vrot.lane.b32.xlu0 %v7133, 96
        %v7170 = vpop.permute.xlu0 %7169
        %7171 = vrot.lane.b32.xlu0 %v7134, 96
        %v7172 = vpop.permute.xlu0 %7171
        %7173 = vrot.lane.b32.xlu0 %v7135, 96
        %v7174 = vpop.permute.xlu0 %7173
        %7175 = vrot.lane.b32.xlu0 %v7136, 96
        %v7176 = vpop.permute.xlu0 %7175
        %7177 = vrot.lane.b32.xlu0 %v7137, 96
        %v7178 = vpop.permute.xlu0 %7177
        %7179 = vrot.lane.b32.xlu0 %v7138, 96
        %v7180 = vpop.permute.xlu0 %7179
        %7181 = vrot.lane.b32.xlu0 %v7139, 96
        %v7182 = vpop.permute.xlu0 %7181
        %7183 = vrot.lane.b32.xlu0 %v7140, 96
        %v7184 = vpop.permute.xlu0 %7183
        %7185 = vrot.lane.b32.xlu0 %v7141, 96
        %v7186 = vpop.permute.xlu0 %7185
        %7187 = vrot.lane.b32.xlu0 %v7142, 96
        %v7188 = vpop.permute.xlu0 %7187
        %7189 = vrot.lane.b32.xlu0 %v7143, 96
        %v7190 = vpop.permute.xlu0 %7189
        %7191 = vrot.lane.b32.xlu0 %v7144, 96
        %v7192 = vpop.permute.xlu0 %7191
        %vm7209 = vcmask 917248
        %7210 = vst.msk [vmem:[#allocation4] sm:$0xff] %vm7209, %v7162
        %7211 = vst.msk [vmem:[#allocation4 + $0x8] sm:$0xff] %vm7209, %v7164
        %7212 = vst.msk [vmem:[#allocation4 + $0x10] sm:$0xff] %vm7209, %v7166
        %7213 = vst.msk [vmem:[#allocation4 + $0x18] sm:$0xff] %vm7209, %v7168
        %7214 = vst.msk [vmem:[#allocation4 + $0x20] sm:$0xff] %vm7209, %v7170
        %7215 = vst.msk [vmem:[#allocation4 + $0x28] sm:$0xff] %vm7209, %v7172
        %7216 = vst.msk [vmem:[#allocation4 + $0x30] sm:$0xff] %vm7209, %v7174
        %7217 = vst.msk [vmem:[#allocation4 + $0x38] sm:$0xff] %vm7209, %v7176
        %7218 = vst.msk [vmem:[#allocation4 + $0x40] sm:$0xff] %vm7209, %v7178
        %7219 = vst.msk [vmem:[#allocation4 + $0x48] sm:$0xff] %vm7209, %v7180
        %7220 = vst.msk [vmem:[#allocation4 + $0x50] sm:$0xff] %vm7209, %v7182
        %7221 = vst.msk [vmem:[#allocation4 + $0x58] sm:$0xff] %vm7209, %v7184
        %7222 = vst.msk [vmem:[#allocation4 + $0x60] sm:$0xff] %vm7209, %v7186
        %7223 = vst.msk [vmem:[#allocation4 + $0x68] sm:$0xff] %vm7209, %v7188
        %7224 = vst.msk [vmem:[#allocation4 + $0x70] sm:$0xff] %vm7209, %v7190
        %7225 = vst.msk [vmem:[#allocation4 + $0x78] sm:$0xff] %vm7209, %v7192
        %v7226 = vld [vmem:[#allocation2] sm:$0xff]
        %v7227 = vld [vmem:[#allocation2 + $0x8] sm:$0xff]
        %v7228 = vld [vmem:[#allocation2 + $0x10] sm:$0xff]
        %v7229 = vld [vmem:[#allocation2 + $0x18] sm:$0xff]
        %v7230 = vld [vmem:[#allocation2 + $0x20] sm:$0xff]
        %v7231 = vld [vmem:[#allocation2 + $0x28] sm:$0xff]
        %v7232 = vld [vmem:[#allocation2 + $0x30] sm:$0xff]
        %v7233 = vld [vmem:[#allocation2 + $0x38] sm:$0xff]
        %v7234 = vld [vmem:[#allocation3] sm:$0xff]
        %v7235 = vld [vmem:[#allocation3 + $0x8] sm:$0xff]
        %v7236 = vld [vmem:[#allocation3 + $0x10] sm:$0xff]
        %v7237 = vld [vmem:[#allocation3 + $0x18] sm:$0xff]
        %v7238 = vld [vmem:[#allocation3 + $0x20] sm:$0xff]
        %v7239 = vld [vmem:[#allocation3 + $0x28] sm:$0xff]
        %v7240 = vld [vmem:[#allocation3 + $0x30] sm:$0xff]
        %v7241 = vld [vmem:[#allocation3 + $0x38] sm:$0xff]
        %v7242 = vld [vmem:[#allocation3 + $0x40] sm:$0xff]
        %v7243 = vld [vmem:[#allocation3 + $0x48] sm:$0xff]
        %v7244 = vld [vmem:[#allocation3 + $0x50] sm:$0xff]
        %v7245 = vld [vmem:[#allocation3 + $0x58] sm:$0xff]
        %v7246 = vld [vmem:[#allocation3 + $0x60] sm:$0xff]
        %v7247 = vld [vmem:[#allocation3 + $0x68] sm:$0xff]
        %v7248 = vld [vmem:[#allocation3 + $0x70] sm:$0xff]
        %v7249 = vld [vmem:[#allocation3 + $0x78] sm:$0xff]
        %v7250 = vld [vmem:[#allocation3 + $0x80] sm:$0xff]
        %v7251 = vld [vmem:[#allocation3 + $0x88] sm:$0xff]
        %v7252 = vld [vmem:[#allocation3 + $0x90] sm:$0xff]
        %v7253 = vld [vmem:[#allocation3 + $0x98] sm:$0xff]
        %v7254 = vld [vmem:[#allocation3 + $0xa0] sm:$0xff]
        %v7255 = vld [vmem:[#allocation3 + $0xa8] sm:$0xff]
        %v7256 = vld [vmem:[#allocation3 + $0xb0] sm:$0xff]
        %v7257 = vld [vmem:[#allocation3 + $0xb8] sm:$0xff]
        %v7258 = vld [vmem:[#allocation3 + $0xc0] sm:$0xff]
        %v7259 = vld [vmem:[#allocation3 + $0xc8] sm:$0xff]
        %v7260 = vld [vmem:[#allocation3 + $0xd0] sm:$0xff]
        %v7261 = vld [vmem:[#allocation3 + $0xd8] sm:$0xff]
        %v7262 = vld [vmem:[#allocation3 + $0xe0] sm:$0xff]
        %v7263 = vld [vmem:[#allocation3 + $0xe8] sm:$0xff]
        %v7264 = vld [vmem:[#allocation3 + $0xf0] sm:$0xff]
        %v7265 = vld [vmem:[#allocation3 + $0xf8] sm:$0xff]
        %7274 = vrot.lane.b32.xlu0 %v7226, 16
        %v7275 = vpop.permute.xlu0 %7274
        %7276 = vrot.lane.b32.xlu0 %v7227, 16
        %v7277 = vpop.permute.xlu0 %7276
        %7278 = vrot.lane.b32.xlu0 %v7228, 16
        %v7279 = vpop.permute.xlu0 %7278
        %7280 = vrot.lane.b32.xlu0 %v7229, 16
        %v7281 = vpop.permute.xlu0 %7280
        %7282 = vrot.lane.b32.xlu0 %v7230, 16
        %v7283 = vpop.permute.xlu0 %7282
        %7284 = vrot.lane.b32.xlu0 %v7231, 16
        %v7285 = vpop.permute.xlu0 %7284
        %7286 = vrot.lane.b32.xlu0 %v7232, 16
        %v7287 = vpop.permute.xlu0 %7286
        %7288 = vrot.lane.b32.xlu0 %v7233, 16
        %v7289 = vpop.permute.xlu0 %7288
        %7306 = vrot.lane.b32.xlu0 %v7234, 16
        %v7307 = vpop.permute.xlu0 %7306
        %7308 = vrot.lane.b32.xlu0 %v7235, 16
        %v7309 = vpop.permute.xlu0 %7308
        %7310 = vrot.lane.b32.xlu0 %v7236, 16
        %v7311 = vpop.permute.xlu0 %7310
        %7312 = vrot.lane.b32.xlu0 %v7237, 16
        %v7313 = vpop.permute.xlu0 %7312
        %7314 = vrot.lane.b32.xlu0 %v7238, 16
        %v7315 = vpop.permute.xlu0 %7314
        %7316 = vrot.lane.b32.xlu0 %v7239, 16
        %v7317 = vpop.permute.xlu0 %7316
        %7318 = vrot.lane.b32.xlu0 %v7240, 16
        %v7319 = vpop.permute.xlu0 %7318
        %7320 = vrot.lane.b32.xlu0 %v7241, 16
        %v7321 = vpop.permute.xlu0 %7320
        %7322 = vrot.lane.b32.xlu0 %v7242, 16
        %v7323 = vpop.permute.xlu0 %7322
        %7324 = vrot.lane.b32.xlu0 %v7243, 16
        %v7325 = vpop.permute.xlu0 %7324
        %7326 = vrot.lane.b32.xlu0 %v7244, 16
        %v7327 = vpop.permute.xlu0 %7326
        %7328 = vrot.lane.b32.xlu0 %v7245, 16
        %v7329 = vpop.permute.xlu0 %7328
        %7330 = vrot.lane.b32.xlu0 %v7246, 16
        %v7331 = vpop.permute.xlu0 %7330
        %7332 = vrot.lane.b32.xlu0 %v7247, 16
        %v7333 = vpop.permute.xlu0 %7332
        %7334 = vrot.lane.b32.xlu0 %v7248, 16
        %v7335 = vpop.permute.xlu0 %7334
        %7336 = vrot.lane.b32.xlu0 %v7249, 16
        %v7337 = vpop.permute.xlu0 %7336
        %v7339 = vsel %vm1278, %v7275, 0
        %v7342 = vsel %vm1278, %v7277, 0
        %v7345 = vsel %vm1278, %v7279, 0
        %v7348 = vsel %vm1278, %v7281, 0
        %v7351 = vsel %vm1278, %v7283, 0
        %v7354 = vsel %vm1278, %v7285, 0
        %v7357 = vsel %vm1278, %v7287, 0
        %v7360 = vsel %vm1278, %v7289, 0
        %v7363 = vsel %vm1278, %v7307, 0
        %v7366 = vsel %vm1278, %v7309, 0
        %v7369 = vsel %vm1278, %v7311, 0
        %v7372 = vsel %vm1278, %v7313, 0
        %v7375 = vsel %vm1278, %v7315, 0
        %v7378 = vsel %vm1278, %v7317, 0
        %v7381 = vsel %vm1278, %v7319, 0
        %v7384 = vsel %vm1278, %v7321, 0
        %v7387 = vsel %vm1278, %v7323, 0
        %v7390 = vsel %vm1278, %v7325, 0
        %v7393 = vsel %vm1278, %v7327, 0
        %v7396 = vsel %vm1278, %v7329, 0
        %v7399 = vsel %vm1278, %v7331, 0
        %v7402 = vsel %vm1278, %v7333, 0
        %v7405 = vsel %vm1278, %v7335, 0
        %v7408 = vsel %vm1278, %v7337, 0
        %7410 = vmatprep.subr.bf16.mxu0 0
        %7411 = vmatpush1.bf16.xpose.msra.mxu0 %v7363
        %7412 = vmatprep.subr.bf16.mxu0 0
        %7413 = vmatpush1.bf16.xpose.msra.mxu0 %v7366
        %7414 = vmatprep.subr.bf16.mxu0 0
        %7415 = vmatpush1.bf16.xpose.msra.mxu0 %v7369
        %7416 = vmatprep.subr.bf16.mxu0 0
        %7417 = vmatpush1.bf16.xpose.msra.mxu0 %v7372
        %7418 = vmatprep.subr.bf16.mxu0 0
        %7419 = vmatpush1.bf16.xpose.msra.mxu0 %v7375
        %7420 = vmatprep.subr.bf16.mxu0 0
        %7421 = vmatpush1.bf16.xpose.msra.mxu0 %v7378
        %7422 = vmatprep.subr.bf16.mxu0 0
        %7423 = vmatpush1.bf16.xpose.msra.mxu0 %v7381
        %7424 = vmatprep.subr.bf16.mxu0 0
        %7425 = vmatpush1.bf16.xpose.msra.mxu0 %v7384
        %7426 = vmatprep.subr.bf16.mxu0 0
        %7427 = vmatpush1.bf16.xpose.msra.mxu0 %v7387
        %7428 = vmatprep.subr.bf16.mxu0 0
        %7429 = vmatpush1.bf16.xpose.msra.mxu0 %v7390
        %7430 = vmatprep.subr.bf16.mxu0 0
        %7431 = vmatpush1.bf16.xpose.msra.mxu0 %v7393
        %7432 = vmatprep.subr.bf16.mxu0 0
        %7433 = vmatpush1.bf16.xpose.msra.mxu0 %v7396
        %7434 = vmatprep.subr.bf16.mxu0 0
        %7435 = vmatpush1.bf16.xpose.msra.mxu0 %v7399
        %7436 = vmatprep.subr.bf16.mxu0 0
        %7437 = vmatpush1.bf16.xpose.msra.mxu0 %v7402
        %7438 = vmatprep.subr.bf16.mxu0 0
        %7439 = vmatpush1.bf16.xpose.msra.mxu0 %v7405
        %7440 = vmatprep.subr.bf16.mxu0 0
        %7441 = vmatpush1.bf16.xpose.msra.mxu0 %v7408
        %7442 = vmatprep.mubr.bf16.mxu0 0
        %7443 = vmatmul.mubr.bf16.gmra.mrb[0].mxu0 %v7339
        %v7444 = vpop.f32.mrb[0].mxu0
        %v7445 = vadd.f32 0.0, %v7444
        %v7446 = vpop.f32.mrb[0].mxu0
        %v7447 = vadd.f32 0.0, %v7446
        %v7448 = vpop.f32.mrb[0].mxu0
        %v7449 = vadd.f32 0.0, %v7448
        %v7450 = vpop.f32.mrb[0].mxu0
        %v7451 = vadd.f32 0.0, %v7450
        %7452 = vmatprep.mubr.bf16.mxu0 0
        %7453 = vmatmul.mubr.bf16.gmra.mrb[0].mxu0 %v7342
        %v7454 = vpop.f32.mrb[0].mxu0
        %v7455 = vadd.f32 0.0, %v7454
        %v7456 = vpop.f32.mrb[0].mxu0
        %v7457 = vadd.f32 0.0, %v7456
        %v7458 = vpop.f32.mrb[0].mxu0
        %v7459 = vadd.f32 0.0, %v7458
        %v7460 = vpop.f32.mrb[0].mxu0
        %v7461 = vadd.f32 0.0, %v7460
        %7462 = vmatprep.mubr.bf16.mxu0 0
        %7463 = vmatmul.mubr.bf16.gmra.mrb[0].mxu0 %v7345
        %v7464 = vpop.f32.mrb[0].mxu0
        %v7465 = vadd.f32 0.0, %v7464
        %v7466 = vpop.f32.mrb[0].mxu0
        %v7467 = vadd.f32 0.0, %v7466
        %v7468 = vpop.f32.mrb[0].mxu0
        %v7469 = vadd.f32 0.0, %v7468
        %v7470 = vpop.f32.mrb[0].mxu0
        %v7471 = vadd.f32 0.0, %v7470
        %7472 = vmatprep.mubr.bf16.mxu0 0
        %7473 = vmatmul.mubr.bf16.gmra.mrb[0].mxu0 %v7348
        %v7474 = vpop.f32.mrb[0].mxu0
        %v7475 = vadd.f32 0.0, %v7474
        %v7476 = vpop.f32.mrb[0].mxu0
        %v7477 = vadd.f32 0.0, %v7476
        %v7478 = vpop.f32.mrb[0].mxu0
        %v7479 = vadd.f32 0.0, %v7478
        %v7480 = vpop.f32.mrb[0].mxu0
        %v7481 = vadd.f32 0.0, %v7480
        %7482 = vmatprep.mubr.bf16.mxu0 0
        %7483 = vmatmul.mubr.bf16.gmra.mrb[0].mxu0 %v7351
        %v7484 = vpop.f32.mrb[0].mxu0
        %v7485 = vadd.f32 0.0, %v7484
        %v7486 = vpop.f32.mrb[0].mxu0
        %v7487 = vadd.f32 0.0, %v7486
        %v7488 = vpop.f32.mrb[0].mxu0
        %v7489 = vadd.f32 0.0, %v7488
        %v7490 = vpop.f32.mrb[0].mxu0
        %v7491 = vadd.f32 0.0, %v7490
        %7492 = vmatprep.mubr.bf16.mxu0 0
        %7493 = vmatmul.mubr.bf16.gmra.mrb[0].mxu0 %v7354
        %v7494 = vpop.f32.mrb[0].mxu0
        %v7495 = vadd.f32 0.0, %v7494
        %v7496 = vpop.f32.mrb[0].mxu0
        %v7497 = vadd.f32 0.0, %v7496
        %v7498 = vpop.f32.mrb[0].mxu0
        %v7499 = vadd.f32 0.0, %v7498
        %v7500 = vpop.f32.mrb[0].mxu0
        %v7501 = vadd.f32 0.0, %v7500
        %7502 = vmatprep.mubr.bf16.mxu0 0
        %7503 = vmatmul.mubr.bf16.gmra.mrb[0].mxu0 %v7357
        %v7504 = vpop.f32.mrb[0].mxu0
        %v7505 = vadd.f32 0.0, %v7504
        %v7506 = vpop.f32.mrb[0].mxu0
        %v7507 = vadd.f32 0.0, %v7506
        %v7508 = vpop.f32.mrb[0].mxu0
        %v7509 = vadd.f32 0.0, %v7508
        %v7510 = vpop.f32.mrb[0].mxu0
        %v7511 = vadd.f32 0.0, %v7510
        %7512 = vmatprep.mubr.bf16.mxu0 0
        %7513 = vmatmul.mubr.bf16.gmra.mrb[0].mxu0 %v7360
        %v7514 = vpop.f32.mrb[0].mxu0
        %v7515 = vadd.f32 0.0, %v7514
        %v7516 = vpop.f32.mrb[0].mxu0
        %v7517 = vadd.f32 0.0, %v7516
        %v7518 = vpop.f32.mrb[0].mxu0
        %v7519 = vadd.f32 0.0, %v7518
        %v7520 = vpop.f32.mrb[0].mxu0
        %v7521 = vadd.f32 0.0, %v7520
        %7522 = vdwg.mxu0
        %v7523 = vmax.f32 %v7445, %v7447
        %7524 = vmax.xlane.f32.xlu0 %v7523
        %v7525 = vpop.xlane.xlu0 %7524
        %v7526 = vmax.f32 %v7449, %v7451
        %7527 = vmax.xlane.f32.xlu0 %v7526
        %v7528 = vpop.xlane.xlu0 %7527
        %v7529 = vmax.f32 %v7455, %v7457
        %7530 = vmax.xlane.f32.xlu0 %v7529
        %v7531 = vpop.xlane.xlu0 %7530
        %v7532 = vmax.f32 %v7459, %v7461
        %7533 = vmax.xlane.f32.xlu0 %v7532
        %v7534 = vpop.xlane.xlu0 %7533
        %v7535 = vmax.f32 %v7465, %v7467
        %7536 = vmax.xlane.f32.xlu0 %v7535
        %v7537 = vpop.xlane.xlu0 %7536
        %v7538 = vmax.f32 %v7469, %v7471
        %7539 = vmax.xlane.f32.xlu0 %v7538
        %v7540 = vpop.xlane.xlu0 %7539
        %v7541 = vmax.f32 %v7475, %v7477
        %7542 = vmax.xlane.f32.xlu0 %v7541
        %v7543 = vpop.xlane.xlu0 %7542
        %v7544 = vmax.f32 %v7479, %v7481
        %7545 = vmax.xlane.f32.xlu0 %v7544
        %v7546 = vpop.xlane.xlu0 %7545
        %v7547 = vmax.f32 %v7485, %v7487
        %7548 = vmax.xlane.f32.xlu0 %v7547
        %v7549 = vpop.xlane.xlu0 %7548
        %v7550 = vmax.f32 %v7489, %v7491
        %7551 = vmax.xlane.f32.xlu0 %v7550
        %v7552 = vpop.xlane.xlu0 %7551
        %v7553 = vmax.f32 %v7495, %v7497
        %7554 = vmax.xlane.f32.xlu0 %v7553
        %v7555 = vpop.xlane.xlu0 %7554
        %v7556 = vmax.f32 %v7499, %v7501
        %7557 = vmax.xlane.f32.xlu0 %v7556
        %v7558 = vpop.xlane.xlu0 %7557
        %v7559 = vmax.f32 %v7505, %v7507
        %7560 = vmax.xlane.f32.xlu0 %v7559
        %v7561 = vpop.xlane.xlu0 %7560
        %v7562 = vmax.f32 %v7509, %v7511
        %7563 = vmax.xlane.f32.xlu0 %v7562
        %v7564 = vpop.xlane.xlu0 %7563
        %v7565 = vmax.f32 %v7515, %v7517
        %7566 = vmax.xlane.f32.xlu0 %v7565
        %v7567 = vpop.xlane.xlu0 %7566
        %v7568 = vmax.f32 %v7519, %v7521
        %7569 = vmax.xlane.f32.xlu0 %v7568
        %v7570 = vpop.xlane.xlu0 %7569
        %v7571 = vpack.c.bf16 %v7449, %v7445
        %v7572 = vpack.c.bf16 %v7451, %v7447
        %v7573 = vpack.c.bf16 %v7459, %v7455
        %v7574 = vpack.c.bf16 %v7461, %v7457
        %v7575 = vpack.c.bf16 %v7469, %v7465
        %v7576 = vpack.c.bf16 %v7471, %v7467
        %v7577 = vpack.c.bf16 %v7479, %v7475
        %v7578 = vpack.c.bf16 %v7481, %v7477
        %v7579 = vpack.c.bf16 %v7489, %v7485
        %v7580 = vpack.c.bf16 %v7491, %v7487
        %v7581 = vpack.c.bf16 %v7499, %v7495
        %v7582 = vpack.c.bf16 %v7501, %v7497
        %v7583 = vpack.c.bf16 %v7509, %v7505
        %v7584 = vpack.c.bf16 %v7511, %v7507
        %v7585 = vpack.c.bf16 %v7519, %v7515
        %v7586 = vpack.c.bf16 %v7521, %v7517
        %v7587 = vpack.c.bf16 %v7528, %v7525
        %v7588 = vpack.c.bf16 %v7534, %v7531
        %v7589 = vpack.c.bf16 %v7540, %v7537
        %v7590 = vpack.c.bf16 %v7546, %v7543
        %v7591 = vpack.c.bf16 %v7552, %v7549
        %v7592 = vpack.c.bf16 %v7558, %v7555
        %v7593 = vpack.c.bf16 %v7564, %v7561
        %v7594 = vpack.c.bf16 %v7570, %v7567
        %v7595 = vsub.bf16 %v7571, %v7587
        %v7596 = vsub.bf16 %v7572, %v7587
        %v7597 = vsub.bf16 %v7573, %v7588
        %v7598 = vsub.bf16 %v7574, %v7588
        %v7599 = vsub.bf16 %v7575, %v7589
        %v7600 = vsub.bf16 %v7576, %v7589
        %v7601 = vsub.bf16 %v7577, %v7590
        %v7602 = vsub.bf16 %v7578, %v7590
        %v7603 = vsub.bf16 %v7579, %v7591
        %v7604 = vsub.bf16 %v7580, %v7591
        %v7605 = vsub.bf16 %v7581, %v7592
        %v7606 = vsub.bf16 %v7582, %v7592
        %v7607 = vsub.bf16 %v7583, %v7593
        %v7608 = vsub.bf16 %v7584, %v7593
        %v7609 = vsub.bf16 %v7585, %v7594
        %v7610 = vsub.bf16 %v7586, %v7594
        %v7612 = vmul.bf16 %v7595, 1069105081
        %v7613 = vpow.bf16.pop %v7612
        %v7615 = vmul.bf16 %v7596, 1069105081
        %v7616 = vpow.bf16.pop %v7615
        %v7618 = vmul.bf16 %v7597, 1069105081
        %v7619 = vpow.bf16.pop %v7618
        %v7621 = vmul.bf16 %v7598, 1069105081
        %v7622 = vpow.bf16.pop %v7621
        %v7624 = vmul.bf16 %v7599, 1069105081
        %v7625 = vpow.bf16.pop %v7624
        %v7627 = vmul.bf16 %v7600, 1069105081
        %v7628 = vpow.bf16.pop %v7627
        %v7630 = vmul.bf16 %v7601, 1069105081
        %v7631 = vpow.bf16.pop %v7630
        %v7633 = vmul.bf16 %v7602, 1069105081
        %v7634 = vpow.bf16.pop %v7633
        %v7636 = vmul.bf16 %v7603, 1069105081
        %v7637 = vpow.bf16.pop %v7636
        %v7639 = vmul.bf16 %v7604, 1069105081
        %v7640 = vpow.bf16.pop %v7639
        %v7642 = vmul.bf16 %v7605, 1069105081
        %v7643 = vpow.bf16.pop %v7642
        %v7645 = vmul.bf16 %v7606, 1069105081
        %v7646 = vpow.bf16.pop %v7645
        %v7648 = vmul.bf16 %v7607, 1069105081
        %v7649 = vpow.bf16.pop %v7648
        %v7651 = vmul.bf16 %v7608, 1069105081
        %v7652 = vpow.bf16.pop %v7651
        %v7654 = vmul.bf16 %v7609, 1069105081
        %v7655 = vpow.bf16.pop %v7654
        %v7657 = vmul.bf16 %v7610, 1069105081
        %v7658 = vpow.bf16.pop %v7657
        %7675 = vrot.lane.b32.xlu0 %v7250, 16
        %v7676 = vpop.permute.xlu0 %7675
        %7677 = vrot.lane.b32.xlu0 %v7251, 16
        %v7678 = vpop.permute.xlu0 %7677
        %7679 = vrot.lane.b32.xlu0 %v7252, 16
        %v7680 = vpop.permute.xlu0 %7679
        %7681 = vrot.lane.b32.xlu0 %v7253, 16
        %v7682 = vpop.permute.xlu0 %7681
        %7683 = vrot.lane.b32.xlu0 %v7254, 16
        %v7684 = vpop.permute.xlu0 %7683
        %7685 = vrot.lane.b32.xlu0 %v7255, 16
        %v7686 = vpop.permute.xlu0 %7685
        %7687 = vrot.lane.b32.xlu0 %v7256, 16
        %v7688 = vpop.permute.xlu0 %7687
        %7689 = vrot.lane.b32.xlu0 %v7257, 16
        %v7690 = vpop.permute.xlu0 %7689
        %7691 = vrot.lane.b32.xlu0 %v7258, 16
        %v7692 = vpop.permute.xlu0 %7691
        %7693 = vrot.lane.b32.xlu0 %v7259, 16
        %v7694 = vpop.permute.xlu0 %7693
        %7695 = vrot.lane.b32.xlu0 %v7260, 16
        %v7696 = vpop.permute.xlu0 %7695
        %7697 = vrot.lane.b32.xlu0 %v7261, 16
        %v7698 = vpop.permute.xlu0 %7697
        %7699 = vrot.lane.b32.xlu0 %v7262, 16
        %v7700 = vpop.permute.xlu0 %7699
        %7701 = vrot.lane.b32.xlu0 %v7263, 16
        %v7702 = vpop.permute.xlu0 %7701
        %7703 = vrot.lane.b32.xlu0 %v7264, 16
        %v7704 = vpop.permute.xlu0 %7703
        %7705 = vrot.lane.b32.xlu0 %v7265, 16
        %v7706 = vpop.permute.xlu0 %7705
        %7723 = vmatprep.subr.bf16.mxu0 0
        %7724 = vmatpush1.bf16.msra.mxu0 %v7676
        %7725 = vmatprep.subr.bf16.mxu0 0
        %7726 = vmatpush1.bf16.msra.mxu0 %v7678
        %7727 = vmatprep.subr.bf16.mxu0 0
        %7728 = vmatpush1.bf16.msra.mxu0 %v7680
        %7729 = vmatprep.subr.bf16.mxu0 0
        %7730 = vmatpush1.bf16.msra.mxu0 %v7682
        %7731 = vmatprep.subr.bf16.mxu0 0
        %7732 = vmatpush1.bf16.msra.mxu0 %v7684
        %7733 = vmatprep.subr.bf16.mxu0 0
        %7734 = vmatpush1.bf16.msra.mxu0 %v7686
        %7735 = vmatprep.subr.bf16.mxu0 0
        %7736 = vmatpush1.bf16.msra.mxu0 %v7688
        %7737 = vmatprep.subr.bf16.mxu0 0
        %7738 = vmatpush1.bf16.msra.mxu0 %v7690
        %7739 = vmatprep.subr.bf16.mxu0 0
        %7740 = vmatpush1.bf16.msra.mxu0 %v7692
        %7741 = vmatprep.subr.bf16.mxu0 0
        %7742 = vmatpush1.bf16.msra.mxu0 %v7694
        %7743 = vmatprep.subr.bf16.mxu0 0
        %7744 = vmatpush1.bf16.msra.mxu0 %v7696
        %7745 = vmatprep.subr.bf16.mxu0 0
        %7746 = vmatpush1.bf16.msra.mxu0 %v7698
        %7747 = vmatprep.subr.bf16.mxu0 0
        %7748 = vmatpush1.bf16.msra.mxu0 %v7700
        %7749 = vmatprep.subr.bf16.mxu0 0
        %7750 = vmatpush1.bf16.msra.mxu0 %v7702
        %7751 = vmatprep.subr.bf16.mxu0 0
        %7752 = vmatpush1.bf16.msra.mxu0 %v7704
        %7753 = vmatprep.subr.bf16.mxu0 0
        %7754 = vmatpush1.bf16.msra.mxu0 %v7706
        %7755 = vmatprep.mubr.bf16.mxu0 %v7616
        %7756 = vmatmul.mubr.bf16.gmra.mrb[0].mxu0 %v7613
        %v7757 = vpop.f32.mrb[0].mxu0
        %v7758 = vadd.f32 0.0, %v7757
        %v7759 = vpop.f32.mrb[0].mxu0
        %v7760 = vpop.f32.mrb[0].mxu0
        %v7761 = vadd.f32 0.0, %v7760
        %v7762 = vpop.f32.mrb[0].mxu0
        %7763 = vmatprep.mubr.bf16.mxu0 %v7622
        %7764 = vmatmul.mubr.bf16.gmra.mrb[0].mxu0 %v7619
        %v7765 = vpop.f32.mrb[0].mxu0
        %v7766 = vadd.f32 0.0, %v7765
        %v7767 = vpop.f32.mrb[0].mxu0
        %v7768 = vpop.f32.mrb[0].mxu0
        %v7769 = vadd.f32 0.0, %v7768
        %v7770 = vpop.f32.mrb[0].mxu0
        %7771 = vmatprep.mubr.bf16.mxu0 %v7628
        %7772 = vmatmul.mubr.bf16.gmra.mrb[0].mxu0 %v7625
        %v7773 = vpop.f32.mrb[0].mxu0
        %v7774 = vadd.f32 0.0, %v7773
        %v7775 = vpop.f32.mrb[0].mxu0
        %v7776 = vpop.f32.mrb[0].mxu0
        %v7777 = vadd.f32 0.0, %v7776
        %v7778 = vpop.f32.mrb[0].mxu0
        %7779 = vmatprep.mubr.bf16.mxu0 %v7634
        %7780 = vmatmul.mubr.bf16.gmra.mrb[0].mxu0 %v7631
        %v7781 = vpop.f32.mrb[0].mxu0
        %v7782 = vadd.f32 0.0, %v7781
        %v7783 = vpop.f32.mrb[0].mxu0
        %v7784 = vpop.f32.mrb[0].mxu0
        %v7785 = vadd.f32 0.0, %v7784
        %v7786 = vpop.f32.mrb[0].mxu0
        %7787 = vmatprep.mubr.bf16.mxu0 %v7640
        %7788 = vmatmul.mubr.bf16.gmra.mrb[0].mxu0 %v7637
        %v7789 = vpop.f32.mrb[0].mxu0
        %v7790 = vadd.f32 0.0, %v7789
        %v7791 = vpop.f32.mrb[0].mxu0
        %v7792 = vpop.f32.mrb[0].mxu0
        %v7793 = vadd.f32 0.0, %v7792
        %v7794 = vpop.f32.mrb[0].mxu0
        %7795 = vmatprep.mubr.bf16.mxu0 %v7646
        %7796 = vmatmul.mubr.bf16.gmra.mrb[0].mxu0 %v7643
        %v7797 = vpop.f32.mrb[0].mxu0
        %v7798 = vadd.f32 0.0, %v7797
        %v7799 = vpop.f32.mrb[0].mxu0
        %v7800 = vpop.f32.mrb[0].mxu0
        %v7801 = vadd.f32 0.0, %v7800
        %v7802 = vpop.f32.mrb[0].mxu0
        %7803 = vmatprep.mubr.bf16.mxu0 %v7652
        %7804 = vmatmul.mubr.bf16.gmra.mrb[0].mxu0 %v7649
        %v7805 = vpop.f32.mrb[0].mxu0
        %v7806 = vadd.f32 0.0, %v7805
        %v7807 = vpop.f32.mrb[0].mxu0
        %v7808 = vpop.f32.mrb[0].mxu0
        %v7809 = vadd.f32 0.0, %v7808
        %v7810 = vpop.f32.mrb[0].mxu0
        %7811 = vmatprep.mubr.bf16.mxu0 %v7658
        %7812 = vmatmul.mubr.bf16.gmra.mrb[0].mxu0 %v7655
        %v7813 = vpop.f32.mrb[0].mxu0
        %v7814 = vadd.f32 0.0, %v7813
        %v7815 = vpop.f32.mrb[0].mxu0
        %v7816 = vpop.f32.mrb[0].mxu0
        %v7817 = vadd.f32 0.0, %v7816
        %v7818 = vpop.f32.mrb[0].mxu0
        %7819 = vdwg.mxu0
        %7820 = vmatprep.subr.bf16.mxu0 0
        %7821 = vmatpush1.bf16.msra.mxu0 1065369472
        %7822 = vmatprep.subr.bf16.mxu0 0
        %7823 = vmatpush1.bf16.msra.mxu0 1065369472
        %7824 = vmatprep.subr.bf16.mxu0 0
        %7825 = vmatpush1.bf16.msra.mxu0 1065369472
        %7826 = vmatprep.subr.bf16.mxu0 0
        %7827 = vmatpush1.bf16.msra.mxu0 1065369472
        %7828 = vmatprep.subr.bf16.mxu0 0
        %7829 = vmatpush1.bf16.msra.mxu0 1065369472
        %7830 = vmatprep.subr.bf16.mxu0 0
        %7831 = vmatpush1.bf16.msra.mxu0 1065369472
        %7832 = vmatprep.subr.bf16.mxu0 0
        %7833 = vmatpush1.bf16.msra.mxu0 1065369472
        %7834 = vmatprep.subr.bf16.mxu0 0
        %7835 = vmatpush1.bf16.msra.mxu0 1065369472
        %7836 = vmatprep.subr.bf16.mxu0 0
        %7837 = vmatpush1.bf16.msra.mxu0 1065369472
        %7838 = vmatprep.subr.bf16.mxu0 0
        %7839 = vmatpush1.bf16.msra.mxu0 1065369472
        %7840 = vmatprep.subr.bf16.mxu0 0
        %7841 = vmatpush1.bf16.msra.mxu0 1065369472
        %7842 = vmatprep.subr.bf16.mxu0 0
        %7843 = vmatpush1.bf16.msra.mxu0 1065369472
        %7844 = vmatprep.subr.bf16.mxu0 0
        %7845 = vmatpush1.bf16.msra.mxu0 1065369472
        %7846 = vmatprep.subr.bf16.mxu0 0
        %7847 = vmatpush1.bf16.msra.mxu0 1065369472
        %7848 = vmatprep.subr.bf16.mxu0 0
        %7849 = vmatpush1.bf16.msra.mxu0 1065369472
        %7850 = vmatprep.subr.bf16.mxu0 0
        %7851 = vmatpush1.bf16.msra.mxu0 1065369472
        %7852 = vmatprep.mubr.bf16.mxu0 %v7616
        %7853 = vmatmul.mubr.bf16.gmra.mrb[0].mxu0 %v7613
        %v7854 = vpop.f32.mrb[0].mxu0
        %v7855 = vadd.f32 0.0, %v7854
        %v7856 = vpop.f32.mrb[0].mxu0
        %v7857 = vpop.f32.mrb[0].mxu0
        %v7858 = vadd.f32 0.0, %v7857
        %v7859 = vpop.f32.mrb[0].mxu0
        %7860 = vmatprep.mubr.bf16.mxu0 %v7622
        %7861 = vmatmul.mubr.bf16.gmra.mrb[0].mxu0 %v7619
        %v7862 = vpop.f32.mrb[0].mxu0
        %v7863 = vadd.f32 0.0, %v7862
        %v7864 = vpop.f32.mrb[0].mxu0
        %v7865 = vpop.f32.mrb[0].mxu0
        %v7866 = vadd.f32 0.0, %v7865
        %v7867 = vpop.f32.mrb[0].mxu0
        %7868 = vmatprep.mubr.bf16.mxu0 %v7628
        %7869 = vmatmul.mubr.bf16.gmra.mrb[0].mxu0 %v7625
        %v7870 = vpop.f32.mrb[0].mxu0
        %v7871 = vadd.f32 0.0, %v7870
        %v7872 = vpop.f32.mrb[0].mxu0
        %v7873 = vpop.f32.mrb[0].mxu0
        %v7874 = vadd.f32 0.0, %v7873
        %v7875 = vpop.f32.mrb[0].mxu0
        %7876 = vmatprep.mubr.bf16.mxu0 %v7634
        %7877 = vmatmul.mubr.bf16.gmra.mrb[0].mxu0 %v7631
        %v7878 = vpop.f32.mrb[0].mxu0
        %v7879 = vadd.f32 0.0, %v7878
        %v7880 = vpop.f32.mrb[0].mxu0
        %v7881 = vpop.f32.mrb[0].mxu0
        %v7882 = vadd.f32 0.0, %v7881
        %v7883 = vpop.f32.mrb[0].mxu0
        %7884 = vmatprep.mubr.bf16.mxu0 %v7640
        %7885 = vmatmul.mubr.bf16.gmra.mrb[0].mxu0 %v7637
        %v7886 = vpop.f32.mrb[0].mxu0
        %v7887 = vadd.f32 0.0, %v7886
        %v7888 = vpop.f32.mrb[0].mxu0
        %v7889 = vpop.f32.mrb[0].mxu0
        %v7890 = vadd.f32 0.0, %v7889
        %v7891 = vpop.f32.mrb[0].mxu0
        %7892 = vmatprep.mubr.bf16.mxu0 %v7646
        %7893 = vmatmul.mubr.bf16.gmra.mrb[0].mxu0 %v7643
        %v7894 = vpop.f32.mrb[0].mxu0
        %v7895 = vadd.f32 0.0, %v7894
        %v7896 = vpop.f32.mrb[0].mxu0
        %v7897 = vpop.f32.mrb[0].mxu0
        %v7898 = vadd.f32 0.0, %v7897
        %v7899 = vpop.f32.mrb[0].mxu0
        %7900 = vmatprep.mubr.bf16.mxu0 %v7652
        %7901 = vmatmul.mubr.bf16.gmra.mrb[0].mxu0 %v7649
        %v7902 = vpop.f32.mrb[0].mxu0
        %v7903 = vadd.f32 0.0, %v7902
        %v7904 = vpop.f32.mrb[0].mxu0
        %v7905 = vpop.f32.mrb[0].mxu0
        %v7906 = vadd.f32 0.0, %v7905
        %v7907 = vpop.f32.mrb[0].mxu0
        %7908 = vmatprep.mubr.bf16.mxu0 %v7658
        %7909 = vmatmul.mubr.bf16.gmra.mrb[0].mxu0 %v7655
        %v7910 = vpop.f32.mrb[0].mxu0
        %v7911 = vadd.f32 0.0, %v7910
        %v7912 = vpop.f32.mrb[0].mxu0
        %v7913 = vpop.f32.mrb[0].mxu0
        %v7914 = vadd.f32 0.0, %v7913
        %v7915 = vpop.f32.mrb[0].mxu0
        %7916 = vdwg.mxu0
        %v7917 = vrcp.pop %v7855
        %v7918 = vrcp.pop %v7858
        %v7919 = vrcp.pop %v7863
        %v7920 = vrcp.pop %v7866
        %v7921 = vrcp.pop %v7871
        %v7922 = vrcp.pop %v7874
        %v7923 = vrcp.pop %v7879
        %v7924 = vrcp.pop %v7882
        %v7925 = vrcp.pop %v7887
        %v7926 = vrcp.pop %v7890
        %v7927 = vrcp.pop %v7895
        %v7928 = vrcp.pop %v7898
        %v7929 = vrcp.pop %v7903
        %v7930 = vrcp.pop %v7906
        %v7931 = vrcp.pop %v7911
        %v7932 = vrcp.pop %v7914
        %7934 = vset.pattern.permute.xlu0 0
        %7935 = vperm.xlu0 %7934, %v7917
        %v7936 = vpop.permute.xlu0 %7935
        %7939 = vset.pattern.permute.xlu0 0
        %7940 = vperm.xlu0 %7939, %v7918
        %v7941 = vpop.permute.xlu0 %7940
        %7944 = vset.pattern.permute.xlu0 0
        %7945 = vperm.xlu0 %7944, %v7919
        %v7946 = vpop.permute.xlu0 %7945
        %7949 = vset.pattern.permute.xlu0 0
        %7950 = vperm.xlu0 %7949, %v7920
        %v7951 = vpop.permute.xlu0 %7950
        %7954 = vset.pattern.permute.xlu0 0
        %7955 = vperm.xlu0 %7954, %v7921
        %v7956 = vpop.permute.xlu0 %7955
        %7959 = vset.pattern.permute.xlu0 0
        %7960 = vperm.xlu0 %7959, %v7922
        %v7961 = vpop.permute.xlu0 %7960
        %7964 = vset.pattern.permute.xlu0 0
        %7965 = vperm.xlu0 %7964, %v7923
        %v7966 = vpop.permute.xlu0 %7965
        %7969 = vset.pattern.permute.xlu0 0
        %7970 = vperm.xlu0 %7969, %v7924
        %v7971 = vpop.permute.xlu0 %7970
        %7974 = vset.pattern.permute.xlu0 0
        %7975 = vperm.xlu0 %7974, %v7925
        %v7976 = vpop.permute.xlu0 %7975
        %7979 = vset.pattern.permute.xlu0 0
        %7980 = vperm.xlu0 %7979, %v7926
        %v7981 = vpop.permute.xlu0 %7980
        %7984 = vset.pattern.permute.xlu0 0
        %7985 = vperm.xlu0 %7984, %v7927
        %v7986 = vpop.permute.xlu0 %7985
        %7989 = vset.pattern.permute.xlu0 0
        %7990 = vperm.xlu0 %7989, %v7928
        %v7991 = vpop.permute.xlu0 %7990
        %7994 = vset.pattern.permute.xlu0 0
        %7995 = vperm.xlu0 %7994, %v7929
        %v7996 = vpop.permute.xlu0 %7995
        %7999 = vset.pattern.permute.xlu0 0
        %8000 = vperm.xlu0 %7999, %v7930
        %v8001 = vpop.permute.xlu0 %8000
        %8004 = vset.pattern.permute.xlu0 0
        %8005 = vperm.xlu0 %8004, %v7931
        %v8006 = vpop.permute.xlu0 %8005
        %8009 = vset.pattern.permute.xlu0 0
        %8010 = vperm.xlu0 %8009, %v7932
        %v8011 = vpop.permute.xlu0 %8010
        %v8013 = vmul.f32 %v7758, %v7936
        %v8014 = vmul.f32 %v7761, %v7941
        %v8015 = vmul.f32 %v7766, %v7946
        %v8016 = vmul.f32 %v7769, %v7951
        %v8017 = vmul.f32 %v7774, %v7956
        %v8018 = vmul.f32 %v7777, %v7961
        %v8019 = vmul.f32 %v7782, %v7966
        %v8020 = vmul.f32 %v7785, %v7971
        %v8021 = vmul.f32 %v7790, %v7976
        %v8022 = vmul.f32 %v7793, %v7981
        %v8023 = vmul.f32 %v7798, %v7986
        %v8024 = vmul.f32 %v7801, %v7991
        %v8025 = vmul.f32 %v7806, %v7996
        %v8026 = vmul.f32 %v7809, %v8001
        %v8027 = vmul.f32 %v7814, %v8006
        %v8028 = vmul.f32 %v7817, %v8011
        %8045 = vrot.lane.b32.xlu0 %v8013, 112
        %v8046 = vpop.permute.xlu0 %8045
        %8047 = vrot.lane.b32.xlu0 %v8014, 112
        %v8048 = vpop.permute.xlu0 %8047
        %8049 = vrot.lane.b32.xlu0 %v8015, 112
        %v8050 = vpop.permute.xlu0 %8049
        %8051 = vrot.lane.b32.xlu0 %v8016, 112
        %v8052 = vpop.permute.xlu0 %8051
        %8053 = vrot.lane.b32.xlu0 %v8017, 112
        %v8054 = vpop.permute.xlu0 %8053
        %8055 = vrot.lane.b32.xlu0 %v8018, 112
        %v8056 = vpop.permute.xlu0 %8055
        %8057 = vrot.lane.b32.xlu0 %v8019, 112
        %v8058 = vpop.permute.xlu0 %8057
        %8059 = vrot.lane.b32.xlu0 %v8020, 112
        %v8060 = vpop.permute.xlu0 %8059
        %8061 = vrot.lane.b32.xlu0 %v8021, 112
        %v8062 = vpop.permute.xlu0 %8061
        %8063 = vrot.lane.b32.xlu0 %v8022, 112
        %v8064 = vpop.permute.xlu0 %8063
        %8065 = vrot.lane.b32.xlu0 %v8023, 112
        %v8066 = vpop.permute.xlu0 %8065
        %8067 = vrot.lane.b32.xlu0 %v8024, 112
        %v8068 = vpop.permute.xlu0 %8067
        %8069 = vrot.lane.b32.xlu0 %v8025, 112
        %v8070 = vpop.permute.xlu0 %8069
        %8071 = vrot.lane.b32.xlu0 %v8026, 112
        %v8072 = vpop.permute.xlu0 %8071
        %8073 = vrot.lane.b32.xlu0 %v8027, 112
        %v8074 = vpop.permute.xlu0 %8073
        %8075 = vrot.lane.b32.xlu0 %v8028, 112
        %v8076 = vpop.permute.xlu0 %8075
        %vm8093 = vcmask 1048448
        %8094 = vst.msk [vmem:[#allocation4] sm:$0xff] %vm8093, %v8046
        %8095 = vst.msk [vmem:[#allocation4 + $0x8] sm:$0xff] %vm8093, %v8048
        %8096 = vst.msk [vmem:[#allocation4 + $0x10] sm:$0xff] %vm8093, %v8050
        %8097 = vst.msk [vmem:[#allocation4 + $0x18] sm:$0xff] %vm8093, %v8052
        %8098 = vst.msk [vmem:[#allocation4 + $0x20] sm:$0xff] %vm8093, %v8054
        %8099 = vst.msk [vmem:[#allocation4 + $0x28] sm:$0xff] %vm8093, %v8056
        %8100 = vst.msk [vmem:[#allocation4 + $0x30] sm:$0xff] %vm8093, %v8058
        %8101 = vst.msk [vmem:[#allocation4 + $0x38] sm:$0xff] %vm8093, %v8060
        %8102 = vst.msk [vmem:[#allocation4 + $0x40] sm:$0xff] %vm8093, %v8062
        %8103 = vst.msk [vmem:[#allocation4 + $0x48] sm:$0xff] %vm8093, %v8064
        %8104 = vst.msk [vmem:[#allocation4 + $0x50] sm:$0xff] %vm8093, %v8066
        %8105 = vst.msk [vmem:[#allocation4 + $0x58] sm:$0xff] %vm8093, %v8068
        %8106 = vst.msk [vmem:[#allocation4 + $0x60] sm:$0xff] %vm8093, %v8070
        %8107 = vst.msk [vmem:[#allocation4 + $0x68] sm:$0xff] %vm8093, %v8072
        %8108 = vst.msk [vmem:[#allocation4 + $0x70] sm:$0xff] %vm8093, %v8074
        %8109 = vst.msk [vmem:[#allocation4 + $0x78] sm:$0xff] %vm8093, %v8076
        %s8110 = smul.u32 %s26, 128
        %s8111 = scalar_lea.vmem [#allocation5], %s8110
        %v8112 = vld [vmem:[%s8111] sm:$0xff]
        %v8113 = vld [vmem:[%s8111 + $0x8] sm:$0xff]
        %v8114 = vld [vmem:[%s8111 + $0x10] sm:$0xff]
        %v8115 = vld [vmem:[%s8111 + $0x18] sm:$0xff]
        %v8116 = vld [vmem:[%s8111 + $0x20] sm:$0xff]
        %v8117 = vld [vmem:[%s8111 + $0x28] sm:$0xff]
        %v8118 = vld [vmem:[%s8111 + $0x30] sm:$0xff]
        %v8119 = vld [vmem:[%s8111 + $0x38] sm:$0xff]
        %v8120 = vld [vmem:[%s8111 + $0x40] sm:$0xff]
        %v8121 = vld [vmem:[%s8111 + $0x48] sm:$0xff]
        %v8122 = vld [vmem:[%s8111 + $0x50] sm:$0xff]
        %v8123 = vld [vmem:[%s8111 + $0x58] sm:$0xff]
        %v8124 = vld [vmem:[%s8111 + $0x60] sm:$0xff]
        %v8125 = vld [vmem:[%s8111 + $0x68] sm:$0xff]
        %v8126 = vld [vmem:[%s8111 + $0x70] sm:$0xff]
        %v8127 = vld [vmem:[%s8111 + $0x78] sm:$0xff]
        %v8128 = vld [vmem:[#allocation4] sm:$0xff]
        %v8129 = vld [vmem:[#allocation4 + $0x8] sm:$0xff]
        %v8130 = vld [vmem:[#allocation4 + $0x10] sm:$0xff]
        %v8131 = vld [vmem:[#allocation4 + $0x18] sm:$0xff]
        %v8132 = vld [vmem:[#allocation4 + $0x20] sm:$0xff]
        %v8133 = vld [vmem:[#allocation4 + $0x28] sm:$0xff]
        %v8134 = vld [vmem:[#allocation4 + $0x30] sm:$0xff]
        %v8135 = vld [vmem:[#allocation4 + $0x38] sm:$0xff]
        %v8136 = vld [vmem:[#allocation4 + $0x40] sm:$0xff]
        %v8137 = vld [vmem:[#allocation4 + $0x48] sm:$0xff]
        %v8138 = vld [vmem:[#allocation4 + $0x50] sm:$0xff]
        %v8139 = vld [vmem:[#allocation4 + $0x58] sm:$0xff]
        %v8140 = vld [vmem:[#allocation4 + $0x60] sm:$0xff]
        %v8141 = vld [vmem:[#allocation4 + $0x68] sm:$0xff]
        %v8142 = vld [vmem:[#allocation4 + $0x70] sm:$0xff]
        %v8143 = vld [vmem:[#allocation4 + $0x78] sm:$0xff]
        %v8144 = vadd.f32 %v8128, %v8112
        %v8145 = vadd.f32 %v8129, %v8113
        %v8146 = vadd.f32 %v8130, %v8114
        %v8147 = vadd.f32 %v8131, %v8115
        %v8148 = vadd.f32 %v8132, %v8116
        %v8149 = vadd.f32 %v8133, %v8117
        %v8150 = vadd.f32 %v8134, %v8118
        %v8151 = vadd.f32 %v8135, %v8119
        %v8152 = vadd.f32 %v8136, %v8120
        %v8153 = vadd.f32 %v8137, %v8121
        %v8154 = vadd.f32 %v8138, %v8122
        %v8155 = vadd.f32 %v8139, %v8123
        %v8156 = vadd.f32 %v8140, %v8124
        %v8157 = vadd.f32 %v8141, %v8125
        %v8158 = vadd.f32 %v8142, %v8126
        %v8159 = vadd.f32 %v8143, %v8127
        %8160 = vst [vmem:[%s239] sm:$0xff] %v8144
        %8161 = vst [vmem:[%s239 + $0x8] sm:$0xff] %v8145
        %8162 = vst [vmem:[%s239 + $0x10] sm:$0xff] %v8146
        %8163 = vst [vmem:[%s239 + $0x18] sm:$0xff] %v8147
        %8164 = vst [vmem:[%s239 + $0x20] sm:$0xff] %v8148
        %8165 = vst [vmem:[%s239 + $0x28] sm:$0xff] %v8149
        %8166 = vst [vmem:[%s239 + $0x30] sm:$0xff] %v8150
        %8167 = vst [vmem:[%s239 + $0x38] sm:$0xff] %v8151
        %8168 = vst [vmem:[%s239 + $0x40] sm:$0xff] %v8152
        %8169 = vst [vmem:[%s239 + $0x48] sm:$0xff] %v8153
        %8170 = vst [vmem:[%s239 + $0x50] sm:$0xff] %v8154
        %8171 = vst [vmem:[%s239 + $0x58] sm:$0xff] %v8155
        %8172 = vst [vmem:[%s239 + $0x60] sm:$0xff] %v8156
        %8173 = vst [vmem:[%s239 + $0x68] sm:$0xff] %v8157
        %8174 = vst [vmem:[%s239 + $0x70] sm:$0xff] %v8158
        %8175 = vst [vmem:[%s239 + $0x78] sm:$0xff] %v8159
        %s8176 = sand.u32 %s116, 1
        %s8177 = scalar_lea.sflag [#allocation7], %s8176
        %s8178 = sand.u32 %s116, 1
        %s8179 = smul.addr %s8178, 128
        %s8180 = scalar_lea.vmem [#allocation11], %s8179
        // Predicated region
        $region45: #{tpu_custom_call.1} parent=31 // pred_check
          %p8181 = pneg %p126
        $region46: #{tpu_custom_call.1} parent=31 // pred_check_branch
          %8183 = sbr.rel (%p8181) target = $region48
        $region47: #{tpu_custom_call.1} parent=31 // pred_region
          %s8184 = smul.u32 16, %s26
          %s8186 = ssub.s32 2048, 2048
          %8187 = vsyncadd %s8177, %s8186
          %s8188 = sadd.s32 %s25, %s8184
          %s8189 = smul.addr %s8188, 128
          %s8190 = scalar_lea.hbm %s3, %s8189
          %s8191 = sshll.u32 %s8180, 4
          %s8192 = int_to_ptr.vmem [resolvable:$true] %s8191
          %8197 = dma.vmem_to_hbm [thread:$0]  %s8192, 2048, %s8190, %s8177, 128, 128, 8
        $region48: #{tpu_custom_call.1} parent=31 // pred_fallthru
          _
      $region32: #{tpu_custom_call.1} parent=5 // pred_fallthru
        _
      %p8198 = scmp.le.s32.totalorder 2, %s16
      // Predicated region
      $region49: #{tpu_custom_call.1} parent=5 // pred_check
        %p8199 = pneg %p8198
      $region50: #{tpu_custom_call.1} parent=5 // pred_check_branch
        %8201 = sbr.rel (%p8199) target = $region52
      $region51: #{tpu_custom_call.1} parent=5 // pred_region
        %s8202 = ssub.s32 %s16, 2
        // Predicated region
        $region53: #{tpu_custom_call.1} parent=51 // pred_check
          %p8203 = pneg %p132
        $region54: #{tpu_custom_call.1} parent=51 // pred_check_branch
          %8205 = sbr.rel (%p8203) target = $region56
        $region55: #{tpu_custom_call.1} parent=51 // pred_region
          %s8206 = sand.u32 %s117, 1
          %s8207 = scalar_lea.sflag [#allocation7], %s8206
          %s8208 = sand.u32 %s117, 1
          %s8209 = smul.addr %s8208, 128
          %s8210 = scalar_lea.vmem [#allocation11], %s8209
          %8211 = dma.done %s8207, 2048
        $region56: #{tpu_custom_call.1} parent=51 // pred_fallthru
          _
      $region52: #{tpu_custom_call.1} parent=5 // pred_fallthru
        _
    $region6: #{tpu_custom_call.1} parent=1 // loop_footer
      %s20 = sadd.s32 1, %s16
    $region7: #{tpu_custom_call.1} parent=1 // loop_footer_branch
      %15 = sbr.rel target = $region3
    $region8: #{tpu_custom_call.1} parent=1 // loop_exit
      _
    %8212 = vsyncpa [#allocation6], 1
    %s8213 = scalar_lea.sflag [#allocation6], 1
    %8214 = vsyncpa %s8213, 1
    %8215 = vsyncpa [#allocation9], 1
    %s8216 = scalar_lea.sflag [#allocation9], 1
    %8217 = vsyncpa %s8216, 1
    %8218 = vsyncpa [#allocation7], 1
    %s8219 = scalar_lea.sflag [#allocation7], 1
    %8220 = vsyncpa %s8219, 1

</llo_original>
